<compile_context>
chip_gen: v7x
topology: tpu7x:2x2x1
jax: 0.10.0
libtpu: 0.0.40
codegen_flags: <defaults>
</compile_context>

<pallas_src>
import math
import numpy as np
import jax
import jax.numpy as jnp
from jax import lax
from jax.experimental import pallas as pl
from jax.experimental.pallas import tpu as pltpu

# --- model config (small, consistent with MASTER's forward) ------------------
BATCH = 8            # independent samples per call
B_TILE = 4           # samples fused per grid step -> M = B_TILE*N*T = 128 rows
N_STOCK = 4          # stocks per sample
T_STEPS = 8          # lookback window (seq len)
D_FEAT = 16          # gate_input_start_index
D_GATE = 8           # gate_input_end_index - gate_input_start_index
D_MODEL = 32
T_NHEAD = 4
S_NHEAD = 2
BETA = 1.0           # Gate temperature (module default beta=None would crash in torch too)
EPS = 1e-5
NT = N_STOCK * T_STEPS              # 32 rows per sample
M_ROWS = B_TILE * NT                # 128 flattened rows per grid step
BN = B_TILE * N_STOCK               # 16 (sample, stock) pairs per grid step
F_TOTAL = D_FEAT + D_GATE
P_LANES = 128                       # slab last dim padded 96 -> 128 (one lane tile)
NEG = -1e30                         # additive mask value

# --- packed parameter slab: one (N_SLOTS, 32, 128) f32 array ------------------
N_SLOTS = 10
SLOT_W_GATE = 0      # (D_GATE, D_FEAT) in [:D_GATE, :D_FEAT]
SLOT_W_X2Y = 1       # (D_FEAT, D_MODEL)
SLOT_T_WQKV = 2      # (D_MODEL, 3*D_MODEL) = [Wq | Wk | Wv], lanes 96:128 zero
SLOT_T_W1 = 3
SLOT_T_W2 = 4
SLOT_S_WQKV = 5      # Wq pre-scaled by 1/sqrt(d_model/s_nhead)
SLOT_S_W1 = 6
SLOT_S_W2 = 7
SLOT_W_TEMP = 8
SLOT_VEC = 9         # one vector per row (biases, LN gamma/beta, decoder)
ROW_B_GATE = 0
ROW_B_X2Y = 1
ROW_T_VEC = 2        # g1, b1, g2, b2, ffn_b1, ffn_b2
ROW_S_VEC = 8        # g1, b1, g2, b2, ffn_b1, ffn_b2
ROW_W_DEC = 14
ROW_B_DEC = 15

# --- aux constant: (3, M, M) = [TAttention mask bias, SAttention mask bias, PE] --
AUX_MASK_T = 0
AUX_MASK_S = 1
AUX_PE = 2           # positional encoding pre-tiled to (M_ROWS, D_MODEL) in [:, :D_MODEL]


# --- shared math (used inside the Pallas kernel and by the pure-JAX ref) ------
def _softmax(x, axis=-1):
    m = jnp.max(x, axis=axis, keepdims=True)
    e = jnp.exp(x - m)
    return e / jnp.sum(e, axis=axis, keepdims=True)


def _layernorm(x, g, b):
    mu = jnp.mean(x, axis=-1, keepdims=True)
    var = jnp.mean(jnp.square(x - mu), axis=-1, keepdims=True)
    return (x - mu) * lax.rsqrt(var + EPS) * g + b


# --- Pallas kernel -------------------------------------------------------------
def _encoder_block(h, w_qkv, w1, w2, vec, vec_row, nhead, mask_bias, att_ref):
    """LayerNorm -> block-masked MHA -> residual -> LayerNorm -> FFN -> residual.

    `mask_bias` is an additive (0 / -1e30) (M, M) matrix restricting attention to
    same-sample/same-stock (TAttention) or same-sample/same-timestep (SAttention)
    pairs: exact zero weight on masked pairs, i.e. mathematically identical to the
    per-stock / per-timestep softmaxes of the reference, with wide 2-D matmuls only.
    Per-head results are written straight into the `att_ref` VMEM scratch at static
    lane offsets (no lane-fragment concatenation).
    """
    g1 = vec[vec_row + 0:vec_row + 1, 0:D_MODEL]
    b1 = vec[vec_row + 1:vec_row + 2, 0:D_MODEL]
    g2 = vec[vec_row + 2:vec_row + 3, 0:D_MODEL]
    b2 = vec[vec_row + 3:vec_row + 4, 0:D_MODEL]
    fb1 = vec[vec_row + 4:vec_row + 5, 0:D_MODEL]
    fb2 = vec[vec_row + 5:vec_row + 6, 0:D_MODEL]

    hn = _layernorm(h, g1, b1)                                           # (M, D)
    # Fused QKV: (M, 32) @ (32, 128); lanes 96:128 of w_qkv are zero padding.
    qkv = jnp.dot(hn, w_qkv, preferred_element_type=jnp.float32)        # (M, 128)
    dh = D_MODEL // nhead
    for i in range(nhead):                        # static unroll: 4 (T) / 2 (S)
        q_h = qkv[:, i * dh:(i + 1) * dh]
        k_h = qkv[:, D_MODEL + i * dh:D_MODEL + (i + 1) * dh]
        v_h = qkv[:, 2 * D_MODEL + i * dh:2 * D_MODEL + (i + 1) * dh]
        s = jnp.einsum('id,jd->ij', q_h, k_h,
                       preferred_element_type=jnp.float32) + mask_bias   # (M, M)
        a = _softmax(s, axis=-1)
        att_ref[:, i * dh:(i + 1) * dh] = jnp.dot(
            a, v_h, preferred_element_type=jnp.float32)
    att = att_ref[...]                                                   # (M, D)

    xt = _layernorm(hn + att, g2, b2)
    f = jnp.maximum(jnp.dot(xt, w1, preferred_element_type=jnp.float32) + fb1, 0.0)
    f = jnp.dot(f, w2, preferred_element_type=jnp.float32) + fb2
    return xt + f


def master_kernel(x_ref, p_ref, aux_ref, o_ref, att_ref):
    x = x_ref[...]                                        # (B_TILE, N, T, F)
    vec = p_ref[SLOT_VEC]                                 # (32, 128) bias/LN/decoder rows
    mask_t = aux_ref[AUX_MASK_T]                          # (M, M) additive bias
    mask_s = aux_ref[AUX_MASK_S]                          # (M, M) additive bias
    pe = aux_ref[AUX_PE, :, 0:D_MODEL]                    # (M, D) pre-tiled PE

    # --- feature gate (gate features of the last timestep) --------------------
    gate_in = x[:, :, T_STEPS - 1, D_FEAT:F_TOTAL].reshape(BN, D_GATE)
    w_gate = p_ref[SLOT_W_GATE, 0:D_GATE, 0:D_FEAT]
    b_gate = vec[ROW_B_GATE:ROW_B_GATE + 1, 0:D_FEAT]
    logits = jnp.dot(gate_in, w_gate, preferred_element_type=jnp.float32) + b_gate
    if BETA != 1.0:
        logits = logits / BETA
    gate = D_FEAT * _softmax(logits, axis=-1)             # (BN, D_FEAT)

    # --- gated src flattened to (M, D_FEAT) ------------------------------------
    src = x[:, :, :, 0:D_FEAT].reshape(M_ROWS, D_FEAT)
    gate_rows = jnp.broadcast_to(
        gate[:, None, :], (BN, T_STEPS, D_FEAT)).reshape(M_ROWS, D_FEAT)
    src = src * gate_rows

    # --- x2y projection + positional encoding on flattened (M, D) --------------
    w_x2y = p_ref[SLOT_W_X2Y, 0:D_FEAT, 0:D_MODEL]
    b_x2y = vec[ROW_B_X2Y:ROW_B_X2Y + 1, 0:D_MODEL]
    h = jnp.dot(src, w_x2y, preferred_element_type=jnp.float32) + b_x2y + pe

    # --- TAttention (across time, per stock) then SAttention (across stocks) ---
    h = _encoder_block(h, p_ref[SLOT_T_WQKV],
                       p_ref[SLOT_T_W1, :, 0:D_MODEL],
                       p_ref[SLOT_T_W2, :, 0:D_MODEL],
                       vec, ROW_T_VEC, T_NHEAD, mask_t, att_ref)
    h = _encoder_block(h, p_ref[SLOT_S_WQKV],
                       p_ref[SLOT_S_W1, :, 0:D_MODEL],
                       p_ref[SLOT_S_W2, :, 0:D_MODEL],
                       vec, ROW_S_VEC, S_NHEAD, mask_s, att_ref)

    # --- TemporalAttention ------------------------------------------------------
    w_temp = p_ref[SLOT_W_TEMP, :, 0:D_MODEL]
    ht = jnp.dot(h, w_temp, preferred_element_type=jnp.float32)          # (M, D)
    ht3 = ht.reshape(BN, T_STEPS, D_MODEL)
    h3 = h.reshape(BN, T_STEPS, D_MODEL)
    query = ht3[:, T_STEPS - 1, :]                                        # (BN, D)
    lam = _softmax(jnp.sum(ht3 * query[:, None, :], axis=-1), axis=-1)    # (BN, T)
    z = jnp.sum(lam[:, :, None] * h3, axis=1)                             # (BN, D)

    # --- decoder, stored as one lane-dense (1, BN) row per grid step ------------
    w_dec = vec[ROW_W_DEC:ROW_W_DEC + 1, 0:D_MODEL]                       # (1, D)
    b_dec = vec[ROW_B_DEC:ROW_B_DEC + 1, 0:1]                             # (1, 1)
    pred = jnp.einsum('od,nd->on', w_dec, z,
                      preferred_element_type=jnp.float32) + b_dec         # (1, BN)
    o_ref[0] = pred


def _cost_estimate(steps):
    m = M_ROWS
    flops = 2 * m * D_FEAT * D_MODEL                       # x2y
    for nhead in (T_NHEAD, S_NHEAD):
        dh = D_MODEL // nhead
        flops += 2 * m * D_MODEL * (3 * D_MODEL)           # fused QKV
        flops += nhead * 4 * m * m * dh                    # scores + att@V
        flops += 2 * (2 * m * D_MODEL * D_MODEL)           # FFN
    flops += 2 * m * D_MODEL * D_MODEL                     # temporal projection
    flops += 6 * m * D_MODEL                               # temporal reduce + decoder
    trans = (T_NHEAD + S_NHEAD) * m * m + BN * (D_FEAT + T_STEPS) + 4 * m
    bytes_per_step = B_TILE * N_STOCK * T_STEPS * F_TOTAL * 4 + BN * 4
    bytes_const = N_SLOTS * D_MODEL * P_LANES * 4 + 3 * M_ROWS * M_ROWS * 4
    return pl.CostEstimate(flops=int(flops * steps),
                           transcendentals=int(trans * steps),
                           bytes_accessed=int(bytes_per_step * steps + bytes_const))


@jax.jit
def master_pallas(x, packed, aux):
    """x: (B, N, T, D_FEAT + D_GATE) float32 -> (B, N) predictions."""
    B = x.shape[0]
    assert B % B_TILE == 0, "BATCH must be a multiple of B_TILE"
    G = B // B_TILE
    out = pl.pallas_call(
        master_kernel,
        out_shape=jax.ShapeDtypeStruct((G, 1, BN), jnp.float32),
        grid=(G,),
        in_specs=[
            pl.BlockSpec((B_TILE, N_STOCK, T_STEPS, F_TOTAL),
                         lambda g: (g, 0, 0, 0)),
            pl.BlockSpec((N_SLOTS, D_MODEL, P_LANES),
                         lambda g: (0, 0, 0)),            # constant -> fetched once
            pl.BlockSpec((3, M_ROWS, M_ROWS),
                         lambda g: (0, 0, 0)),            # constant -> fetched once
        ],
        out_specs=pl.BlockSpec((1, 1, BN), lambda g: (g, 0, 0)),
        scratch_shapes=[pltpu.VMEM((M_ROWS, D_MODEL), jnp.float32)],
        compiler_params=pltpu.CompilerParams(
            dimension_semantics=("parallel",)),
        cost_estimate=_cost_estimate(G),
    )(x, packed, aux)
    return out.reshape(B, N_STOCK)


# --- deterministic parameter / input construction ------------------------------
def make_pe(T, d_model):
    pos = np.arange(T, dtype=np.float32)[:, None]
    div = np.exp(np.arange(0, d_model, 2, dtype=np.float32) *
                 (-math.log(10000.0) / d_model))
    pe = np.zeros((T, d_model), dtype=np.float32)
    pe[:, 0::2] = np.sin(pos * div)
    pe[:, 1::2] = np.cos(pos * div)
    return jnp.asarray(pe)


def init_params(key):
    keys = iter(jax.random.split(key, 32))

    def uniform(shape, fan_in):
        bound = 1.0 / math.sqrt(fan_in)
        return jax.random.uniform(next(keys), shape, jnp.float32, -bound, bound)

    p = {
        'w_gate': uniform((D_GATE, D_FEAT), D_GATE),
        'b_gate': uniform((D_FEAT,), D_GATE),
        'w_x2y': uniform((D_FEAT, D_MODEL), D_FEAT),
        'b_x2y': uniform((D_MODEL,), D_FEAT),
        'w_temp': uniform((D_MODEL, D_MODEL), D_MODEL),
        'w_dec': uniform((D_MODEL,), D_MODEL),
        'b_dec': uniform((1,), D_MODEL),
    }
    for pre in ('t', 's'):
        # LayerNorm gamma/beta perturbed from (1, 0) so the packing path of every
        # parameter is exercised by the correctness check (semantics unchanged).
        p[f'{pre}_g1'] = 1.0 + 0.1 * jax.random.normal(next(keys), (D_MODEL,), jnp.float32)
        p[f'{pre}_b1'] = 0.1 * jax.random.normal(next(keys), (D_MODEL,), jnp.float32)
        p[f'{pre}_g2'] = 1.0 + 0.1 * jax.random.normal(next(keys), (D_MODEL,), jnp.float32)
        p[f'{pre}_b2'] = 0.1 * jax.random.normal(next(keys), (D_MODEL,), jnp.float32)
        p[f'{pre}_wq'] = uniform((D_MODEL, D_MODEL), D_MODEL)
        p[f'{pre}_wk'] = uniform((D_MODEL, D_MODEL), D_MODEL)
        p[f'{pre}_wv'] = uniform((D_MODEL, D_MODEL), D_MODEL)
        p[f'{pre}_w1'] = uniform((D_MODEL, D_MODEL), D_MODEL)
        p[f'{pre}_fb1'] = uniform((D_MODEL,), D_MODEL)
        p[f'{pre}_w2'] = uniform((D_MODEL, D_MODEL), D_MODEL)
        p[f'{pre}_fb2'] = uniform((D_MODEL,), D_MODEL)
    return p


def pack_params(p):
    """Pack every parameter into one (N_SLOTS, 32, 128) slab (lane-tile aligned).

    The SAttention temperature is folded into its packed Wq so the kernel does no
    per-head score scaling at all.
    """
    P = np.zeros((N_SLOTS, D_MODEL, P_LANES), np.float32)
    P[SLOT_W_GATE, :D_GATE, :D_FEAT] = np.asarray(p['w_gate'])
    P[SLOT_W_X2Y, :D_FEAT, :D_MODEL] = np.asarray(p['w_x2y'])
    P[SLOT_T_WQKV, :, :3 * D_MODEL] = np.concatenate(
        [np.asarray(p['t_wq']), np.asarray(p['t_wk']), np.asarray(p['t_wv'])], axis=1)
    P[SLOT_T_W1, :, :D_MODEL] = np.asarray(p['t_w1'])
    P[SLOT_T_W2, :, :D_MODEL] = np.asarray(p['t_w2'])
    s_temp = math.sqrt(D_MODEL / S_NHEAD)
    P[SLOT_S_WQKV, :, :3 * D_MODEL] = np.concatenate(
        [np.asarray(p['s_wq']) / s_temp, np.asarray(p['s_wk']), np.asarray(p['s_wv'])],
        axis=1)
    P[SLOT_S_W1, :, :D_MODEL] = np.asarray(p['s_w1'])
    P[SLOT_S_W2, :, :D_MODEL] = np.asarray(p['s_w2'])
    P[SLOT_W_TEMP, :, :D_MODEL] = np.asarray(p['w_temp'])
    V = P[SLOT_VEC]
    V[ROW_B_GATE, :D_FEAT] = np.asarray(p['b_gate'])
    V[ROW_B_X2Y, :D_MODEL] = np.asarray(p['b_x2y'])
    for base, pre in ((ROW_T_VEC, 't'), (ROW_S_VEC, 's')):
        V[base + 0, :D_MODEL] = np.asarray(p[f'{pre}_g1'])
        V[base + 1, :D_MODEL] = np.asarray(p[f'{pre}_b1'])
        V[base + 2, :D_MODEL] = np.asarray(p[f'{pre}_g2'])
        V[base + 3, :D_MODEL] = np.asarray(p[f'{pre}_b2'])
        V[base + 4, :D_MODEL] = np.asarray(p[f'{pre}_fb1'])
        V[base + 5, :D_MODEL] = np.asarray(p[f'{pre}_fb2'])
    V[ROW_W_DEC, :D_MODEL] = np.asarray(p['w_dec'])
    V[ROW_B_DEC, 0] = float(np.asarray(p['b_dec'])[0])
    return jnp.asarray(P)


def make_aux(pe):
    """Host-precomputed additive attention masks + pre-tiled positional encoding.

    Flattened row r = (sample b, stock n, time t) with r = b*NT + n*T + t:
      * TAttention mask: same (sample, stock)  <=>  r//T == c//T
      * SAttention mask: same sample AND same timestep
    """
    r = np.arange(M_ROWS)
    same_stock = (r[:, None] // T_STEPS) == (r[None, :] // T_STEPS)
    same_sample = (r[:, None] // NT) == (r[None, :] // NT)
    same_time = same_sample & ((r[:, None] % T_STEPS) == (r[None, :] % T_STEPS))
    aux = np.zeros((3, M_ROWS, M_ROWS), np.float32)
    aux[AUX_MASK_T] = np.where(same_stock, 0.0, NEG).astype(np.float32)
    aux[AUX_MASK_S] = np.where(same_time, 0.0, NEG).astype(np.float32)
    aux[AUX_PE, :, :D_MODEL] = np.tile(np.asarray(pe), (BN, 1))
    return jnp.asarray(aux)


# --- pure-JAX reference (mirrors the torch module, per-head loops and all) -----
def _ref_attention_block(h, p, pre, nhead, over_stocks):
    hn = _layernorm(h, p[f'{pre}_g1'], p[f'{pre}_b1'])
    q = jnp.einsum('ntd,de->nte', hn, p[f'{pre}_wq'])
    k = jnp.einsum('ntd,de->nte', hn, p[f'{pre}_wk'])
    v = jnp.einsum('ntd,de->nte', hn, p[f'{pre}_wv'])
    dim = D_MODEL // nhead
    heads = []
    for i in range(nhead):
        sl = slice(i * dim, None) if i == nhead - 1 else slice(i * dim, (i + 1) * dim)
        qh, kh, vh = q[..., sl], k[..., sl], v[..., sl]
        if over_stocks:
            temp = math.sqrt(D_MODEL / nhead)
            att = _softmax(jnp.einsum('ntd,mtd->tnm', qh, kh) / temp, axis=-1)
            heads.append(jnp.einsum('tnm,mtd->ntd', att, vh))
        else:
            att = _softmax(jnp.einsum('ntd,nsd->nts', qh, kh), axis=-1)
            heads.append(jnp.einsum('nts,nsd->ntd', att, vh))
    att_out = jnp.concatenate(heads, axis=-1)
    xt = _layernorm(hn + att_out, p[f'{pre}_g2'], p[f'{pre}_b2'])
    f = jnp.maximum(xt @ p[f'{pre}_w1'] + p[f'{pre}_fb1'], 0.0)
    f = f @ p[f'{pre}_w2'] + p[f'{pre}_fb2']
    return xt + f


def master_forward_ref(x, pe, p):
    """Reference for one (N, T, F) sample; returns (N,)."""
    src = x[:, :, :D_FEAT]
    gate_in = x[:, -1, D_FEAT:D_FEAT + D_GATE]
    gate = D_FEAT * _softmax((gate_in @ p['w_gate'] + p['b_gate']) / BETA, axis=-1)
    src = src * gate[:, None, :]
    h = jnp.einsum('ntf,fd->ntd', src, p['w_x2y']) + p['b_x2y'] + pe
    h = _ref_attention_block(h, p, 't', T_NHEAD, over_stocks=False)
    h = _ref_attention_block(h, p, 's', S_NHEAD, over_stocks=True)
    ht = jnp.einsum('ntd,de->nte', h, p['w_temp'])
    query = ht[:, -1, :]
    lam = _softmax(jnp.sum(ht * query[:, None, :], axis=-1), axis=1)
    z = jnp.sum(lam[:, :, None] * h, axis=1)
    return jnp.sum(z * p['w_dec'], axis=-1) + p['b_dec'][0]


if __name__ == "__main__":
    key = jax.random.PRNGKey(0)
    kx, kp = jax.random.split(key)

    x = jax.random.normal(kx, (BATCH, N_STOCK, T_STEPS, F_TOTAL), dtype=jnp.float32)
    params = init_params(kp)
    pe = make_pe(T_STEPS, D_MODEL)
    packed = pack_params(params)
    aux = make_aux(pe)

    out = jax.block_until_ready(master_pallas(x, packed, aux))
    assert out.shape == (BATCH, N_STOCK)

    ref = jax.block_until_ready(
        jax.vmap(lambda xb: master_forward_ref(xb, pe, params))(x))
    np.testing.assert_allclose(np.asarray(out), np.asarray(ref), rtol=3e-3, atol=3e-3)

    print("KERNEL_OK")
</pallas_src>

<mosaic_0001>
module attributes {stable_mosaic.version = 11 : i64} {
  func.func @master_kernel(%arg0: i32, %arg1: memref<4x4x8x24xf32, #tpu.memory_space<vmem>>, %arg2: memref<10x32x128xf32, #tpu.memory_space<vmem>>, %arg3: memref<3x128x128xf32, #tpu.memory_space<vmem>>, %arg4: memref<1x1x16xf32, #tpu.memory_space<vmem>>, %arg5: memref<128x32xf32, #tpu.memory_space<vmem>>) attributes {dimension_semantics = [#tpu.dimension_semantics<parallel>], iteration_bounds = array<i64: 2>, scalar_prefetch = 0 : i64, scratch_operands = 1 : i64, tpu.core_type = #tpu.core_type<tc>, window_params = [{transform_indices = @transform_0, window_bounds = array<i64: 4, 4, 8, 24>}, {pipeline_mode = #tpu.pipeline_mode<synchronous>, transform_indices = @transform_1, window_bounds = array<i64: 10, 32, 128>}, {pipeline_mode = #tpu.pipeline_mode<synchronous>, transform_indices = @transform_2, window_bounds = array<i64: 3, 128, 128>}, {transform_indices = @transform_3, window_bounds = array<i64: 1, 1, 16>}]} {
    %c0 = arith.constant 0 : index
    %c0_0 = arith.constant 0 : index
    %c0_1 = arith.constant 0 : index
    %c0_2 = arith.constant 0 : index
    %0 = vector.load %arg1[%c0, %c0_0, %c0_1, %c0_2] : memref<4x4x8x24xf32, #tpu.memory_space<vmem>>, vector<4x4x8x24xf32>
    %c9 = arith.constant 9 : index
    %c0_3 = arith.constant 0 : index
    %c0_4 = arith.constant 0 : index
    %1 = vector.load %arg2[%c9, %c0_3, %c0_4] : memref<10x32x128xf32, #tpu.memory_space<vmem>>, vector<1x32x128xf32>
    %2 = vector.shape_cast %1 : vector<1x32x128xf32> to vector<32x128xf32>
    %c0_5 = arith.constant 0 : index
    %c0_6 = arith.constant 0 : index
    %c0_7 = arith.constant 0 : index
    %3 = vector.load %arg3[%c0_5, %c0_6, %c0_7] : memref<3x128x128xf32, #tpu.memory_space<vmem>>, vector<1x128x128xf32>
    %4 = vector.shape_cast %3 : vector<1x128x128xf32> to vector<128x128xf32>
    %c1 = arith.constant 1 : index
    %c0_8 = arith.constant 0 : index
    %c0_9 = arith.constant 0 : index
    %5 = vector.load %arg3[%c1, %c0_8, %c0_9] : memref<3x128x128xf32, #tpu.memory_space<vmem>>, vector<1x128x128xf32>
    %6 = vector.shape_cast %5 : vector<1x128x128xf32> to vector<128x128xf32>
    %c2 = arith.constant 2 : index
    %c0_10 = arith.constant 0 : index
    %c0_11 = arith.constant 0 : index
    %7 = vector.load %arg3[%c2, %c0_10, %c0_11] : memref<3x128x128xf32, #tpu.memory_space<vmem>>, vector<1x128x32xf32>
    %8 = vector.shape_cast %7 : vector<1x128x32xf32> to vector<128x32xf32>
    %9 = vector.extract_strided_slice %0 {offsets = [0, 0, 7, 16], sizes = [4, 4, 1, 8], strides = [1, 1, 1, 1]} : vector<4x4x8x24xf32> to vector<4x4x1x8xf32>
    %10 = vector.shape_cast %9 : vector<4x4x1x8xf32> to vector<4x4x8xf32>
    %11 = vector.shape_cast %10 : vector<4x4x8xf32> to vector<16x8xf32>
    %c0_12 = arith.constant 0 : index
    %c0_13 = arith.constant 0 : index
    %c0_14 = arith.constant 0 : index
    %12 = vector.load %arg2[%c0_12, %c0_13, %c0_14] : memref<10x32x128xf32, #tpu.memory_space<vmem>>, vector<1x8x16xf32>
    %13 = vector.shape_cast %12 : vector<1x8x16xf32> to vector<8x16xf32>
    %14 = vector.extract_strided_slice %2 {offsets = [0, 0], sizes = [1, 16], strides = [1, 1]} : vector<32x128xf32> to vector<1x16xf32>
    %cst = arith.constant dense<0.000000e+00> : vector<16x16xf32>
    %15 = tpu.matmul %11, %13, %cst {dimension_numbers = #tpu.dot_dimension_numbers<[1], [0], [0], [1], [0, 0, 1, 1], [], []>} : vector<16x8xf32>, vector<8x16xf32>, vector<16x16xf32> -> vector<16x16xf32>
    %16 = vector.broadcast %14 : vector<1x16xf32> to vector<16x16xf32>
    %17 = arith.addf %15, %16 : vector<16x16xf32>
    %cst_15 = arith.constant dense<0xFF800000> : vector<16xf32>
    %18 = vector.multi_reduction <maximumf>, %17, %cst_15 [1] : vector<16x16xf32> to vector<16xf32>
    %19 = vector.shape_cast %18 : vector<16xf32> to vector<16x1xf32>
    %20 = vector.broadcast %19 : vector<16x1xf32> to vector<16x16xf32>
    %21 = arith.subf %17, %20 : vector<16x16xf32>
    %22 = math.exp %21 : vector<16x16xf32>
    %cst_16 = arith.constant dense<0.000000e+00> : vector<16xf32>
    %23 = vector.multi_reduction <add>, %22, %cst_16 [1] : vector<16x16xf32> to vector<16xf32>
    %24 = vector.shape_cast %23 : vector<16xf32> to vector<16x1xf32>
    %25 = vector.broadcast %24 : vector<16x1xf32> to vector<16x16xf32>
    %26 = arith.divf %22, %25 : vector<16x16xf32>
    %cst_17 = arith.constant 1.600000e+01 : f32
    %27 = vector.broadcast %cst_17 : f32 to vector<16x16xf32>
    %28 = arith.mulf %27, %26 : vector<16x16xf32>
    %29 = vector.extract_strided_slice %0 {offsets = [0, 0, 0, 0], sizes = [4, 4, 8, 16], strides = [1, 1, 1, 1]} : vector<4x4x8x24xf32> to vector<4x4x8x16xf32>
    %30 = vector.shape_cast %29 : vector<4x4x8x16xf32> to vector<128x16xf32>
    %31 = vector.shape_cast %28 : vector<16x16xf32> to vector<16x1x16xf32>
    %32 = vector.shape_cast %31 : vector<16x1x16xf32> to vector<16x1x16xf32>
    %33 = vector.broadcast %32 : vector<16x1x16xf32> to vector<16x8x16xf32>
    %34 = vector.shape_cast %33 : vector<16x8x16xf32> to vector<128x16xf32>
    %35 = arith.mulf %30, %34 : vector<128x16xf32>
    %c1_18 = arith.constant 1 : index
    %c0_19 = arith.constant 0 : index
    %c0_20 = arith.constant 0 : index
    %36 = vector.load %arg2[%c1_18, %c0_19, %c0_20] : memref<10x32x128xf32, #tpu.memory_space<vmem>>, vector<1x16x32xf32>
    %37 = vector.shape_cast %36 : vector<1x16x32xf32> to vector<16x32xf32>
    %38 = vector.extract_strided_slice %2 {offsets = [1, 0], sizes = [1, 32], strides = [1, 1]} : vector<32x128xf32> to vector<1x32xf32>
    %cst_21 = arith.constant dense<0.000000e+00> : vector<128x32xf32>
    %39 = tpu.matmul %35, %37, %cst_21 {dimension_numbers = #tpu.dot_dimension_numbers<[1], [0], [0], [1], [0, 0, 1, 1], [], []>} : vector<128x16xf32>, vector<16x32xf32>, vector<128x32xf32> -> vector<128x32xf32>
    %40 = vector.broadcast %38 : vector<1x32xf32> to vector<128x32xf32>
    %41 = arith.addf %39, %40 : vector<128x32xf32>
    %42 = arith.addf %41, %8 : vector<128x32xf32>
    %c2_22 = arith.constant 2 : index
    %c0_23 = arith.constant 0 : index
    %c0_24 = arith.constant 0 : index
    %43 = vector.load %arg2[%c2_22, %c0_23, %c0_24] : memref<10x32x128xf32, #tpu.memory_space<vmem>>, vector<1x32x128xf32>
    %44 = vector.shape_cast %43 : vector<1x32x128xf32> to vector<32x128xf32>
    %c3 = arith.constant 3 : index
    %c0_25 = arith.constant 0 : index
    %c0_26 = arith.constant 0 : index
    %45 = vector.load %arg2[%c3, %c0_25, %c0_26] : memref<10x32x128xf32, #tpu.memory_space<vmem>>, vector<1x32x32xf32>
    %46 = vector.shape_cast %45 : vector<1x32x32xf32> to vector<32x32xf32>
    %c4 = arith.constant 4 : index
    %c0_27 = arith.constant 0 : index
    %c0_28 = arith.constant 0 : index
    %47 = vector.load %arg2[%c4, %c0_27, %c0_28] : memref<10x32x128xf32, #tpu.memory_space<vmem>>, vector<1x32x32xf32>
    %48 = vector.shape_cast %47 : vector<1x32x32xf32> to vector<32x32xf32>
    %49 = vector.extract_strided_slice %2 {offsets = [2, 0], sizes = [1, 32], strides = [1, 1]} : vector<32x128xf32> to vector<1x32xf32>
    %50 = vector.extract_strided_slice %2 {offsets = [3, 0], sizes = [1, 32], strides = [1, 1]} : vector<32x128xf32> to vector<1x32xf32>
    %51 = vector.extract_strided_slice %2 {offsets = [4, 0], sizes = [1, 32], strides = [1, 1]} : vector<32x128xf32> to vector<1x32xf32>
    %52 = vector.extract_strided_slice %2 {offsets = [5, 0], sizes = [1, 32], strides = [1, 1]} : vector<32x128xf32> to vector<1x32xf32>
    %53 = vector.extract_strided_slice %2 {offsets = [6, 0], sizes = [1, 32], strides = [1, 1]} : vector<32x128xf32> to vector<1x32xf32>
    %54 = vector.extract_strided_slice %2 {offsets = [7, 0], sizes = [1, 32], strides = [1, 1]} : vector<32x128xf32> to vector<1x32xf32>
    %cst_29 = arith.constant dense<0.000000e+00> : vector<128xf32>
    %55 = vector.multi_reduction <add>, %42, %cst_29 [1] : vector<128x32xf32> to vector<128xf32>
    %56 = vector.shape_cast %55 : vector<128xf32> to vector<128x1xf32>
    %cst_30 = arith.constant 3.200000e+01 : f32
    %57 = vector.broadcast %cst_30 : f32 to vector<128x1xf32>
    %58 = arith.divf %56, %57 : vector<128x1xf32>
    %59 = vector.broadcast %58 : vector<128x1xf32> to vector<128x32xf32>
    %60 = arith.subf %42, %59 : vector<128x32xf32>
    %61 = arith.mulf %60, %60 : vector<128x32xf32>
    %cst_31 = arith.constant dense<0.000000e+00> : vector<128xf32>
    %62 = vector.multi_reduction <add>, %61, %cst_31 [1] : vector<128x32xf32> to vector<128xf32>
    %63 = vector.shape_cast %62 : vector<128xf32> to vector<128x1xf32>
    %cst_32 = arith.constant 3.200000e+01 : f32
    %64 = vector.broadcast %cst_32 : f32 to vector<128x1xf32>
    %65 = arith.divf %63, %64 : vector<128x1xf32>
    %66 = vector.broadcast %58 : vector<128x1xf32> to vector<128x32xf32>
    %67 = arith.subf %42, %66 : vector<128x32xf32>
    %cst_33 = arith.constant 9.99999974E-6 : f32
    %68 = vector.broadcast %cst_33 : f32 to vector<128x1xf32>
    %69 = arith.addf %65, %68 : vector<128x1xf32>
    %70 = math.rsqrt %69 : vector<128x1xf32>
    %71 = vector.broadcast %70 : vector<128x1xf32> to vector<128x32xf32>
    %72 = arith.mulf %67, %71 : vector<128x32xf32>
    %73 = vector.broadcast %49 : vector<1x32xf32> to vector<128x32xf32>
    %74 = arith.mulf %72, %73 : vector<128x32xf32>
    %75 = vector.broadcast %50 : vector<1x32xf32> to vector<128x32xf32>
    %76 = arith.addf %74, %75 : vector<128x32xf32>
    %cst_34 = arith.constant dense<0.000000e+00> : vector<128x128xf32>
    %77 = tpu.matmul %76, %44, %cst_34 {dimension_numbers = #tpu.dot_dimension_numbers<[1], [0], [0], [1], [0, 0, 1, 1], [], []>} : vector<128x32xf32>, vector<32x128xf32>, vector<128x128xf32> -> vector<128x128xf32>
    %78 = vector.extract_strided_slice %77 {offsets = [0, 0], sizes = [128, 8], strides = [1, 1]} : vector<128x128xf32> to vector<128x8xf32>
    %79 = vector.extract_strided_slice %77 {offsets = [0, 32], sizes = [128, 8], strides = [1, 1]} : vector<128x128xf32> to vector<128x8xf32>
    %80 = vector.extract_strided_slice %77 {offsets = [0, 64], sizes = [128, 8], strides = [1, 1]} : vector<128x128xf32> to vector<128x8xf32>
    "tpu.trace_start"() <{level = 10 : i32, message = "id,jd->ij"}> : () -> ()
    %cst_35 = arith.constant dense<0.000000e+00> : vector<128x128xf32>
    %81 = tpu.matmul %78, %79, %cst_35 {dimension_numbers = #tpu.dot_dimension_numbers<[1], [1], [0], [0], [0, 0, 1, 0], [], []>} : vector<128x8xf32>, vector<128x8xf32>, vector<128x128xf32> -> vector<128x128xf32>
    "tpu.trace_stop"() : () -> ()
    %82 = arith.addf %81, %4 : vector<128x128xf32>
    %cst_36 = arith.constant dense<0xFF800000> : vector<128xf32>
    %83 = vector.multi_reduction <maximumf>, %82, %cst_36 [1] : vector<128x128xf32> to vector<128xf32>
    %84 = vector.shape_cast %83 : vector<128xf32> to vector<128x1xf32>
    %85 = vector.broadcast %84 : vector<128x1xf32> to vector<128x128xf32>
    %86 = arith.subf %82, %85 : vector<128x128xf32>
    %87 = math.exp %86 : vector<128x128xf32>
    %cst_37 = arith.constant dense<0.000000e+00> : vector<128xf32>
    %88 = vector.multi_reduction <add>, %87, %cst_37 [1] : vector<128x128xf32> to vector<128xf32>
    %89 = vector.shape_cast %88 : vector<128xf32> to vector<128x1xf32>
    %90 = vector.broadcast %89 : vector<128x1xf32> to vector<128x128xf32>
    %91 = arith.divf %87, %90 : vector<128x128xf32>
    %cst_38 = arith.constant dense<0.000000e+00> : vector<128x8xf32>
    %92 = tpu.matmul %91, %80, %cst_38 {dimension_numbers = #tpu.dot_dimension_numbers<[1], [0], [0], [1], [0, 0, 1, 1], [], []>} : vector<128x128xf32>, vector<128x8xf32>, vector<128x8xf32> -> vector<128x8xf32>
    %c0_39 = arith.constant 0 : index
    %c0_40 = arith.constant 0 : index
    %93 = vector.load %arg5[%c0_39, %c0_40] : memref<128x32xf32, #tpu.memory_space<vmem>>, vector<128x8xf32>
    tpu.vector_store %arg5[%c0_39, %c0_40], %92 {strides = array<i32>} : memref<128x32xf32, #tpu.memory_space<vmem>>, vector<128x8xf32>,
    %94 = vector.extract_strided_slice %77 {offsets = [0, 8], sizes = [128, 8], strides = [1, 1]} : vector<128x128xf32> to vector<128x8xf32>
    %95 = vector.extract_strided_slice %77 {offsets = [0, 40], sizes = [128, 8], strides = [1, 1]} : vector<128x128xf32> to vector<128x8xf32>
    %96 = vector.extract_strided_slice %77 {offsets = [0, 72], sizes = [128, 8], strides = [1, 1]} : vector<128x128xf32> to vector<128x8xf32>
    "tpu.trace_start"() <{level = 10 : i32, message = "id,jd->ij"}> : () -> ()
    %cst_41 = arith.constant dense<0.000000e+00> : vector<128x128xf32>
    %97 = tpu.matmul %94, %95, %cst_41 {dimension_numbers = #tpu.dot_dimension_numbers<[1], [1], [0], [0], [0, 0, 1, 0], [], []>} : vector<128x8xf32>, vector<128x8xf32>, vector<128x128xf32> -> vector<128x128xf32>
    "tpu.trace_stop"() : () -> ()
    %98 = arith.addf %97, %4 : vector<128x128xf32>
    %cst_42 = arith.constant dense<0xFF800000> : vector<128xf32>
    %99 = vector.multi_reduction <maximumf>, %98, %cst_42 [1] : vector<128x128xf32> to vector<128xf32>
    %100 = vector.shape_cast %99 : vector<128xf32> to vector<128x1xf32>
    %101 = vector.broadcast %100 : vector<128x1xf32> to vector<128x128xf32>
    %102 = arith.subf %98, %101 : vector<128x128xf32>
    %103 = math.exp %102 : vector<128x128xf32>
    %cst_43 = arith.constant dense<0.000000e+00> : vector<128xf32>
    %104 = vector.multi_reduction <add>, %103, %cst_43 [1] : vector<128x128xf32> to vector<128xf32>
    %105 = vector.shape_cast %104 : vector<128xf32> to vector<128x1xf32>
    %106 = vector.broadcast %105 : vector<128x1xf32> to vector<128x128xf32>
    %107 = arith.divf %103, %106 : vector<128x128xf32>
    %cst_44 = arith.constant dense<0.000000e+00> : vector<128x8xf32>
    %108 = tpu.matmul %107, %96, %cst_44 {dimension_numbers = #tpu.dot_dimension_numbers<[1], [0], [0], [1], [0, 0, 1, 1], [], []>} : vector<128x128xf32>, vector<128x8xf32>, vector<128x8xf32> -> vector<128x8xf32>
    %c0_45 = arith.constant 0 : index
    %c8 = arith.constant 8 : index
    %109 = vector.load %arg5[%c0_45, %c8] : memref<128x32xf32, #tpu.memory_space<vmem>>, vector<128x8xf32>
    tpu.vector_store %arg5[%c0_45, %c8], %108 {strides = array<i32>} : memref<128x32xf32, #tpu.memory_space<vmem>>, vector<128x8xf32>,
    %110 = vector.extract_strided_slice %77 {offsets = [0, 16], sizes = [128, 8], strides = [1, 1]} : vector<128x128xf32> to vector<128x8xf32>
    %111 = vector.extract_strided_slice %77 {offsets = [0, 48], sizes = [128, 8], strides = [1, 1]} : vector<128x128xf32> to vector<128x8xf32>
    %112 = vector.extract_strided_slice %77 {offsets = [0, 80], sizes = [128, 8], strides = [1, 1]} : vector<128x128xf32> to vector<128x8xf32>
    "tpu.trace_start"() <{level = 10 : i32, message = "id,jd->ij"}> : () -> ()
    %cst_46 = arith.constant dense<0.000000e+00> : vector<128x128xf32>
    %113 = tpu.matmul %110, %111, %cst_46 {dimension_numbers = #tpu.dot_dimension_numbers<[1], [1], [0], [0], [0, 0, 1, 0], [], []>} : vector<128x8xf32>, vector<128x8xf32>, vector<128x128xf32> -> vector<128x128xf32>
    "tpu.trace_stop"() : () -> ()
    %114 = arith.addf %113, %4 : vector<128x128xf32>
    %cst_47 = arith.constant dense<0xFF800000> : vector<128xf32>
    %115 = vector.multi_reduction <maximumf>, %114, %cst_47 [1] : vector<128x128xf32> to vector<128xf32>
    %116 = vector.shape_cast %115 : vector<128xf32> to vector<128x1xf32>
    %117 = vector.broadcast %116 : vector<128x1xf32> to vector<128x128xf32>
    %118 = arith.subf %114, %117 : vector<128x128xf32>
    %119 = math.exp %118 : vector<128x128xf32>
    %cst_48 = arith.constant dense<0.000000e+00> : vector<128xf32>
    %120 = vector.multi_reduction <add>, %119, %cst_48 [1] : vector<128x128xf32> to vector<128xf32>
    %121 = vector.shape_cast %120 : vector<128xf32> to vector<128x1xf32>
    %122 = vector.broadcast %121 : vector<128x1xf32> to vector<128x128xf32>
    %123 = arith.divf %119, %122 : vector<128x128xf32>
    %cst_49 = arith.constant dense<0.000000e+00> : vector<128x8xf32>
    %124 = tpu.matmul %123, %112, %cst_49 {dimension_numbers = #tpu.dot_dimension_numbers<[1], [0], [0], [1], [0, 0, 1, 1], [], []>} : vector<128x128xf32>, vector<128x8xf32>, vector<128x8xf32> -> vector<128x8xf32>
    %c0_50 = arith.constant 0 : index
    %c16 = arith.constant 16 : index
    %125 = vector.load %arg5[%c0_50, %c16] : memref<128x32xf32, #tpu.memory_space<vmem>>, vector<128x8xf32>
    tpu.vector_store %arg5[%c0_50, %c16], %124 {strides = array<i32>} : memref<128x32xf32, #tpu.memory_space<vmem>>, vector<128x8xf32>,
    %126 = vector.extract_strided_slice %77 {offsets = [0, 24], sizes = [128, 8], strides = [1, 1]} : vector<128x128xf32> to vector<128x8xf32>
    %127 = vector.extract_strided_slice %77 {offsets = [0, 56], sizes = [128, 8], strides = [1, 1]} : vector<128x128xf32> to vector<128x8xf32>
    %128 = vector.extract_strided_slice %77 {offsets = [0, 88], sizes = [128, 8], strides = [1, 1]} : vector<128x128xf32> to vector<128x8xf32>
    "tpu.trace_start"() <{level = 10 : i32, message = "id,jd->ij"}> : () -> ()
    %cst_51 = arith.constant dense<0.000000e+00> : vector<128x128xf32>
    %129 = tpu.matmul %126, %127, %cst_51 {dimension_numbers = #tpu.dot_dimension_numbers<[1], [1], [0], [0], [0, 0, 1, 0], [], []>} : vector<128x8xf32>, vector<128x8xf32>, vector<128x128xf32> -> vector<128x128xf32>
    "tpu.trace_stop"() : () -> ()
    %130 = arith.addf %129, %4 : vector<128x128xf32>
    %cst_52 = arith.constant dense<0xFF800000> : vector<128xf32>
    %131 = vector.multi_reduction <maximumf>, %130, %cst_52 [1] : vector<128x128xf32> to vector<128xf32>
    %132 = vector.shape_cast %131 : vector<128xf32> to vector<128x1xf32>
    %133 = vector.broadcast %132 : vector<128x1xf32> to vector<128x128xf32>
    %134 = arith.subf %130, %133 : vector<128x128xf32>
    %135 = math.exp %134 : vector<128x128xf32>
    %cst_53 = arith.constant dense<0.000000e+00> : vector<128xf32>
    %136 = vector.multi_reduction <add>, %135, %cst_53 [1] : vector<128x128xf32> to vector<128xf32>
    %137 = vector.shape_cast %136 : vector<128xf32> to vector<128x1xf32>
    %138 = vector.broadcast %137 : vector<128x1xf32> to vector<128x128xf32>
    %139 = arith.divf %135, %138 : vector<128x128xf32>
    %cst_54 = arith.constant dense<0.000000e+00> : vector<128x8xf32>
    %140 = tpu.matmul %139, %128, %cst_54 {dimension_numbers = #tpu.dot_dimension_numbers<[1], [0], [0], [1], [0, 0, 1, 1], [], []>} : vector<128x128xf32>, vector<128x8xf32>, vector<128x8xf32> -> vector<128x8xf32>
    %c0_55 = arith.constant 0 : index
    %c24 = arith.constant 24 : index
    %141 = vector.load %arg5[%c0_55, %c24] : memref<128x32xf32, #tpu.memory_space<vmem>>, vector<128x8xf32>
    tpu.vector_store %arg5[%c0_55, %c24], %140 {strides = array<i32>} : memref<128x32xf32, #tpu.memory_space<vmem>>, vector<128x8xf32>,
    %c0_56 = arith.constant 0 : index
    %c0_57 = arith.constant 0 : index
    %142 = vector.load %arg5[%c0_56, %c0_57] : memref<128x32xf32, #tpu.memory_space<vmem>>, vector<128x32xf32>
    %143 = arith.addf %76, %142 : vector<128x32xf32>
    %cst_58 = arith.constant dense<0.000000e+00> : vector<128xf32>
    %144 = vector.multi_reduction <add>, %143, %cst_58 [1] : vector<128x32xf32> to vector<128xf32>
    %145 = vector.shape_cast %144 : vector<128xf32> to vector<128x1xf32>
    %cst_59 = arith.constant 3.200000e+01 : f32
    %146 = vector.broadcast %cst_59 : f32 to vector<128x1xf32>
    %147 = arith.divf %145, %146 : vector<128x1xf32>
    %148 = vector.broadcast %147 : vector<128x1xf32> to vector<128x32xf32>
    %149 = arith.subf %143, %148 : vector<128x32xf32>
    %150 = arith.mulf %149, %149 : vector<128x32xf32>
    %cst_60 = arith.constant dense<0.000000e+00> : vector<128xf32>
    %151 = vector.multi_reduction <add>, %150, %cst_60 [1] : vector<128x32xf32> to vector<128xf32>
    %152 = vector.shape_cast %151 : vector<128xf32> to vector<128x1xf32>
    %cst_61 = arith.constant 3.200000e+01 : f32
    %153 = vector.broadcast %cst_61 : f32 to vector<128x1xf32>
    %154 = arith.divf %152, %153 : vector<128x1xf32>
    %155 = vector.broadcast %147 : vector<128x1xf32> to vector<128x32xf32>
    %156 = arith.subf %143, %155 : vector<128x32xf32>
    %cst_62 = arith.constant 9.99999974E-6 : f32
    %157 = vector.broadcast %cst_62 : f32 to vector<128x1xf32>
    %158 = arith.addf %154, %157 : vector<128x1xf32>
    %159 = math.rsqrt %158 : vector<128x1xf32>
    %160 = vector.broadcast %159 : vector<128x1xf32> to vector<128x32xf32>
    %161 = arith.mulf %156, %160 : vector<128x32xf32>
    %162 = vector.broadcast %51 : vector<1x32xf32> to vector<128x32xf32>
    %163 = arith.mulf %161, %162 : vector<128x32xf32>
    %164 = vector.broadcast %52 : vector<1x32xf32> to vector<128x32xf32>
    %165 = arith.addf %163, %164 : vector<128x32xf32>
    %cst_63 = arith.constant dense<0.000000e+00> : vector<128x32xf32>
    %166 = tpu.matmul %165, %46, %cst_63 {dimension_numbers = #tpu.dot_dimension_numbers<[1], [0], [0], [1], [0, 0, 1, 1], [], []>} : vector<128x32xf32>, vector<32x32xf32>, vector<128x32xf32> -> vector<128x32xf32>
    %167 = vector.broadcast %53 : vector<1x32xf32> to vector<128x32xf32>
    %168 = arith.addf %166, %167 : vector<128x32xf32>
    %cst_64 = arith.constant 0.000000e+00 : f32
    %169 = vector.broadcast %cst_64 : f32 to vector<128x32xf32>
    %170 = arith.maximumf %168, %169 : vector<128x32xf32>
    %cst_65 = arith.constant dense<0.000000e+00> : vector<128x32xf32>
    %171 = tpu.matmul %170, %48, %cst_65 {dimension_numbers = #tpu.dot_dimension_numbers<[1], [0], [0], [1], [0, 0, 1, 1], [], []>} : vector<128x32xf32>, vector<32x32xf32>, vector<128x32xf32> -> vector<128x32xf32>
    %172 = vector.broadcast %54 : vector<1x32xf32> to vector<128x32xf32>
    %173 = arith.addf %171, %172 : vector<128x32xf32>
    %174 = arith.addf %165, %173 : vector<128x32xf32>
    %c5 = arith.constant 5 : index
    %c0_66 = arith.constant 0 : index
    %c0_67 = arith.constant 0 : index
    %175 = vector.load %arg2[%c5, %c0_66, %c0_67] : memref<10x32x128xf32, #tpu.memory_space<vmem>>, vector<1x32x128xf32>
    %176 = vector.shape_cast %175 : vector<1x32x128xf32> to vector<32x128xf32>
    %c6 = arith.constant 6 : index
    %c0_68 = arith.constant 0 : index
    %c0_69 = arith.constant 0 : index
    %177 = vector.load %arg2[%c6, %c0_68, %c0_69] : memref<10x32x128xf32, #tpu.memory_space<vmem>>, vector<1x32x32xf32>
    %178 = vector.shape_cast %177 : vector<1x32x32xf32> to vector<32x32xf32>
    %c7 = arith.constant 7 : index
    %c0_70 = arith.constant 0 : index
    %c0_71 = arith.constant 0 : index
    %179 = vector.load %arg2[%c7, %c0_70, %c0_71] : memref<10x32x128xf32, #tpu.memory_space<vmem>>, vector<1x32x32xf32>
    %180 = vector.shape_cast %179 : vector<1x32x32xf32> to vector<32x32xf32>
    %181 = vector.extract_strided_slice %2 {offsets = [8, 0], sizes = [1, 32], strides = [1, 1]} : vector<32x128xf32> to vector<1x32xf32>
    %182 = vector.extract_strided_slice %2 {offsets = [9, 0], sizes = [1, 32], strides = [1, 1]} : vector<32x128xf32> to vector<1x32xf32>
    %183 = vector.extract_strided_slice %2 {offsets = [10, 0], sizes = [1, 32], strides = [1, 1]} : vector<32x128xf32> to vector<1x32xf32>
    %184 = vector.extract_strided_slice %2 {offsets = [11, 0], sizes = [1, 32], strides = [1, 1]} : vector<32x128xf32> to vector<1x32xf32>
    %185 = vector.extract_strided_slice %2 {offsets = [12, 0], sizes = [1, 32], strides = [1, 1]} : vector<32x128xf32> to vector<1x32xf32>
    %186 = vector.extract_strided_slice %2 {offsets = [13, 0], sizes = [1, 32], strides = [1, 1]} : vector<32x128xf32> to vector<1x32xf32>
    %cst_72 = arith.constant dense<0.000000e+00> : vector<128xf32>
    %187 = vector.multi_reduction <add>, %174, %cst_72 [1] : vector<128x32xf32> to vector<128xf32>
    %188 = vector.shape_cast %187 : vector<128xf32> to vector<128x1xf32>
    %cst_73 = arith.constant 3.200000e+01 : f32
    %189 = vector.broadcast %cst_73 : f32 to vector<128x1xf32>
    %190 = arith.divf %188, %189 : vector<128x1xf32>
    %191 = vector.broadcast %190 : vector<128x1xf32> to vector<128x32xf32>
    %192 = arith.subf %174, %191 : vector<128x32xf32>
    %193 = arith.mulf %192, %192 : vector<128x32xf32>
    %cst_74 = arith.constant dense<0.000000e+00> : vector<128xf32>
    %194 = vector.multi_reduction <add>, %193, %cst_74 [1] : vector<128x32xf32> to vector<128xf32>
    %195 = vector.shape_cast %194 : vector<128xf32> to vector<128x1xf32>
    %cst_75 = arith.constant 3.200000e+01 : f32
    %196 = vector.broadcast %cst_75 : f32 to vector<128x1xf32>
    %197 = arith.divf %195, %196 : vector<128x1xf32>
    %198 = vector.broadcast %190 : vector<128x1xf32> to vector<128x32xf32>
    %199 = arith.subf %174, %198 : vector<128x32xf32>
    %cst_76 = arith.constant 9.99999974E-6 : f32
    %200 = vector.broadcast %cst_76 : f32 to vector<128x1xf32>
    %201 = arith.addf %197, %200 : vector<128x1xf32>
    %202 = math.rsqrt %201 : vector<128x1xf32>
    %203 = vector.broadcast %202 : vector<128x1xf32> to vector<128x32xf32>
    %204 = arith.mulf %199, %203 : vector<128x32xf32>
    %205 = vector.broadcast %181 : vector<1x32xf32> to vector<128x32xf32>
    %206 = arith.mulf %204, %205 : vector<128x32xf32>
    %207 = vector.broadcast %182 : vector<1x32xf32> to vector<128x32xf32>
    %208 = arith.addf %206, %207 : vector<128x32xf32>
    %cst_77 = arith.constant dense<0.000000e+00> : vector<128x128xf32>
    %209 = tpu.matmul %208, %176, %cst_77 {dimension_numbers = #tpu.dot_dimension_numbers<[1], [0], [0], [1], [0, 0, 1, 1], [], []>} : vector<128x32xf32>, vector<32x128xf32>, vector<128x128xf32> -> vector<128x128xf32>
    %210 = vector.extract_strided_slice %209 {offsets = [0, 0], sizes = [128, 16], strides = [1, 1]} : vector<128x128xf32> to vector<128x16xf32>
    %211 = vector.extract_strided_slice %209 {offsets = [0, 32], sizes = [128, 16], strides = [1, 1]} : vector<128x128xf32> to vector<128x16xf32>
    %212 = vector.extract_strided_slice %209 {offsets = [0, 64], sizes = [128, 16], strides = [1, 1]} : vector<128x128xf32> to vector<128x16xf32>
    "tpu.trace_start"() <{level = 10 : i32, message = "id,jd->ij"}> : () -> ()
    %cst_78 = arith.constant dense<0.000000e+00> : vector<128x128xf32>
    %213 = tpu.matmul %210, %211, %cst_78 {dimension_numbers = #tpu.dot_dimension_numbers<[1], [1], [0], [0], [0, 0, 1, 0], [], []>} : vector<128x16xf32>, vector<128x16xf32>, vector<128x128xf32> -> vector<128x128xf32>
    "tpu.trace_stop"() : () -> ()
    %214 = arith.addf %213, %6 : vector<128x128xf32>
    %cst_79 = arith.constant dense<0xFF800000> : vector<128xf32>
    %215 = vector.multi_reduction <maximumf>, %214, %cst_79 [1] : vector<128x128xf32> to vector<128xf32>
    %216 = vector.shape_cast %215 : vector<128xf32> to vector<128x1xf32>
    %217 = vector.broadcast %216 : vector<128x1xf32> to vector<128x128xf32>
    %218 = arith.subf %214, %217 : vector<128x128xf32>
    %219 = math.exp %218 : vector<128x128xf32>
    %cst_80 = arith.constant dense<0.000000e+00> : vector<128xf32>
    %220 = vector.multi_reduction <add>, %219, %cst_80 [1] : vector<128x128xf32> to vector<128xf32>
    %221 = vector.shape_cast %220 : vector<128xf32> to vector<128x1xf32>
    %222 = vector.broadcast %221 : vector<128x1xf32> to vector<128x128xf32>
    %223 = arith.divf %219, %222 : vector<128x128xf32>
    %cst_81 = arith.constant dense<0.000000e+00> : vector<128x16xf32>
    %224 = tpu.matmul %223, %212, %cst_81 {dimension_numbers = #tpu.dot_dimension_numbers<[1], [0], [0], [1], [0, 0, 1, 1], [], []>} : vector<128x128xf32>, vector<128x16xf32>, vector<128x16xf32> -> vector<128x16xf32>
    %c0_82 = arith.constant 0 : index
    %c0_83 = arith.constant 0 : index
    %225 = vector.load %arg5[%c0_82, %c0_83] : memref<128x32xf32, #tpu.memory_space<vmem>>, vector<128x16xf32>
    tpu.vector_store %arg5[%c0_82, %c0_83], %224 {strides = array<i32>} : memref<128x32xf32, #tpu.memory_space<vmem>>, vector<128x16xf32>,
    %226 = vector.extract_strided_slice %209 {offsets = [0, 16], sizes = [128, 16], strides = [1, 1]} : vector<128x128xf32> to vector<128x16xf32>
    %227 = vector.extract_strided_slice %209 {offsets = [0, 48], sizes = [128, 16], strides = [1, 1]} : vector<128x128xf32> to vector<128x16xf32>
    %228 = vector.extract_strided_slice %209 {offsets = [0, 80], sizes = [128, 16], strides = [1, 1]} : vector<128x128xf32> to vector<128x16xf32>
    "tpu.trace_start"() <{level = 10 : i32, message = "id,jd->ij"}> : () -> ()
    %cst_84 = arith.constant dense<0.000000e+00> : vector<128x128xf32>
    %229 = tpu.matmul %226, %227, %cst_84 {dimension_numbers = #tpu.dot_dimension_numbers<[1], [1], [0], [0], [0, 0, 1, 0], [], []>} : vector<128x16xf32>, vector<128x16xf32>, vector<128x128xf32> -> vector<128x128xf32>
    "tpu.trace_stop"() : () -> ()
    %230 = arith.addf %229, %6 : vector<128x128xf32>
    %cst_85 = arith.constant dense<0xFF800000> : vector<128xf32>
    %231 = vector.multi_reduction <maximumf>, %230, %cst_85 [1] : vector<128x128xf32> to vector<128xf32>
    %232 = vector.shape_cast %231 : vector<128xf32> to vector<128x1xf32>
    %233 = vector.broadcast %232 : vector<128x1xf32> to vector<128x128xf32>
    %234 = arith.subf %230, %233 : vector<128x128xf32>
    %235 = math.exp %234 : vector<128x128xf32>
    %cst_86 = arith.constant dense<0.000000e+00> : vector<128xf32>
    %236 = vector.multi_reduction <add>, %235, %cst_86 [1] : vector<128x128xf32> to vector<128xf32>
    %237 = vector.shape_cast %236 : vector<128xf32> to vector<128x1xf32>
    %238 = vector.broadcast %237 : vector<128x1xf32> to vector<128x128xf32>
    %239 = arith.divf %235, %238 : vector<128x128xf32>
    %cst_87 = arith.constant dense<0.000000e+00> : vector<128x16xf32>
    %240 = tpu.matmul %239, %228, %cst_87 {dimension_numbers = #tpu.dot_dimension_numbers<[1], [0], [0], [1], [0, 0, 1, 1], [], []>} : vector<128x128xf32>, vector<128x16xf32>, vector<128x16xf32> -> vector<128x16xf32>
    %c0_88 = arith.constant 0 : index
    %c16_89 = arith.constant 16 : index
    %241 = vector.load %arg5[%c0_88, %c16_89] : memref<128x32xf32, #tpu.memory_space<vmem>>, vector<128x16xf32>
    tpu.vector_store %arg5[%c0_88, %c16_89], %240 {strides = array<i32>} : memref<128x32xf32, #tpu.memory_space<vmem>>, vector<128x16xf32>,
    %c0_90 = arith.constant 0 : index
    %c0_91 = arith.constant 0 : index
    %242 = vector.load %arg5[%c0_90, %c0_91] : memref<128x32xf32, #tpu.memory_space<vmem>>, vector<128x32xf32>
    %243 = arith.addf %208, %242 : vector<128x32xf32>
    %cst_92 = arith.constant dense<0.000000e+00> : vector<128xf32>
    %244 = vector.multi_reduction <add>, %243, %cst_92 [1] : vector<128x32xf32> to vector<128xf32>
    %245 = vector.shape_cast %244 : vector<128xf32> to vector<128x1xf32>
    %cst_93 = arith.constant 3.200000e+01 : f32
    %246 = vector.broadcast %cst_93 : f32 to vector<128x1xf32>
    %247 = arith.divf %245, %246 : vector<128x1xf32>
    %248 = vector.broadcast %247 : vector<128x1xf32> to vector<128x32xf32>
    %249 = arith.subf %243, %248 : vector<128x32xf32>
    %250 = arith.mulf %249, %249 : vector<128x32xf32>
    %cst_94 = arith.constant dense<0.000000e+00> : vector<128xf32>
    %251 = vector.multi_reduction <add>, %250, %cst_94 [1] : vector<128x32xf32> to vector<128xf32>
    %252 = vector.shape_cast %251 : vector<128xf32> to vector<128x1xf32>
    %cst_95 = arith.constant 3.200000e+01 : f32
    %253 = vector.broadcast %cst_95 : f32 to vector<128x1xf32>
    %254 = arith.divf %252, %253 : vector<128x1xf32>
    %255 = vector.broadcast %247 : vector<128x1xf32> to vector<128x32xf32>
    %256 = arith.subf %243, %255 : vector<128x32xf32>
    %cst_96 = arith.constant 9.99999974E-6 : f32
    %257 = vector.broadcast %cst_96 : f32 to vector<128x1xf32>
    %258 = arith.addf %254, %257 : vector<128x1xf32>
    %259 = math.rsqrt %258 : vector<128x1xf32>
    %260 = vector.broadcast %259 : vector<128x1xf32> to vector<128x32xf32>
    %261 = arith.mulf %256, %260 : vector<128x32xf32>
    %262 = vector.broadcast %183 : vector<1x32xf32> to vector<128x32xf32>
    %263 = arith.mulf %261, %262 : vector<128x32xf32>
    %264 = vector.broadcast %184 : vector<1x32xf32> to vector<128x32xf32>
    %265 = arith.addf %263, %264 : vector<128x32xf32>
    %cst_97 = arith.constant dense<0.000000e+00> : vector<128x32xf32>
    %266 = tpu.matmul %265, %178, %cst_97 {dimension_numbers = #tpu.dot_dimension_numbers<[1], [0], [0], [1], [0, 0, 1, 1], [], []>} : vector<128x32xf32>, vector<32x32xf32>, vector<128x32xf32> -> vector<128x32xf32>
    %267 = vector.broadcast %185 : vector<1x32xf32> to vector<128x32xf32>
    %268 = arith.addf %266, %267 : vector<128x32xf32>
    %cst_98 = arith.constant 0.000000e+00 : f32
    %269 = vector.broadcast %cst_98 : f32 to vector<128x32xf32>
    %270 = arith.maximumf %268, %269 : vector<128x32xf32>
    %cst_99 = arith.constant dense<0.000000e+00> : vector<128x32xf32>
    %271 = tpu.matmul %270, %180, %cst_99 {dimension_numbers = #tpu.dot_dimension_numbers<[1], [0], [0], [1], [0, 0, 1, 1], [], []>} : vector<128x32xf32>, vector<32x32xf32>, vector<128x32xf32> -> vector<128x32xf32>
    %272 = vector.broadcast %186 : vector<1x32xf32> to vector<128x32xf32>
    %273 = arith.addf %271, %272 : vector<128x32xf32>
    %274 = arith.addf %265, %273 : vector<128x32xf32>
    %c8_100 = arith.constant 8 : index
    %c0_101 = arith.constant 0 : index
    %c0_102 = arith.constant 0 : index
    %275 = vector.load %arg2[%c8_100, %c0_101, %c0_102] : memref<10x32x128xf32, #tpu.memory_space<vmem>>, vector<1x32x32xf32>
    %276 = vector.shape_cast %275 : vector<1x32x32xf32> to vector<32x32xf32>
    %cst_103 = arith.constant dense<0.000000e+00> : vector<128x32xf32>
    %277 = tpu.matmul %274, %276, %cst_103 {dimension_numbers = #tpu.dot_dimension_numbers<[1], [0], [0], [1], [0, 0, 1, 1], [], []>} : vector<128x32xf32>, vector<32x32xf32>, vector<128x32xf32> -> vector<128x32xf32>
    %278 = vector.shape_cast %277 : vector<128x32xf32> to vector<16x8x32xf32>
    %279 = vector.shape_cast %274 : vector<128x32xf32> to vector<16x8x32xf32>
    %280 = vector.extract_strided_slice %278 {offsets = [0, 7, 0], sizes = [16, 1, 32], strides = [1, 1, 1]} : vector<16x8x32xf32> to vector<16x1x32xf32>
    %281 = vector.shape_cast %280 : vector<16x1x32xf32> to vector<16x32xf32>
    %282 = vector.shape_cast %281 : vector<16x32xf32> to vector<16x1x32xf32>
    %283 = vector.broadcast %282 : vector<16x1x32xf32> to vector<16x8x32xf32>
    %284 = arith.mulf %278, %283 : vector<16x8x32xf32>
    %cst_104 = arith.constant dense<0.000000e+00> : vector<16x8xf32>
    %285 = vector.multi_reduction <add>, %284, %cst_104 [2] : vector<16x8x32xf32> to vector<16x8xf32>
    %cst_105 = arith.constant dense<0xFF800000> : vector<16xf32>
    %286 = vector.multi_reduction <maximumf>, %285, %cst_105 [1] : vector<16x8xf32> to vector<16xf32>
    %287 = vector.shape_cast %286 : vector<16xf32> to vector<16x1xf32>
    %288 = vector.broadcast %287 : vector<16x1xf32> to vector<16x8xf32>
    %289 = arith.subf %285, %288 : vector<16x8xf32>
    %290 = math.exp %289 : vector<16x8xf32>
    %cst_106 = arith.constant dense<0.000000e+00> : vector<16xf32>
    %291 = vector.multi_reduction <add>, %290, %cst_106 [1] : vector<16x8xf32> to vector<16xf32>
    %292 = vector.shape_cast %291 : vector<16xf32> to vector<16x1xf32>
    %293 = vector.broadcast %292 : vector<16x1xf32> to vector<16x8xf32>
    %294 = arith.divf %290, %293 : vector<16x8xf32>
    %295 = vector.shape_cast %294 : vector<16x8xf32> to vector<16x8x1xf32>
    %296 = vector.broadcast %295 : vector<16x8x1xf32> to vector<16x8x32xf32>
    %297 = arith.mulf %296, %279 : vector<16x8x32xf32>
    %cst_107 = arith.constant dense<0.000000e+00> : vector<16x32xf32>
    %298 = vector.multi_reduction <add>, %297, %cst_107 [1] : vector<16x8x32xf32> to vector<16x32xf32>
    %299 = vector.extract_strided_slice %2 {offsets = [14, 0], sizes = [1, 32], strides = [1, 1]} : vector<32x128xf32> to vector<1x32xf32>
    %300 = vector.extract_strided_slice %2 {offsets = [15, 0], sizes = [1, 1], strides = [1, 1]} : vector<32x128xf32> to vector<1x1xf32>
    "tpu.trace_start"() <{level = 10 : i32, message = "od,nd->on"}> : () -> ()
    %cst_108 = arith.constant dense<0.000000e+00> : vector<1x16xf32>
    %301 = tpu.matmul %299, %298, %cst_108 {dimension_numbers = #tpu.dot_dimension_numbers<[1], [1], [0], [0], [0, 0, 1, 0], [], []>} : vector<1x32xf32>, vector<16x32xf32>, vector<1x16xf32> -> vector<1x16xf32>
    "tpu.trace_stop"() : () -> ()
    %302 = vector.broadcast %300 : vector<1x1xf32> to vector<1x16xf32>
    %303 = arith.addf %301, %302 : vector<1x16xf32>
    %c0_109 = arith.constant 0 : index
    %c0_110 = arith.constant 0 : index
    %c0_111 = arith.constant 0 : index
    %304 = vector.load %arg4[%c0_109, %c0_110, %c0_111] : memref<1x1x16xf32, #tpu.memory_space<vmem>>, vector<1x1x16xf32>
    %305 = vector.shape_cast %304 : vector<1x1x16xf32> to vector<1x16xf32>
    %306 = vector.shape_cast %303 : vector<1x16xf32> to vector<1x1x16xf32>
    tpu.vector_store %arg4[%c0_109, %c0_110, %c0_111], %306 {strides = array<i32>} : memref<1x1x16xf32, #tpu.memory_space<vmem>>, vector<1x1x16xf32>,
    return
  }
  func.func @transform_0(%arg0: i32) -> (i32, i32, i32, i32) {
    %c0_i32 = arith.constant 0 : i32
    %c0_i32_0 = arith.constant 0 : i32
    %c0_i32_1 = arith.constant 0 : i32
    %c0_i32_2 = arith.constant 0 : i32
    return %arg0, %c0_i32, %c0_i32_0, %c0_i32_1 : i32, i32, i32, i32
  }
  func.func @transform_1(%arg0: i32) -> (i32, i32, i32) {
    %c0_i32 = arith.constant 0 : i32
    %c0_i32_0 = arith.constant 0 : i32
    %c0_i32_1 = arith.constant 0 : i32
    %c0_i32_2 = arith.constant 0 : i32
    return %c0_i32, %c0_i32_0, %c0_i32_1 : i32, i32, i32
  }
  func.func @transform_2(%arg0: i32) -> (i32, i32, i32) {
    %c0_i32 = arith.constant 0 : i32
    %c0_i32_0 = arith.constant 0 : i32
    %c0_i32_1 = arith.constant 0 : i32
    %c0_i32_2 = arith.constant 0 : i32
    return %c0_i32, %c0_i32_0, %c0_i32_1 : i32, i32, i32
  }
  func.func @transform_3(%arg0: i32) -> (i32, i32, i32) {
    %c0_i32 = arith.constant 0 : i32
    %c0_i32_0 = arith.constant 0 : i32
    %c0_i32_1 = arith.constant 0 : i32
    return %arg0, %c0_i32, %c0_i32_0 : i32, i32, i32
  }
}

</mosaic_0001>

<llo_original>
// kernel: master_pallas.1
$region0: #{master_pallas.1}
  #allocation0 [shape = 'u32[]', space=smem, size = 0x4, offset = 0x4, fixed_abs, tag = 'smem constant byte address 0x4 - core index']
  #allocation1 [shape = 'u32[144,128]{1,0:T(1,128)}', space=vmem, size = 0x12000, scoped, tag = 'internal scratch']
  #allocation2 [shape = 'f32[128,32]{1,0:T(8,128)}', space=vmem, size = 0x10000, scoped, tag = 'scratch operand']
  %s0 = inlined_call_operand.hbm [shape: f32[8,4,8,24], index: 0, kind: input, shape index: {}]
  %s1 = inlined_call_operand.hbm [shape: f32[10,32,128], index: 1, kind: input, shape index: {}]
  %s2 = inlined_call_operand.hbm [shape: f32[3,128,128], index: 2, kind: input, shape index: {}]
  %s3 = inlined_call_operand.vmem [shape: f32[2,1,16], index: 3, kind: output, shape index: {}]
  %s4 = sld [smem:[#allocation0]]
  $region57: #{master_pallas.1} parent=0
    _
  %s6 = ssub.s32 1, %s4
  %s7 = scalar_select 0, %s6, %s4
  $region1: #{master_pallas.1} parent=0
    #allocation3 [shape = 'u8[131072]{0}', space=vmem, size = 0x20000, scoped, tag = 'input window, operand 0']
    #allocation4 [shape = 's32[2]{0}', space=sflag, size = 0x8, scoped, tag = 'scoped memory for master_pallas.1']
    #allocation5 [shape = 'u8[163840]{0}', space=vmem, size = 0x28000, scoped, tag = 'input window, operand 1, single buffered']
    #allocation6 [shape = 's32[1]{0}', space=sflag, size = 0x4, scoped, tag = 'scoped memory for master_pallas.1']
    #allocation7 [shape = 'u8[196608]{0}', space=vmem, size = 0x30000, scoped, tag = 'input window, operand 2, single buffered']
    %8 = vsyncpa [#allocation4], 0
    %s9 = scalar_lea.sflag [#allocation4], 1
    %10 = vsyncpa %s9, 0
    %11 = vsyncpa [#allocation6], 0
    loop: start=0, step=1, limit=4
    $region2: #{master_pallas.1} parent=1 // loop_pre_header
      _
    $region3: #{master_pallas.1} parent=1 // loop_header
      %s13 = sphi 0, %s17
      %p14 = scmp.ge.s32.totalorder %s13, 4
      %s23 = sphi 0, %s25
      %s26 = sphi 0, %s23
      %s27 = sphi 0, %s26
      %s43 = sphi 0, %s27
      %s47 = sphi 0, %s47
      %s49 = sphi 0, %s47
      %s50 = sphi 0, %s49
      %s64 = sphi 0, %s50
      %s68 = sphi 0, %s68
      %s70 = sphi 0, %s68
      %s71 = sphi 0, %s70
      %s85 = sphi 0, %s71
      %s91 = sphi 0, %s93
      %s94 = sphi 0, %s91
      %s95 = sphi 0, %s94
      %s111 = sphi 0, %s95
    $region4: #{master_pallas.1} parent=1 // loop_header_branch
      %16 = sbr.rel (%p14) target = $region8
    $region5: #{master_pallas.1} parent=1 // loop_body
      %s18 = ssub.s32 %s13, 1
      %s19 = ssub.s32 %s13, 2
      %s20 = sadd.s32 %s13, 1
      %s21 = ssub.s32 %s13, %s20
      %p22 = scmp.eq.s32.totalorder %s21, 0
      %s24 = sadd.s32 %s23, 1
      %s25 = scalar_select %p22, %s23, %s24
      %p28 = pneg %p22
      %p29 = scmp.eq.s32.totalorder %s13, 1
      %p30 = por %p28, %p29
      %p31 = scmp.ne.s32.totalorder %s23, %s26
      %p32 = scmp.eq.s32.totalorder %s13, 0
      %p33 = por %p31, %p32
      %p34 = scmp.ne.s32.totalorder %s23, %s26
      %p35 = scmp.eq.s32.totalorder %s18, 1
      %p36 = por %p34, %p35
      %p37 = scmp.ne.s32.totalorder %s26, %s27
      %p38 = scmp.eq.s32.totalorder %s18, 0
      %p39 = por %p37, %p38
      %p40 = scmp.ne.s32.totalorder %s26, %s27
      %p41 = scmp.eq.s32.totalorder %s19, 1
      %p42 = por %p40, %p41
      %p44 = scmp.ne.s32.totalorder %s27, %s43
      %p45 = scmp.eq.s32.totalorder %s19, 0
      %p46 = por %p44, %p45
      %s48 = sadd.s32 %s47, 1
      %p51 = scmp.eq.s32.totalorder %s13, 1
      %p52 = scmp.ne.s32.totalorder %s47, %s49
      %p53 = scmp.eq.s32.totalorder %s13, 0
      %p54 = por %p52, %p53
      %p55 = scmp.ne.s32.totalorder %s47, %s49
      %p56 = scmp.eq.s32.totalorder %s18, 1
      %p57 = por %p55, %p56
      %p58 = scmp.ne.s32.totalorder %s49, %s50
      %p59 = scmp.eq.s32.totalorder %s18, 0
      %p60 = por %p58, %p59
      %p61 = scmp.ne.s32.totalorder %s49, %s50
      %p62 = scmp.eq.s32.totalorder %s19, 1
      %p63 = por %p61, %p62
      %p65 = scmp.ne.s32.totalorder %s50, %s64
      %p66 = scmp.eq.s32.totalorder %s19, 0
      %p67 = por %p65, %p66
      %s69 = sadd.s32 %s68, 1
      %p72 = scmp.eq.s32.totalorder %s13, 1
      %p73 = scmp.ne.s32.totalorder %s68, %s70
      %p74 = scmp.eq.s32.totalorder %s13, 0
      %p75 = por %p73, %p74
      %p76 = scmp.ne.s32.totalorder %s68, %s70
      %p77 = scmp.eq.s32.totalorder %s18, 1
      %p78 = por %p76, %p77
      %p79 = scmp.ne.s32.totalorder %s70, %s71
      %p80 = scmp.eq.s32.totalorder %s18, 0
      %p81 = por %p79, %p80
      %p82 = scmp.ne.s32.totalorder %s70, %s71
      %p83 = scmp.eq.s32.totalorder %s19, 1
      %p84 = por %p82, %p83
      %p86 = scmp.ne.s32.totalorder %s71, %s85
      %p87 = scmp.eq.s32.totalorder %s19, 0
      %p88 = por %p86, %p87
      %s89 = ssub.s32 %s13, %s20
      %p90 = scmp.eq.s32.totalorder %s89, 0
      %s92 = sadd.s32 %s91, 1
      %s93 = scalar_select %p90, %s91, %s92
      %p96 = pneg %p90
      %p97 = scmp.eq.s32.totalorder %s13, 1
      %p98 = por %p96, %p97
      %p99 = scmp.ne.s32.totalorder %s91, %s94
      %p100 = scmp.eq.s32.totalorder %s13, 0
      %p101 = por %p99, %p100
      %p102 = scmp.ne.s32.totalorder %s91, %s94
      %p103 = scmp.eq.s32.totalorder %s18, 1
      %p104 = por %p102, %p103
      %p105 = scmp.ne.s32.totalorder %s94, %s95
      %p106 = scmp.eq.s32.totalorder %s18, 0
      %p107 = por %p105, %p106
      %p108 = scmp.ne.s32.totalorder %s94, %s95
      %p109 = scmp.eq.s32.totalorder %s19, 1
      %p110 = por %p108, %p109
      %p112 = scmp.ne.s32.totalorder %s95, %s111
      %p113 = scmp.eq.s32.totalorder %s19, 0
      %p114 = por %p112, %p113
      %p115 = scmp.le.s32.totalorder 1, %s13
      %p116 = scmp.lt.s32.totalorder %s13, 3
      %p117 = pnand %p115, %p116
      %p118 = pneg %p117
      // Predicated region
      $region9: #{master_pallas.1} parent=5 // pred_check
        _
      $region10: #{master_pallas.1} parent=5 // pred_check_branch
        %120 = sbr.rel (%p117) target = $region12
      $region11: #{master_pallas.1} parent=5 // pred_region
        %s121 = ssub.s32 %s13, 1
        // Predicated region
        $region13: #{master_pallas.1} parent=11 // pred_check
          %p122 = pneg %p60
        $region14: #{master_pallas.1} parent=11 // pred_check_branch
          %124 = sbr.rel (%p122) target = $region16
        $region15: #{master_pallas.1} parent=11 // pred_region
          %s126 = ssub.s32 5120, 5120
          %127 = vsyncadd [#allocation6], %s126
          %s128 = sshll.u32 [#allocation5], 4
          %s129 = int_to_ptr.vmem [resolvable:$true] %s128
          %134 = dma.hbm_to_vmem [thread:$0]  %s1, 5120, %s129, [#allocation6], 128, 128, 8
        $region16: #{master_pallas.1} parent=11 // pred_fallthru
          _
        // Predicated region
        $region17: #{master_pallas.1} parent=11 // pred_check
          %p135 = pneg %p81
        $region18: #{master_pallas.1} parent=11 // pred_check_branch
          %137 = sbr.rel (%p135) target = $region20
        $region19: #{master_pallas.1} parent=11 // pred_region
          %s139 = ssub.s32 6144, 6144
          %140 = vsyncadd [#allocation6], %s139
          %s141 = sshll.u32 [#allocation7], 4
          %s142 = int_to_ptr.vmem [resolvable:$true] %s141
          %147 = dma.hbm_to_vmem [thread:$0]  %s2, 6144, %s142, [#allocation6], 128, 128, 8
        $region20: #{master_pallas.1} parent=11 // pred_fallthru
          _
      $region12: #{master_pallas.1} parent=5 // pred_fallthru
        _
      %p148 = scmp.lt.s32.totalorder %s13, 2
      // Predicated region
      $region21: #{master_pallas.1} parent=5 // pred_check
        %p149 = pneg %p148
      $region22: #{master_pallas.1} parent=5 // pred_check_branch
        %151 = sbr.rel (%p149) target = $region24
      $region23: #{master_pallas.1} parent=5 // pred_region
        // Predicated region
        $region25: #{master_pallas.1} parent=23 // pred_check
          %p152 = pneg %p33
        $region26: #{master_pallas.1} parent=23 // pred_check_branch
          %154 = sbr.rel (%p152) target = $region28
        $region27: #{master_pallas.1} parent=23 // pred_region
          %s155 = sand.u32 %s23, 1
          %s156 = scalar_lea.sflag [#allocation4], %s155
          %s157 = sand.u32 %s23, 1
          %s158 = smul.addr %s157, 128
          %s159 = scalar_lea.vmem [#allocation3], %s158
          %s160 = smul.u32 4, %s13
          %s162 = ssub.s32 2048, 2048
          %163 = vsyncadd %s156, %s162
          %s164 = smul.addr %s160, 4
          %s165 = smul.addr %s164, 128
          %s166 = scalar_lea.hbm %s0, %s165
          %s167 = sshll.u32 %s159, 4
          %s168 = int_to_ptr.vmem [resolvable:$true] %s167
          %173 = dma.hbm_to_vmem [thread:$0]  %s166, 2048, %s168, %s156, 128, 128, 8
        $region28: #{master_pallas.1} parent=23 // pred_fallthru
          _
      $region24: #{master_pallas.1} parent=5 // pred_fallthru
        _
      %p174 = scmp.le.s32.totalorder 1, %s13
      %p175 = scmp.lt.s32.totalorder %s13, 3
      %p176 = pnand %p174, %p175
      %p177 = pneg %p176
      // Predicated region
      $region29: #{master_pallas.1} parent=5 // pred_check
        _
      $region30: #{master_pallas.1} parent=5 // pred_check_branch
        %179 = sbr.rel (%p176) target = $region32
      $region31: #{master_pallas.1} parent=5 // pred_region
        %s180 = ssub.s32 %s13, 1
        %s181 = sand.u32 %s26, 1
        %s182 = scalar_lea.sflag [#allocation4], %s181
        %s183 = sand.u32 %s26, 1
        %s184 = smul.addr %s183, 128
        %s185 = scalar_lea.vmem [#allocation3], %s184
        // Predicated region
        $region33: #{master_pallas.1} parent=31 // pred_check
          %p186 = pneg %p39
        $region34: #{master_pallas.1} parent=31 // pred_check_branch
          %188 = sbr.rel (%p186) target = $region36
        $region35: #{master_pallas.1} parent=31 // pred_region
          %189 = dma.done %s182, 2048
        $region36: #{master_pallas.1} parent=31 // pred_fallthru
          _
        // Predicated region
        $region37: #{master_pallas.1} parent=31 // pred_check
          %p190 = pneg %p60
        $region38: #{master_pallas.1} parent=31 // pred_check_branch
          %192 = sbr.rel (%p190) target = $region40
        $region39: #{master_pallas.1} parent=31 // pred_region
          %193 = dma.done [#allocation6], 5120
        $region40: #{master_pallas.1} parent=31 // pred_fallthru
          _
        // Predicated region
        $region41: #{master_pallas.1} parent=31 // pred_check
          %p194 = pneg %p81
        $region42: #{master_pallas.1} parent=31 // pred_check_branch
          %196 = sbr.rel (%p194) target = $region44
        $region43: #{master_pallas.1} parent=31 // pred_region
          %197 = dma.done [#allocation6], 6144
        $region44: #{master_pallas.1} parent=31 // pred_fallthru
          _
        %s198 = sand.u32 %s26, 1
        %s199 = scalar_lea.sflag [#allocation4], %s198
        %s200 = sand.u32 %s26, 1
        %s201 = smul.addr %s200, 128
        %s202 = scalar_lea.vmem [#allocation3], %s201
        %p203 = pneg %p39
        %p204 = pneg %p36
        %p205 = pneg %p60
        %p206 = pneg %p57
        %p207 = pneg %p81
        %p208 = pneg %p78
        %p209 = pneg %p107
        %p210 = pneg %p104
        %p211 = scmp.lt.s32.totalorder %s18, 1
        %s212 = scalar_select %p211, %s18, 1
        %s213 = scalar_lea.vmem %s3, %s212
        %s214 = smul.u32 4, %s18
        %p215 = scmp.lt.s32.totalorder %s18, 1
        %s216 = scalar_select %p215, %s18, 1
        %s217 = scalar_lea.vmem %s3, %s216
        %v218 = vld [vmem:[%s185] sm:$0xff]
        %v219 = vld [vmem:[%s185 + $0x8] sm:$0xff]
        %v220 = vld [vmem:[%s185 + $0x10] sm:$0xff]
        %v221 = vld [vmem:[%s185 + $0x18] sm:$0xff]
        %v222 = vld [vmem:[%s185 + $0x20] sm:$0xff]
        %v223 = vld [vmem:[%s185 + $0x28] sm:$0xff]
        %v224 = vld [vmem:[%s185 + $0x30] sm:$0xff]
        %v225 = vld [vmem:[%s185 + $0x38] sm:$0xff]
        %v226 = vld [vmem:[%s185 + $0x40] sm:$0xff]
        %v227 = vld [vmem:[%s185 + $0x48] sm:$0xff]
        %v228 = vld [vmem:[%s185 + $0x50] sm:$0xff]
        %v229 = vld [vmem:[%s185 + $0x58] sm:$0xff]
        %v230 = vld [vmem:[%s185 + $0x60] sm:$0xff]
        %v231 = vld [vmem:[%s185 + $0x68] sm:$0xff]
        %v232 = vld [vmem:[%s185 + $0x70] sm:$0xff]
        %v233 = vld [vmem:[%s185 + $0x78] sm:$0xff]
        %s234 = scalar_lea.vmem [#allocation5], 288
        %v235 = vld [vmem:[%s234] sm:$0xff]
        %v236 = vld [vmem:[%s234 + $0x8] sm:$0xff]
        %v237 = vld [vmem:[#allocation7] sm:$0xff]
        %v238 = vld [vmem:[#allocation7 + $0x8] sm:$0xff]
        %v239 = vld [vmem:[#allocation7 + $0x10] sm:$0xff]
        %v240 = vld [vmem:[#allocation7 + $0x18] sm:$0xff]
        %v241 = vld [vmem:[#allocation7 + $0x20] sm:$0xff]
        %v242 = vld [vmem:[#allocation7 + $0x28] sm:$0xff]
        %v243 = vld [vmem:[#allocation7 + $0x30] sm:$0xff]
        %v244 = vld [vmem:[#allocation7 + $0x38] sm:$0xff]
        %v245 = vld [vmem:[#allocation7 + $0x40] sm:$0xff]
        %v246 = vld [vmem:[#allocation7 + $0x48] sm:$0xff]
        %v247 = vld [vmem:[#allocation7 + $0x50] sm:$0xff]
        %v248 = vld [vmem:[#allocation7 + $0x58] sm:$0xff]
        %v249 = vld [vmem:[#allocation7 + $0x60] sm:$0xff]
        %v250 = vld [vmem:[#allocation7 + $0x68] sm:$0xff]
        %v251 = vld [vmem:[#allocation7 + $0x70] sm:$0xff]
        %v252 = vld [vmem:[#allocation7 + $0x78] sm:$0xff]
        %s253 = scalar_lea.vmem [#allocation7], 128
        %v254 = vld [vmem:[%s253] sm:$0xff]
        %v255 = vld [vmem:[%s253 + $0x8] sm:$0xff]
        %v256 = vld [vmem:[%s253 + $0x10] sm:$0xff]
        %v257 = vld [vmem:[%s253 + $0x18] sm:$0xff]
        %v258 = vld [vmem:[%s253 + $0x20] sm:$0xff]
        %v259 = vld [vmem:[%s253 + $0x28] sm:$0xff]
        %v260 = vld [vmem:[%s253 + $0x30] sm:$0xff]
        %v261 = vld [vmem:[%s253 + $0x38] sm:$0xff]
        %v262 = vld [vmem:[%s253 + $0x40] sm:$0xff]
        %v263 = vld [vmem:[%s253 + $0x48] sm:$0xff]
        %v264 = vld [vmem:[%s253 + $0x50] sm:$0xff]
        %v265 = vld [vmem:[%s253 + $0x58] sm:$0xff]
        %v266 = vld [vmem:[%s253 + $0x60] sm:$0xff]
        %v267 = vld [vmem:[%s253 + $0x68] sm:$0xff]
        %v268 = vld [vmem:[%s253 + $0x70] sm:$0xff]
        %v269 = vld [vmem:[%s253 + $0x78] sm:$0xff]
        %s270 = scalar_lea.vmem [#allocation7], 256
        %v271 = vld [vmem:[%s270] sm:$0xff]
        %v272 = vld [vmem:[%s270 + $0x8] sm:$0xff]
        %v273 = vld [vmem:[%s270 + $0x10] sm:$0xff]
        %v274 = vld [vmem:[%s270 + $0x18] sm:$0xff]
        %v275 = vld [vmem:[%s270 + $0x20] sm:$0xff]
        %v276 = vld [vmem:[%s270 + $0x28] sm:$0xff]
        %v277 = vld [vmem:[%s270 + $0x30] sm:$0xff]
        %v278 = vld [vmem:[%s270 + $0x38] sm:$0xff]
        %v279 = vld [vmem:[%s270 + $0x40] sm:$0xff]
        %v280 = vld [vmem:[%s270 + $0x48] sm:$0xff]
        %v281 = vld [vmem:[%s270 + $0x50] sm:$0xff]
        %v282 = vld [vmem:[%s270 + $0x58] sm:$0xff]
        %v283 = vld [vmem:[%s270 + $0x60] sm:$0xff]
        %v284 = vld [vmem:[%s270 + $0x68] sm:$0xff]
        %v285 = vld [vmem:[%s270 + $0x70] sm:$0xff]
        %v286 = vld [vmem:[%s270 + $0x78] sm:$0xff]
        %v287 = vld [vmem:[#allocation5] sm:$0xff]
        %v288 = vlaneseq
        %v289 = vshrl.u32 %v288, 7
        %v290 = vsub.s32 0, %v289
        %v291 = vrot.slane %v235, %v290
        %v308 = vrot.slane %v218, 7
        %v309 = vrot.slane %v219, 6
        %vm310 = vcmask 1041409
        %v311 = vsel %vm310, %v309, %v308
        %v312 = vrot.slane %v220, 5
        %vm313 = vcmask 1042434
        %v314 = vsel %vm313, %v312, %v311
        %v315 = vrot.slane %v221, 4
        %vm316 = vcmask 1043459
        %v317 = vsel %vm316, %v315, %v314
        %v318 = vrot.slane %v222, 3
        %vm319 = vcmask 1044484
        %v320 = vsel %vm319, %v318, %v317
        %v321 = vrot.slane %v223, 2
        %vm322 = vcmask 1045509
        %v323 = vsel %vm322, %v321, %v320
        %v324 = vrot.slane %v224, 1
        %vm325 = vcmask 1046534
        %v326 = vsel %vm325, %v324, %v323
        %vm327 = vcmask 1047559
        %v328 = vsel %vm327, %v225, %v326
        %v329 = vrot.slane %v226, 7
        %v330 = vrot.slane %v227, 6
        %v331 = vsel %vm310, %v330, %v329
        %v332 = vrot.slane %v228, 5
        %v333 = vsel %vm313, %v332, %v331
        %v334 = vrot.slane %v229, 4
        %v335 = vsel %vm316, %v334, %v333
        %v336 = vrot.slane %v230, 3
        %v337 = vsel %vm319, %v336, %v335
        %v338 = vrot.slane %v231, 2
        %v339 = vsel %vm322, %v338, %v337
        %v340 = vrot.slane %v232, 1
        %v341 = vsel %vm325, %v340, %v339
        %v342 = vsel %vm327, %v233, %v341
        %343 = vrot.lane.b32.xlu0 %v328, 112
        %v344 = vpop.permute.xlu0 %343
        %345 = vrot.lane.b32.xlu0 %v342, 112
        %v346 = vpop.permute.xlu0 %345
        %vm347 = vcmask 64512
        %v348 = vsel %vm347, %v344, 0
        %v350 = vsel %vm347, %v346, 0
        %352 = vmatprep.subr.mxu0 0.0
        %353 = vmatpush1.msra.mxu0 %v287
        %354 = vmatprep.subr.mxu0 0.0
        %355 = vmatpush1.msra.mxu0 0.0
        %356 = vmatprep.subr.mxu0 0.0
        %357 = vmatpush1.msra.mxu0 0.0
        %358 = vmatprep.subr.mxu0 0.0
        %359 = vmatpush1.msra.mxu0 0.0
        %360 = vmatprep.subr.mxu0 0.0
        %361 = vmatpush1.msra.mxu0 0.0
        %362 = vmatprep.subr.mxu0 0.0
        %363 = vmatpush1.msra.mxu0 0.0
        %364 = vmatprep.subr.mxu0 0.0
        %365 = vmatpush1.msra.mxu0 0.0
        %366 = vmatprep.subr.mxu0 0.0
        %367 = vmatpush1.msra.mxu0 0.0
        %368 = vmatprep.subr.mxu0 0.0
        %369 = vmatpush1.msra.mxu0 0.0
        %370 = vmatprep.subr.mxu0 0.0
        %371 = vmatpush1.msra.mxu0 0.0
        %372 = vmatprep.subr.mxu0 0.0
        %373 = vmatpush1.msra.mxu0 0.0
        %374 = vmatprep.subr.mxu0 0.0
        %375 = vmatpush1.msra.mxu0 0.0
        %376 = vmatprep.subr.mxu0 0.0
        %377 = vmatpush1.msra.mxu0 0.0
        %378 = vmatprep.subr.mxu0 0.0
        %379 = vmatpush1.msra.mxu0 0.0
        %380 = vmatprep.subr.mxu0 0.0
        %381 = vmatpush1.msra.mxu0 0.0
        %382 = vmatprep.subr.mxu0 0.0
        %383 = vmatpush1.msra.mxu0 0.0
        %384 = vmatprep.subr.mxu0 0.0
        %385 = vmatpush1.msra.mxu0 0.0
        %386 = vmatprep.subr.mxu0 0.0
        %387 = vmatpush1.msra.mxu0 0.0
        %388 = vmatprep.subr.mxu0 0.0
        %389 = vmatpush1.msra.mxu0 0.0
        %390 = vmatprep.subr.mxu0 0.0
        %391 = vmatpush1.msra.mxu0 0.0
        %392 = vmatprep.subr.mxu0 0.0
        %393 = vmatpush1.msra.mxu0 0.0
        %394 = vmatprep.subr.mxu0 0.0
        %395 = vmatpush1.msra.mxu0 0.0
        %396 = vmatprep.subr.mxu0 0.0
        %397 = vmatpush1.msra.mxu0 0.0
        %398 = vmatprep.subr.mxu0 0.0
        %399 = vmatpush1.msra.mxu0 0.0
        %400 = vmatprep.subr.mxu0 0.0
        %401 = vmatpush1.msra.mxu0 0.0
        %402 = vmatprep.subr.mxu0 0.0
        %403 = vmatpush1.msra.mxu0 0.0
        %404 = vmatprep.subr.mxu0 0.0
        %405 = vmatpush1.msra.mxu0 0.0
        %406 = vmatprep.subr.mxu0 0.0
        %407 = vmatpush1.msra.mxu0 0.0
        %408 = vmatprep.subr.mxu0 0.0
        %409 = vmatpush1.msra.mxu0 0.0
        %410 = vmatprep.subr.mxu0 0.0
        %411 = vmatpush1.msra.mxu0 0.0
        %412 = vmatprep.subr.mxu0 0.0
        %413 = vmatpush1.msra.mxu0 0.0
        %414 = vmatprep.subr.mxu0 0.0
        %415 = vmatpush1.msra.mxu0 0.0
        %416 = vmatprep.mubr.f32.mxu0 0.0
        %417 = vmatmul.mubr.f32.gmra.mrb[0].mxu0 %v348
        %v418 = vpop.f32.mrb[0].mxu0
        %v419 = vadd.f32 %v291, %v418
        %v420 = vpop.f32.mrb[0].mxu0
        %421 = vmatprep.mubr.f32.mxu0 0.0
        %422 = vmatmul.mubr.f32.gmra.mrb[0].mxu0 %v350
        %v423 = vpop.f32.mrb[0].mxu0
        %v424 = vadd.f32 %v291, %v423
        %v425 = vpop.f32.mrb[0].mxu0
        %426 = vdwg.mxu0
        %vm427 = vcmask 130048
        %v428 = vsel %vm427, %v419, -inf
        %429 = vmax.xlane.f32.xlu0 %v428
        %v430 = vpop.xlane.xlu0 %429
        %v431 = vsel %vm427, %v424, -inf
        %432 = vmax.xlane.f32.xlu0 %v431
        %v433 = vpop.xlane.xlu0 %432
        %v434 = vsub.f32 %v419, %v430
        %v435 = vsub.f32 %v424, %v433
        %v436 = vmul.f32 %v434, 1.442695
        %v437 = vpow.pop %v436
        %v438 = vmul.f32 %v435, 1.442695
        %v439 = vpow.pop %v438
        %v440 = vsel %vm427, %v437, 0.0
        %441 = vadd.xlane.f32.xlu0 %v440
        %v442 = vpop.xlane.xlu0 %441
        %v443 = vsel %vm427, %v439, 0.0
        %444 = vadd.xlane.f32.xlu0 %v443
        %v445 = vpop.xlane.xlu0 %444
        %v446 = vrcp.pop %v442
        %v447 = vmul.f32 %v437, %v446
        %v448 = vrcp.pop %v445
        %v449 = vmul.f32 %v439, %v448
        %v450 = vmul.f32 %v447, 16.0
        %v451 = vmul.f32 %v449, 16.0
        %v454 = vcombine.high %v450, %v450
        %v456 = vunpack.c.l.s4 1966171168
        %v457 = vunpack.c.0.s8 %v456
        %v458 = vlaneseq
        %v459 = vshrl.u32 %v458, 7
        %v460 = vsub.s32 %v457, %v459
        %v461 = vrot.slane %v450, %v460
        %v463 = vunpack.c.l.s4 1966171168
        %v464 = vunpack.c.0.s8 %v463
        %v465 = vlaneseq
        %v466 = vshrl.u32 %v465, 7
        %v467 = vsub.s32 %v464, %v466
        %v468 = vrot.slane %v454, %v467
        %v469 = vcombine.high %v461, %v461
        %v470 = vcombine.high %v468, %v468
        %v472 = vunpack.c.l.s4 1966171168
        %v473 = vunpack.c.0.s8 %v472
        %v474 = vlaneseq
        %v475 = vshrl.u32 %v474, 7
        %v476 = vsub.s32 %v473, %v475
        %v477 = vrot.slane %v461, %v476
        %v479 = vunpack.c.l.s4 1966171168
        %v480 = vunpack.c.0.s8 %v479
        %v481 = vlaneseq
        %v482 = vshrl.u32 %v481, 7
        %v483 = vsub.s32 %v480, %v482
        %v484 = vrot.slane %v468, %v483
        %v486 = vunpack.c.l.s4 1966171168
        %v487 = vunpack.c.0.s8 %v486
        %v488 = vlaneseq
        %v489 = vshrl.u32 %v488, 7
        %v490 = vsub.s32 %v487, %v489
        %v491 = vrot.slane %v469, %v490
        %v493 = vunpack.c.l.s4 1966171168
        %v494 = vunpack.c.0.s8 %v493
        %v495 = vlaneseq
        %v496 = vshrl.u32 %v495, 7
        %v497 = vsub.s32 %v494, %v496
        %v498 = vrot.slane %v470, %v497
        %v499 = vcombine.high %v477, %v477
        %v500 = vcombine.high %v484, %v484
        %v501 = vcombine.high %v491, %v491
        %v502 = vcombine.high %v498, %v498
        %v503 = vcombine.high %v451, %v451
        %v505 = vunpack.c.l.s4 1966171168
        %v506 = vunpack.c.0.s8 %v505
        %v507 = vlaneseq
        %v508 = vshrl.u32 %v507, 7
        %v509 = vsub.s32 %v506, %v508
        %v510 = vrot.slane %v451, %v509
        %v512 = vunpack.c.l.s4 1966171168
        %v513 = vunpack.c.0.s8 %v512
        %v514 = vlaneseq
        %v515 = vshrl.u32 %v514, 7
        %v516 = vsub.s32 %v513, %v515
        %v517 = vrot.slane %v503, %v516
        %v518 = vcombine.high %v510, %v510
        %v519 = vcombine.high %v517, %v517
        %v521 = vunpack.c.l.s4 1966171168
        %v522 = vunpack.c.0.s8 %v521
        %v523 = vlaneseq
        %v524 = vshrl.u32 %v523, 7
        %v525 = vsub.s32 %v522, %v524
        %v526 = vrot.slane %v510, %v525
        %v528 = vunpack.c.l.s4 1966171168
        %v529 = vunpack.c.0.s8 %v528
        %v530 = vlaneseq
        %v531 = vshrl.u32 %v530, 7
        %v532 = vsub.s32 %v529, %v531
        %v533 = vrot.slane %v517, %v532
        %v535 = vunpack.c.l.s4 1966171168
        %v536 = vunpack.c.0.s8 %v535
        %v537 = vlaneseq
        %v538 = vshrl.u32 %v537, 7
        %v539 = vsub.s32 %v536, %v538
        %v540 = vrot.slane %v518, %v539
        %v542 = vunpack.c.l.s4 1966171168
        %v543 = vunpack.c.0.s8 %v542
        %v544 = vlaneseq
        %v545 = vshrl.u32 %v544, 7
        %v546 = vsub.s32 %v543, %v545
        %v547 = vrot.slane %v519, %v546
        %v548 = vcombine.high %v526, %v526
        %v549 = vcombine.high %v533, %v533
        %v550 = vcombine.high %v540, %v540
        %v551 = vcombine.high %v547, %v547
        %v552 = vlaneseq
        %v553 = vshrl.u32 %v552, 7
        %v554 = vsub.s32 0, %v553
        %v555 = vrot.slane %v477, %v554
        %v556 = vlaneseq
        %v557 = vshrl.u32 %v556, 7
        %v558 = vsub.s32 0, %v557
        %v559 = vrot.slane %v491, %v558
        %v560 = vlaneseq
        %v561 = vshrl.u32 %v560, 7
        %v562 = vsub.s32 0, %v561
        %v563 = vrot.slane %v499, %v562
        %v564 = vlaneseq
        %v565 = vshrl.u32 %v564, 7
        %v566 = vsub.s32 0, %v565
        %v567 = vrot.slane %v501, %v566
        %v568 = vlaneseq
        %v569 = vshrl.u32 %v568, 7
        %v570 = vsub.s32 0, %v569
        %v571 = vrot.slane %v484, %v570
        %v572 = vlaneseq
        %v573 = vshrl.u32 %v572, 7
        %v574 = vsub.s32 0, %v573
        %v575 = vrot.slane %v498, %v574
        %v576 = vlaneseq
        %v577 = vshrl.u32 %v576, 7
        %v578 = vsub.s32 0, %v577
        %v579 = vrot.slane %v500, %v578
        %v580 = vlaneseq
        %v581 = vshrl.u32 %v580, 7
        %v582 = vsub.s32 0, %v581
        %v583 = vrot.slane %v502, %v582
        %v584 = vlaneseq
        %v585 = vshrl.u32 %v584, 7
        %v586 = vsub.s32 0, %v585
        %v587 = vrot.slane %v526, %v586
        %v588 = vlaneseq
        %v589 = vshrl.u32 %v588, 7
        %v590 = vsub.s32 0, %v589
        %v591 = vrot.slane %v540, %v590
        %v592 = vlaneseq
        %v593 = vshrl.u32 %v592, 7
        %v594 = vsub.s32 0, %v593
        %v595 = vrot.slane %v548, %v594
        %v596 = vlaneseq
        %v597 = vshrl.u32 %v596, 7
        %v598 = vsub.s32 0, %v597
        %v599 = vrot.slane %v550, %v598
        %v600 = vlaneseq
        %v601 = vshrl.u32 %v600, 7
        %v602 = vsub.s32 0, %v601
        %v603 = vrot.slane %v533, %v602
        %v604 = vlaneseq
        %v605 = vshrl.u32 %v604, 7
        %v606 = vsub.s32 0, %v605
        %v607 = vrot.slane %v547, %v606
        %v608 = vlaneseq
        %v609 = vshrl.u32 %v608, 7
        %v610 = vsub.s32 0, %v609
        %v611 = vrot.slane %v549, %v610
        %v612 = vlaneseq
        %v613 = vshrl.u32 %v612, 7
        %v614 = vsub.s32 0, %v613
        %v615 = vrot.slane %v551, %v614
        %v632 = vmul.f32 %v218, %v555
        %v633 = vmul.f32 %v219, %v559
        %v634 = vmul.f32 %v220, %v563
        %v635 = vmul.f32 %v221, %v567
        %v636 = vmul.f32 %v222, %v571
        %v637 = vmul.f32 %v223, %v575
        %v638 = vmul.f32 %v224, %v579
        %v639 = vmul.f32 %v225, %v583
        %v640 = vmul.f32 %v226, %v587
        %v641 = vmul.f32 %v227, %v591
        %v642 = vmul.f32 %v228, %v595
        %v643 = vmul.f32 %v229, %v599
        %v644 = vmul.f32 %v230, %v603
        %v645 = vmul.f32 %v231, %v607
        %v646 = vmul.f32 %v232, %v611
        %v647 = vmul.f32 %v233, %v615
        %s648 = scalar_lea.vmem [#allocation5], 32
        %v649 = vld [vmem:[%s648] sm:$0xff]
        %v650 = vld [vmem:[%s648 + $0x8] sm:$0xff]
        %v651 = vlaneseq
        %v652 = vshrl.u32 %v651, 7
        %v653 = vsub.s32 1, %v652
        %v654 = vrot.slane %v235, %v653
        %v656 = vsel %vm427, %v632, 0
        %v659 = vsel %vm427, %v633, 0
        %v662 = vsel %vm427, %v634, 0
        %v665 = vsel %vm427, %v635, 0
        %v668 = vsel %vm427, %v636, 0
        %v671 = vsel %vm427, %v637, 0
        %v674 = vsel %vm427, %v638, 0
        %v677 = vsel %vm427, %v639, 0
        %v680 = vsel %vm427, %v640, 0
        %v683 = vsel %vm427, %v641, 0
        %v686 = vsel %vm427, %v642, 0
        %v689 = vsel %vm427, %v643, 0
        %v692 = vsel %vm427, %v644, 0
        %v695 = vsel %vm427, %v645, 0
        %v698 = vsel %vm427, %v646, 0
        %v701 = vsel %vm427, %v647, 0
        %703 = vmatprep.subr.mxu0 0.0
        %704 = vmatpush1.msra.mxu0 %v649
        %705 = vmatprep.subr.mxu0 0.0
        %706 = vmatpush1.msra.mxu0 %v650
        %707 = vmatprep.subr.mxu0 0.0
        %708 = vmatpush1.msra.mxu0 0.0
        %709 = vmatprep.subr.mxu0 0.0
        %710 = vmatpush1.msra.mxu0 0.0
        %711 = vmatprep.subr.mxu0 0.0
        %712 = vmatpush1.msra.mxu0 0.0
        %713 = vmatprep.subr.mxu0 0.0
        %714 = vmatpush1.msra.mxu0 0.0
        %715 = vmatprep.subr.mxu0 0.0
        %716 = vmatpush1.msra.mxu0 0.0
        %717 = vmatprep.subr.mxu0 0.0
        %718 = vmatpush1.msra.mxu0 0.0
        %719 = vmatprep.subr.mxu0 0.0
        %720 = vmatpush1.msra.mxu0 0.0
        %721 = vmatprep.subr.mxu0 0.0
        %722 = vmatpush1.msra.mxu0 0.0
        %723 = vmatprep.subr.mxu0 0.0
        %724 = vmatpush1.msra.mxu0 0.0
        %725 = vmatprep.subr.mxu0 0.0
        %726 = vmatpush1.msra.mxu0 0.0
        %727 = vmatprep.subr.mxu0 0.0
        %728 = vmatpush1.msra.mxu0 0.0
        %729 = vmatprep.subr.mxu0 0.0
        %730 = vmatpush1.msra.mxu0 0.0
        %731 = vmatprep.subr.mxu0 0.0
        %732 = vmatpush1.msra.mxu0 0.0
        %733 = vmatprep.subr.mxu0 0.0
        %734 = vmatpush1.msra.mxu0 0.0
        %735 = vmatprep.subr.mxu0 0.0
        %736 = vmatpush1.msra.mxu0 0.0
        %737 = vmatprep.subr.mxu0 0.0
        %738 = vmatpush1.msra.mxu0 0.0
        %739 = vmatprep.subr.mxu0 0.0
        %740 = vmatpush1.msra.mxu0 0.0
        %741 = vmatprep.subr.mxu0 0.0
        %742 = vmatpush1.msra.mxu0 0.0
        %743 = vmatprep.subr.mxu0 0.0
        %744 = vmatpush1.msra.mxu0 0.0
        %745 = vmatprep.subr.mxu0 0.0
        %746 = vmatpush1.msra.mxu0 0.0
        %747 = vmatprep.subr.mxu0 0.0
        %748 = vmatpush1.msra.mxu0 0.0
        %749 = vmatprep.subr.mxu0 0.0
        %750 = vmatpush1.msra.mxu0 0.0
        %751 = vmatprep.subr.mxu0 0.0
        %752 = vmatpush1.msra.mxu0 0.0
        %753 = vmatprep.subr.mxu0 0.0
        %754 = vmatpush1.msra.mxu0 0.0
        %755 = vmatprep.subr.mxu0 0.0
        %756 = vmatpush1.msra.mxu0 0.0
        %757 = vmatprep.subr.mxu0 0.0
        %758 = vmatpush1.msra.mxu0 0.0
        %759 = vmatprep.subr.mxu0 0.0
        %760 = vmatpush1.msra.mxu0 0.0
        %761 = vmatprep.subr.mxu0 0.0
        %762 = vmatpush1.msra.mxu0 0.0
        %763 = vmatprep.subr.mxu0 0.0
        %764 = vmatpush1.msra.mxu0 0.0
        %765 = vmatprep.subr.mxu0 0.0
        %766 = vmatpush1.msra.mxu0 0.0
        %767 = vmatprep.mubr.f32.mxu0 0.0
        %768 = vmatmul.mubr.f32.gmra.mrb[0].mxu0 %v656
        %v769 = vpop.f32.mrb[0].mxu0
        %v770 = vadd.f32 %v654, %v769
        %v771 = vpop.f32.mrb[0].mxu0
        %772 = vmatprep.mubr.f32.mxu0 0.0
        %773 = vmatmul.mubr.f32.gmra.mrb[0].mxu0 %v659
        %v774 = vpop.f32.mrb[0].mxu0
        %v775 = vadd.f32 %v654, %v774
        %v776 = vpop.f32.mrb[0].mxu0
        %777 = vmatprep.mubr.f32.mxu0 0.0
        %778 = vmatmul.mubr.f32.gmra.mrb[0].mxu0 %v662
        %v779 = vpop.f32.mrb[0].mxu0
        %v780 = vadd.f32 %v654, %v779
        %v781 = vpop.f32.mrb[0].mxu0
        %782 = vmatprep.mubr.f32.mxu0 0.0
        %783 = vmatmul.mubr.f32.gmra.mrb[0].mxu0 %v665
        %v784 = vpop.f32.mrb[0].mxu0
        %v785 = vadd.f32 %v654, %v784
        %v786 = vpop.f32.mrb[0].mxu0
        %787 = vmatprep.mubr.f32.mxu0 0.0
        %788 = vmatmul.mubr.f32.gmra.mrb[0].mxu0 %v668
        %v789 = vpop.f32.mrb[0].mxu0
        %v790 = vadd.f32 %v654, %v789
        %v791 = vpop.f32.mrb[0].mxu0
        %792 = vmatprep.mubr.f32.mxu0 0.0
        %793 = vmatmul.mubr.f32.gmra.mrb[0].mxu0 %v671
        %v794 = vpop.f32.mrb[0].mxu0
        %v795 = vadd.f32 %v654, %v794
        %v796 = vpop.f32.mrb[0].mxu0
        %797 = vmatprep.mubr.f32.mxu0 0.0
        %798 = vmatmul.mubr.f32.gmra.mrb[0].mxu0 %v674
        %v799 = vpop.f32.mrb[0].mxu0
        %v800 = vadd.f32 %v654, %v799
        %v801 = vpop.f32.mrb[0].mxu0
        %802 = vmatprep.mubr.f32.mxu0 0.0
        %803 = vmatmul.mubr.f32.gmra.mrb[0].mxu0 %v677
        %v804 = vpop.f32.mrb[0].mxu0
        %v805 = vadd.f32 %v654, %v804
        %v806 = vpop.f32.mrb[0].mxu0
        %807 = vmatprep.mubr.f32.mxu0 0.0
        %808 = vmatmul.mubr.f32.gmra.mrb[0].mxu0 %v680
        %v809 = vpop.f32.mrb[0].mxu0
        %v810 = vadd.f32 %v654, %v809
        %v811 = vpop.f32.mrb[0].mxu0
        %812 = vmatprep.mubr.f32.mxu0 0.0
        %813 = vmatmul.mubr.f32.gmra.mrb[0].mxu0 %v683
        %v814 = vpop.f32.mrb[0].mxu0
        %v815 = vadd.f32 %v654, %v814
        %v816 = vpop.f32.mrb[0].mxu0
        %817 = vmatprep.mubr.f32.mxu0 0.0
        %818 = vmatmul.mubr.f32.gmra.mrb[0].mxu0 %v686
        %v819 = vpop.f32.mrb[0].mxu0
        %v820 = vadd.f32 %v654, %v819
        %v821 = vpop.f32.mrb[0].mxu0
        %822 = vmatprep.mubr.f32.mxu0 0.0
        %823 = vmatmul.mubr.f32.gmra.mrb[0].mxu0 %v689
        %v824 = vpop.f32.mrb[0].mxu0
        %v825 = vadd.f32 %v654, %v824
        %v826 = vpop.f32.mrb[0].mxu0
        %827 = vmatprep.mubr.f32.mxu0 0.0
        %828 = vmatmul.mubr.f32.gmra.mrb[0].mxu0 %v692
        %v829 = vpop.f32.mrb[0].mxu0
        %v830 = vadd.f32 %v654, %v829
        %v831 = vpop.f32.mrb[0].mxu0
        %832 = vmatprep.mubr.f32.mxu0 0.0
        %833 = vmatmul.mubr.f32.gmra.mrb[0].mxu0 %v695
        %v834 = vpop.f32.mrb[0].mxu0
        %v835 = vadd.f32 %v654, %v834
        %v836 = vpop.f32.mrb[0].mxu0
        %837 = vmatprep.mubr.f32.mxu0 0.0
        %838 = vmatmul.mubr.f32.gmra.mrb[0].mxu0 %v698
        %v839 = vpop.f32.mrb[0].mxu0
        %v840 = vadd.f32 %v654, %v839
        %v841 = vpop.f32.mrb[0].mxu0
        %842 = vmatprep.mubr.f32.mxu0 0.0
        %843 = vmatmul.mubr.f32.gmra.mrb[0].mxu0 %v701
        %v844 = vpop.f32.mrb[0].mxu0
        %v845 = vadd.f32 %v654, %v844
        %v846 = vpop.f32.mrb[0].mxu0
        %847 = vdwg.mxu0
        %v848 = vadd.f32 %v770, %v271
        %v849 = vadd.f32 %v775, %v272
        %v850 = vadd.f32 %v780, %v273
        %v851 = vadd.f32 %v785, %v274
        %v852 = vadd.f32 %v790, %v275
        %v853 = vadd.f32 %v795, %v276
        %v854 = vadd.f32 %v800, %v277
        %v855 = vadd.f32 %v805, %v278
        %v856 = vadd.f32 %v810, %v279
        %v857 = vadd.f32 %v815, %v280
        %v858 = vadd.f32 %v820, %v281
        %v859 = vadd.f32 %v825, %v282
        %v860 = vadd.f32 %v830, %v283
        %v861 = vadd.f32 %v835, %v284
        %v862 = vadd.f32 %v840, %v285
        %v863 = vadd.f32 %v845, %v286
        %s864 = scalar_lea.vmem [#allocation5], 64
        %v865 = vld [vmem:[%s864] sm:$0xff]
        %v866 = vld [vmem:[%s864 + $0x8] sm:$0xff]
        %v867 = vld [vmem:[%s864 + $0x10] sm:$0xff]
        %v868 = vld [vmem:[%s864 + $0x18] sm:$0xff]
        %s869 = scalar_lea.vmem [#allocation5], 96
        %v870 = vld [vmem:[%s869] sm:$0xff]
        %v871 = vld [vmem:[%s869 + $0x8] sm:$0xff]
        %v872 = vld [vmem:[%s869 + $0x10] sm:$0xff]
        %v873 = vld [vmem:[%s869 + $0x18] sm:$0xff]
        %s874 = scalar_lea.vmem [#allocation5], 128
        %v875 = vld [vmem:[%s874] sm:$0xff]
        %v876 = vld [vmem:[%s874 + $0x8] sm:$0xff]
        %v877 = vld [vmem:[%s874 + $0x10] sm:$0xff]
        %v878 = vld [vmem:[%s874 + $0x18] sm:$0xff]
        %vm879 = vcmask 261120
        %v880 = vsel %vm879, %v848, 0.0
        %881 = vadd.xlane.f32.xlu0 %v880
        %v882 = vpop.xlane.xlu0 %881
        %v883 = vsel %vm879, %v849, 0.0
        %884 = vadd.xlane.f32.xlu0 %v883
        %v885 = vpop.xlane.xlu0 %884
        %v886 = vsel %vm879, %v850, 0.0
        %887 = vadd.xlane.f32.xlu0 %v886
        %v888 = vpop.xlane.xlu0 %887
        %v889 = vsel %vm879, %v851, 0.0
        %890 = vadd.xlane.f32.xlu0 %v889
        %v891 = vpop.xlane.xlu0 %890
        %v892 = vsel %vm879, %v852, 0.0
        %893 = vadd.xlane.f32.xlu0 %v892
        %v894 = vpop.xlane.xlu0 %893
        %v895 = vsel %vm879, %v853, 0.0
        %896 = vadd.xlane.f32.xlu0 %v895
        %v897 = vpop.xlane.xlu0 %896
        %v898 = vsel %vm879, %v854, 0.0
        %899 = vadd.xlane.f32.xlu0 %v898
        %v900 = vpop.xlane.xlu0 %899
        %v901 = vsel %vm879, %v855, 0.0
        %902 = vadd.xlane.f32.xlu0 %v901
        %v903 = vpop.xlane.xlu0 %902
        %v904 = vsel %vm879, %v856, 0.0
        %905 = vadd.xlane.f32.xlu0 %v904
        %v906 = vpop.xlane.xlu0 %905
        %v907 = vsel %vm879, %v857, 0.0
        %908 = vadd.xlane.f32.xlu0 %v907
        %v909 = vpop.xlane.xlu0 %908
        %v910 = vsel %vm879, %v858, 0.0
        %911 = vadd.xlane.f32.xlu0 %v910
        %v912 = vpop.xlane.xlu0 %911
        %v913 = vsel %vm879, %v859, 0.0
        %914 = vadd.xlane.f32.xlu0 %v913
        %v915 = vpop.xlane.xlu0 %914
        %v916 = vsel %vm879, %v860, 0.0
        %917 = vadd.xlane.f32.xlu0 %v916
        %v918 = vpop.xlane.xlu0 %917
        %v919 = vsel %vm879, %v861, 0.0
        %920 = vadd.xlane.f32.xlu0 %v919
        %v921 = vpop.xlane.xlu0 %920
        %v922 = vsel %vm879, %v862, 0.0
        %923 = vadd.xlane.f32.xlu0 %v922
        %v924 = vpop.xlane.xlu0 %923
        %v925 = vsel %vm879, %v863, 0.0
        %926 = vadd.xlane.f32.xlu0 %v925
        %v927 = vpop.xlane.xlu0 %926
        %v928 = vrcp.pop 32.0
        %v929 = vmul.f32 %v882, %v928
        %v930 = vmul.f32 %v885, %v928
        %v931 = vmul.f32 %v888, %v928
        %v932 = vmul.f32 %v891, %v928
        %v933 = vmul.f32 %v894, %v928
        %v934 = vmul.f32 %v897, %v928
        %v935 = vmul.f32 %v900, %v928
        %v936 = vmul.f32 %v903, %v928
        %v937 = vmul.f32 %v906, %v928
        %v938 = vmul.f32 %v909, %v928
        %v939 = vmul.f32 %v912, %v928
        %v940 = vmul.f32 %v915, %v928
        %v941 = vmul.f32 %v918, %v928
        %v942 = vmul.f32 %v921, %v928
        %v943 = vmul.f32 %v924, %v928
        %v944 = vmul.f32 %v927, %v928
        %v945 = vsub.f32 %v848, %v929
        %v946 = vsub.f32 %v849, %v930
        %v947 = vsub.f32 %v850, %v931
        %v948 = vsub.f32 %v851, %v932
        %v949 = vsub.f32 %v852, %v933
        %v950 = vsub.f32 %v853, %v934
        %v951 = vsub.f32 %v854, %v935
        %v952 = vsub.f32 %v855, %v936
        %v953 = vsub.f32 %v856, %v937
        %v954 = vsub.f32 %v857, %v938
        %v955 = vsub.f32 %v858, %v939
        %v956 = vsub.f32 %v859, %v940
        %v957 = vsub.f32 %v860, %v941
        %v958 = vsub.f32 %v861, %v942
        %v959 = vsub.f32 %v862, %v943
        %v960 = vsub.f32 %v863, %v944
        %v961 = vmul.f32 %v945, %v945
        %v962 = vmul.f32 %v946, %v946
        %v963 = vmul.f32 %v947, %v947
        %v964 = vmul.f32 %v948, %v948
        %v965 = vmul.f32 %v949, %v949
        %v966 = vmul.f32 %v950, %v950
        %v967 = vmul.f32 %v951, %v951
        %v968 = vmul.f32 %v952, %v952
        %v969 = vmul.f32 %v953, %v953
        %v970 = vmul.f32 %v954, %v954
        %v971 = vmul.f32 %v955, %v955
        %v972 = vmul.f32 %v956, %v956
        %v973 = vmul.f32 %v957, %v957
        %v974 = vmul.f32 %v958, %v958
        %v975 = vmul.f32 %v959, %v959
        %v976 = vmul.f32 %v960, %v960
        %v977 = vsel %vm879, %v961, 0.0
        %978 = vadd.xlane.f32.xlu0 %v977
        %v979 = vpop.xlane.xlu0 %978
        %v980 = vsel %vm879, %v962, 0.0
        %981 = vadd.xlane.f32.xlu0 %v980
        %v982 = vpop.xlane.xlu0 %981
        %v983 = vsel %vm879, %v963, 0.0
        %984 = vadd.xlane.f32.xlu0 %v983
        %v985 = vpop.xlane.xlu0 %984
        %v986 = vsel %vm879, %v964, 0.0
        %987 = vadd.xlane.f32.xlu0 %v986
        %v988 = vpop.xlane.xlu0 %987
        %v989 = vsel %vm879, %v965, 0.0
        %990 = vadd.xlane.f32.xlu0 %v989
        %v991 = vpop.xlane.xlu0 %990
        %v992 = vsel %vm879, %v966, 0.0
        %993 = vadd.xlane.f32.xlu0 %v992
        %v994 = vpop.xlane.xlu0 %993
        %v995 = vsel %vm879, %v967, 0.0
        %996 = vadd.xlane.f32.xlu0 %v995
        %v997 = vpop.xlane.xlu0 %996
        %v998 = vsel %vm879, %v968, 0.0
        %999 = vadd.xlane.f32.xlu0 %v998
        %v1000 = vpop.xlane.xlu0 %999
        %v1001 = vsel %vm879, %v969, 0.0
        %1002 = vadd.xlane.f32.xlu0 %v1001
        %v1003 = vpop.xlane.xlu0 %1002
        %v1004 = vsel %vm879, %v970, 0.0
        %1005 = vadd.xlane.f32.xlu0 %v1004
        %v1006 = vpop.xlane.xlu0 %1005
        %v1007 = vsel %vm879, %v971, 0.0
        %1008 = vadd.xlane.f32.xlu0 %v1007
        %v1009 = vpop.xlane.xlu0 %1008
        %v1010 = vsel %vm879, %v972, 0.0
        %1011 = vadd.xlane.f32.xlu0 %v1010
        %v1012 = vpop.xlane.xlu0 %1011
        %v1013 = vsel %vm879, %v973, 0.0
        %1014 = vadd.xlane.f32.xlu0 %v1013
        %v1015 = vpop.xlane.xlu0 %1014
        %v1016 = vsel %vm879, %v974, 0.0
        %1017 = vadd.xlane.f32.xlu0 %v1016
        %v1018 = vpop.xlane.xlu0 %1017
        %v1019 = vsel %vm879, %v975, 0.0
        %1020 = vadd.xlane.f32.xlu0 %v1019
        %v1021 = vpop.xlane.xlu0 %1020
        %v1022 = vsel %vm879, %v976, 0.0
        %1023 = vadd.xlane.f32.xlu0 %v1022
        %v1024 = vpop.xlane.xlu0 %1023
        %v1025 = vmul.f32 %v979, %v928
        %v1026 = vmul.f32 %v982, %v928
        %v1027 = vmul.f32 %v985, %v928
        %v1028 = vmul.f32 %v988, %v928
        %v1029 = vmul.f32 %v991, %v928
        %v1030 = vmul.f32 %v994, %v928
        %v1031 = vmul.f32 %v997, %v928
        %v1032 = vmul.f32 %v1000, %v928
        %v1033 = vmul.f32 %v1003, %v928
        %v1034 = vmul.f32 %v1006, %v928
        %v1035 = vmul.f32 %v1009, %v928
        %v1036 = vmul.f32 %v1012, %v928
        %v1037 = vmul.f32 %v1015, %v928
        %v1038 = vmul.f32 %v1018, %v928
        %v1039 = vmul.f32 %v1021, %v928
        %v1040 = vmul.f32 %v1024, %v928
        %v1041 = vadd.f32 %v1025, 1e-05
        %v1042 = vadd.f32 %v1026, 1e-05
        %v1043 = vadd.f32 %v1027, 1e-05
        %v1044 = vadd.f32 %v1028, 1e-05
        %v1045 = vadd.f32 %v1029, 1e-05
        %v1046 = vadd.f32 %v1030, 1e-05
        %v1047 = vadd.f32 %v1031, 1e-05
        %v1048 = vadd.f32 %v1032, 1e-05
        %v1049 = vadd.f32 %v1033, 1e-05
        %v1050 = vadd.f32 %v1034, 1e-05
        %v1051 = vadd.f32 %v1035, 1e-05
        %v1052 = vadd.f32 %v1036, 1e-05
        %v1053 = vadd.f32 %v1037, 1e-05
        %v1054 = vadd.f32 %v1038, 1e-05
        %v1055 = vadd.f32 %v1039, 1e-05
        %v1056 = vadd.f32 %v1040, 1e-05
        %v1057 = vrsqrt.pop %v1041
        %v1058 = vrsqrt.pop %v1042
        %v1059 = vrsqrt.pop %v1043
        %v1060 = vrsqrt.pop %v1044
        %v1061 = vrsqrt.pop %v1045
        %v1062 = vrsqrt.pop %v1046
        %v1063 = vrsqrt.pop %v1047
        %v1064 = vrsqrt.pop %v1048
        %v1065 = vrsqrt.pop %v1049
        %v1066 = vrsqrt.pop %v1050
        %v1067 = vrsqrt.pop %v1051
        %v1068 = vrsqrt.pop %v1052
        %v1069 = vrsqrt.pop %v1053
        %v1070 = vrsqrt.pop %v1054
        %v1071 = vrsqrt.pop %v1055
        %v1072 = vrsqrt.pop %v1056
        %v1073 = vmul.f32 %v945, %v1057
        %v1074 = vmul.f32 %v946, %v1058
        %v1075 = vmul.f32 %v947, %v1059
        %v1076 = vmul.f32 %v948, %v1060
        %v1077 = vmul.f32 %v949, %v1061
        %v1078 = vmul.f32 %v950, %v1062
        %v1079 = vmul.f32 %v951, %v1063
        %v1080 = vmul.f32 %v952, %v1064
        %v1081 = vmul.f32 %v953, %v1065
        %v1082 = vmul.f32 %v954, %v1066
        %v1083 = vmul.f32 %v955, %v1067
        %v1084 = vmul.f32 %v956, %v1068
        %v1085 = vmul.f32 %v957, %v1069
        %v1086 = vmul.f32 %v958, %v1070
        %v1087 = vmul.f32 %v959, %v1071
        %v1088 = vmul.f32 %v960, %v1072
        %v1089 = vlaneseq
        %v1090 = vshrl.u32 %v1089, 7
        %v1091 = vsub.s32 2, %v1090
        %v1092 = vrot.slane %v235, %v1091
        %v1093 = vmul.f32 %v1073, %v1092
        %v1094 = vmul.f32 %v1074, %v1092
        %v1095 = vmul.f32 %v1075, %v1092
        %v1096 = vmul.f32 %v1076, %v1092
        %v1097 = vmul.f32 %v1077, %v1092
        %v1098 = vmul.f32 %v1078, %v1092
        %v1099 = vmul.f32 %v1079, %v1092
        %v1100 = vmul.f32 %v1080, %v1092
        %v1101 = vmul.f32 %v1081, %v1092
        %v1102 = vmul.f32 %v1082, %v1092
        %v1103 = vmul.f32 %v1083, %v1092
        %v1104 = vmul.f32 %v1084, %v1092
        %v1105 = vmul.f32 %v1085, %v1092
        %v1106 = vmul.f32 %v1086, %v1092
        %v1107 = vmul.f32 %v1087, %v1092
        %v1108 = vmul.f32 %v1088, %v1092
        %v1109 = vlaneseq
        %v1110 = vshrl.u32 %v1109, 7
        %v1111 = vsub.s32 3, %v1110
        %v1112 = vrot.slane %v235, %v1111
        %v1113 = vadd.f32 %v1093, %v1112
        %v1114 = vadd.f32 %v1094, %v1112
        %v1115 = vadd.f32 %v1095, %v1112
        %v1116 = vadd.f32 %v1096, %v1112
        %v1117 = vadd.f32 %v1097, %v1112
        %v1118 = vadd.f32 %v1098, %v1112
        %v1119 = vadd.f32 %v1099, %v1112
        %v1120 = vadd.f32 %v1100, %v1112
        %v1121 = vadd.f32 %v1101, %v1112
        %v1122 = vadd.f32 %v1102, %v1112
        %v1123 = vadd.f32 %v1103, %v1112
        %v1124 = vadd.f32 %v1104, %v1112
        %v1125 = vadd.f32 %v1105, %v1112
        %v1126 = vadd.f32 %v1106, %v1112
        %v1127 = vadd.f32 %v1107, %v1112
        %v1128 = vadd.f32 %v1108, %v1112
        %v1130 = vsel %vm879, %v1113, 0
        %v1133 = vsel %vm879, %v1114, 0
        %v1136 = vsel %vm879, %v1115, 0
        %v1139 = vsel %vm879, %v1116, 0
        %v1142 = vsel %vm879, %v1117, 0
        %v1145 = vsel %vm879, %v1118, 0
        %v1148 = vsel %vm879, %v1119, 0
        %v1151 = vsel %vm879, %v1120, 0
        %v1154 = vsel %vm879, %v1121, 0
        %v1157 = vsel %vm879, %v1122, 0
        %v1160 = vsel %vm879, %v1123, 0
        %v1163 = vsel %vm879, %v1124, 0
        %v1166 = vsel %vm879, %v1125, 0
        %v1169 = vsel %vm879, %v1126, 0
        %v1172 = vsel %vm879, %v1127, 0
        %v1175 = vsel %vm879, %v1128, 0
        %1177 = vmatprep.subr.mxu0 0.0
        %1178 = vmatpush1.msra.mxu0 %v865
        %1179 = vmatprep.subr.mxu0 0.0
        %1180 = vmatpush1.msra.mxu0 %v866
        %1181 = vmatprep.subr.mxu0 0.0
        %1182 = vmatpush1.msra.mxu0 %v867
        %1183 = vmatprep.subr.mxu0 0.0
        %1184 = vmatpush1.msra.mxu0 %v868
        %1185 = vmatprep.subr.mxu0 0.0
        %1186 = vmatpush1.msra.mxu0 0.0
        %1187 = vmatprep.subr.mxu0 0.0
        %1188 = vmatpush1.msra.mxu0 0.0
        %1189 = vmatprep.subr.mxu0 0.0
        %1190 = vmatpush1.msra.mxu0 0.0
        %1191 = vmatprep.subr.mxu0 0.0
        %1192 = vmatpush1.msra.mxu0 0.0
        %1193 = vmatprep.subr.mxu0 0.0
        %1194 = vmatpush1.msra.mxu0 0.0
        %1195 = vmatprep.subr.mxu0 0.0
        %1196 = vmatpush1.msra.mxu0 0.0
        %1197 = vmatprep.subr.mxu0 0.0
        %1198 = vmatpush1.msra.mxu0 0.0
        %1199 = vmatprep.subr.mxu0 0.0
        %1200 = vmatpush1.msra.mxu0 0.0
        %1201 = vmatprep.subr.mxu0 0.0
        %1202 = vmatpush1.msra.mxu0 0.0
        %1203 = vmatprep.subr.mxu0 0.0
        %1204 = vmatpush1.msra.mxu0 0.0
        %1205 = vmatprep.subr.mxu0 0.0
        %1206 = vmatpush1.msra.mxu0 0.0
        %1207 = vmatprep.subr.mxu0 0.0
        %1208 = vmatpush1.msra.mxu0 0.0
        %1209 = vmatprep.subr.mxu0 0.0
        %1210 = vmatpush1.msra.mxu0 0.0
        %1211 = vmatprep.subr.mxu0 0.0
        %1212 = vmatpush1.msra.mxu0 0.0
        %1213 = vmatprep.subr.mxu0 0.0
        %1214 = vmatpush1.msra.mxu0 0.0
        %1215 = vmatprep.subr.mxu0 0.0
        %1216 = vmatpush1.msra.mxu0 0.0
        %1217 = vmatprep.subr.mxu0 0.0
        %1218 = vmatpush1.msra.mxu0 0.0
        %1219 = vmatprep.subr.mxu0 0.0
        %1220 = vmatpush1.msra.mxu0 0.0
        %1221 = vmatprep.subr.mxu0 0.0
        %1222 = vmatpush1.msra.mxu0 0.0
        %1223 = vmatprep.subr.mxu0 0.0
        %1224 = vmatpush1.msra.mxu0 0.0
        %1225 = vmatprep.subr.mxu0 0.0
        %1226 = vmatpush1.msra.mxu0 0.0
        %1227 = vmatprep.subr.mxu0 0.0
        %1228 = vmatpush1.msra.mxu0 0.0
        %1229 = vmatprep.subr.mxu0 0.0
        %1230 = vmatpush1.msra.mxu0 0.0
        %1231 = vmatprep.subr.mxu0 0.0
        %1232 = vmatpush1.msra.mxu0 0.0
        %1233 = vmatprep.subr.mxu0 0.0
        %1234 = vmatpush1.msra.mxu0 0.0
        %1235 = vmatprep.subr.mxu0 0.0
        %1236 = vmatpush1.msra.mxu0 0.0
        %1237 = vmatprep.subr.mxu0 0.0
        %1238 = vmatpush1.msra.mxu0 0.0
        %1239 = vmatprep.subr.mxu0 0.0
        %1240 = vmatpush1.msra.mxu0 0.0
        %1241 = vmatprep.mubr.f32.mxu0 0.0
        %1242 = vmatmul.mubr.f32.gmra.mrb[0].mxu0 %v1130
        %v1243 = vpop.f32.mrb[0].mxu0
        %v1244 = vadd.f32 0.0, %v1243
        %v1245 = vpop.f32.mrb[0].mxu0
        %1246 = vmatprep.mubr.f32.mxu0 0.0
        %1247 = vmatmul.mubr.f32.gmra.mrb[0].mxu0 %v1133
        %v1248 = vpop.f32.mrb[0].mxu0
        %v1249 = vadd.f32 0.0, %v1248
        %v1250 = vpop.f32.mrb[0].mxu0
        %1251 = vmatprep.mubr.f32.mxu0 0.0
        %1252 = vmatmul.mubr.f32.gmra.mrb[0].mxu0 %v1136
        %v1253 = vpop.f32.mrb[0].mxu0
        %v1254 = vadd.f32 0.0, %v1253
        %v1255 = vpop.f32.mrb[0].mxu0
        %1256 = vmatprep.mubr.f32.mxu0 0.0
        %1257 = vmatmul.mubr.f32.gmra.mrb[0].mxu0 %v1139
        %v1258 = vpop.f32.mrb[0].mxu0
        %v1259 = vadd.f32 0.0, %v1258
        %v1260 = vpop.f32.mrb[0].mxu0
        %1261 = vmatprep.mubr.f32.mxu0 0.0
        %1262 = vmatmul.mubr.f32.gmra.mrb[0].mxu0 %v1142
        %v1263 = vpop.f32.mrb[0].mxu0
        %v1264 = vadd.f32 0.0, %v1263
        %v1265 = vpop.f32.mrb[0].mxu0
        %1266 = vmatprep.mubr.f32.mxu0 0.0
        %1267 = vmatmul.mubr.f32.gmra.mrb[0].mxu0 %v1145
        %v1268 = vpop.f32.mrb[0].mxu0
        %v1269 = vadd.f32 0.0, %v1268
        %v1270 = vpop.f32.mrb[0].mxu0
        %1271 = vmatprep.mubr.f32.mxu0 0.0
        %1272 = vmatmul.mubr.f32.gmra.mrb[0].mxu0 %v1148
        %v1273 = vpop.f32.mrb[0].mxu0
        %v1274 = vadd.f32 0.0, %v1273
        %v1275 = vpop.f32.mrb[0].mxu0
        %1276 = vmatprep.mubr.f32.mxu0 0.0
        %1277 = vmatmul.mubr.f32.gmra.mrb[0].mxu0 %v1151
        %v1278 = vpop.f32.mrb[0].mxu0
        %v1279 = vadd.f32 0.0, %v1278
        %v1280 = vpop.f32.mrb[0].mxu0
        %1281 = vmatprep.mubr.f32.mxu0 0.0
        %1282 = vmatmul.mubr.f32.gmra.mrb[0].mxu0 %v1154
        %v1283 = vpop.f32.mrb[0].mxu0
        %v1284 = vadd.f32 0.0, %v1283
        %v1285 = vpop.f32.mrb[0].mxu0
        %1286 = vmatprep.mubr.f32.mxu0 0.0
        %1287 = vmatmul.mubr.f32.gmra.mrb[0].mxu0 %v1157
        %v1288 = vpop.f32.mrb[0].mxu0
        %v1289 = vadd.f32 0.0, %v1288
        %v1290 = vpop.f32.mrb[0].mxu0
        %1291 = vmatprep.mubr.f32.mxu0 0.0
        %1292 = vmatmul.mubr.f32.gmra.mrb[0].mxu0 %v1160
        %v1293 = vpop.f32.mrb[0].mxu0
        %v1294 = vadd.f32 0.0, %v1293
        %v1295 = vpop.f32.mrb[0].mxu0
        %1296 = vmatprep.mubr.f32.mxu0 0.0
        %1297 = vmatmul.mubr.f32.gmra.mrb[0].mxu0 %v1163
        %v1298 = vpop.f32.mrb[0].mxu0
        %v1299 = vadd.f32 0.0, %v1298
        %v1300 = vpop.f32.mrb[0].mxu0
        %1301 = vmatprep.mubr.f32.mxu0 0.0
        %1302 = vmatmul.mubr.f32.gmra.mrb[0].mxu0 %v1166
        %v1303 = vpop.f32.mrb[0].mxu0
        %v1304 = vadd.f32 0.0, %v1303
        %v1305 = vpop.f32.mrb[0].mxu0
        %1306 = vmatprep.mubr.f32.mxu0 0.0
        %1307 = vmatmul.mubr.f32.gmra.mrb[0].mxu0 %v1169
        %v1308 = vpop.f32.mrb[0].mxu0
        %v1309 = vadd.f32 0.0, %v1308
        %v1310 = vpop.f32.mrb[0].mxu0
        %1311 = vmatprep.mubr.f32.mxu0 0.0
        %1312 = vmatmul.mubr.f32.gmra.mrb[0].mxu0 %v1172
        %v1313 = vpop.f32.mrb[0].mxu0
        %v1314 = vadd.f32 0.0, %v1313
        %v1315 = vpop.f32.mrb[0].mxu0
        %1316 = vmatprep.mubr.f32.mxu0 0.0
        %1317 = vmatmul.mubr.f32.gmra.mrb[0].mxu0 %v1175
        %v1318 = vpop.f32.mrb[0].mxu0
        %v1319 = vadd.f32 0.0, %v1318
        %v1320 = vpop.f32.mrb[0].mxu0
        %1321 = vdwg.mxu0
        %1338 = vrot.lane.b32.xlu0 %v1244, 96
        %v1339 = vpop.permute.xlu0 %1338
        %1340 = vrot.lane.b32.xlu0 %v1249, 96
        %v1341 = vpop.permute.xlu0 %1340
        %1342 = vrot.lane.b32.xlu0 %v1254, 96
        %v1343 = vpop.permute.xlu0 %1342
        %1344 = vrot.lane.b32.xlu0 %v1259, 96
        %v1345 = vpop.permute.xlu0 %1344
        %1346 = vrot.lane.b32.xlu0 %v1264, 96
        %v1347 = vpop.permute.xlu0 %1346
        %1348 = vrot.lane.b32.xlu0 %v1269, 96
        %v1349 = vpop.permute.xlu0 %1348
        %1350 = vrot.lane.b32.xlu0 %v1274, 96
        %v1351 = vpop.permute.xlu0 %1350
        %1352 = vrot.lane.b32.xlu0 %v1279, 96
        %v1353 = vpop.permute.xlu0 %1352
        %1354 = vrot.lane.b32.xlu0 %v1284, 96
        %v1355 = vpop.permute.xlu0 %1354
        %1356 = vrot.lane.b32.xlu0 %v1289, 96
        %v1357 = vpop.permute.xlu0 %1356
        %1358 = vrot.lane.b32.xlu0 %v1294, 96
        %v1359 = vpop.permute.xlu0 %1358
        %1360 = vrot.lane.b32.xlu0 %v1299, 96
        %v1361 = vpop.permute.xlu0 %1360
        %1362 = vrot.lane.b32.xlu0 %v1304, 96
        %v1363 = vpop.permute.xlu0 %1362
        %1364 = vrot.lane.b32.xlu0 %v1309, 96
        %v1365 = vpop.permute.xlu0 %1364
        %1366 = vrot.lane.b32.xlu0 %v1314, 96
        %v1367 = vpop.permute.xlu0 %1366
        %1368 = vrot.lane.b32.xlu0 %v1319, 96
        %v1369 = vpop.permute.xlu0 %1368
        %v1370 = vsel %vm347, %v1244, 0
        %v1372 = vsel %vm347, %v1249, 0
        %v1374 = vsel %vm347, %v1254, 0
        %v1376 = vsel %vm347, %v1259, 0
        %v1378 = vsel %vm347, %v1264, 0
        %v1380 = vsel %vm347, %v1269, 0
        %v1382 = vsel %vm347, %v1274, 0
        %v1384 = vsel %vm347, %v1279, 0
        %v1386 = vsel %vm347, %v1284, 0
        %v1388 = vsel %vm347, %v1289, 0
        %v1390 = vsel %vm347, %v1294, 0
        %v1392 = vsel %vm347, %v1299, 0
        %v1394 = vsel %vm347, %v1304, 0
        %v1396 = vsel %vm347, %v1309, 0
        %v1398 = vsel %vm347, %v1314, 0
        %v1400 = vsel %vm347, %v1319, 0
        %v1402 = vsel %vm347, %v1339, 0
        %v1404 = vsel %vm347, %v1341, 0
        %v1406 = vsel %vm347, %v1343, 0
        %v1408 = vsel %vm347, %v1345, 0
        %v1410 = vsel %vm347, %v1347, 0
        %v1412 = vsel %vm347, %v1349, 0
        %v1414 = vsel %vm347, %v1351, 0
        %v1416 = vsel %vm347, %v1353, 0
        %v1418 = vsel %vm347, %v1355, 0
        %v1420 = vsel %vm347, %v1357, 0
        %v1422 = vsel %vm347, %v1359, 0
        %v1424 = vsel %vm347, %v1361, 0
        %v1426 = vsel %vm347, %v1363, 0
        %v1428 = vsel %vm347, %v1365, 0
        %v1430 = vsel %vm347, %v1367, 0
        %v1432 = vsel %vm347, %v1369, 0
        %1434 = vmatprep.subr.mxu0 0.0
        %1435 = vmatpush1.xpose.msra.mxu0 %v1402
        %1436 = vmatprep.subr.mxu0 0.0
        %1437 = vmatpush1.xpose.msra.mxu0 %v1404
        %1438 = vmatprep.subr.mxu0 0.0
        %1439 = vmatpush1.xpose.msra.mxu0 %v1406
        %1440 = vmatprep.subr.mxu0 0.0
        %1441 = vmatpush1.xpose.msra.mxu0 %v1408
        %1442 = vmatprep.subr.mxu0 0.0
        %1443 = vmatpush1.xpose.msra.mxu0 %v1410
        %1444 = vmatprep.subr.mxu0 0.0
        %1445 = vmatpush1.xpose.msra.mxu0 %v1412
        %1446 = vmatprep.subr.mxu0 0.0
        %1447 = vmatpush1.xpose.msra.mxu0 %v1414
        %1448 = vmatprep.subr.mxu0 0.0
        %1449 = vmatpush1.xpose.msra.mxu0 %v1416
        %1450 = vmatprep.subr.mxu0 0.0
        %1451 = vmatpush1.xpose.msra.mxu0 %v1418
        %1452 = vmatprep.subr.mxu0 0.0
        %1453 = vmatpush1.xpose.msra.mxu0 %v1420
        %1454 = vmatprep.subr.mxu0 0.0
        %1455 = vmatpush1.xpose.msra.mxu0 %v1422
        %1456 = vmatprep.subr.mxu0 0.0
        %1457 = vmatpush1.xpose.msra.mxu0 %v1424
        %1458 = vmatprep.subr.mxu0 0.0
        %1459 = vmatpush1.xpose.msra.mxu0 %v1426
        %1460 = vmatprep.subr.mxu0 0.0
        %1461 = vmatpush1.xpose.msra.mxu0 %v1428
        %1462 = vmatprep.subr.mxu0 0.0
        %1463 = vmatpush1.xpose.msra.mxu0 %v1430
        %1464 = vmatprep.subr.mxu0 0.0
        %1465 = vmatpush1.xpose.msra.mxu0 %v1432
        %1466 = vmatprep.subr.mxu0 0.0
        %1467 = vmatpush1.xpose.msra.mxu0 0.0
        %1468 = vmatprep.subr.mxu0 0.0
        %1469 = vmatpush1.xpose.msra.mxu0 0.0
        %1470 = vmatprep.subr.mxu0 0.0
        %1471 = vmatpush1.xpose.msra.mxu0 0.0
        %1472 = vmatprep.subr.mxu0 0.0
        %1473 = vmatpush1.xpose.msra.mxu0 0.0
        %1474 = vmatprep.subr.mxu0 0.0
        %1475 = vmatpush1.xpose.msra.mxu0 0.0
        %1476 = vmatprep.subr.mxu0 0.0
        %1477 = vmatpush1.xpose.msra.mxu0 0.0
        %1478 = vmatprep.subr.mxu0 0.0
        %1479 = vmatpush1.xpose.msra.mxu0 0.0
        %1480 = vmatprep.subr.mxu0 0.0
        %1481 = vmatpush1.xpose.msra.mxu0 0.0
        %1482 = vmatprep.subr.mxu0 0.0
        %1483 = vmatpush1.xpose.msra.mxu0 0.0
        %1484 = vmatprep.subr.mxu0 0.0
        %1485 = vmatpush1.xpose.msra.mxu0 0.0
        %1486 = vmatprep.subr.mxu0 0.0
        %1487 = vmatpush1.xpose.msra.mxu0 0.0
        %1488 = vmatprep.subr.mxu0 0.0
        %1489 = vmatpush1.xpose.msra.mxu0 0.0
        %1490 = vmatprep.subr.mxu0 0.0
        %1491 = vmatpush1.xpose.msra.mxu0 0.0
        %1492 = vmatprep.subr.mxu0 0.0
        %1493 = vmatpush1.xpose.msra.mxu0 0.0
        %1494 = vmatprep.subr.mxu0 0.0
        %1495 = vmatpush1.xpose.msra.mxu0 0.0
        %1496 = vmatprep.subr.mxu0 0.0
        %1497 = vmatpush1.xpose.msra.mxu0 0.0
        %1498 = vmatprep.mubr.f32.mxu0 0.0
        %1499 = vmatmul.mubr.f32.gmra.mrb[0].mxu0 %v1370
        %v1500 = vpop.f32.mrb[0].mxu0
        %v1501 = vadd.f32 %v237, %v1500
        %v1502 = vpop.f32.mrb[0].mxu0
        %1503 = vmatprep.mubr.f32.mxu0 0.0
        %1504 = vmatmul.mubr.f32.gmra.mrb[0].mxu0 %v1372
        %v1505 = vpop.f32.mrb[0].mxu0
        %v1506 = vadd.f32 %v238, %v1505
        %v1507 = vpop.f32.mrb[0].mxu0
        %1508 = vmatprep.mubr.f32.mxu0 0.0
        %1509 = vmatmul.mubr.f32.gmra.mrb[0].mxu0 %v1374
        %v1510 = vpop.f32.mrb[0].mxu0
        %v1511 = vadd.f32 %v239, %v1510
        %v1512 = vpop.f32.mrb[0].mxu0
        %1513 = vmatprep.mubr.f32.mxu0 0.0
        %1514 = vmatmul.mubr.f32.gmra.mrb[0].mxu0 %v1376
        %v1515 = vpop.f32.mrb[0].mxu0
        %v1516 = vadd.f32 %v240, %v1515
        %v1517 = vpop.f32.mrb[0].mxu0
        %1518 = vmatprep.mubr.f32.mxu0 0.0
        %1519 = vmatmul.mubr.f32.gmra.mrb[0].mxu0 %v1378
        %v1520 = vpop.f32.mrb[0].mxu0
        %v1521 = vadd.f32 %v241, %v1520
        %v1522 = vpop.f32.mrb[0].mxu0
        %1523 = vmatprep.mubr.f32.mxu0 0.0
        %1524 = vmatmul.mubr.f32.gmra.mrb[0].mxu0 %v1380
        %v1525 = vpop.f32.mrb[0].mxu0
        %v1526 = vadd.f32 %v242, %v1525
        %v1527 = vpop.f32.mrb[0].mxu0
        %1528 = vmatprep.mubr.f32.mxu0 0.0
        %1529 = vmatmul.mubr.f32.gmra.mrb[0].mxu0 %v1382
        %v1530 = vpop.f32.mrb[0].mxu0
        %v1531 = vadd.f32 %v243, %v1530
        %v1532 = vpop.f32.mrb[0].mxu0
        %1533 = vmatprep.mubr.f32.mxu0 0.0
        %1534 = vmatmul.mubr.f32.gmra.mrb[0].mxu0 %v1384
        %v1535 = vpop.f32.mrb[0].mxu0
        %v1536 = vadd.f32 %v244, %v1535
        %v1537 = vpop.f32.mrb[0].mxu0
        %1538 = vmatprep.mubr.f32.mxu0 0.0
        %1539 = vmatmul.mubr.f32.gmra.mrb[0].mxu0 %v1386
        %v1540 = vpop.f32.mrb[0].mxu0
        %v1541 = vadd.f32 %v245, %v1540
        %v1542 = vpop.f32.mrb[0].mxu0
        %1543 = vmatprep.mubr.f32.mxu0 0.0
        %1544 = vmatmul.mubr.f32.gmra.mrb[0].mxu0 %v1388
        %v1545 = vpop.f32.mrb[0].mxu0
        %v1546 = vadd.f32 %v246, %v1545
        %v1547 = vpop.f32.mrb[0].mxu0
        %1548 = vmatprep.mubr.f32.mxu0 0.0
        %1549 = vmatmul.mubr.f32.gmra.mrb[0].mxu0 %v1390
        %v1550 = vpop.f32.mrb[0].mxu0
        %v1551 = vadd.f32 %v247, %v1550
        %v1552 = vpop.f32.mrb[0].mxu0
        %1553 = vmatprep.mubr.f32.mxu0 0.0
        %1554 = vmatmul.mubr.f32.gmra.mrb[0].mxu0 %v1392
        %v1555 = vpop.f32.mrb[0].mxu0
        %v1556 = vadd.f32 %v248, %v1555
        %v1557 = vpop.f32.mrb[0].mxu0
        %1558 = vmatprep.mubr.f32.mxu0 0.0
        %1559 = vmatmul.mubr.f32.gmra.mrb[0].mxu0 %v1394
        %v1560 = vpop.f32.mrb[0].mxu0
        %v1561 = vadd.f32 %v249, %v1560
        %v1562 = vpop.f32.mrb[0].mxu0
        %1563 = vmatprep.mubr.f32.mxu0 0.0
        %1564 = vmatmul.mubr.f32.gmra.mrb[0].mxu0 %v1396
        %v1565 = vpop.f32.mrb[0].mxu0
        %v1566 = vadd.f32 %v250, %v1565
        %v1567 = vpop.f32.mrb[0].mxu0
        %1568 = vmatprep.mubr.f32.mxu0 0.0
        %1569 = vmatmul.mubr.f32.gmra.mrb[0].mxu0 %v1398
        %v1570 = vpop.f32.mrb[0].mxu0
        %v1571 = vadd.f32 %v251, %v1570
        %v1572 = vpop.f32.mrb[0].mxu0
        %1573 = vmatprep.mubr.f32.mxu0 0.0
        %1574 = vmatmul.mubr.f32.gmra.mrb[0].mxu0 %v1400
        %v1575 = vpop.f32.mrb[0].mxu0
        %v1576 = vadd.f32 %v252, %v1575
        %v1577 = vpop.f32.mrb[0].mxu0
        %1578 = vdwg.mxu0
        %1579 = vmax.xlane.f32.xlu0 %v1501
        %v1580 = vpop.xlane.xlu0 %1579
        %1581 = vmax.xlane.f32.xlu0 %v1506
        %v1582 = vpop.xlane.xlu0 %1581
        %1583 = vmax.xlane.f32.xlu0 %v1511
        %v1584 = vpop.xlane.xlu0 %1583
        %1585 = vmax.xlane.f32.xlu0 %v1516
        %v1586 = vpop.xlane.xlu0 %1585
        %1587 = vmax.xlane.f32.xlu0 %v1521
        %v1588 = vpop.xlane.xlu0 %1587
        %1589 = vmax.xlane.f32.xlu0 %v1526
        %v1590 = vpop.xlane.xlu0 %1589
        %1591 = vmax.xlane.f32.xlu0 %v1531
        %v1592 = vpop.xlane.xlu0 %1591
        %1593 = vmax.xlane.f32.xlu0 %v1536
        %v1594 = vpop.xlane.xlu0 %1593
        %1595 = vmax.xlane.f32.xlu0 %v1541
        %v1596 = vpop.xlane.xlu0 %1595
        %1597 = vmax.xlane.f32.xlu0 %v1546
        %v1598 = vpop.xlane.xlu0 %1597
        %1599 = vmax.xlane.f32.xlu0 %v1551
        %v1600 = vpop.xlane.xlu0 %1599
        %1601 = vmax.xlane.f32.xlu0 %v1556
        %v1602 = vpop.xlane.xlu0 %1601
        %1603 = vmax.xlane.f32.xlu0 %v1561
        %v1604 = vpop.xlane.xlu0 %1603
        %1605 = vmax.xlane.f32.xlu0 %v1566
        %v1606 = vpop.xlane.xlu0 %1605
        %1607 = vmax.xlane.f32.xlu0 %v1571
        %v1608 = vpop.xlane.xlu0 %1607
        %1609 = vmax.xlane.f32.xlu0 %v1576
        %v1610 = vpop.xlane.xlu0 %1609
        %v1611 = vsub.f32 %v1501, %v1580
        %v1612 = vsub.f32 %v1506, %v1582
        %v1613 = vsub.f32 %v1511, %v1584
        %v1614 = vsub.f32 %v1516, %v1586
        %v1615 = vsub.f32 %v1521, %v1588
        %v1616 = vsub.f32 %v1526, %v1590
        %v1617 = vsub.f32 %v1531, %v1592
        %v1618 = vsub.f32 %v1536, %v1594
        %v1619 = vsub.f32 %v1541, %v1596
        %v1620 = vsub.f32 %v1546, %v1598
        %v1621 = vsub.f32 %v1551, %v1600
        %v1622 = vsub.f32 %v1556, %v1602
        %v1623 = vsub.f32 %v1561, %v1604
        %v1624 = vsub.f32 %v1566, %v1606
        %v1625 = vsub.f32 %v1571, %v1608
        %v1626 = vsub.f32 %v1576, %v1610
        %v1627 = vmul.f32 %v1611, 1.442695
        %v1628 = vpow.pop %v1627
        %v1629 = vmul.f32 %v1612, 1.442695
        %v1630 = vpow.pop %v1629
        %v1631 = vmul.f32 %v1613, 1.442695
        %v1632 = vpow.pop %v1631
        %v1633 = vmul.f32 %v1614, 1.442695
        %v1634 = vpow.pop %v1633
        %v1635 = vmul.f32 %v1615, 1.442695
        %v1636 = vpow.pop %v1635
        %v1637 = vmul.f32 %v1616, 1.442695
        %v1638 = vpow.pop %v1637
        %v1639 = vmul.f32 %v1617, 1.442695
        %v1640 = vpow.pop %v1639
        %v1641 = vmul.f32 %v1618, 1.442695
        %v1642 = vpow.pop %v1641
        %v1643 = vmul.f32 %v1619, 1.442695
        %v1644 = vpow.pop %v1643
        %v1645 = vmul.f32 %v1620, 1.442695
        %v1646 = vpow.pop %v1645
        %v1647 = vmul.f32 %v1621, 1.442695
        %v1648 = vpow.pop %v1647
        %v1649 = vmul.f32 %v1622, 1.442695
        %v1650 = vpow.pop %v1649
        %v1651 = vmul.f32 %v1623, 1.442695
        %v1652 = vpow.pop %v1651
        %v1653 = vmul.f32 %v1624, 1.442695
        %v1654 = vpow.pop %v1653
        %v1655 = vmul.f32 %v1625, 1.442695
        %v1656 = vpow.pop %v1655
        %v1657 = vmul.f32 %v1626, 1.442695
        %v1658 = vpow.pop %v1657
        %1659 = vadd.xlane.f32.xlu0 %v1628
        %v1660 = vpop.xlane.xlu0 %1659
        %1661 = vadd.xlane.f32.xlu0 %v1630
        %v1662 = vpop.xlane.xlu0 %1661
        %1663 = vadd.xlane.f32.xlu0 %v1632
        %v1664 = vpop.xlane.xlu0 %1663
        %1665 = vadd.xlane.f32.xlu0 %v1634
        %v1666 = vpop.xlane.xlu0 %1665
        %1667 = vadd.xlane.f32.xlu0 %v1636
        %v1668 = vpop.xlane.xlu0 %1667
        %1669 = vadd.xlane.f32.xlu0 %v1638
        %v1670 = vpop.xlane.xlu0 %1669
        %1671 = vadd.xlane.f32.xlu0 %v1640
        %v1672 = vpop.xlane.xlu0 %1671
        %1673 = vadd.xlane.f32.xlu0 %v1642
        %v1674 = vpop.xlane.xlu0 %1673
        %1675 = vadd.xlane.f32.xlu0 %v1644
        %v1676 = vpop.xlane.xlu0 %1675
        %1677 = vadd.xlane.f32.xlu0 %v1646
        %v1678 = vpop.xlane.xlu0 %1677
        %1679 = vadd.xlane.f32.xlu0 %v1648
        %v1680 = vpop.xlane.xlu0 %1679
        %1681 = vadd.xlane.f32.xlu0 %v1650
        %v1682 = vpop.xlane.xlu0 %1681
        %1683 = vadd.xlane.f32.xlu0 %v1652
        %v1684 = vpop.xlane.xlu0 %1683
        %1685 = vadd.xlane.f32.xlu0 %v1654
        %v1686 = vpop.xlane.xlu0 %1685
        %1687 = vadd.xlane.f32.xlu0 %v1656
        %v1688 = vpop.xlane.xlu0 %1687
        %1689 = vadd.xlane.f32.xlu0 %v1658
        %v1690 = vpop.xlane.xlu0 %1689
        %v1691 = vrcp.pop %v1660
        %v1692 = vmul.f32 %v1628, %v1691
        %v1693 = vrcp.pop %v1662
        %v1694 = vmul.f32 %v1630, %v1693
        %v1695 = vrcp.pop %v1664
        %v1696 = vmul.f32 %v1632, %v1695
        %v1697 = vrcp.pop %v1666
        %v1698 = vmul.f32 %v1634, %v1697
        %v1699 = vrcp.pop %v1668
        %v1700 = vmul.f32 %v1636, %v1699
        %v1701 = vrcp.pop %v1670
        %v1702 = vmul.f32 %v1638, %v1701
        %v1703 = vrcp.pop %v1672
        %v1704 = vmul.f32 %v1640, %v1703
        %v1705 = vrcp.pop %v1674
        %v1706 = vmul.f32 %v1642, %v1705
        %v1707 = vrcp.pop %v1676
        %v1708 = vmul.f32 %v1644, %v1707
        %v1709 = vrcp.pop %v1678
        %v1710 = vmul.f32 %v1646, %v1709
        %v1711 = vrcp.pop %v1680
        %v1712 = vmul.f32 %v1648, %v1711
        %v1713 = vrcp.pop %v1682
        %v1714 = vmul.f32 %v1650, %v1713
        %v1715 = vrcp.pop %v1684
        %v1716 = vmul.f32 %v1652, %v1715
        %v1717 = vrcp.pop %v1686
        %v1718 = vmul.f32 %v1654, %v1717
        %v1719 = vrcp.pop %v1688
        %v1720 = vmul.f32 %v1656, %v1719
        %v1721 = vrcp.pop %v1690
        %v1722 = vmul.f32 %v1658, %v1721
        %1723 = vrot.lane.b32.xlu0 %v1244, 64
        %v1724 = vpop.permute.xlu0 %1723
        %1725 = vrot.lane.b32.xlu0 %v1249, 64
        %v1726 = vpop.permute.xlu0 %1725
        %1727 = vrot.lane.b32.xlu0 %v1254, 64
        %v1728 = vpop.permute.xlu0 %1727
        %1729 = vrot.lane.b32.xlu0 %v1259, 64
        %v1730 = vpop.permute.xlu0 %1729
        %1731 = vrot.lane.b32.xlu0 %v1264, 64
        %v1732 = vpop.permute.xlu0 %1731
        %1733 = vrot.lane.b32.xlu0 %v1269, 64
        %v1734 = vpop.permute.xlu0 %1733
        %1735 = vrot.lane.b32.xlu0 %v1274, 64
        %v1736 = vpop.permute.xlu0 %1735
        %1737 = vrot.lane.b32.xlu0 %v1279, 64
        %v1738 = vpop.permute.xlu0 %1737
        %1739 = vrot.lane.b32.xlu0 %v1284, 64
        %v1740 = vpop.permute.xlu0 %1739
        %1741 = vrot.lane.b32.xlu0 %v1289, 64
        %v1742 = vpop.permute.xlu0 %1741
        %1743 = vrot.lane.b32.xlu0 %v1294, 64
        %v1744 = vpop.permute.xlu0 %1743
        %1745 = vrot.lane.b32.xlu0 %v1299, 64
        %v1746 = vpop.permute.xlu0 %1745
        %1747 = vrot.lane.b32.xlu0 %v1304, 64
        %v1748 = vpop.permute.xlu0 %1747
        %1749 = vrot.lane.b32.xlu0 %v1309, 64
        %v1750 = vpop.permute.xlu0 %1749
        %1751 = vrot.lane.b32.xlu0 %v1314, 64
        %v1752 = vpop.permute.xlu0 %1751
        %1753 = vrot.lane.b32.xlu0 %v1319, 64
        %v1754 = vpop.permute.xlu0 %1753
        %1771 = vmatprep.subr.mxu0 0.0
        %1772 = vmatpush1.msra.mxu0 %v1724
        %1773 = vmatprep.subr.mxu0 0.0
        %1774 = vmatpush1.msra.mxu0 %v1726
        %1775 = vmatprep.subr.mxu0 0.0
        %1776 = vmatpush1.msra.mxu0 %v1728
        %1777 = vmatprep.subr.mxu0 0.0
        %1778 = vmatpush1.msra.mxu0 %v1730
        %1779 = vmatprep.subr.mxu0 0.0
        %1780 = vmatpush1.msra.mxu0 %v1732
        %1781 = vmatprep.subr.mxu0 0.0
        %1782 = vmatpush1.msra.mxu0 %v1734
        %1783 = vmatprep.subr.mxu0 0.0
        %1784 = vmatpush1.msra.mxu0 %v1736
        %1785 = vmatprep.subr.mxu0 0.0
        %1786 = vmatpush1.msra.mxu0 %v1738
        %1787 = vmatprep.subr.mxu0 0.0
        %1788 = vmatpush1.msra.mxu0 %v1740
        %1789 = vmatprep.subr.mxu0 0.0
        %1790 = vmatpush1.msra.mxu0 %v1742
        %1791 = vmatprep.subr.mxu0 0.0
        %1792 = vmatpush1.msra.mxu0 %v1744
        %1793 = vmatprep.subr.mxu0 0.0
        %1794 = vmatpush1.msra.mxu0 %v1746
        %1795 = vmatprep.subr.mxu0 0.0
        %1796 = vmatpush1.msra.mxu0 %v1748
        %1797 = vmatprep.subr.mxu0 0.0
        %1798 = vmatpush1.msra.mxu0 %v1750
        %1799 = vmatprep.subr.mxu0 0.0
        %1800 = vmatpush1.msra.mxu0 %v1752
        %1801 = vmatprep.subr.mxu0 0.0
        %1802 = vmatpush1.msra.mxu0 %v1754
        %1803 = vmatprep.subr.mxu0 0.0
        %1804 = vmatpush1.msra.mxu0 0.0
        %1805 = vmatprep.subr.mxu0 0.0
        %1806 = vmatpush1.msra.mxu0 0.0
        %1807 = vmatprep.subr.mxu0 0.0
        %1808 = vmatpush1.msra.mxu0 0.0
        %1809 = vmatprep.subr.mxu0 0.0
        %1810 = vmatpush1.msra.mxu0 0.0
        %1811 = vmatprep.subr.mxu0 0.0
        %1812 = vmatpush1.msra.mxu0 0.0
        %1813 = vmatprep.subr.mxu0 0.0
        %1814 = vmatpush1.msra.mxu0 0.0
        %1815 = vmatprep.subr.mxu0 0.0
        %1816 = vmatpush1.msra.mxu0 0.0
        %1817 = vmatprep.subr.mxu0 0.0
        %1818 = vmatpush1.msra.mxu0 0.0
        %1819 = vmatprep.subr.mxu0 0.0
        %1820 = vmatpush1.msra.mxu0 0.0
        %1821 = vmatprep.subr.mxu0 0.0
        %1822 = vmatpush1.msra.mxu0 0.0
        %1823 = vmatprep.subr.mxu0 0.0
        %1824 = vmatpush1.msra.mxu0 0.0
        %1825 = vmatprep.subr.mxu0 0.0
        %1826 = vmatpush1.msra.mxu0 0.0
        %1827 = vmatprep.subr.mxu0 0.0
        %1828 = vmatpush1.msra.mxu0 0.0
        %1829 = vmatprep.subr.mxu0 0.0
        %1830 = vmatpush1.msra.mxu0 0.0
        %1831 = vmatprep.subr.mxu0 0.0
        %1832 = vmatpush1.msra.mxu0 0.0
        %1833 = vmatprep.subr.mxu0 0.0
        %1834 = vmatpush1.msra.mxu0 0.0
        %1835 = vmatprep.mubr.f32.mxu0 0.0
        %1836 = vmatmul.mubr.f32.gmra.mrb[0].mxu0 %v1692
        %v1837 = vpop.f32.mrb[0].mxu0
        %v1838 = vadd.f32 0.0, %v1837
        %v1839 = vpop.f32.mrb[0].mxu0
        %1840 = vmatprep.mubr.f32.mxu0 0.0
        %1841 = vmatmul.mubr.f32.gmra.mrb[0].mxu0 %v1694
        %v1842 = vpop.f32.mrb[0].mxu0
        %v1843 = vadd.f32 0.0, %v1842
        %v1844 = vpop.f32.mrb[0].mxu0
        %1845 = vmatprep.mubr.f32.mxu0 0.0
        %1846 = vmatmul.mubr.f32.gmra.mrb[0].mxu0 %v1696
        %v1847 = vpop.f32.mrb[0].mxu0
        %v1848 = vadd.f32 0.0, %v1847
        %v1849 = vpop.f32.mrb[0].mxu0
        %1850 = vmatprep.mubr.f32.mxu0 0.0
        %1851 = vmatmul.mubr.f32.gmra.mrb[0].mxu0 %v1698
        %v1852 = vpop.f32.mrb[0].mxu0
        %v1853 = vadd.f32 0.0, %v1852
        %v1854 = vpop.f32.mrb[0].mxu0
        %1855 = vmatprep.mubr.f32.mxu0 0.0
        %1856 = vmatmul.mubr.f32.gmra.mrb[0].mxu0 %v1700
        %v1857 = vpop.f32.mrb[0].mxu0
        %v1858 = vadd.f32 0.0, %v1857
        %v1859 = vpop.f32.mrb[0].mxu0
        %1860 = vmatprep.mubr.f32.mxu0 0.0
        %1861 = vmatmul.mubr.f32.gmra.mrb[0].mxu0 %v1702
        %v1862 = vpop.f32.mrb[0].mxu0
        %v1863 = vadd.f32 0.0, %v1862
        %v1864 = vpop.f32.mrb[0].mxu0
        %1865 = vmatprep.mubr.f32.mxu0 0.0
        %1866 = vmatmul.mubr.f32.gmra.mrb[0].mxu0 %v1704
        %v1867 = vpop.f32.mrb[0].mxu0
        %v1868 = vadd.f32 0.0, %v1867
        %v1869 = vpop.f32.mrb[0].mxu0
        %1870 = vmatprep.mubr.f32.mxu0 0.0
        %1871 = vmatmul.mubr.f32.gmra.mrb[0].mxu0 %v1706
        %v1872 = vpop.f32.mrb[0].mxu0
        %v1873 = vadd.f32 0.0, %v1872
        %v1874 = vpop.f32.mrb[0].mxu0
        %1875 = vmatprep.mubr.f32.mxu0 0.0
        %1876 = vmatmul.mubr.f32.gmra.mrb[0].mxu0 %v1708
        %v1877 = vpop.f32.mrb[0].mxu0
        %v1878 = vadd.f32 0.0, %v1877
        %v1879 = vpop.f32.mrb[0].mxu0
        %1880 = vmatprep.mubr.f32.mxu0 0.0
        %1881 = vmatmul.mubr.f32.gmra.mrb[0].mxu0 %v1710
        %v1882 = vpop.f32.mrb[0].mxu0
        %v1883 = vadd.f32 0.0, %v1882
        %v1884 = vpop.f32.mrb[0].mxu0
        %1885 = vmatprep.mubr.f32.mxu0 0.0
        %1886 = vmatmul.mubr.f32.gmra.mrb[0].mxu0 %v1712
        %v1887 = vpop.f32.mrb[0].mxu0
        %v1888 = vadd.f32 0.0, %v1887
        %v1889 = vpop.f32.mrb[0].mxu0
        %1890 = vmatprep.mubr.f32.mxu0 0.0
        %1891 = vmatmul.mubr.f32.gmra.mrb[0].mxu0 %v1714
        %v1892 = vpop.f32.mrb[0].mxu0
        %v1893 = vadd.f32 0.0, %v1892
        %v1894 = vpop.f32.mrb[0].mxu0
        %1895 = vmatprep.mubr.f32.mxu0 0.0
        %1896 = vmatmul.mubr.f32.gmra.mrb[0].mxu0 %v1716
        %v1897 = vpop.f32.mrb[0].mxu0
        %v1898 = vadd.f32 0.0, %v1897
        %v1899 = vpop.f32.mrb[0].mxu0
        %1900 = vmatprep.mubr.f32.mxu0 0.0
        %1901 = vmatmul.mubr.f32.gmra.mrb[0].mxu0 %v1718
        %v1902 = vpop.f32.mrb[0].mxu0
        %v1903 = vadd.f32 0.0, %v1902
        %v1904 = vpop.f32.mrb[0].mxu0
        %1905 = vmatprep.mubr.f32.mxu0 0.0
        %1906 = vmatmul.mubr.f32.gmra.mrb[0].mxu0 %v1720
        %v1907 = vpop.f32.mrb[0].mxu0
        %v1908 = vadd.f32 0.0, %v1907
        %v1909 = vpop.f32.mrb[0].mxu0
        %1910 = vmatprep.mubr.f32.mxu0 0.0
        %1911 = vmatmul.mubr.f32.gmra.mrb[0].mxu0 %v1722
        %v1912 = vpop.f32.mrb[0].mxu0
        %v1913 = vadd.f32 0.0, %v1912
        %v1914 = vpop.f32.mrb[0].mxu0
        %1915 = vdwg.mxu0
        %1916 = vst.msk [vmem:[#allocation2] sm:$0xff] %vm347, %v1838
        %1917 = vst.msk [vmem:[#allocation2 + $0x8] sm:$0xff] %vm347, %v1843
        %1918 = vst.msk [vmem:[#allocation2 + $0x10] sm:$0xff] %vm347, %v1848
        %1919 = vst.msk [vmem:[#allocation2 + $0x18] sm:$0xff] %vm347, %v1853
        %1920 = vst.msk [vmem:[#allocation2 + $0x20] sm:$0xff] %vm347, %v1858
        %1921 = vst.msk [vmem:[#allocation2 + $0x28] sm:$0xff] %vm347, %v1863
        %1922 = vst.msk [vmem:[#allocation2 + $0x30] sm:$0xff] %vm347, %v1868
        %1923 = vst.msk [vmem:[#allocation2 + $0x38] sm:$0xff] %vm347, %v1873
        %1924 = vst.msk [vmem:[#allocation2 + $0x40] sm:$0xff] %vm347, %v1878
        %1925 = vst.msk [vmem:[#allocation2 + $0x48] sm:$0xff] %vm347, %v1883
        %1926 = vst.msk [vmem:[#allocation2 + $0x50] sm:$0xff] %vm347, %v1888
        %1927 = vst.msk [vmem:[#allocation2 + $0x58] sm:$0xff] %vm347, %v1893
        %1928 = vst.msk [vmem:[#allocation2 + $0x60] sm:$0xff] %vm347, %v1898
        %1929 = vst.msk [vmem:[#allocation2 + $0x68] sm:$0xff] %vm347, %v1903
        %1930 = vst.msk [vmem:[#allocation2 + $0x70] sm:$0xff] %vm347, %v1908
        %1931 = vst.msk [vmem:[#allocation2 + $0x78] sm:$0xff] %vm347, %v1913
        %1932 = vrot.lane.b32.xlu0 %v1244, 120
        %v1933 = vpop.permute.xlu0 %1932
        %1934 = vrot.lane.b32.xlu0 %v1249, 120
        %v1935 = vpop.permute.xlu0 %1934
        %1936 = vrot.lane.b32.xlu0 %v1254, 120
        %v1937 = vpop.permute.xlu0 %1936
        %1938 = vrot.lane.b32.xlu0 %v1259, 120
        %v1939 = vpop.permute.xlu0 %1938
        %1940 = vrot.lane.b32.xlu0 %v1264, 120
        %v1941 = vpop.permute.xlu0 %1940
        %1942 = vrot.lane.b32.xlu0 %v1269, 120
        %v1943 = vpop.permute.xlu0 %1942
        %1944 = vrot.lane.b32.xlu0 %v1274, 120
        %v1945 = vpop.permute.xlu0 %1944
        %1946 = vrot.lane.b32.xlu0 %v1279, 120
        %v1947 = vpop.permute.xlu0 %1946
        %1948 = vrot.lane.b32.xlu0 %v1284, 120
        %v1949 = vpop.permute.xlu0 %1948
        %1950 = vrot.lane.b32.xlu0 %v1289, 120
        %v1951 = vpop.permute.xlu0 %1950
        %1952 = vrot.lane.b32.xlu0 %v1294, 120
        %v1953 = vpop.permute.xlu0 %1952
        %1954 = vrot.lane.b32.xlu0 %v1299, 120
        %v1955 = vpop.permute.xlu0 %1954
        %1956 = vrot.lane.b32.xlu0 %v1304, 120
        %v1957 = vpop.permute.xlu0 %1956
        %1958 = vrot.lane.b32.xlu0 %v1309, 120
        %v1959 = vpop.permute.xlu0 %1958
        %1960 = vrot.lane.b32.xlu0 %v1314, 120
        %v1961 = vpop.permute.xlu0 %1960
        %1962 = vrot.lane.b32.xlu0 %v1319, 120
        %v1963 = vpop.permute.xlu0 %1962
        %1964 = vrot.lane.b32.xlu0 %v1244, 88
        %v1965 = vpop.permute.xlu0 %1964
        %1966 = vrot.lane.b32.xlu0 %v1249, 88
        %v1967 = vpop.permute.xlu0 %1966
        %1968 = vrot.lane.b32.xlu0 %v1254, 88
        %v1969 = vpop.permute.xlu0 %1968
        %1970 = vrot.lane.b32.xlu0 %v1259, 88
        %v1971 = vpop.permute.xlu0 %1970
        %1972 = vrot.lane.b32.xlu0 %v1264, 88
        %v1973 = vpop.permute.xlu0 %1972
        %1974 = vrot.lane.b32.xlu0 %v1269, 88
        %v1975 = vpop.permute.xlu0 %1974
        %1976 = vrot.lane.b32.xlu0 %v1274, 88
        %v1977 = vpop.permute.xlu0 %1976
        %1978 = vrot.lane.b32.xlu0 %v1279, 88
        %v1979 = vpop.permute.xlu0 %1978
        %1980 = vrot.lane.b32.xlu0 %v1284, 88
        %v1981 = vpop.permute.xlu0 %1980
        %1982 = vrot.lane.b32.xlu0 %v1289, 88
        %v1983 = vpop.permute.xlu0 %1982
        %1984 = vrot.lane.b32.xlu0 %v1294, 88
        %v1985 = vpop.permute.xlu0 %1984
        %1986 = vrot.lane.b32.xlu0 %v1299, 88
        %v1987 = vpop.permute.xlu0 %1986
        %1988 = vrot.lane.b32.xlu0 %v1304, 88
        %v1989 = vpop.permute.xlu0 %1988
        %1990 = vrot.lane.b32.xlu0 %v1309, 88
        %v1991 = vpop.permute.xlu0 %1990
        %1992 = vrot.lane.b32.xlu0 %v1314, 88
        %v1993 = vpop.permute.xlu0 %1992
        %1994 = vrot.lane.b32.xlu0 %v1319, 88
        %v1995 = vpop.permute.xlu0 %1994
        %v1996 = vsel %vm347, %v1933, 0
        %v1998 = vsel %vm347, %v1935, 0
        %v2000 = vsel %vm347, %v1937, 0
        %v2002 = vsel %vm347, %v1939, 0
        %v2004 = vsel %vm347, %v1941, 0
        %v2006 = vsel %vm347, %v1943, 0
        %v2008 = vsel %vm347, %v1945, 0
        %v2010 = vsel %vm347, %v1947, 0
        %v2012 = vsel %vm347, %v1949, 0
        %v2014 = vsel %vm347, %v1951, 0
        %v2016 = vsel %vm347, %v1953, 0
        %v2018 = vsel %vm347, %v1955, 0
        %v2020 = vsel %vm347, %v1957, 0
        %v2022 = vsel %vm347, %v1959, 0
        %v2024 = vsel %vm347, %v1961, 0
        %v2026 = vsel %vm347, %v1963, 0
        %v2028 = vsel %vm347, %v1965, 0
        %v2030 = vsel %vm347, %v1967, 0
        %v2032 = vsel %vm347, %v1969, 0
        %v2034 = vsel %vm347, %v1971, 0
        %v2036 = vsel %vm347, %v1973, 0
        %v2038 = vsel %vm347, %v1975, 0
        %v2040 = vsel %vm347, %v1977, 0
        %v2042 = vsel %vm347, %v1979, 0
        %v2044 = vsel %vm347, %v1981, 0
        %v2046 = vsel %vm347, %v1983, 0
        %v2048 = vsel %vm347, %v1985, 0
        %v2050 = vsel %vm347, %v1987, 0
        %v2052 = vsel %vm347, %v1989, 0
        %v2054 = vsel %vm347, %v1991, 0
        %v2056 = vsel %vm347, %v1993, 0
        %v2058 = vsel %vm347, %v1995, 0
        %2060 = vmatprep.subr.mxu0 0.0
        %2061 = vmatpush1.xpose.msra.mxu0 %v2028
        %2062 = vmatprep.subr.mxu0 0.0
        %2063 = vmatpush1.xpose.msra.mxu0 %v2030
        %2064 = vmatprep.subr.mxu0 0.0
        %2065 = vmatpush1.xpose.msra.mxu0 %v2032
        %2066 = vmatprep.subr.mxu0 0.0
        %2067 = vmatpush1.xpose.msra.mxu0 %v2034
        %2068 = vmatprep.subr.mxu0 0.0
        %2069 = vmatpush1.xpose.msra.mxu0 %v2036
        %2070 = vmatprep.subr.mxu0 0.0
        %2071 = vmatpush1.xpose.msra.mxu0 %v2038
        %2072 = vmatprep.subr.mxu0 0.0
        %2073 = vmatpush1.xpose.msra.mxu0 %v2040
        %2074 = vmatprep.subr.mxu0 0.0
        %2075 = vmatpush1.xpose.msra.mxu0 %v2042
        %2076 = vmatprep.subr.mxu0 0.0
        %2077 = vmatpush1.xpose.msra.mxu0 %v2044
        %2078 = vmatprep.subr.mxu0 0.0
        %2079 = vmatpush1.xpose.msra.mxu0 %v2046
        %2080 = vmatprep.subr.mxu0 0.0
        %2081 = vmatpush1.xpose.msra.mxu0 %v2048
        %2082 = vmatprep.subr.mxu0 0.0
        %2083 = vmatpush1.xpose.msra.mxu0 %v2050
        %2084 = vmatprep.subr.mxu0 0.0
        %2085 = vmatpush1.xpose.msra.mxu0 %v2052
        %2086 = vmatprep.subr.mxu0 0.0
        %2087 = vmatpush1.xpose.msra.mxu0 %v2054
        %2088 = vmatprep.subr.mxu0 0.0
        %2089 = vmatpush1.xpose.msra.mxu0 %v2056
        %2090 = vmatprep.subr.mxu0 0.0
        %2091 = vmatpush1.xpose.msra.mxu0 %v2058
        %2092 = vmatprep.subr.mxu0 0.0
        %2093 = vmatpush1.xpose.msra.mxu0 0.0
        %2094 = vmatprep.subr.mxu0 0.0
        %2095 = vmatpush1.xpose.msra.mxu0 0.0
        %2096 = vmatprep.subr.mxu0 0.0
        %2097 = vmatpush1.xpose.msra.mxu0 0.0
        %2098 = vmatprep.subr.mxu0 0.0
        %2099 = vmatpush1.xpose.msra.mxu0 0.0
        %2100 = vmatprep.subr.mxu0 0.0
        %2101 = vmatpush1.xpose.msra.mxu0 0.0
        %2102 = vmatprep.subr.mxu0 0.0
        %2103 = vmatpush1.xpose.msra.mxu0 0.0
        %2104 = vmatprep.subr.mxu0 0.0
        %2105 = vmatpush1.xpose.msra.mxu0 0.0
        %2106 = vmatprep.subr.mxu0 0.0
        %2107 = vmatpush1.xpose.msra.mxu0 0.0
        %2108 = vmatprep.subr.mxu0 0.0
        %2109 = vmatpush1.xpose.msra.mxu0 0.0
        %2110 = vmatprep.subr.mxu0 0.0
        %2111 = vmatpush1.xpose.msra.mxu0 0.0
        %2112 = vmatprep.subr.mxu0 0.0
        %2113 = vmatpush1.xpose.msra.mxu0 0.0
        %2114 = vmatprep.subr.mxu0 0.0
        %2115 = vmatpush1.xpose.msra.mxu0 0.0
        %2116 = vmatprep.subr.mxu0 0.0
        %2117 = vmatpush1.xpose.msra.mxu0 0.0
        %2118 = vmatprep.subr.mxu0 0.0
        %2119 = vmatpush1.xpose.msra.mxu0 0.0
        %2120 = vmatprep.subr.mxu0 0.0
        %2121 = vmatpush1.xpose.msra.mxu0 0.0
        %2122 = vmatprep.subr.mxu0 0.0
        %2123 = vmatpush1.xpose.msra.mxu0 0.0
        %2124 = vmatprep.mubr.f32.mxu0 0.0
        %2125 = vmatmul.mubr.f32.gmra.mrb[0].mxu0 %v1996
        %v2126 = vpop.f32.mrb[0].mxu0
        %v2127 = vadd.f32 %v237, %v2126
        %v2128 = vpop.f32.mrb[0].mxu0
        %2129 = vmatprep.mubr.f32.mxu0 0.0
        %2130 = vmatmul.mubr.f32.gmra.mrb[0].mxu0 %v1998
        %v2131 = vpop.f32.mrb[0].mxu0
        %v2132 = vadd.f32 %v238, %v2131
        %v2133 = vpop.f32.mrb[0].mxu0
        %2134 = vmatprep.mubr.f32.mxu0 0.0
        %2135 = vmatmul.mubr.f32.gmra.mrb[0].mxu0 %v2000
        %v2136 = vpop.f32.mrb[0].mxu0
        %v2137 = vadd.f32 %v239, %v2136
        %v2138 = vpop.f32.mrb[0].mxu0
        %2139 = vmatprep.mubr.f32.mxu0 0.0
        %2140 = vmatmul.mubr.f32.gmra.mrb[0].mxu0 %v2002
        %v2141 = vpop.f32.mrb[0].mxu0
        %v2142 = vadd.f32 %v240, %v2141
        %v2143 = vpop.f32.mrb[0].mxu0
        %2144 = vmatprep.mubr.f32.mxu0 0.0
        %2145 = vmatmul.mubr.f32.gmra.mrb[0].mxu0 %v2004
        %v2146 = vpop.f32.mrb[0].mxu0
        %v2147 = vadd.f32 %v241, %v2146
        %v2148 = vpop.f32.mrb[0].mxu0
        %2149 = vmatprep.mubr.f32.mxu0 0.0
        %2150 = vmatmul.mubr.f32.gmra.mrb[0].mxu0 %v2006
        %v2151 = vpop.f32.mrb[0].mxu0
        %v2152 = vadd.f32 %v242, %v2151
        %v2153 = vpop.f32.mrb[0].mxu0
        %2154 = vmatprep.mubr.f32.mxu0 0.0
        %2155 = vmatmul.mubr.f32.gmra.mrb[0].mxu0 %v2008
        %v2156 = vpop.f32.mrb[0].mxu0
        %v2157 = vadd.f32 %v243, %v2156
        %v2158 = vpop.f32.mrb[0].mxu0
        %2159 = vmatprep.mubr.f32.mxu0 0.0
        %2160 = vmatmul.mubr.f32.gmra.mrb[0].mxu0 %v2010
        %v2161 = vpop.f32.mrb[0].mxu0
        %v2162 = vadd.f32 %v244, %v2161
        %v2163 = vpop.f32.mrb[0].mxu0
        %2164 = vmatprep.mubr.f32.mxu0 0.0
        %2165 = vmatmul.mubr.f32.gmra.mrb[0].mxu0 %v2012
        %v2166 = vpop.f32.mrb[0].mxu0
        %v2167 = vadd.f32 %v245, %v2166
        %v2168 = vpop.f32.mrb[0].mxu0
        %2169 = vmatprep.mubr.f32.mxu0 0.0
        %2170 = vmatmul.mubr.f32.gmra.mrb[0].mxu0 %v2014
        %v2171 = vpop.f32.mrb[0].mxu0
        %v2172 = vadd.f32 %v246, %v2171
        %v2173 = vpop.f32.mrb[0].mxu0
        %2174 = vmatprep.mubr.f32.mxu0 0.0
        %2175 = vmatmul.mubr.f32.gmra.mrb[0].mxu0 %v2016
        %v2176 = vpop.f32.mrb[0].mxu0
        %v2177 = vadd.f32 %v247, %v2176
        %v2178 = vpop.f32.mrb[0].mxu0
        %2179 = vmatprep.mubr.f32.mxu0 0.0
        %2180 = vmatmul.mubr.f32.gmra.mrb[0].mxu0 %v2018
        %v2181 = vpop.f32.mrb[0].mxu0
        %v2182 = vadd.f32 %v248, %v2181
        %v2183 = vpop.f32.mrb[0].mxu0
        %2184 = vmatprep.mubr.f32.mxu0 0.0
        %2185 = vmatmul.mubr.f32.gmra.mrb[0].mxu0 %v2020
        %v2186 = vpop.f32.mrb[0].mxu0
        %v2187 = vadd.f32 %v249, %v2186
        %v2188 = vpop.f32.mrb[0].mxu0
        %2189 = vmatprep.mubr.f32.mxu0 0.0
        %2190 = vmatmul.mubr.f32.gmra.mrb[0].mxu0 %v2022
        %v2191 = vpop.f32.mrb[0].mxu0
        %v2192 = vadd.f32 %v250, %v2191
        %v2193 = vpop.f32.mrb[0].mxu0
        %2194 = vmatprep.mubr.f32.mxu0 0.0
        %2195 = vmatmul.mubr.f32.gmra.mrb[0].mxu0 %v2024
        %v2196 = vpop.f32.mrb[0].mxu0
        %v2197 = vadd.f32 %v251, %v2196
        %v2198 = vpop.f32.mrb[0].mxu0
        %2199 = vmatprep.mubr.f32.mxu0 0.0
        %2200 = vmatmul.mubr.f32.gmra.mrb[0].mxu0 %v2026
        %v2201 = vpop.f32.mrb[0].mxu0
        %v2202 = vadd.f32 %v252, %v2201
        %v2203 = vpop.f32.mrb[0].mxu0
        %2204 = vdwg.mxu0
        %2205 = vmax.xlane.f32.xlu0 %v2127
        %v2206 = vpop.xlane.xlu0 %2205
        %2207 = vmax.xlane.f32.xlu0 %v2132
        %v2208 = vpop.xlane.xlu0 %2207
        %2209 = vmax.xlane.f32.xlu0 %v2137
        %v2210 = vpop.xlane.xlu0 %2209
        %2211 = vmax.xlane.f32.xlu0 %v2142
        %v2212 = vpop.xlane.xlu0 %2211
        %2213 = vmax.xlane.f32.xlu0 %v2147
        %v2214 = vpop.xlane.xlu0 %2213
        %2215 = vmax.xlane.f32.xlu0 %v2152
        %v2216 = vpop.xlane.xlu0 %2215
        %2217 = vmax.xlane.f32.xlu0 %v2157
        %v2218 = vpop.xlane.xlu0 %2217
        %2219 = vmax.xlane.f32.xlu0 %v2162
        %v2220 = vpop.xlane.xlu0 %2219
        %2221 = vmax.xlane.f32.xlu0 %v2167
        %v2222 = vpop.xlane.xlu0 %2221
        %2223 = vmax.xlane.f32.xlu0 %v2172
        %v2224 = vpop.xlane.xlu0 %2223
        %2225 = vmax.xlane.f32.xlu0 %v2177
        %v2226 = vpop.xlane.xlu0 %2225
        %2227 = vmax.xlane.f32.xlu0 %v2182
        %v2228 = vpop.xlane.xlu0 %2227
        %2229 = vmax.xlane.f32.xlu0 %v2187
        %v2230 = vpop.xlane.xlu0 %2229
        %2231 = vmax.xlane.f32.xlu0 %v2192
        %v2232 = vpop.xlane.xlu0 %2231
        %2233 = vmax.xlane.f32.xlu0 %v2197
        %v2234 = vpop.xlane.xlu0 %2233
        %2235 = vmax.xlane.f32.xlu0 %v2202
        %v2236 = vpop.xlane.xlu0 %2235
        %v2237 = vsub.f32 %v2127, %v2206
        %v2238 = vsub.f32 %v2132, %v2208
        %v2239 = vsub.f32 %v2137, %v2210
        %v2240 = vsub.f32 %v2142, %v2212
        %v2241 = vsub.f32 %v2147, %v2214
        %v2242 = vsub.f32 %v2152, %v2216
        %v2243 = vsub.f32 %v2157, %v2218
        %v2244 = vsub.f32 %v2162, %v2220
        %v2245 = vsub.f32 %v2167, %v2222
        %v2246 = vsub.f32 %v2172, %v2224
        %v2247 = vsub.f32 %v2177, %v2226
        %v2248 = vsub.f32 %v2182, %v2228
        %v2249 = vsub.f32 %v2187, %v2230
        %v2250 = vsub.f32 %v2192, %v2232
        %v2251 = vsub.f32 %v2197, %v2234
        %v2252 = vsub.f32 %v2202, %v2236
        %v2253 = vmul.f32 %v2237, 1.442695
        %v2254 = vpow.pop %v2253
        %v2255 = vmul.f32 %v2238, 1.442695
        %v2256 = vpow.pop %v2255
        %v2257 = vmul.f32 %v2239, 1.442695
        %v2258 = vpow.pop %v2257
        %v2259 = vmul.f32 %v2240, 1.442695
        %v2260 = vpow.pop %v2259
        %v2261 = vmul.f32 %v2241, 1.442695
        %v2262 = vpow.pop %v2261
        %v2263 = vmul.f32 %v2242, 1.442695
        %v2264 = vpow.pop %v2263
        %v2265 = vmul.f32 %v2243, 1.442695
        %v2266 = vpow.pop %v2265
        %v2267 = vmul.f32 %v2244, 1.442695
        %v2268 = vpow.pop %v2267
        %v2269 = vmul.f32 %v2245, 1.442695
        %v2270 = vpow.pop %v2269
        %v2271 = vmul.f32 %v2246, 1.442695
        %v2272 = vpow.pop %v2271
        %v2273 = vmul.f32 %v2247, 1.442695
        %v2274 = vpow.pop %v2273
        %v2275 = vmul.f32 %v2248, 1.442695
        %v2276 = vpow.pop %v2275
        %v2277 = vmul.f32 %v2249, 1.442695
        %v2278 = vpow.pop %v2277
        %v2279 = vmul.f32 %v2250, 1.442695
        %v2280 = vpow.pop %v2279
        %v2281 = vmul.f32 %v2251, 1.442695
        %v2282 = vpow.pop %v2281
        %v2283 = vmul.f32 %v2252, 1.442695
        %v2284 = vpow.pop %v2283
        %2285 = vadd.xlane.f32.xlu0 %v2254
        %v2286 = vpop.xlane.xlu0 %2285
        %2287 = vadd.xlane.f32.xlu0 %v2256
        %v2288 = vpop.xlane.xlu0 %2287
        %2289 = vadd.xlane.f32.xlu0 %v2258
        %v2290 = vpop.xlane.xlu0 %2289
        %2291 = vadd.xlane.f32.xlu0 %v2260
        %v2292 = vpop.xlane.xlu0 %2291
        %2293 = vadd.xlane.f32.xlu0 %v2262
        %v2294 = vpop.xlane.xlu0 %2293
        %2295 = vadd.xlane.f32.xlu0 %v2264
        %v2296 = vpop.xlane.xlu0 %2295
        %2297 = vadd.xlane.f32.xlu0 %v2266
        %v2298 = vpop.xlane.xlu0 %2297
        %2299 = vadd.xlane.f32.xlu0 %v2268
        %v2300 = vpop.xlane.xlu0 %2299
        %2301 = vadd.xlane.f32.xlu0 %v2270
        %v2302 = vpop.xlane.xlu0 %2301
        %2303 = vadd.xlane.f32.xlu0 %v2272
        %v2304 = vpop.xlane.xlu0 %2303
        %2305 = vadd.xlane.f32.xlu0 %v2274
        %v2306 = vpop.xlane.xlu0 %2305
        %2307 = vadd.xlane.f32.xlu0 %v2276
        %v2308 = vpop.xlane.xlu0 %2307
        %2309 = vadd.xlane.f32.xlu0 %v2278
        %v2310 = vpop.xlane.xlu0 %2309
        %2311 = vadd.xlane.f32.xlu0 %v2280
        %v2312 = vpop.xlane.xlu0 %2311
        %2313 = vadd.xlane.f32.xlu0 %v2282
        %v2314 = vpop.xlane.xlu0 %2313
        %2315 = vadd.xlane.f32.xlu0 %v2284
        %v2316 = vpop.xlane.xlu0 %2315
        %v2317 = vrcp.pop %v2286
        %v2318 = vmul.f32 %v2254, %v2317
        %v2319 = vrcp.pop %v2288
        %v2320 = vmul.f32 %v2256, %v2319
        %v2321 = vrcp.pop %v2290
        %v2322 = vmul.f32 %v2258, %v2321
        %v2323 = vrcp.pop %v2292
        %v2324 = vmul.f32 %v2260, %v2323
        %v2325 = vrcp.pop %v2294
        %v2326 = vmul.f32 %v2262, %v2325
        %v2327 = vrcp.pop %v2296
        %v2328 = vmul.f32 %v2264, %v2327
        %v2329 = vrcp.pop %v2298
        %v2330 = vmul.f32 %v2266, %v2329
        %v2331 = vrcp.pop %v2300
        %v2332 = vmul.f32 %v2268, %v2331
        %v2333 = vrcp.pop %v2302
        %v2334 = vmul.f32 %v2270, %v2333
        %v2335 = vrcp.pop %v2304
        %v2336 = vmul.f32 %v2272, %v2335
        %v2337 = vrcp.pop %v2306
        %v2338 = vmul.f32 %v2274, %v2337
        %v2339 = vrcp.pop %v2308
        %v2340 = vmul.f32 %v2276, %v2339
        %v2341 = vrcp.pop %v2310
        %v2342 = vmul.f32 %v2278, %v2341
        %v2343 = vrcp.pop %v2312
        %v2344 = vmul.f32 %v2280, %v2343
        %v2345 = vrcp.pop %v2314
        %v2346 = vmul.f32 %v2282, %v2345
        %v2347 = vrcp.pop %v2316
        %v2348 = vmul.f32 %v2284, %v2347
        %2349 = vrot.lane.b32.xlu0 %v1244, 56
        %v2350 = vpop.permute.xlu0 %2349
        %2351 = vrot.lane.b32.xlu0 %v1249, 56
        %v2352 = vpop.permute.xlu0 %2351
        %2353 = vrot.lane.b32.xlu0 %v1254, 56
        %v2354 = vpop.permute.xlu0 %2353
        %2355 = vrot.lane.b32.xlu0 %v1259, 56
        %v2356 = vpop.permute.xlu0 %2355
        %2357 = vrot.lane.b32.xlu0 %v1264, 56
        %v2358 = vpop.permute.xlu0 %2357
        %2359 = vrot.lane.b32.xlu0 %v1269, 56
        %v2360 = vpop.permute.xlu0 %2359
        %2361 = vrot.lane.b32.xlu0 %v1274, 56
        %v2362 = vpop.permute.xlu0 %2361
        %2363 = vrot.lane.b32.xlu0 %v1279, 56
        %v2364 = vpop.permute.xlu0 %2363
        %2365 = vrot.lane.b32.xlu0 %v1284, 56
        %v2366 = vpop.permute.xlu0 %2365
        %2367 = vrot.lane.b32.xlu0 %v1289, 56
        %v2368 = vpop.permute.xlu0 %2367
        %2369 = vrot.lane.b32.xlu0 %v1294, 56
        %v2370 = vpop.permute.xlu0 %2369
        %2371 = vrot.lane.b32.xlu0 %v1299, 56
        %v2372 = vpop.permute.xlu0 %2371
        %2373 = vrot.lane.b32.xlu0 %v1304, 56
        %v2374 = vpop.permute.xlu0 %2373
        %2375 = vrot.lane.b32.xlu0 %v1309, 56
        %v2376 = vpop.permute.xlu0 %2375
        %2377 = vrot.lane.b32.xlu0 %v1314, 56
        %v2378 = vpop.permute.xlu0 %2377
        %2379 = vrot.lane.b32.xlu0 %v1319, 56
        %v2380 = vpop.permute.xlu0 %2379
        %2397 = vmatprep.subr.mxu0 0.0
        %2398 = vmatpush1.msra.mxu0 %v2350
        %2399 = vmatprep.subr.mxu0 0.0
        %2400 = vmatpush1.msra.mxu0 %v2352
        %2401 = vmatprep.subr.mxu0 0.0
        %2402 = vmatpush1.msra.mxu0 %v2354
        %2403 = vmatprep.subr.mxu0 0.0
        %2404 = vmatpush1.msra.mxu0 %v2356
        %2405 = vmatprep.subr.mxu0 0.0
        %2406 = vmatpush1.msra.mxu0 %v2358
        %2407 = vmatprep.subr.mxu0 0.0
        %2408 = vmatpush1.msra.mxu0 %v2360
        %2409 = vmatprep.subr.mxu0 0.0
        %2410 = vmatpush1.msra.mxu0 %v2362
        %2411 = vmatprep.subr.mxu0 0.0
        %2412 = vmatpush1.msra.mxu0 %v2364
        %2413 = vmatprep.subr.mxu0 0.0
        %2414 = vmatpush1.msra.mxu0 %v2366
        %2415 = vmatprep.subr.mxu0 0.0
        %2416 = vmatpush1.msra.mxu0 %v2368
        %2417 = vmatprep.subr.mxu0 0.0
        %2418 = vmatpush1.msra.mxu0 %v2370
        %2419 = vmatprep.subr.mxu0 0.0
        %2420 = vmatpush1.msra.mxu0 %v2372
        %2421 = vmatprep.subr.mxu0 0.0
        %2422 = vmatpush1.msra.mxu0 %v2374
        %2423 = vmatprep.subr.mxu0 0.0
        %2424 = vmatpush1.msra.mxu0 %v2376
        %2425 = vmatprep.subr.mxu0 0.0
        %2426 = vmatpush1.msra.mxu0 %v2378
        %2427 = vmatprep.subr.mxu0 0.0
        %2428 = vmatpush1.msra.mxu0 %v2380
        %2429 = vmatprep.subr.mxu0 0.0
        %2430 = vmatpush1.msra.mxu0 0.0
        %2431 = vmatprep.subr.mxu0 0.0
        %2432 = vmatpush1.msra.mxu0 0.0
        %2433 = vmatprep.subr.mxu0 0.0
        %2434 = vmatpush1.msra.mxu0 0.0
        %2435 = vmatprep.subr.mxu0 0.0
        %2436 = vmatpush1.msra.mxu0 0.0
        %2437 = vmatprep.subr.mxu0 0.0
        %2438 = vmatpush1.msra.mxu0 0.0
        %2439 = vmatprep.subr.mxu0 0.0
        %2440 = vmatpush1.msra.mxu0 0.0
        %2441 = vmatprep.subr.mxu0 0.0
        %2442 = vmatpush1.msra.mxu0 0.0
        %2443 = vmatprep.subr.mxu0 0.0
        %2444 = vmatpush1.msra.mxu0 0.0
        %2445 = vmatprep.subr.mxu0 0.0
        %2446 = vmatpush1.msra.mxu0 0.0
        %2447 = vmatprep.subr.mxu0 0.0
        %2448 = vmatpush1.msra.mxu0 0.0
        %2449 = vmatprep.subr.mxu0 0.0
        %2450 = vmatpush1.msra.mxu0 0.0
        %2451 = vmatprep.subr.mxu0 0.0
        %2452 = vmatpush1.msra.mxu0 0.0
        %2453 = vmatprep.subr.mxu0 0.0
        %2454 = vmatpush1.msra.mxu0 0.0
        %2455 = vmatprep.subr.mxu0 0.0
        %2456 = vmatpush1.msra.mxu0 0.0
        %2457 = vmatprep.subr.mxu0 0.0
        %2458 = vmatpush1.msra.mxu0 0.0
        %2459 = vmatprep.subr.mxu0 0.0
        %2460 = vmatpush1.msra.mxu0 0.0
        %2461 = vmatprep.mubr.f32.mxu0 0.0
        %2462 = vmatmul.mubr.f32.gmra.mrb[0].mxu0 %v2318
        %v2463 = vpop.f32.mrb[0].mxu0
        %v2464 = vadd.f32 0.0, %v2463
        %v2465 = vpop.f32.mrb[0].mxu0
        %2466 = vmatprep.mubr.f32.mxu0 0.0
        %2467 = vmatmul.mubr.f32.gmra.mrb[0].mxu0 %v2320
        %v2468 = vpop.f32.mrb[0].mxu0
        %v2469 = vadd.f32 0.0, %v2468
        %v2470 = vpop.f32.mrb[0].mxu0
        %2471 = vmatprep.mubr.f32.mxu0 0.0
        %2472 = vmatmul.mubr.f32.gmra.mrb[0].mxu0 %v2322
        %v2473 = vpop.f32.mrb[0].mxu0
        %v2474 = vadd.f32 0.0, %v2473
        %v2475 = vpop.f32.mrb[0].mxu0
        %2476 = vmatprep.mubr.f32.mxu0 0.0
        %2477 = vmatmul.mubr.f32.gmra.mrb[0].mxu0 %v2324
        %v2478 = vpop.f32.mrb[0].mxu0
        %v2479 = vadd.f32 0.0, %v2478
        %v2480 = vpop.f32.mrb[0].mxu0
        %2481 = vmatprep.mubr.f32.mxu0 0.0
        %2482 = vmatmul.mubr.f32.gmra.mrb[0].mxu0 %v2326
        %v2483 = vpop.f32.mrb[0].mxu0
        %v2484 = vadd.f32 0.0, %v2483
        %v2485 = vpop.f32.mrb[0].mxu0
        %2486 = vmatprep.mubr.f32.mxu0 0.0
        %2487 = vmatmul.mubr.f32.gmra.mrb[0].mxu0 %v2328
        %v2488 = vpop.f32.mrb[0].mxu0
        %v2489 = vadd.f32 0.0, %v2488
        %v2490 = vpop.f32.mrb[0].mxu0
        %2491 = vmatprep.mubr.f32.mxu0 0.0
        %2492 = vmatmul.mubr.f32.gmra.mrb[0].mxu0 %v2330
        %v2493 = vpop.f32.mrb[0].mxu0
        %v2494 = vadd.f32 0.0, %v2493
        %v2495 = vpop.f32.mrb[0].mxu0
        %2496 = vmatprep.mubr.f32.mxu0 0.0
        %2497 = vmatmul.mubr.f32.gmra.mrb[0].mxu0 %v2332
        %v2498 = vpop.f32.mrb[0].mxu0
        %v2499 = vadd.f32 0.0, %v2498
        %v2500 = vpop.f32.mrb[0].mxu0
        %2501 = vmatprep.mubr.f32.mxu0 0.0
        %2502 = vmatmul.mubr.f32.gmra.mrb[0].mxu0 %v2334
        %v2503 = vpop.f32.mrb[0].mxu0
        %v2504 = vadd.f32 0.0, %v2503
        %v2505 = vpop.f32.mrb[0].mxu0
        %2506 = vmatprep.mubr.f32.mxu0 0.0
        %2507 = vmatmul.mubr.f32.gmra.mrb[0].mxu0 %v2336
        %v2508 = vpop.f32.mrb[0].mxu0
        %v2509 = vadd.f32 0.0, %v2508
        %v2510 = vpop.f32.mrb[0].mxu0
        %2511 = vmatprep.mubr.f32.mxu0 0.0
        %2512 = vmatmul.mubr.f32.gmra.mrb[0].mxu0 %v2338
        %v2513 = vpop.f32.mrb[0].mxu0
        %v2514 = vadd.f32 0.0, %v2513
        %v2515 = vpop.f32.mrb[0].mxu0
        %2516 = vmatprep.mubr.f32.mxu0 0.0
        %2517 = vmatmul.mubr.f32.gmra.mrb[0].mxu0 %v2340
        %v2518 = vpop.f32.mrb[0].mxu0
        %v2519 = vadd.f32 0.0, %v2518
        %v2520 = vpop.f32.mrb[0].mxu0
        %2521 = vmatprep.mubr.f32.mxu0 0.0
        %2522 = vmatmul.mubr.f32.gmra.mrb[0].mxu0 %v2342
        %v2523 = vpop.f32.mrb[0].mxu0
        %v2524 = vadd.f32 0.0, %v2523
        %v2525 = vpop.f32.mrb[0].mxu0
        %2526 = vmatprep.mubr.f32.mxu0 0.0
        %2527 = vmatmul.mubr.f32.gmra.mrb[0].mxu0 %v2344
        %v2528 = vpop.f32.mrb[0].mxu0
        %v2529 = vadd.f32 0.0, %v2528
        %v2530 = vpop.f32.mrb[0].mxu0
        %2531 = vmatprep.mubr.f32.mxu0 0.0
        %2532 = vmatmul.mubr.f32.gmra.mrb[0].mxu0 %v2346
        %v2533 = vpop.f32.mrb[0].mxu0
        %v2534 = vadd.f32 0.0, %v2533
        %v2535 = vpop.f32.mrb[0].mxu0
        %2536 = vmatprep.mubr.f32.mxu0 0.0
        %2537 = vmatmul.mubr.f32.gmra.mrb[0].mxu0 %v2348
        %v2538 = vpop.f32.mrb[0].mxu0
        %v2539 = vadd.f32 0.0, %v2538
        %v2540 = vpop.f32.mrb[0].mxu0
        %2541 = vdwg.mxu0
        %2558 = vrot.lane.b32.xlu0 %v2464, 8
        %v2559 = vpop.permute.xlu0 %2558
        %2560 = vrot.lane.b32.xlu0 %v2469, 8
        %v2561 = vpop.permute.xlu0 %2560
        %2562 = vrot.lane.b32.xlu0 %v2474, 8
        %v2563 = vpop.permute.xlu0 %2562
        %2564 = vrot.lane.b32.xlu0 %v2479, 8
        %v2565 = vpop.permute.xlu0 %2564
        %2566 = vrot.lane.b32.xlu0 %v2484, 8
        %v2567 = vpop.permute.xlu0 %2566
        %2568 = vrot.lane.b32.xlu0 %v2489, 8
        %v2569 = vpop.permute.xlu0 %2568
        %2570 = vrot.lane.b32.xlu0 %v2494, 8
        %v2571 = vpop.permute.xlu0 %2570
        %2572 = vrot.lane.b32.xlu0 %v2499, 8
        %v2573 = vpop.permute.xlu0 %2572
        %2574 = vrot.lane.b32.xlu0 %v2504, 8
        %v2575 = vpop.permute.xlu0 %2574
        %2576 = vrot.lane.b32.xlu0 %v2509, 8
        %v2577 = vpop.permute.xlu0 %2576
        %2578 = vrot.lane.b32.xlu0 %v2514, 8
        %v2579 = vpop.permute.xlu0 %2578
        %2580 = vrot.lane.b32.xlu0 %v2519, 8
        %v2581 = vpop.permute.xlu0 %2580
        %2582 = vrot.lane.b32.xlu0 %v2524, 8
        %v2583 = vpop.permute.xlu0 %2582
        %2584 = vrot.lane.b32.xlu0 %v2529, 8
        %v2585 = vpop.permute.xlu0 %2584
        %2586 = vrot.lane.b32.xlu0 %v2534, 8
        %v2587 = vpop.permute.xlu0 %2586
        %2588 = vrot.lane.b32.xlu0 %v2539, 8
        %v2589 = vpop.permute.xlu0 %2588
        %vm2606 = vcmask 130112
        %2607 = vst.msk [vmem:[#allocation2] sm:$0xff] %vm2606, %v2559
        %2608 = vst.msk [vmem:[#allocation2 + $0x8] sm:$0xff] %vm2606, %v2561
        %2609 = vst.msk [vmem:[#allocation2 + $0x10] sm:$0xff] %vm2606, %v2563
        %2610 = vst.msk [vmem:[#allocation2 + $0x18] sm:$0xff] %vm2606, %v2565
        %2611 = vst.msk [vmem:[#allocation2 + $0x20] sm:$0xff] %vm2606, %v2567
        %2612 = vst.msk [vmem:[#allocation2 + $0x28] sm:$0xff] %vm2606, %v2569
        %2613 = vst.msk [vmem:[#allocation2 + $0x30] sm:$0xff] %vm2606, %v2571
        %2614 = vst.msk [vmem:[#allocation2 + $0x38] sm:$0xff] %vm2606, %v2573
        %2615 = vst.msk [vmem:[#allocation2 + $0x40] sm:$0xff] %vm2606, %v2575
        %2616 = vst.msk [vmem:[#allocation2 + $0x48] sm:$0xff] %vm2606, %v2577
        %2617 = vst.msk [vmem:[#allocation2 + $0x50] sm:$0xff] %vm2606, %v2579
        %2618 = vst.msk [vmem:[#allocation2 + $0x58] sm:$0xff] %vm2606, %v2581
        %2619 = vst.msk [vmem:[#allocation2 + $0x60] sm:$0xff] %vm2606, %v2583
        %2620 = vst.msk [vmem:[#allocation2 + $0x68] sm:$0xff] %vm2606, %v2585
        %2621 = vst.msk [vmem:[#allocation2 + $0x70] sm:$0xff] %vm2606, %v2587
        %2622 = vst.msk [vmem:[#allocation2 + $0x78] sm:$0xff] %vm2606, %v2589
        %2623 = vrot.lane.b32.xlu0 %v1244, 112
        %v2624 = vpop.permute.xlu0 %2623
        %2625 = vrot.lane.b32.xlu0 %v1249, 112
        %v2626 = vpop.permute.xlu0 %2625
        %2627 = vrot.lane.b32.xlu0 %v1254, 112
        %v2628 = vpop.permute.xlu0 %2627
        %2629 = vrot.lane.b32.xlu0 %v1259, 112
        %v2630 = vpop.permute.xlu0 %2629
        %2631 = vrot.lane.b32.xlu0 %v1264, 112
        %v2632 = vpop.permute.xlu0 %2631
        %2633 = vrot.lane.b32.xlu0 %v1269, 112
        %v2634 = vpop.permute.xlu0 %2633
        %2635 = vrot.lane.b32.xlu0 %v1274, 112
        %v2636 = vpop.permute.xlu0 %2635
        %2637 = vrot.lane.b32.xlu0 %v1279, 112
        %v2638 = vpop.permute.xlu0 %2637
        %2639 = vrot.lane.b32.xlu0 %v1284, 112
        %v2640 = vpop.permute.xlu0 %2639
        %2641 = vrot.lane.b32.xlu0 %v1289, 112
        %v2642 = vpop.permute.xlu0 %2641
        %2643 = vrot.lane.b32.xlu0 %v1294, 112
        %v2644 = vpop.permute.xlu0 %2643
        %2645 = vrot.lane.b32.xlu0 %v1299, 112
        %v2646 = vpop.permute.xlu0 %2645
        %2647 = vrot.lane.b32.xlu0 %v1304, 112
        %v2648 = vpop.permute.xlu0 %2647
        %2649 = vrot.lane.b32.xlu0 %v1309, 112
        %v2650 = vpop.permute.xlu0 %2649
        %2651 = vrot.lane.b32.xlu0 %v1314, 112
        %v2652 = vpop.permute.xlu0 %2651
        %2653 = vrot.lane.b32.xlu0 %v1319, 112
        %v2654 = vpop.permute.xlu0 %2653
        %2655 = vrot.lane.b32.xlu0 %v1244, 80
        %v2656 = vpop.permute.xlu0 %2655
        %2657 = vrot.lane.b32.xlu0 %v1249, 80
        %v2658 = vpop.permute.xlu0 %2657
        %2659 = vrot.lane.b32.xlu0 %v1254, 80
        %v2660 = vpop.permute.xlu0 %2659
        %2661 = vrot.lane.b32.xlu0 %v1259, 80
        %v2662 = vpop.permute.xlu0 %2661
        %2663 = vrot.lane.b32.xlu0 %v1264, 80
        %v2664 = vpop.permute.xlu0 %2663
        %2665 = vrot.lane.b32.xlu0 %v1269, 80
        %v2666 = vpop.permute.xlu0 %2665
        %2667 = vrot.lane.b32.xlu0 %v1274, 80
        %v2668 = vpop.permute.xlu0 %2667
        %2669 = vrot.lane.b32.xlu0 %v1279, 80
        %v2670 = vpop.permute.xlu0 %2669
        %2671 = vrot.lane.b32.xlu0 %v1284, 80
        %v2672 = vpop.permute.xlu0 %2671
        %2673 = vrot.lane.b32.xlu0 %v1289, 80
        %v2674 = vpop.permute.xlu0 %2673
        %2675 = vrot.lane.b32.xlu0 %v1294, 80
        %v2676 = vpop.permute.xlu0 %2675
        %2677 = vrot.lane.b32.xlu0 %v1299, 80
        %v2678 = vpop.permute.xlu0 %2677
        %2679 = vrot.lane.b32.xlu0 %v1304, 80
        %v2680 = vpop.permute.xlu0 %2679
        %2681 = vrot.lane.b32.xlu0 %v1309, 80
        %v2682 = vpop.permute.xlu0 %2681
        %2683 = vrot.lane.b32.xlu0 %v1314, 80
        %v2684 = vpop.permute.xlu0 %2683
        %2685 = vrot.lane.b32.xlu0 %v1319, 80
        %v2686 = vpop.permute.xlu0 %2685
        %v2687 = vsel %vm347, %v2624, 0
        %v2689 = vsel %vm347, %v2626, 0
        %v2691 = vsel %vm347, %v2628, 0
        %v2693 = vsel %vm347, %v2630, 0
        %v2695 = vsel %vm347, %v2632, 0
        %v2697 = vsel %vm347, %v2634, 0
        %v2699 = vsel %vm347, %v2636, 0
        %v2701 = vsel %vm347, %v2638, 0
        %v2703 = vsel %vm347, %v2640, 0
        %v2705 = vsel %vm347, %v2642, 0
        %v2707 = vsel %vm347, %v2644, 0
        %v2709 = vsel %vm347, %v2646, 0
        %v2711 = vsel %vm347, %v2648, 0
        %v2713 = vsel %vm347, %v2650, 0
        %v2715 = vsel %vm347, %v2652, 0
        %v2717 = vsel %vm347, %v2654, 0
        %v2719 = vsel %vm347, %v2656, 0
        %v2721 = vsel %vm347, %v2658, 0
        %v2723 = vsel %vm347, %v2660, 0
        %v2725 = vsel %vm347, %v2662, 0
        %v2727 = vsel %vm347, %v2664, 0
        %v2729 = vsel %vm347, %v2666, 0
        %v2731 = vsel %vm347, %v2668, 0
        %v2733 = vsel %vm347, %v2670, 0
        %v2735 = vsel %vm347, %v2672, 0
        %v2737 = vsel %vm347, %v2674, 0
        %v2739 = vsel %vm347, %v2676, 0
        %v2741 = vsel %vm347, %v2678, 0
        %v2743 = vsel %vm347, %v2680, 0
        %v2745 = vsel %vm347, %v2682, 0
        %v2747 = vsel %vm347, %v2684, 0
        %v2749 = vsel %vm347, %v2686, 0
        %2751 = vmatprep.subr.mxu0 0.0
        %2752 = vmatpush1.xpose.msra.mxu0 %v2719
        %2753 = vmatprep.subr.mxu0 0.0
        %2754 = vmatpush1.xpose.msra.mxu0 %v2721
        %2755 = vmatprep.subr.mxu0 0.0
        %2756 = vmatpush1.xpose.msra.mxu0 %v2723
        %2757 = vmatprep.subr.mxu0 0.0
        %2758 = vmatpush1.xpose.msra.mxu0 %v2725
        %2759 = vmatprep.subr.mxu0 0.0
        %2760 = vmatpush1.xpose.msra.mxu0 %v2727
        %2761 = vmatprep.subr.mxu0 0.0
        %2762 = vmatpush1.xpose.msra.mxu0 %v2729
        %2763 = vmatprep.subr.mxu0 0.0
        %2764 = vmatpush1.xpose.msra.mxu0 %v2731
        %2765 = vmatprep.subr.mxu0 0.0
        %2766 = vmatpush1.xpose.msra.mxu0 %v2733
        %2767 = vmatprep.subr.mxu0 0.0
        %2768 = vmatpush1.xpose.msra.mxu0 %v2735
        %2769 = vmatprep.subr.mxu0 0.0
        %2770 = vmatpush1.xpose.msra.mxu0 %v2737
        %2771 = vmatprep.subr.mxu0 0.0
        %2772 = vmatpush1.xpose.msra.mxu0 %v2739
        %2773 = vmatprep.subr.mxu0 0.0
        %2774 = vmatpush1.xpose.msra.mxu0 %v2741
        %2775 = vmatprep.subr.mxu0 0.0
        %2776 = vmatpush1.xpose.msra.mxu0 %v2743
        %2777 = vmatprep.subr.mxu0 0.0
        %2778 = vmatpush1.xpose.msra.mxu0 %v2745
        %2779 = vmatprep.subr.mxu0 0.0
        %2780 = vmatpush1.xpose.msra.mxu0 %v2747
        %2781 = vmatprep.subr.mxu0 0.0
        %2782 = vmatpush1.xpose.msra.mxu0 %v2749
        %2783 = vmatprep.subr.mxu0 0.0
        %2784 = vmatpush1.xpose.msra.mxu0 0.0
        %2785 = vmatprep.subr.mxu0 0.0
        %2786 = vmatpush1.xpose.msra.mxu0 0.0
        %2787 = vmatprep.subr.mxu0 0.0
        %2788 = vmatpush1.xpose.msra.mxu0 0.0
        %2789 = vmatprep.subr.mxu0 0.0
        %2790 = vmatpush1.xpose.msra.mxu0 0.0
        %2791 = vmatprep.subr.mxu0 0.0
        %2792 = vmatpush1.xpose.msra.mxu0 0.0
        %2793 = vmatprep.subr.mxu0 0.0
        %2794 = vmatpush1.xpose.msra.mxu0 0.0
        %2795 = vmatprep.subr.mxu0 0.0
        %2796 = vmatpush1.xpose.msra.mxu0 0.0
        %2797 = vmatprep.subr.mxu0 0.0
        %2798 = vmatpush1.xpose.msra.mxu0 0.0
        %2799 = vmatprep.subr.mxu0 0.0
        %2800 = vmatpush1.xpose.msra.mxu0 0.0
        %2801 = vmatprep.subr.mxu0 0.0
        %2802 = vmatpush1.xpose.msra.mxu0 0.0
        %2803 = vmatprep.subr.mxu0 0.0
        %2804 = vmatpush1.xpose.msra.mxu0 0.0
        %2805 = vmatprep.subr.mxu0 0.0
        %2806 = vmatpush1.xpose.msra.mxu0 0.0
        %2807 = vmatprep.subr.mxu0 0.0
        %2808 = vmatpush1.xpose.msra.mxu0 0.0
        %2809 = vmatprep.subr.mxu0 0.0
        %2810 = vmatpush1.xpose.msra.mxu0 0.0
        %2811 = vmatprep.subr.mxu0 0.0
        %2812 = vmatpush1.xpose.msra.mxu0 0.0
        %2813 = vmatprep.subr.mxu0 0.0
        %2814 = vmatpush1.xpose.msra.mxu0 0.0
        %2815 = vmatprep.mubr.f32.mxu0 0.0
        %2816 = vmatmul.mubr.f32.gmra.mrb[0].mxu0 %v2687
        %v2817 = vpop.f32.mrb[0].mxu0
        %v2818 = vadd.f32 %v237, %v2817
        %v2819 = vpop.f32.mrb[0].mxu0
        %2820 = vmatprep.mubr.f32.mxu0 0.0
        %2821 = vmatmul.mubr.f32.gmra.mrb[0].mxu0 %v2689
        %v2822 = vpop.f32.mrb[0].mxu0
        %v2823 = vadd.f32 %v238, %v2822
        %v2824 = vpop.f32.mrb[0].mxu0
        %2825 = vmatprep.mubr.f32.mxu0 0.0
        %2826 = vmatmul.mubr.f32.gmra.mrb[0].mxu0 %v2691
        %v2827 = vpop.f32.mrb[0].mxu0
        %v2828 = vadd.f32 %v239, %v2827
        %v2829 = vpop.f32.mrb[0].mxu0
        %2830 = vmatprep.mubr.f32.mxu0 0.0
        %2831 = vmatmul.mubr.f32.gmra.mrb[0].mxu0 %v2693
        %v2832 = vpop.f32.mrb[0].mxu0
        %v2833 = vadd.f32 %v240, %v2832
        %v2834 = vpop.f32.mrb[0].mxu0
        %2835 = vmatprep.mubr.f32.mxu0 0.0
        %2836 = vmatmul.mubr.f32.gmra.mrb[0].mxu0 %v2695
        %v2837 = vpop.f32.mrb[0].mxu0
        %v2838 = vadd.f32 %v241, %v2837
        %v2839 = vpop.f32.mrb[0].mxu0
        %2840 = vmatprep.mubr.f32.mxu0 0.0
        %2841 = vmatmul.mubr.f32.gmra.mrb[0].mxu0 %v2697
        %v2842 = vpop.f32.mrb[0].mxu0
        %v2843 = vadd.f32 %v242, %v2842
        %v2844 = vpop.f32.mrb[0].mxu0
        %2845 = vmatprep.mubr.f32.mxu0 0.0
        %2846 = vmatmul.mubr.f32.gmra.mrb[0].mxu0 %v2699
        %v2847 = vpop.f32.mrb[0].mxu0
        %v2848 = vadd.f32 %v243, %v2847
        %v2849 = vpop.f32.mrb[0].mxu0
        %2850 = vmatprep.mubr.f32.mxu0 0.0
        %2851 = vmatmul.mubr.f32.gmra.mrb[0].mxu0 %v2701
        %v2852 = vpop.f32.mrb[0].mxu0
        %v2853 = vadd.f32 %v244, %v2852
        %v2854 = vpop.f32.mrb[0].mxu0
        %2855 = vmatprep.mubr.f32.mxu0 0.0
        %2856 = vmatmul.mubr.f32.gmra.mrb[0].mxu0 %v2703
        %v2857 = vpop.f32.mrb[0].mxu0
        %v2858 = vadd.f32 %v245, %v2857
        %v2859 = vpop.f32.mrb[0].mxu0
        %2860 = vmatprep.mubr.f32.mxu0 0.0
        %2861 = vmatmul.mubr.f32.gmra.mrb[0].mxu0 %v2705
        %v2862 = vpop.f32.mrb[0].mxu0
        %v2863 = vadd.f32 %v246, %v2862
        %v2864 = vpop.f32.mrb[0].mxu0
        %2865 = vmatprep.mubr.f32.mxu0 0.0
        %2866 = vmatmul.mubr.f32.gmra.mrb[0].mxu0 %v2707
        %v2867 = vpop.f32.mrb[0].mxu0
        %v2868 = vadd.f32 %v247, %v2867
        %v2869 = vpop.f32.mrb[0].mxu0
        %2870 = vmatprep.mubr.f32.mxu0 0.0
        %2871 = vmatmul.mubr.f32.gmra.mrb[0].mxu0 %v2709
        %v2872 = vpop.f32.mrb[0].mxu0
        %v2873 = vadd.f32 %v248, %v2872
        %v2874 = vpop.f32.mrb[0].mxu0
        %2875 = vmatprep.mubr.f32.mxu0 0.0
        %2876 = vmatmul.mubr.f32.gmra.mrb[0].mxu0 %v2711
        %v2877 = vpop.f32.mrb[0].mxu0
        %v2878 = vadd.f32 %v249, %v2877
        %v2879 = vpop.f32.mrb[0].mxu0
        %2880 = vmatprep.mubr.f32.mxu0 0.0
        %2881 = vmatmul.mubr.f32.gmra.mrb[0].mxu0 %v2713
        %v2882 = vpop.f32.mrb[0].mxu0
        %v2883 = vadd.f32 %v250, %v2882
        %v2884 = vpop.f32.mrb[0].mxu0
        %2885 = vmatprep.mubr.f32.mxu0 0.0
        %2886 = vmatmul.mubr.f32.gmra.mrb[0].mxu0 %v2715
        %v2887 = vpop.f32.mrb[0].mxu0
        %v2888 = vadd.f32 %v251, %v2887
        %v2889 = vpop.f32.mrb[0].mxu0
        %2890 = vmatprep.mubr.f32.mxu0 0.0
        %2891 = vmatmul.mubr.f32.gmra.mrb[0].mxu0 %v2717
        %v2892 = vpop.f32.mrb[0].mxu0
        %v2893 = vadd.f32 %v252, %v2892
        %v2894 = vpop.f32.mrb[0].mxu0
        %2895 = vdwg.mxu0
        %2896 = vmax.xlane.f32.xlu0 %v2818
        %v2897 = vpop.xlane.xlu0 %2896
        %2898 = vmax.xlane.f32.xlu0 %v2823
        %v2899 = vpop.xlane.xlu0 %2898
        %2900 = vmax.xlane.f32.xlu0 %v2828
        %v2901 = vpop.xlane.xlu0 %2900
        %2902 = vmax.xlane.f32.xlu0 %v2833
        %v2903 = vpop.xlane.xlu0 %2902
        %2904 = vmax.xlane.f32.xlu0 %v2838
        %v2905 = vpop.xlane.xlu0 %2904
        %2906 = vmax.xlane.f32.xlu0 %v2843
        %v2907 = vpop.xlane.xlu0 %2906
        %2908 = vmax.xlane.f32.xlu0 %v2848
        %v2909 = vpop.xlane.xlu0 %2908
        %2910 = vmax.xlane.f32.xlu0 %v2853
        %v2911 = vpop.xlane.xlu0 %2910
        %2912 = vmax.xlane.f32.xlu0 %v2858
        %v2913 = vpop.xlane.xlu0 %2912
        %2914 = vmax.xlane.f32.xlu0 %v2863
        %v2915 = vpop.xlane.xlu0 %2914
        %2916 = vmax.xlane.f32.xlu0 %v2868
        %v2917 = vpop.xlane.xlu0 %2916
        %2918 = vmax.xlane.f32.xlu0 %v2873
        %v2919 = vpop.xlane.xlu0 %2918
        %2920 = vmax.xlane.f32.xlu0 %v2878
        %v2921 = vpop.xlane.xlu0 %2920
        %2922 = vmax.xlane.f32.xlu0 %v2883
        %v2923 = vpop.xlane.xlu0 %2922
        %2924 = vmax.xlane.f32.xlu0 %v2888
        %v2925 = vpop.xlane.xlu0 %2924
        %2926 = vmax.xlane.f32.xlu0 %v2893
        %v2927 = vpop.xlane.xlu0 %2926
        %v2928 = vsub.f32 %v2818, %v2897
        %v2929 = vsub.f32 %v2823, %v2899
        %v2930 = vsub.f32 %v2828, %v2901
        %v2931 = vsub.f32 %v2833, %v2903
        %v2932 = vsub.f32 %v2838, %v2905
        %v2933 = vsub.f32 %v2843, %v2907
        %v2934 = vsub.f32 %v2848, %v2909
        %v2935 = vsub.f32 %v2853, %v2911
        %v2936 = vsub.f32 %v2858, %v2913
        %v2937 = vsub.f32 %v2863, %v2915
        %v2938 = vsub.f32 %v2868, %v2917
        %v2939 = vsub.f32 %v2873, %v2919
        %v2940 = vsub.f32 %v2878, %v2921
        %v2941 = vsub.f32 %v2883, %v2923
        %v2942 = vsub.f32 %v2888, %v2925
        %v2943 = vsub.f32 %v2893, %v2927
        %v2944 = vmul.f32 %v2928, 1.442695
        %v2945 = vpow.pop %v2944
        %v2946 = vmul.f32 %v2929, 1.442695
        %v2947 = vpow.pop %v2946
        %v2948 = vmul.f32 %v2930, 1.442695
        %v2949 = vpow.pop %v2948
        %v2950 = vmul.f32 %v2931, 1.442695
        %v2951 = vpow.pop %v2950
        %v2952 = vmul.f32 %v2932, 1.442695
        %v2953 = vpow.pop %v2952
        %v2954 = vmul.f32 %v2933, 1.442695
        %v2955 = vpow.pop %v2954
        %v2956 = vmul.f32 %v2934, 1.442695
        %v2957 = vpow.pop %v2956
        %v2958 = vmul.f32 %v2935, 1.442695
        %v2959 = vpow.pop %v2958
        %v2960 = vmul.f32 %v2936, 1.442695
        %v2961 = vpow.pop %v2960
        %v2962 = vmul.f32 %v2937, 1.442695
        %v2963 = vpow.pop %v2962
        %v2964 = vmul.f32 %v2938, 1.442695
        %v2965 = vpow.pop %v2964
        %v2966 = vmul.f32 %v2939, 1.442695
        %v2967 = vpow.pop %v2966
        %v2968 = vmul.f32 %v2940, 1.442695
        %v2969 = vpow.pop %v2968
        %v2970 = vmul.f32 %v2941, 1.442695
        %v2971 = vpow.pop %v2970
        %v2972 = vmul.f32 %v2942, 1.442695
        %v2973 = vpow.pop %v2972
        %v2974 = vmul.f32 %v2943, 1.442695
        %v2975 = vpow.pop %v2974
        %2976 = vadd.xlane.f32.xlu0 %v2945
        %v2977 = vpop.xlane.xlu0 %2976
        %2978 = vadd.xlane.f32.xlu0 %v2947
        %v2979 = vpop.xlane.xlu0 %2978
        %2980 = vadd.xlane.f32.xlu0 %v2949
        %v2981 = vpop.xlane.xlu0 %2980
        %2982 = vadd.xlane.f32.xlu0 %v2951
        %v2983 = vpop.xlane.xlu0 %2982
        %2984 = vadd.xlane.f32.xlu0 %v2953
        %v2985 = vpop.xlane.xlu0 %2984
        %2986 = vadd.xlane.f32.xlu0 %v2955
        %v2987 = vpop.xlane.xlu0 %2986
        %2988 = vadd.xlane.f32.xlu0 %v2957
        %v2989 = vpop.xlane.xlu0 %2988
        %2990 = vadd.xlane.f32.xlu0 %v2959
        %v2991 = vpop.xlane.xlu0 %2990
        %2992 = vadd.xlane.f32.xlu0 %v2961
        %v2993 = vpop.xlane.xlu0 %2992
        %2994 = vadd.xlane.f32.xlu0 %v2963
        %v2995 = vpop.xlane.xlu0 %2994
        %2996 = vadd.xlane.f32.xlu0 %v2965
        %v2997 = vpop.xlane.xlu0 %2996
        %2998 = vadd.xlane.f32.xlu0 %v2967
        %v2999 = vpop.xlane.xlu0 %2998
        %3000 = vadd.xlane.f32.xlu0 %v2969
        %v3001 = vpop.xlane.xlu0 %3000
        %3002 = vadd.xlane.f32.xlu0 %v2971
        %v3003 = vpop.xlane.xlu0 %3002
        %3004 = vadd.xlane.f32.xlu0 %v2973
        %v3005 = vpop.xlane.xlu0 %3004
        %3006 = vadd.xlane.f32.xlu0 %v2975
        %v3007 = vpop.xlane.xlu0 %3006
        %v3008 = vrcp.pop %v2977
        %v3009 = vmul.f32 %v2945, %v3008
        %v3010 = vrcp.pop %v2979
        %v3011 = vmul.f32 %v2947, %v3010
        %v3012 = vrcp.pop %v2981
        %v3013 = vmul.f32 %v2949, %v3012
        %v3014 = vrcp.pop %v2983
        %v3015 = vmul.f32 %v2951, %v3014
        %v3016 = vrcp.pop %v2985
        %v3017 = vmul.f32 %v2953, %v3016
        %v3018 = vrcp.pop %v2987
        %v3019 = vmul.f32 %v2955, %v3018
        %v3020 = vrcp.pop %v2989
        %v3021 = vmul.f32 %v2957, %v3020
        %v3022 = vrcp.pop %v2991
        %v3023 = vmul.f32 %v2959, %v3022
        %v3024 = vrcp.pop %v2993
        %v3025 = vmul.f32 %v2961, %v3024
        %v3026 = vrcp.pop %v2995
        %v3027 = vmul.f32 %v2963, %v3026
        %v3028 = vrcp.pop %v2997
        %v3029 = vmul.f32 %v2965, %v3028
        %v3030 = vrcp.pop %v2999
        %v3031 = vmul.f32 %v2967, %v3030
        %v3032 = vrcp.pop %v3001
        %v3033 = vmul.f32 %v2969, %v3032
        %v3034 = vrcp.pop %v3003
        %v3035 = vmul.f32 %v2971, %v3034
        %v3036 = vrcp.pop %v3005
        %v3037 = vmul.f32 %v2973, %v3036
        %v3038 = vrcp.pop %v3007
        %v3039 = vmul.f32 %v2975, %v3038
        %3040 = vrot.lane.b32.xlu0 %v1244, 48
        %v3041 = vpop.permute.xlu0 %3040
        %3042 = vrot.lane.b32.xlu0 %v1249, 48
        %v3043 = vpop.permute.xlu0 %3042
        %3044 = vrot.lane.b32.xlu0 %v1254, 48
        %v3045 = vpop.permute.xlu0 %3044
        %3046 = vrot.lane.b32.xlu0 %v1259, 48
        %v3047 = vpop.permute.xlu0 %3046
        %3048 = vrot.lane.b32.xlu0 %v1264, 48
        %v3049 = vpop.permute.xlu0 %3048
        %3050 = vrot.lane.b32.xlu0 %v1269, 48
        %v3051 = vpop.permute.xlu0 %3050
        %3052 = vrot.lane.b32.xlu0 %v1274, 48
        %v3053 = vpop.permute.xlu0 %3052
        %3054 = vrot.lane.b32.xlu0 %v1279, 48
        %v3055 = vpop.permute.xlu0 %3054
        %3056 = vrot.lane.b32.xlu0 %v1284, 48
        %v3057 = vpop.permute.xlu0 %3056
        %3058 = vrot.lane.b32.xlu0 %v1289, 48
        %v3059 = vpop.permute.xlu0 %3058
        %3060 = vrot.lane.b32.xlu0 %v1294, 48
        %v3061 = vpop.permute.xlu0 %3060
        %3062 = vrot.lane.b32.xlu0 %v1299, 48
        %v3063 = vpop.permute.xlu0 %3062
        %3064 = vrot.lane.b32.xlu0 %v1304, 48
        %v3065 = vpop.permute.xlu0 %3064
        %3066 = vrot.lane.b32.xlu0 %v1309, 48
        %v3067 = vpop.permute.xlu0 %3066
        %3068 = vrot.lane.b32.xlu0 %v1314, 48
        %v3069 = vpop.permute.xlu0 %3068
        %3070 = vrot.lane.b32.xlu0 %v1319, 48
        %v3071 = vpop.permute.xlu0 %3070
        %3088 = vmatprep.subr.mxu0 0.0
        %3089 = vmatpush1.msra.mxu0 %v3041
        %3090 = vmatprep.subr.mxu0 0.0
        %3091 = vmatpush1.msra.mxu0 %v3043
        %3092 = vmatprep.subr.mxu0 0.0
        %3093 = vmatpush1.msra.mxu0 %v3045
        %3094 = vmatprep.subr.mxu0 0.0
        %3095 = vmatpush1.msra.mxu0 %v3047
        %3096 = vmatprep.subr.mxu0 0.0
        %3097 = vmatpush1.msra.mxu0 %v3049
        %3098 = vmatprep.subr.mxu0 0.0
        %3099 = vmatpush1.msra.mxu0 %v3051
        %3100 = vmatprep.subr.mxu0 0.0
        %3101 = vmatpush1.msra.mxu0 %v3053
        %3102 = vmatprep.subr.mxu0 0.0
        %3103 = vmatpush1.msra.mxu0 %v3055
        %3104 = vmatprep.subr.mxu0 0.0
        %3105 = vmatpush1.msra.mxu0 %v3057
        %3106 = vmatprep.subr.mxu0 0.0
        %3107 = vmatpush1.msra.mxu0 %v3059
        %3108 = vmatprep.subr.mxu0 0.0
        %3109 = vmatpush1.msra.mxu0 %v3061
        %3110 = vmatprep.subr.mxu0 0.0
        %3111 = vmatpush1.msra.mxu0 %v3063
        %3112 = vmatprep.subr.mxu0 0.0
        %3113 = vmatpush1.msra.mxu0 %v3065
        %3114 = vmatprep.subr.mxu0 0.0
        %3115 = vmatpush1.msra.mxu0 %v3067
        %3116 = vmatprep.subr.mxu0 0.0
        %3117 = vmatpush1.msra.mxu0 %v3069
        %3118 = vmatprep.subr.mxu0 0.0
        %3119 = vmatpush1.msra.mxu0 %v3071
        %3120 = vmatprep.subr.mxu0 0.0
        %3121 = vmatpush1.msra.mxu0 0.0
        %3122 = vmatprep.subr.mxu0 0.0
        %3123 = vmatpush1.msra.mxu0 0.0
        %3124 = vmatprep.subr.mxu0 0.0
        %3125 = vmatpush1.msra.mxu0 0.0
        %3126 = vmatprep.subr.mxu0 0.0
        %3127 = vmatpush1.msra.mxu0 0.0
        %3128 = vmatprep.subr.mxu0 0.0
        %3129 = vmatpush1.msra.mxu0 0.0
        %3130 = vmatprep.subr.mxu0 0.0
        %3131 = vmatpush1.msra.mxu0 0.0
        %3132 = vmatprep.subr.mxu0 0.0
        %3133 = vmatpush1.msra.mxu0 0.0
        %3134 = vmatprep.subr.mxu0 0.0
        %3135 = vmatpush1.msra.mxu0 0.0
        %3136 = vmatprep.subr.mxu0 0.0
        %3137 = vmatpush1.msra.mxu0 0.0
        %3138 = vmatprep.subr.mxu0 0.0
        %3139 = vmatpush1.msra.mxu0 0.0
        %3140 = vmatprep.subr.mxu0 0.0
        %3141 = vmatpush1.msra.mxu0 0.0
        %3142 = vmatprep.subr.mxu0 0.0
        %3143 = vmatpush1.msra.mxu0 0.0
        %3144 = vmatprep.subr.mxu0 0.0
        %3145 = vmatpush1.msra.mxu0 0.0
        %3146 = vmatprep.subr.mxu0 0.0
        %3147 = vmatpush1.msra.mxu0 0.0
        %3148 = vmatprep.subr.mxu0 0.0
        %3149 = vmatpush1.msra.mxu0 0.0
        %3150 = vmatprep.subr.mxu0 0.0
        %3151 = vmatpush1.msra.mxu0 0.0
        %3152 = vmatprep.mubr.f32.mxu0 0.0
        %3153 = vmatmul.mubr.f32.gmra.mrb[0].mxu0 %v3009
        %v3154 = vpop.f32.mrb[0].mxu0
        %v3155 = vadd.f32 0.0, %v3154
        %v3156 = vpop.f32.mrb[0].mxu0
        %3157 = vmatprep.mubr.f32.mxu0 0.0
        %3158 = vmatmul.mubr.f32.gmra.mrb[0].mxu0 %v3011
        %v3159 = vpop.f32.mrb[0].mxu0
        %v3160 = vadd.f32 0.0, %v3159
        %v3161 = vpop.f32.mrb[0].mxu0
        %3162 = vmatprep.mubr.f32.mxu0 0.0
        %3163 = vmatmul.mubr.f32.gmra.mrb[0].mxu0 %v3013
        %v3164 = vpop.f32.mrb[0].mxu0
        %v3165 = vadd.f32 0.0, %v3164
        %v3166 = vpop.f32.mrb[0].mxu0
        %3167 = vmatprep.mubr.f32.mxu0 0.0
        %3168 = vmatmul.mubr.f32.gmra.mrb[0].mxu0 %v3015
        %v3169 = vpop.f32.mrb[0].mxu0
        %v3170 = vadd.f32 0.0, %v3169
        %v3171 = vpop.f32.mrb[0].mxu0
        %3172 = vmatprep.mubr.f32.mxu0 0.0
        %3173 = vmatmul.mubr.f32.gmra.mrb[0].mxu0 %v3017
        %v3174 = vpop.f32.mrb[0].mxu0
        %v3175 = vadd.f32 0.0, %v3174
        %v3176 = vpop.f32.mrb[0].mxu0
        %3177 = vmatprep.mubr.f32.mxu0 0.0
        %3178 = vmatmul.mubr.f32.gmra.mrb[0].mxu0 %v3019
        %v3179 = vpop.f32.mrb[0].mxu0
        %v3180 = vadd.f32 0.0, %v3179
        %v3181 = vpop.f32.mrb[0].mxu0
        %3182 = vmatprep.mubr.f32.mxu0 0.0
        %3183 = vmatmul.mubr.f32.gmra.mrb[0].mxu0 %v3021
        %v3184 = vpop.f32.mrb[0].mxu0
        %v3185 = vadd.f32 0.0, %v3184
        %v3186 = vpop.f32.mrb[0].mxu0
        %3187 = vmatprep.mubr.f32.mxu0 0.0
        %3188 = vmatmul.mubr.f32.gmra.mrb[0].mxu0 %v3023
        %v3189 = vpop.f32.mrb[0].mxu0
        %v3190 = vadd.f32 0.0, %v3189
        %v3191 = vpop.f32.mrb[0].mxu0
        %3192 = vmatprep.mubr.f32.mxu0 0.0
        %3193 = vmatmul.mubr.f32.gmra.mrb[0].mxu0 %v3025
        %v3194 = vpop.f32.mrb[0].mxu0
        %v3195 = vadd.f32 0.0, %v3194
        %v3196 = vpop.f32.mrb[0].mxu0
        %3197 = vmatprep.mubr.f32.mxu0 0.0
        %3198 = vmatmul.mubr.f32.gmra.mrb[0].mxu0 %v3027
        %v3199 = vpop.f32.mrb[0].mxu0
        %v3200 = vadd.f32 0.0, %v3199
        %v3201 = vpop.f32.mrb[0].mxu0
        %3202 = vmatprep.mubr.f32.mxu0 0.0
        %3203 = vmatmul.mubr.f32.gmra.mrb[0].mxu0 %v3029
        %v3204 = vpop.f32.mrb[0].mxu0
        %v3205 = vadd.f32 0.0, %v3204
        %v3206 = vpop.f32.mrb[0].mxu0
        %3207 = vmatprep.mubr.f32.mxu0 0.0
        %3208 = vmatmul.mubr.f32.gmra.mrb[0].mxu0 %v3031
        %v3209 = vpop.f32.mrb[0].mxu0
        %v3210 = vadd.f32 0.0, %v3209
        %v3211 = vpop.f32.mrb[0].mxu0
        %3212 = vmatprep.mubr.f32.mxu0 0.0
        %3213 = vmatmul.mubr.f32.gmra.mrb[0].mxu0 %v3033
        %v3214 = vpop.f32.mrb[0].mxu0
        %v3215 = vadd.f32 0.0, %v3214
        %v3216 = vpop.f32.mrb[0].mxu0
        %3217 = vmatprep.mubr.f32.mxu0 0.0
        %3218 = vmatmul.mubr.f32.gmra.mrb[0].mxu0 %v3035
        %v3219 = vpop.f32.mrb[0].mxu0
        %v3220 = vadd.f32 0.0, %v3219
        %v3221 = vpop.f32.mrb[0].mxu0
        %3222 = vmatprep.mubr.f32.mxu0 0.0
        %3223 = vmatmul.mubr.f32.gmra.mrb[0].mxu0 %v3037
        %v3224 = vpop.f32.mrb[0].mxu0
        %v3225 = vadd.f32 0.0, %v3224
        %v3226 = vpop.f32.mrb[0].mxu0
        %3227 = vmatprep.mubr.f32.mxu0 0.0
        %3228 = vmatmul.mubr.f32.gmra.mrb[0].mxu0 %v3039
        %v3229 = vpop.f32.mrb[0].mxu0
        %v3230 = vadd.f32 0.0, %v3229
        %v3231 = vpop.f32.mrb[0].mxu0
        %3232 = vdwg.mxu0
        %3249 = vrot.lane.b32.xlu0 %v3155, 16
        %v3250 = vpop.permute.xlu0 %3249
        %3251 = vrot.lane.b32.xlu0 %v3160, 16
        %v3252 = vpop.permute.xlu0 %3251
        %3253 = vrot.lane.b32.xlu0 %v3165, 16
        %v3254 = vpop.permute.xlu0 %3253
        %3255 = vrot.lane.b32.xlu0 %v3170, 16
        %v3256 = vpop.permute.xlu0 %3255
        %3257 = vrot.lane.b32.xlu0 %v3175, 16
        %v3258 = vpop.permute.xlu0 %3257
        %3259 = vrot.lane.b32.xlu0 %v3180, 16
        %v3260 = vpop.permute.xlu0 %3259
        %3261 = vrot.lane.b32.xlu0 %v3185, 16
        %v3262 = vpop.permute.xlu0 %3261
        %3263 = vrot.lane.b32.xlu0 %v3190, 16
        %v3264 = vpop.permute.xlu0 %3263
        %3265 = vrot.lane.b32.xlu0 %v3195, 16
        %v3266 = vpop.permute.xlu0 %3265
        %3267 = vrot.lane.b32.xlu0 %v3200, 16
        %v3268 = vpop.permute.xlu0 %3267
        %3269 = vrot.lane.b32.xlu0 %v3205, 16
        %v3270 = vpop.permute.xlu0 %3269
        %3271 = vrot.lane.b32.xlu0 %v3210, 16
        %v3272 = vpop.permute.xlu0 %3271
        %3273 = vrot.lane.b32.xlu0 %v3215, 16
        %v3274 = vpop.permute.xlu0 %3273
        %3275 = vrot.lane.b32.xlu0 %v3220, 16
        %v3276 = vpop.permute.xlu0 %3275
        %3277 = vrot.lane.b32.xlu0 %v3225, 16
        %v3278 = vpop.permute.xlu0 %3277
        %3279 = vrot.lane.b32.xlu0 %v3230, 16
        %v3280 = vpop.permute.xlu0 %3279
        %vm3297 = vcmask 195712
        %3298 = vst.msk [vmem:[#allocation2] sm:$0xff] %vm3297, %v3250
        %3299 = vst.msk [vmem:[#allocation2 + $0x8] sm:$0xff] %vm3297, %v3252
        %3300 = vst.msk [vmem:[#allocation2 + $0x10] sm:$0xff] %vm3297, %v3254
        %3301 = vst.msk [vmem:[#allocation2 + $0x18] sm:$0xff] %vm3297, %v3256
        %3302 = vst.msk [vmem:[#allocation2 + $0x20] sm:$0xff] %vm3297, %v3258
        %3303 = vst.msk [vmem:[#allocation2 + $0x28] sm:$0xff] %vm3297, %v3260
        %3304 = vst.msk [vmem:[#allocation2 + $0x30] sm:$0xff] %vm3297, %v3262
        %3305 = vst.msk [vmem:[#allocation2 + $0x38] sm:$0xff] %vm3297, %v3264
        %3306 = vst.msk [vmem:[#allocation2 + $0x40] sm:$0xff] %vm3297, %v3266
        %3307 = vst.msk [vmem:[#allocation2 + $0x48] sm:$0xff] %vm3297, %v3268
        %3308 = vst.msk [vmem:[#allocation2 + $0x50] sm:$0xff] %vm3297, %v3270
        %3309 = vst.msk [vmem:[#allocation2 + $0x58] sm:$0xff] %vm3297, %v3272
        %3310 = vst.msk [vmem:[#allocation2 + $0x60] sm:$0xff] %vm3297, %v3274
        %3311 = vst.msk [vmem:[#allocation2 + $0x68] sm:$0xff] %vm3297, %v3276
        %3312 = vst.msk [vmem:[#allocation2 + $0x70] sm:$0xff] %vm3297, %v3278
        %3313 = vst.msk [vmem:[#allocation2 + $0x78] sm:$0xff] %vm3297, %v3280
        %3314 = vrot.lane.b32.xlu0 %v1244, 104
        %v3315 = vpop.permute.xlu0 %3314
        %3316 = vrot.lane.b32.xlu0 %v1249, 104
        %v3317 = vpop.permute.xlu0 %3316
        %3318 = vrot.lane.b32.xlu0 %v1254, 104
        %v3319 = vpop.permute.xlu0 %3318
        %3320 = vrot.lane.b32.xlu0 %v1259, 104
        %v3321 = vpop.permute.xlu0 %3320
        %3322 = vrot.lane.b32.xlu0 %v1264, 104
        %v3323 = vpop.permute.xlu0 %3322
        %3324 = vrot.lane.b32.xlu0 %v1269, 104
        %v3325 = vpop.permute.xlu0 %3324
        %3326 = vrot.lane.b32.xlu0 %v1274, 104
        %v3327 = vpop.permute.xlu0 %3326
        %3328 = vrot.lane.b32.xlu0 %v1279, 104
        %v3329 = vpop.permute.xlu0 %3328
        %3330 = vrot.lane.b32.xlu0 %v1284, 104
        %v3331 = vpop.permute.xlu0 %3330
        %3332 = vrot.lane.b32.xlu0 %v1289, 104
        %v3333 = vpop.permute.xlu0 %3332
        %3334 = vrot.lane.b32.xlu0 %v1294, 104
        %v3335 = vpop.permute.xlu0 %3334
        %3336 = vrot.lane.b32.xlu0 %v1299, 104
        %v3337 = vpop.permute.xlu0 %3336
        %3338 = vrot.lane.b32.xlu0 %v1304, 104
        %v3339 = vpop.permute.xlu0 %3338
        %3340 = vrot.lane.b32.xlu0 %v1309, 104
        %v3341 = vpop.permute.xlu0 %3340
        %3342 = vrot.lane.b32.xlu0 %v1314, 104
        %v3343 = vpop.permute.xlu0 %3342
        %3344 = vrot.lane.b32.xlu0 %v1319, 104
        %v3345 = vpop.permute.xlu0 %3344
        %3346 = vrot.lane.b32.xlu0 %v1244, 72
        %v3347 = vpop.permute.xlu0 %3346
        %3348 = vrot.lane.b32.xlu0 %v1249, 72
        %v3349 = vpop.permute.xlu0 %3348
        %3350 = vrot.lane.b32.xlu0 %v1254, 72
        %v3351 = vpop.permute.xlu0 %3350
        %3352 = vrot.lane.b32.xlu0 %v1259, 72
        %v3353 = vpop.permute.xlu0 %3352
        %3354 = vrot.lane.b32.xlu0 %v1264, 72
        %v3355 = vpop.permute.xlu0 %3354
        %3356 = vrot.lane.b32.xlu0 %v1269, 72
        %v3357 = vpop.permute.xlu0 %3356
        %3358 = vrot.lane.b32.xlu0 %v1274, 72
        %v3359 = vpop.permute.xlu0 %3358
        %3360 = vrot.lane.b32.xlu0 %v1279, 72
        %v3361 = vpop.permute.xlu0 %3360
        %3362 = vrot.lane.b32.xlu0 %v1284, 72
        %v3363 = vpop.permute.xlu0 %3362
        %3364 = vrot.lane.b32.xlu0 %v1289, 72
        %v3365 = vpop.permute.xlu0 %3364
        %3366 = vrot.lane.b32.xlu0 %v1294, 72
        %v3367 = vpop.permute.xlu0 %3366
        %3368 = vrot.lane.b32.xlu0 %v1299, 72
        %v3369 = vpop.permute.xlu0 %3368
        %3370 = vrot.lane.b32.xlu0 %v1304, 72
        %v3371 = vpop.permute.xlu0 %3370
        %3372 = vrot.lane.b32.xlu0 %v1309, 72
        %v3373 = vpop.permute.xlu0 %3372
        %3374 = vrot.lane.b32.xlu0 %v1314, 72
        %v3375 = vpop.permute.xlu0 %3374
        %3376 = vrot.lane.b32.xlu0 %v1319, 72
        %v3377 = vpop.permute.xlu0 %3376
        %v3378 = vsel %vm347, %v3315, 0
        %v3380 = vsel %vm347, %v3317, 0
        %v3382 = vsel %vm347, %v3319, 0
        %v3384 = vsel %vm347, %v3321, 0
        %v3386 = vsel %vm347, %v3323, 0
        %v3388 = vsel %vm347, %v3325, 0
        %v3390 = vsel %vm347, %v3327, 0
        %v3392 = vsel %vm347, %v3329, 0
        %v3394 = vsel %vm347, %v3331, 0
        %v3396 = vsel %vm347, %v3333, 0
        %v3398 = vsel %vm347, %v3335, 0
        %v3400 = vsel %vm347, %v3337, 0
        %v3402 = vsel %vm347, %v3339, 0
        %v3404 = vsel %vm347, %v3341, 0
        %v3406 = vsel %vm347, %v3343, 0
        %v3408 = vsel %vm347, %v3345, 0
        %v3410 = vsel %vm347, %v3347, 0
        %v3412 = vsel %vm347, %v3349, 0
        %v3414 = vsel %vm347, %v3351, 0
        %v3416 = vsel %vm347, %v3353, 0
        %v3418 = vsel %vm347, %v3355, 0
        %v3420 = vsel %vm347, %v3357, 0
        %v3422 = vsel %vm347, %v3359, 0
        %v3424 = vsel %vm347, %v3361, 0
        %v3426 = vsel %vm347, %v3363, 0
        %v3428 = vsel %vm347, %v3365, 0
        %v3430 = vsel %vm347, %v3367, 0
        %v3432 = vsel %vm347, %v3369, 0
        %v3434 = vsel %vm347, %v3371, 0
        %v3436 = vsel %vm347, %v3373, 0
        %v3438 = vsel %vm347, %v3375, 0
        %v3440 = vsel %vm347, %v3377, 0
        %3442 = vmatprep.subr.mxu0 0.0
        %3443 = vmatpush1.xpose.msra.mxu0 %v3410
        %3444 = vmatprep.subr.mxu0 0.0
        %3445 = vmatpush1.xpose.msra.mxu0 %v3412
        %3446 = vmatprep.subr.mxu0 0.0
        %3447 = vmatpush1.xpose.msra.mxu0 %v3414
        %3448 = vmatprep.subr.mxu0 0.0
        %3449 = vmatpush1.xpose.msra.mxu0 %v3416
        %3450 = vmatprep.subr.mxu0 0.0
        %3451 = vmatpush1.xpose.msra.mxu0 %v3418
        %3452 = vmatprep.subr.mxu0 0.0
        %3453 = vmatpush1.xpose.msra.mxu0 %v3420
        %3454 = vmatprep.subr.mxu0 0.0
        %3455 = vmatpush1.xpose.msra.mxu0 %v3422
        %3456 = vmatprep.subr.mxu0 0.0
        %3457 = vmatpush1.xpose.msra.mxu0 %v3424
        %3458 = vmatprep.subr.mxu0 0.0
        %3459 = vmatpush1.xpose.msra.mxu0 %v3426
        %3460 = vmatprep.subr.mxu0 0.0
        %3461 = vmatpush1.xpose.msra.mxu0 %v3428
        %3462 = vmatprep.subr.mxu0 0.0
        %3463 = vmatpush1.xpose.msra.mxu0 %v3430
        %3464 = vmatprep.subr.mxu0 0.0
        %3465 = vmatpush1.xpose.msra.mxu0 %v3432
        %3466 = vmatprep.subr.mxu0 0.0
        %3467 = vmatpush1.xpose.msra.mxu0 %v3434
        %3468 = vmatprep.subr.mxu0 0.0
        %3469 = vmatpush1.xpose.msra.mxu0 %v3436
        %3470 = vmatprep.subr.mxu0 0.0
        %3471 = vmatpush1.xpose.msra.mxu0 %v3438
        %3472 = vmatprep.subr.mxu0 0.0
        %3473 = vmatpush1.xpose.msra.mxu0 %v3440
        %3474 = vmatprep.subr.mxu0 0.0
        %3475 = vmatpush1.xpose.msra.mxu0 0.0
        %3476 = vmatprep.subr.mxu0 0.0
        %3477 = vmatpush1.xpose.msra.mxu0 0.0
        %3478 = vmatprep.subr.mxu0 0.0
        %3479 = vmatpush1.xpose.msra.mxu0 0.0
        %3480 = vmatprep.subr.mxu0 0.0
        %3481 = vmatpush1.xpose.msra.mxu0 0.0
        %3482 = vmatprep.subr.mxu0 0.0
        %3483 = vmatpush1.xpose.msra.mxu0 0.0
        %3484 = vmatprep.subr.mxu0 0.0
        %3485 = vmatpush1.xpose.msra.mxu0 0.0
        %3486 = vmatprep.subr.mxu0 0.0
        %3487 = vmatpush1.xpose.msra.mxu0 0.0
        %3488 = vmatprep.subr.mxu0 0.0
        %3489 = vmatpush1.xpose.msra.mxu0 0.0
        %3490 = vmatprep.subr.mxu0 0.0
        %3491 = vmatpush1.xpose.msra.mxu0 0.0
        %3492 = vmatprep.subr.mxu0 0.0
        %3493 = vmatpush1.xpose.msra.mxu0 0.0
        %3494 = vmatprep.subr.mxu0 0.0
        %3495 = vmatpush1.xpose.msra.mxu0 0.0
        %3496 = vmatprep.subr.mxu0 0.0
        %3497 = vmatpush1.xpose.msra.mxu0 0.0
        %3498 = vmatprep.subr.mxu0 0.0
        %3499 = vmatpush1.xpose.msra.mxu0 0.0
        %3500 = vmatprep.subr.mxu0 0.0
        %3501 = vmatpush1.xpose.msra.mxu0 0.0
        %3502 = vmatprep.subr.mxu0 0.0
        %3503 = vmatpush1.xpose.msra.mxu0 0.0
        %3504 = vmatprep.subr.mxu0 0.0
        %3505 = vmatpush1.xpose.msra.mxu0 0.0
        %3506 = vmatprep.mubr.f32.mxu0 0.0
        %3507 = vmatmul.mubr.f32.gmra.mrb[0].mxu0 %v3378
        %v3508 = vpop.f32.mrb[0].mxu0
        %v3509 = vadd.f32 %v237, %v3508
        %v3510 = vpop.f32.mrb[0].mxu0
        %3511 = vmatprep.mubr.f32.mxu0 0.0
        %3512 = vmatmul.mubr.f32.gmra.mrb[0].mxu0 %v3380
        %v3513 = vpop.f32.mrb[0].mxu0
        %v3514 = vadd.f32 %v238, %v3513
        %v3515 = vpop.f32.mrb[0].mxu0
        %3516 = vmatprep.mubr.f32.mxu0 0.0
        %3517 = vmatmul.mubr.f32.gmra.mrb[0].mxu0 %v3382
        %v3518 = vpop.f32.mrb[0].mxu0
        %v3519 = vadd.f32 %v239, %v3518
        %v3520 = vpop.f32.mrb[0].mxu0
        %3521 = vmatprep.mubr.f32.mxu0 0.0
        %3522 = vmatmul.mubr.f32.gmra.mrb[0].mxu0 %v3384
        %v3523 = vpop.f32.mrb[0].mxu0
        %v3524 = vadd.f32 %v240, %v3523
        %v3525 = vpop.f32.mrb[0].mxu0
        %3526 = vmatprep.mubr.f32.mxu0 0.0
        %3527 = vmatmul.mubr.f32.gmra.mrb[0].mxu0 %v3386
        %v3528 = vpop.f32.mrb[0].mxu0
        %v3529 = vadd.f32 %v241, %v3528
        %v3530 = vpop.f32.mrb[0].mxu0
        %3531 = vmatprep.mubr.f32.mxu0 0.0
        %3532 = vmatmul.mubr.f32.gmra.mrb[0].mxu0 %v3388
        %v3533 = vpop.f32.mrb[0].mxu0
        %v3534 = vadd.f32 %v242, %v3533
        %v3535 = vpop.f32.mrb[0].mxu0
        %3536 = vmatprep.mubr.f32.mxu0 0.0
        %3537 = vmatmul.mubr.f32.gmra.mrb[0].mxu0 %v3390
        %v3538 = vpop.f32.mrb[0].mxu0
        %v3539 = vadd.f32 %v243, %v3538
        %v3540 = vpop.f32.mrb[0].mxu0
        %3541 = vmatprep.mubr.f32.mxu0 0.0
        %3542 = vmatmul.mubr.f32.gmra.mrb[0].mxu0 %v3392
        %v3543 = vpop.f32.mrb[0].mxu0
        %v3544 = vadd.f32 %v244, %v3543
        %v3545 = vpop.f32.mrb[0].mxu0
        %3546 = vmatprep.mubr.f32.mxu0 0.0
        %3547 = vmatmul.mubr.f32.gmra.mrb[0].mxu0 %v3394
        %v3548 = vpop.f32.mrb[0].mxu0
        %v3549 = vadd.f32 %v245, %v3548
        %v3550 = vpop.f32.mrb[0].mxu0
        %3551 = vmatprep.mubr.f32.mxu0 0.0
        %3552 = vmatmul.mubr.f32.gmra.mrb[0].mxu0 %v3396
        %v3553 = vpop.f32.mrb[0].mxu0
        %v3554 = vadd.f32 %v246, %v3553
        %v3555 = vpop.f32.mrb[0].mxu0
        %3556 = vmatprep.mubr.f32.mxu0 0.0
        %3557 = vmatmul.mubr.f32.gmra.mrb[0].mxu0 %v3398
        %v3558 = vpop.f32.mrb[0].mxu0
        %v3559 = vadd.f32 %v247, %v3558
        %v3560 = vpop.f32.mrb[0].mxu0
        %3561 = vmatprep.mubr.f32.mxu0 0.0
        %3562 = vmatmul.mubr.f32.gmra.mrb[0].mxu0 %v3400
        %v3563 = vpop.f32.mrb[0].mxu0
        %v3564 = vadd.f32 %v248, %v3563
        %v3565 = vpop.f32.mrb[0].mxu0
        %3566 = vmatprep.mubr.f32.mxu0 0.0
        %3567 = vmatmul.mubr.f32.gmra.mrb[0].mxu0 %v3402
        %v3568 = vpop.f32.mrb[0].mxu0
        %v3569 = vadd.f32 %v249, %v3568
        %v3570 = vpop.f32.mrb[0].mxu0
        %3571 = vmatprep.mubr.f32.mxu0 0.0
        %3572 = vmatmul.mubr.f32.gmra.mrb[0].mxu0 %v3404
        %v3573 = vpop.f32.mrb[0].mxu0
        %v3574 = vadd.f32 %v250, %v3573
        %v3575 = vpop.f32.mrb[0].mxu0
        %3576 = vmatprep.mubr.f32.mxu0 0.0
        %3577 = vmatmul.mubr.f32.gmra.mrb[0].mxu0 %v3406
        %v3578 = vpop.f32.mrb[0].mxu0
        %v3579 = vadd.f32 %v251, %v3578
        %v3580 = vpop.f32.mrb[0].mxu0
        %3581 = vmatprep.mubr.f32.mxu0 0.0
        %3582 = vmatmul.mubr.f32.gmra.mrb[0].mxu0 %v3408
        %v3583 = vpop.f32.mrb[0].mxu0
        %v3584 = vadd.f32 %v252, %v3583
        %v3585 = vpop.f32.mrb[0].mxu0
        %3586 = vdwg.mxu0
        %3587 = vmax.xlane.f32.xlu0 %v3509
        %v3588 = vpop.xlane.xlu0 %3587
        %3589 = vmax.xlane.f32.xlu0 %v3514
        %v3590 = vpop.xlane.xlu0 %3589
        %3591 = vmax.xlane.f32.xlu0 %v3519
        %v3592 = vpop.xlane.xlu0 %3591
        %3593 = vmax.xlane.f32.xlu0 %v3524
        %v3594 = vpop.xlane.xlu0 %3593
        %3595 = vmax.xlane.f32.xlu0 %v3529
        %v3596 = vpop.xlane.xlu0 %3595
        %3597 = vmax.xlane.f32.xlu0 %v3534
        %v3598 = vpop.xlane.xlu0 %3597
        %3599 = vmax.xlane.f32.xlu0 %v3539
        %v3600 = vpop.xlane.xlu0 %3599
        %3601 = vmax.xlane.f32.xlu0 %v3544
        %v3602 = vpop.xlane.xlu0 %3601
        %3603 = vmax.xlane.f32.xlu0 %v3549
        %v3604 = vpop.xlane.xlu0 %3603
        %3605 = vmax.xlane.f32.xlu0 %v3554
        %v3606 = vpop.xlane.xlu0 %3605
        %3607 = vmax.xlane.f32.xlu0 %v3559
        %v3608 = vpop.xlane.xlu0 %3607
        %3609 = vmax.xlane.f32.xlu0 %v3564
        %v3610 = vpop.xlane.xlu0 %3609
        %3611 = vmax.xlane.f32.xlu0 %v3569
        %v3612 = vpop.xlane.xlu0 %3611
        %3613 = vmax.xlane.f32.xlu0 %v3574
        %v3614 = vpop.xlane.xlu0 %3613
        %3615 = vmax.xlane.f32.xlu0 %v3579
        %v3616 = vpop.xlane.xlu0 %3615
        %3617 = vmax.xlane.f32.xlu0 %v3584
        %v3618 = vpop.xlane.xlu0 %3617
        %v3619 = vsub.f32 %v3509, %v3588
        %v3620 = vsub.f32 %v3514, %v3590
        %v3621 = vsub.f32 %v3519, %v3592
        %v3622 = vsub.f32 %v3524, %v3594
        %v3623 = vsub.f32 %v3529, %v3596
        %v3624 = vsub.f32 %v3534, %v3598
        %v3625 = vsub.f32 %v3539, %v3600
        %v3626 = vsub.f32 %v3544, %v3602
        %v3627 = vsub.f32 %v3549, %v3604
        %v3628 = vsub.f32 %v3554, %v3606
        %v3629 = vsub.f32 %v3559, %v3608
        %v3630 = vsub.f32 %v3564, %v3610
        %v3631 = vsub.f32 %v3569, %v3612
        %v3632 = vsub.f32 %v3574, %v3614
        %v3633 = vsub.f32 %v3579, %v3616
        %v3634 = vsub.f32 %v3584, %v3618
        %v3635 = vmul.f32 %v3619, 1.442695
        %v3636 = vpow.pop %v3635
        %v3637 = vmul.f32 %v3620, 1.442695
        %v3638 = vpow.pop %v3637
        %v3639 = vmul.f32 %v3621, 1.442695
        %v3640 = vpow.pop %v3639
        %v3641 = vmul.f32 %v3622, 1.442695
        %v3642 = vpow.pop %v3641
        %v3643 = vmul.f32 %v3623, 1.442695
        %v3644 = vpow.pop %v3643
        %v3645 = vmul.f32 %v3624, 1.442695
        %v3646 = vpow.pop %v3645
        %v3647 = vmul.f32 %v3625, 1.442695
        %v3648 = vpow.pop %v3647
        %v3649 = vmul.f32 %v3626, 1.442695
        %v3650 = vpow.pop %v3649
        %v3651 = vmul.f32 %v3627, 1.442695
        %v3652 = vpow.pop %v3651
        %v3653 = vmul.f32 %v3628, 1.442695
        %v3654 = vpow.pop %v3653
        %v3655 = vmul.f32 %v3629, 1.442695
        %v3656 = vpow.pop %v3655
        %v3657 = vmul.f32 %v3630, 1.442695
        %v3658 = vpow.pop %v3657
        %v3659 = vmul.f32 %v3631, 1.442695
        %v3660 = vpow.pop %v3659
        %v3661 = vmul.f32 %v3632, 1.442695
        %v3662 = vpow.pop %v3661
        %v3663 = vmul.f32 %v3633, 1.442695
        %v3664 = vpow.pop %v3663
        %v3665 = vmul.f32 %v3634, 1.442695
        %v3666 = vpow.pop %v3665
        %3667 = vadd.xlane.f32.xlu0 %v3636
        %v3668 = vpop.xlane.xlu0 %3667
        %3669 = vadd.xlane.f32.xlu0 %v3638
        %v3670 = vpop.xlane.xlu0 %3669
        %3671 = vadd.xlane.f32.xlu0 %v3640
        %v3672 = vpop.xlane.xlu0 %3671
        %3673 = vadd.xlane.f32.xlu0 %v3642
        %v3674 = vpop.xlane.xlu0 %3673
        %3675 = vadd.xlane.f32.xlu0 %v3644
        %v3676 = vpop.xlane.xlu0 %3675
        %3677 = vadd.xlane.f32.xlu0 %v3646
        %v3678 = vpop.xlane.xlu0 %3677
        %3679 = vadd.xlane.f32.xlu0 %v3648
        %v3680 = vpop.xlane.xlu0 %3679
        %3681 = vadd.xlane.f32.xlu0 %v3650
        %v3682 = vpop.xlane.xlu0 %3681
        %3683 = vadd.xlane.f32.xlu0 %v3652
        %v3684 = vpop.xlane.xlu0 %3683
        %3685 = vadd.xlane.f32.xlu0 %v3654
        %v3686 = vpop.xlane.xlu0 %3685
        %3687 = vadd.xlane.f32.xlu0 %v3656
        %v3688 = vpop.xlane.xlu0 %3687
        %3689 = vadd.xlane.f32.xlu0 %v3658
        %v3690 = vpop.xlane.xlu0 %3689
        %3691 = vadd.xlane.f32.xlu0 %v3660
        %v3692 = vpop.xlane.xlu0 %3691
        %3693 = vadd.xlane.f32.xlu0 %v3662
        %v3694 = vpop.xlane.xlu0 %3693
        %3695 = vadd.xlane.f32.xlu0 %v3664
        %v3696 = vpop.xlane.xlu0 %3695
        %3697 = vadd.xlane.f32.xlu0 %v3666
        %v3698 = vpop.xlane.xlu0 %3697
        %v3699 = vrcp.pop %v3668
        %v3700 = vmul.f32 %v3636, %v3699
        %v3701 = vrcp.pop %v3670
        %v3702 = vmul.f32 %v3638, %v3701
        %v3703 = vrcp.pop %v3672
        %v3704 = vmul.f32 %v3640, %v3703
        %v3705 = vrcp.pop %v3674
        %v3706 = vmul.f32 %v3642, %v3705
        %v3707 = vrcp.pop %v3676
        %v3708 = vmul.f32 %v3644, %v3707
        %v3709 = vrcp.pop %v3678
        %v3710 = vmul.f32 %v3646, %v3709
        %v3711 = vrcp.pop %v3680
        %v3712 = vmul.f32 %v3648, %v3711
        %v3713 = vrcp.pop %v3682
        %v3714 = vmul.f32 %v3650, %v3713
        %v3715 = vrcp.pop %v3684
        %v3716 = vmul.f32 %v3652, %v3715
        %v3717 = vrcp.pop %v3686
        %v3718 = vmul.f32 %v3654, %v3717
        %v3719 = vrcp.pop %v3688
        %v3720 = vmul.f32 %v3656, %v3719
        %v3721 = vrcp.pop %v3690
        %v3722 = vmul.f32 %v3658, %v3721
        %v3723 = vrcp.pop %v3692
        %v3724 = vmul.f32 %v3660, %v3723
        %v3725 = vrcp.pop %v3694
        %v3726 = vmul.f32 %v3662, %v3725
        %v3727 = vrcp.pop %v3696
        %v3728 = vmul.f32 %v3664, %v3727
        %v3729 = vrcp.pop %v3698
        %v3730 = vmul.f32 %v3666, %v3729
        %3731 = vrot.lane.b32.xlu0 %v1244, 40
        %v3732 = vpop.permute.xlu0 %3731
        %3733 = vrot.lane.b32.xlu0 %v1249, 40
        %v3734 = vpop.permute.xlu0 %3733
        %3735 = vrot.lane.b32.xlu0 %v1254, 40
        %v3736 = vpop.permute.xlu0 %3735
        %3737 = vrot.lane.b32.xlu0 %v1259, 40
        %v3738 = vpop.permute.xlu0 %3737
        %3739 = vrot.lane.b32.xlu0 %v1264, 40
        %v3740 = vpop.permute.xlu0 %3739
        %3741 = vrot.lane.b32.xlu0 %v1269, 40
        %v3742 = vpop.permute.xlu0 %3741
        %3743 = vrot.lane.b32.xlu0 %v1274, 40
        %v3744 = vpop.permute.xlu0 %3743
        %3745 = vrot.lane.b32.xlu0 %v1279, 40
        %v3746 = vpop.permute.xlu0 %3745
        %3747 = vrot.lane.b32.xlu0 %v1284, 40
        %v3748 = vpop.permute.xlu0 %3747
        %3749 = vrot.lane.b32.xlu0 %v1289, 40
        %v3750 = vpop.permute.xlu0 %3749
        %3751 = vrot.lane.b32.xlu0 %v1294, 40
        %v3752 = vpop.permute.xlu0 %3751
        %3753 = vrot.lane.b32.xlu0 %v1299, 40
        %v3754 = vpop.permute.xlu0 %3753
        %3755 = vrot.lane.b32.xlu0 %v1304, 40
        %v3756 = vpop.permute.xlu0 %3755
        %3757 = vrot.lane.b32.xlu0 %v1309, 40
        %v3758 = vpop.permute.xlu0 %3757
        %3759 = vrot.lane.b32.xlu0 %v1314, 40
        %v3760 = vpop.permute.xlu0 %3759
        %3761 = vrot.lane.b32.xlu0 %v1319, 40
        %v3762 = vpop.permute.xlu0 %3761
        %3779 = vmatprep.subr.mxu0 0.0
        %3780 = vmatpush1.msra.mxu0 %v3732
        %3781 = vmatprep.subr.mxu0 0.0
        %3782 = vmatpush1.msra.mxu0 %v3734
        %3783 = vmatprep.subr.mxu0 0.0
        %3784 = vmatpush1.msra.mxu0 %v3736
        %3785 = vmatprep.subr.mxu0 0.0
        %3786 = vmatpush1.msra.mxu0 %v3738
        %3787 = vmatprep.subr.mxu0 0.0
        %3788 = vmatpush1.msra.mxu0 %v3740
        %3789 = vmatprep.subr.mxu0 0.0
        %3790 = vmatpush1.msra.mxu0 %v3742
        %3791 = vmatprep.subr.mxu0 0.0
        %3792 = vmatpush1.msra.mxu0 %v3744
        %3793 = vmatprep.subr.mxu0 0.0
        %3794 = vmatpush1.msra.mxu0 %v3746
        %3795 = vmatprep.subr.mxu0 0.0
        %3796 = vmatpush1.msra.mxu0 %v3748
        %3797 = vmatprep.subr.mxu0 0.0
        %3798 = vmatpush1.msra.mxu0 %v3750
        %3799 = vmatprep.subr.mxu0 0.0
        %3800 = vmatpush1.msra.mxu0 %v3752
        %3801 = vmatprep.subr.mxu0 0.0
        %3802 = vmatpush1.msra.mxu0 %v3754
        %3803 = vmatprep.subr.mxu0 0.0
        %3804 = vmatpush1.msra.mxu0 %v3756
        %3805 = vmatprep.subr.mxu0 0.0
        %3806 = vmatpush1.msra.mxu0 %v3758
        %3807 = vmatprep.subr.mxu0 0.0
        %3808 = vmatpush1.msra.mxu0 %v3760
        %3809 = vmatprep.subr.mxu0 0.0
        %3810 = vmatpush1.msra.mxu0 %v3762
        %3811 = vmatprep.subr.mxu0 0.0
        %3812 = vmatpush1.msra.mxu0 0.0
        %3813 = vmatprep.subr.mxu0 0.0
        %3814 = vmatpush1.msra.mxu0 0.0
        %3815 = vmatprep.subr.mxu0 0.0
        %3816 = vmatpush1.msra.mxu0 0.0
        %3817 = vmatprep.subr.mxu0 0.0
        %3818 = vmatpush1.msra.mxu0 0.0
        %3819 = vmatprep.subr.mxu0 0.0
        %3820 = vmatpush1.msra.mxu0 0.0
        %3821 = vmatprep.subr.mxu0 0.0
        %3822 = vmatpush1.msra.mxu0 0.0
        %3823 = vmatprep.subr.mxu0 0.0
        %3824 = vmatpush1.msra.mxu0 0.0
        %3825 = vmatprep.subr.mxu0 0.0
        %3826 = vmatpush1.msra.mxu0 0.0
        %3827 = vmatprep.subr.mxu0 0.0
        %3828 = vmatpush1.msra.mxu0 0.0
        %3829 = vmatprep.subr.mxu0 0.0
        %3830 = vmatpush1.msra.mxu0 0.0
        %3831 = vmatprep.subr.mxu0 0.0
        %3832 = vmatpush1.msra.mxu0 0.0
        %3833 = vmatprep.subr.mxu0 0.0
        %3834 = vmatpush1.msra.mxu0 0.0
        %3835 = vmatprep.subr.mxu0 0.0
        %3836 = vmatpush1.msra.mxu0 0.0
        %3837 = vmatprep.subr.mxu0 0.0
        %3838 = vmatpush1.msra.mxu0 0.0
        %3839 = vmatprep.subr.mxu0 0.0
        %3840 = vmatpush1.msra.mxu0 0.0
        %3841 = vmatprep.subr.mxu0 0.0
        %3842 = vmatpush1.msra.mxu0 0.0
        %3843 = vmatprep.mubr.f32.mxu0 0.0
        %3844 = vmatmul.mubr.f32.gmra.mrb[0].mxu0 %v3700
        %v3845 = vpop.f32.mrb[0].mxu0
        %v3846 = vadd.f32 0.0, %v3845
        %v3847 = vpop.f32.mrb[0].mxu0
        %3848 = vmatprep.mubr.f32.mxu0 0.0
        %3849 = vmatmul.mubr.f32.gmra.mrb[0].mxu0 %v3702
        %v3850 = vpop.f32.mrb[0].mxu0
        %v3851 = vadd.f32 0.0, %v3850
        %v3852 = vpop.f32.mrb[0].mxu0
        %3853 = vmatprep.mubr.f32.mxu0 0.0
        %3854 = vmatmul.mubr.f32.gmra.mrb[0].mxu0 %v3704
        %v3855 = vpop.f32.mrb[0].mxu0
        %v3856 = vadd.f32 0.0, %v3855
        %v3857 = vpop.f32.mrb[0].mxu0
        %3858 = vmatprep.mubr.f32.mxu0 0.0
        %3859 = vmatmul.mubr.f32.gmra.mrb[0].mxu0 %v3706
        %v3860 = vpop.f32.mrb[0].mxu0
        %v3861 = vadd.f32 0.0, %v3860
        %v3862 = vpop.f32.mrb[0].mxu0
        %3863 = vmatprep.mubr.f32.mxu0 0.0
        %3864 = vmatmul.mubr.f32.gmra.mrb[0].mxu0 %v3708
        %v3865 = vpop.f32.mrb[0].mxu0
        %v3866 = vadd.f32 0.0, %v3865
        %v3867 = vpop.f32.mrb[0].mxu0
        %3868 = vmatprep.mubr.f32.mxu0 0.0
        %3869 = vmatmul.mubr.f32.gmra.mrb[0].mxu0 %v3710
        %v3870 = vpop.f32.mrb[0].mxu0
        %v3871 = vadd.f32 0.0, %v3870
        %v3872 = vpop.f32.mrb[0].mxu0
        %3873 = vmatprep.mubr.f32.mxu0 0.0
        %3874 = vmatmul.mubr.f32.gmra.mrb[0].mxu0 %v3712
        %v3875 = vpop.f32.mrb[0].mxu0
        %v3876 = vadd.f32 0.0, %v3875
        %v3877 = vpop.f32.mrb[0].mxu0
        %3878 = vmatprep.mubr.f32.mxu0 0.0
        %3879 = vmatmul.mubr.f32.gmra.mrb[0].mxu0 %v3714
        %v3880 = vpop.f32.mrb[0].mxu0
        %v3881 = vadd.f32 0.0, %v3880
        %v3882 = vpop.f32.mrb[0].mxu0
        %3883 = vmatprep.mubr.f32.mxu0 0.0
        %3884 = vmatmul.mubr.f32.gmra.mrb[0].mxu0 %v3716
        %v3885 = vpop.f32.mrb[0].mxu0
        %v3886 = vadd.f32 0.0, %v3885
        %v3887 = vpop.f32.mrb[0].mxu0
        %3888 = vmatprep.mubr.f32.mxu0 0.0
        %3889 = vmatmul.mubr.f32.gmra.mrb[0].mxu0 %v3718
        %v3890 = vpop.f32.mrb[0].mxu0
        %v3891 = vadd.f32 0.0, %v3890
        %v3892 = vpop.f32.mrb[0].mxu0
        %3893 = vmatprep.mubr.f32.mxu0 0.0
        %3894 = vmatmul.mubr.f32.gmra.mrb[0].mxu0 %v3720
        %v3895 = vpop.f32.mrb[0].mxu0
        %v3896 = vadd.f32 0.0, %v3895
        %v3897 = vpop.f32.mrb[0].mxu0
        %3898 = vmatprep.mubr.f32.mxu0 0.0
        %3899 = vmatmul.mubr.f32.gmra.mrb[0].mxu0 %v3722
        %v3900 = vpop.f32.mrb[0].mxu0
        %v3901 = vadd.f32 0.0, %v3900
        %v3902 = vpop.f32.mrb[0].mxu0
        %3903 = vmatprep.mubr.f32.mxu0 0.0
        %3904 = vmatmul.mubr.f32.gmra.mrb[0].mxu0 %v3724
        %v3905 = vpop.f32.mrb[0].mxu0
        %v3906 = vadd.f32 0.0, %v3905
        %v3907 = vpop.f32.mrb[0].mxu0
        %3908 = vmatprep.mubr.f32.mxu0 0.0
        %3909 = vmatmul.mubr.f32.gmra.mrb[0].mxu0 %v3726
        %v3910 = vpop.f32.mrb[0].mxu0
        %v3911 = vadd.f32 0.0, %v3910
        %v3912 = vpop.f32.mrb[0].mxu0
        %3913 = vmatprep.mubr.f32.mxu0 0.0
        %3914 = vmatmul.mubr.f32.gmra.mrb[0].mxu0 %v3728
        %v3915 = vpop.f32.mrb[0].mxu0
        %v3916 = vadd.f32 0.0, %v3915
        %v3917 = vpop.f32.mrb[0].mxu0
        %3918 = vmatprep.mubr.f32.mxu0 0.0
        %3919 = vmatmul.mubr.f32.gmra.mrb[0].mxu0 %v3730
        %v3920 = vpop.f32.mrb[0].mxu0
        %v3921 = vadd.f32 0.0, %v3920
        %v3922 = vpop.f32.mrb[0].mxu0
        %3923 = vdwg.mxu0
        %3940 = vrot.lane.b32.xlu0 %v3846, 24
        %v3941 = vpop.permute.xlu0 %3940
        %3942 = vrot.lane.b32.xlu0 %v3851, 24
        %v3943 = vpop.permute.xlu0 %3942
        %3944 = vrot.lane.b32.xlu0 %v3856, 24
        %v3945 = vpop.permute.xlu0 %3944
        %3946 = vrot.lane.b32.xlu0 %v3861, 24
        %v3947 = vpop.permute.xlu0 %3946
        %3948 = vrot.lane.b32.xlu0 %v3866, 24
        %v3949 = vpop.permute.xlu0 %3948
        %3950 = vrot.lane.b32.xlu0 %v3871, 24
        %v3951 = vpop.permute.xlu0 %3950
        %3952 = vrot.lane.b32.xlu0 %v3876, 24
        %v3953 = vpop.permute.xlu0 %3952
        %3954 = vrot.lane.b32.xlu0 %v3881, 24
        %v3955 = vpop.permute.xlu0 %3954
        %3956 = vrot.lane.b32.xlu0 %v3886, 24
        %v3957 = vpop.permute.xlu0 %3956
        %3958 = vrot.lane.b32.xlu0 %v3891, 24
        %v3959 = vpop.permute.xlu0 %3958
        %3960 = vrot.lane.b32.xlu0 %v3896, 24
        %v3961 = vpop.permute.xlu0 %3960
        %3962 = vrot.lane.b32.xlu0 %v3901, 24
        %v3963 = vpop.permute.xlu0 %3962
        %3964 = vrot.lane.b32.xlu0 %v3906, 24
        %v3965 = vpop.permute.xlu0 %3964
        %3966 = vrot.lane.b32.xlu0 %v3911, 24
        %v3967 = vpop.permute.xlu0 %3966
        %3968 = vrot.lane.b32.xlu0 %v3916, 24
        %v3969 = vpop.permute.xlu0 %3968
        %3970 = vrot.lane.b32.xlu0 %v3921, 24
        %v3971 = vpop.permute.xlu0 %3970
        %vm3988 = vcmask 261312
        %3989 = vst.msk [vmem:[#allocation2] sm:$0xff] %vm3988, %v3941
        %3990 = vst.msk [vmem:[#allocation2 + $0x8] sm:$0xff] %vm3988, %v3943
        %3991 = vst.msk [vmem:[#allocation2 + $0x10] sm:$0xff] %vm3988, %v3945
        %3992 = vst.msk [vmem:[#allocation2 + $0x18] sm:$0xff] %vm3988, %v3947
        %3993 = vst.msk [vmem:[#allocation2 + $0x20] sm:$0xff] %vm3988, %v3949
        %3994 = vst.msk [vmem:[#allocation2 + $0x28] sm:$0xff] %vm3988, %v3951
        %3995 = vst.msk [vmem:[#allocation2 + $0x30] sm:$0xff] %vm3988, %v3953
        %3996 = vst.msk [vmem:[#allocation2 + $0x38] sm:$0xff] %vm3988, %v3955
        %3997 = vst.msk [vmem:[#allocation2 + $0x40] sm:$0xff] %vm3988, %v3957
        %3998 = vst.msk [vmem:[#allocation2 + $0x48] sm:$0xff] %vm3988, %v3959
        %3999 = vst.msk [vmem:[#allocation2 + $0x50] sm:$0xff] %vm3988, %v3961
        %4000 = vst.msk [vmem:[#allocation2 + $0x58] sm:$0xff] %vm3988, %v3963
        %4001 = vst.msk [vmem:[#allocation2 + $0x60] sm:$0xff] %vm3988, %v3965
        %4002 = vst.msk [vmem:[#allocation2 + $0x68] sm:$0xff] %vm3988, %v3967
        %4003 = vst.msk [vmem:[#allocation2 + $0x70] sm:$0xff] %vm3988, %v3969
        %4004 = vst.msk [vmem:[#allocation2 + $0x78] sm:$0xff] %vm3988, %v3971
        %v4005 = vld [vmem:[#allocation2] sm:$0xff]
        %v4006 = vld [vmem:[#allocation2 + $0x8] sm:$0xff]
        %v4007 = vld [vmem:[#allocation2 + $0x10] sm:$0xff]
        %v4008 = vld [vmem:[#allocation2 + $0x18] sm:$0xff]
        %v4009 = vld [vmem:[#allocation2 + $0x20] sm:$0xff]
        %v4010 = vld [vmem:[#allocation2 + $0x28] sm:$0xff]
        %v4011 = vld [vmem:[#allocation2 + $0x30] sm:$0xff]
        %v4012 = vld [vmem:[#allocation2 + $0x38] sm:$0xff]
        %v4013 = vld [vmem:[#allocation2 + $0x40] sm:$0xff]
        %v4014 = vld [vmem:[#allocation2 + $0x48] sm:$0xff]
        %v4015 = vld [vmem:[#allocation2 + $0x50] sm:$0xff]
        %v4016 = vld [vmem:[#allocation2 + $0x58] sm:$0xff]
        %v4017 = vld [vmem:[#allocation2 + $0x60] sm:$0xff]
        %v4018 = vld [vmem:[#allocation2 + $0x68] sm:$0xff]
        %v4019 = vld [vmem:[#allocation2 + $0x70] sm:$0xff]
        %v4020 = vld [vmem:[#allocation2 + $0x78] sm:$0xff]
        %v4021 = vadd.f32 %v1113, %v4005
        %v4022 = vadd.f32 %v1114, %v4006
        %v4023 = vadd.f32 %v1115, %v4007
        %v4024 = vadd.f32 %v1116, %v4008
        %v4025 = vadd.f32 %v1117, %v4009
        %v4026 = vadd.f32 %v1118, %v4010
        %v4027 = vadd.f32 %v1119, %v4011
        %v4028 = vadd.f32 %v1120, %v4012
        %v4029 = vadd.f32 %v1121, %v4013
        %v4030 = vadd.f32 %v1122, %v4014
        %v4031 = vadd.f32 %v1123, %v4015
        %v4032 = vadd.f32 %v1124, %v4016
        %v4033 = vadd.f32 %v1125, %v4017
        %v4034 = vadd.f32 %v1126, %v4018
        %v4035 = vadd.f32 %v1127, %v4019
        %v4036 = vadd.f32 %v1128, %v4020
        %v4037 = vsel %vm879, %v4021, 0.0
        %4038 = vadd.xlane.f32.xlu0 %v4037
        %v4039 = vpop.xlane.xlu0 %4038
        %v4040 = vsel %vm879, %v4022, 0.0
        %4041 = vadd.xlane.f32.xlu0 %v4040
        %v4042 = vpop.xlane.xlu0 %4041
        %v4043 = vsel %vm879, %v4023, 0.0
        %4044 = vadd.xlane.f32.xlu0 %v4043
        %v4045 = vpop.xlane.xlu0 %4044
        %v4046 = vsel %vm879, %v4024, 0.0
        %4047 = vadd.xlane.f32.xlu0 %v4046
        %v4048 = vpop.xlane.xlu0 %4047
        %v4049 = vsel %vm879, %v4025, 0.0
        %4050 = vadd.xlane.f32.xlu0 %v4049
        %v4051 = vpop.xlane.xlu0 %4050
        %v4052 = vsel %vm879, %v4026, 0.0
        %4053 = vadd.xlane.f32.xlu0 %v4052
        %v4054 = vpop.xlane.xlu0 %4053
        %v4055 = vsel %vm879, %v4027, 0.0
        %4056 = vadd.xlane.f32.xlu0 %v4055
        %v4057 = vpop.xlane.xlu0 %4056
        %v4058 = vsel %vm879, %v4028, 0.0
        %4059 = vadd.xlane.f32.xlu0 %v4058
        %v4060 = vpop.xlane.xlu0 %4059
        %v4061 = vsel %vm879, %v4029, 0.0
        %4062 = vadd.xlane.f32.xlu0 %v4061
        %v4063 = vpop.xlane.xlu0 %4062
        %v4064 = vsel %vm879, %v4030, 0.0
        %4065 = vadd.xlane.f32.xlu0 %v4064
        %v4066 = vpop.xlane.xlu0 %4065
        %v4067 = vsel %vm879, %v4031, 0.0
        %4068 = vadd.xlane.f32.xlu0 %v4067
        %v4069 = vpop.xlane.xlu0 %4068
        %v4070 = vsel %vm879, %v4032, 0.0
        %4071 = vadd.xlane.f32.xlu0 %v4070
        %v4072 = vpop.xlane.xlu0 %4071
        %v4073 = vsel %vm879, %v4033, 0.0
        %4074 = vadd.xlane.f32.xlu0 %v4073
        %v4075 = vpop.xlane.xlu0 %4074
        %v4076 = vsel %vm879, %v4034, 0.0
        %4077 = vadd.xlane.f32.xlu0 %v4076
        %v4078 = vpop.xlane.xlu0 %4077
        %v4079 = vsel %vm879, %v4035, 0.0
        %4080 = vadd.xlane.f32.xlu0 %v4079
        %v4081 = vpop.xlane.xlu0 %4080
        %v4082 = vsel %vm879, %v4036, 0.0
        %4083 = vadd.xlane.f32.xlu0 %v4082
        %v4084 = vpop.xlane.xlu0 %4083
        %v4085 = vmul.f32 %v4039, %v928
        %v4086 = vmul.f32 %v4042, %v928
        %v4087 = vmul.f32 %v4045, %v928
        %v4088 = vmul.f32 %v4048, %v928
        %v4089 = vmul.f32 %v4051, %v928
        %v4090 = vmul.f32 %v4054, %v928
        %v4091 = vmul.f32 %v4057, %v928
        %v4092 = vmul.f32 %v4060, %v928
        %v4093 = vmul.f32 %v4063, %v928
        %v4094 = vmul.f32 %v4066, %v928
        %v4095 = vmul.f32 %v4069, %v928
        %v4096 = vmul.f32 %v4072, %v928
        %v4097 = vmul.f32 %v4075, %v928
        %v4098 = vmul.f32 %v4078, %v928
        %v4099 = vmul.f32 %v4081, %v928
        %v4100 = vmul.f32 %v4084, %v928
        %v4101 = vsub.f32 %v4021, %v4085
        %v4102 = vsub.f32 %v4022, %v4086
        %v4103 = vsub.f32 %v4023, %v4087
        %v4104 = vsub.f32 %v4024, %v4088
        %v4105 = vsub.f32 %v4025, %v4089
        %v4106 = vsub.f32 %v4026, %v4090
        %v4107 = vsub.f32 %v4027, %v4091
        %v4108 = vsub.f32 %v4028, %v4092
        %v4109 = vsub.f32 %v4029, %v4093
        %v4110 = vsub.f32 %v4030, %v4094
        %v4111 = vsub.f32 %v4031, %v4095
        %v4112 = vsub.f32 %v4032, %v4096
        %v4113 = vsub.f32 %v4033, %v4097
        %v4114 = vsub.f32 %v4034, %v4098
        %v4115 = vsub.f32 %v4035, %v4099
        %v4116 = vsub.f32 %v4036, %v4100
        %v4117 = vmul.f32 %v4101, %v4101
        %v4118 = vmul.f32 %v4102, %v4102
        %v4119 = vmul.f32 %v4103, %v4103
        %v4120 = vmul.f32 %v4104, %v4104
        %v4121 = vmul.f32 %v4105, %v4105
        %v4122 = vmul.f32 %v4106, %v4106
        %v4123 = vmul.f32 %v4107, %v4107
        %v4124 = vmul.f32 %v4108, %v4108
        %v4125 = vmul.f32 %v4109, %v4109
        %v4126 = vmul.f32 %v4110, %v4110
        %v4127 = vmul.f32 %v4111, %v4111
        %v4128 = vmul.f32 %v4112, %v4112
        %v4129 = vmul.f32 %v4113, %v4113
        %v4130 = vmul.f32 %v4114, %v4114
        %v4131 = vmul.f32 %v4115, %v4115
        %v4132 = vmul.f32 %v4116, %v4116
        %v4133 = vsel %vm879, %v4117, 0.0
        %4134 = vadd.xlane.f32.xlu0 %v4133
        %v4135 = vpop.xlane.xlu0 %4134
        %v4136 = vsel %vm879, %v4118, 0.0
        %4137 = vadd.xlane.f32.xlu0 %v4136
        %v4138 = vpop.xlane.xlu0 %4137
        %v4139 = vsel %vm879, %v4119, 0.0
        %4140 = vadd.xlane.f32.xlu0 %v4139
        %v4141 = vpop.xlane.xlu0 %4140
        %v4142 = vsel %vm879, %v4120, 0.0
        %4143 = vadd.xlane.f32.xlu0 %v4142
        %v4144 = vpop.xlane.xlu0 %4143
        %v4145 = vsel %vm879, %v4121, 0.0
        %4146 = vadd.xlane.f32.xlu0 %v4145
        %v4147 = vpop.xlane.xlu0 %4146
        %v4148 = vsel %vm879, %v4122, 0.0
        %4149 = vadd.xlane.f32.xlu0 %v4148
        %v4150 = vpop.xlane.xlu0 %4149
        %v4151 = vsel %vm879, %v4123, 0.0
        %4152 = vadd.xlane.f32.xlu0 %v4151
        %v4153 = vpop.xlane.xlu0 %4152
        %v4154 = vsel %vm879, %v4124, 0.0
        %4155 = vadd.xlane.f32.xlu0 %v4154
        %v4156 = vpop.xlane.xlu0 %4155
        %v4157 = vsel %vm879, %v4125, 0.0
        %4158 = vadd.xlane.f32.xlu0 %v4157
        %v4159 = vpop.xlane.xlu0 %4158
        %v4160 = vsel %vm879, %v4126, 0.0
        %4161 = vadd.xlane.f32.xlu0 %v4160
        %v4162 = vpop.xlane.xlu0 %4161
        %v4163 = vsel %vm879, %v4127, 0.0
        %4164 = vadd.xlane.f32.xlu0 %v4163
        %v4165 = vpop.xlane.xlu0 %4164
        %v4166 = vsel %vm879, %v4128, 0.0
        %4167 = vadd.xlane.f32.xlu0 %v4166
        %v4168 = vpop.xlane.xlu0 %4167
        %v4169 = vsel %vm879, %v4129, 0.0
        %4170 = vadd.xlane.f32.xlu0 %v4169
        %v4171 = vpop.xlane.xlu0 %4170
        %v4172 = vsel %vm879, %v4130, 0.0
        %4173 = vadd.xlane.f32.xlu0 %v4172
        %v4174 = vpop.xlane.xlu0 %4173
        %v4175 = vsel %vm879, %v4131, 0.0
        %4176 = vadd.xlane.f32.xlu0 %v4175
        %v4177 = vpop.xlane.xlu0 %4176
        %v4178 = vsel %vm879, %v4132, 0.0
        %4179 = vadd.xlane.f32.xlu0 %v4178
        %v4180 = vpop.xlane.xlu0 %4179
        %v4181 = vmul.f32 %v4135, %v928
        %v4182 = vmul.f32 %v4138, %v928
        %v4183 = vmul.f32 %v4141, %v928
        %v4184 = vmul.f32 %v4144, %v928
        %v4185 = vmul.f32 %v4147, %v928
        %v4186 = vmul.f32 %v4150, %v928
        %v4187 = vmul.f32 %v4153, %v928
        %v4188 = vmul.f32 %v4156, %v928
        %v4189 = vmul.f32 %v4159, %v928
        %v4190 = vmul.f32 %v4162, %v928
        %v4191 = vmul.f32 %v4165, %v928
        %v4192 = vmul.f32 %v4168, %v928
        %v4193 = vmul.f32 %v4171, %v928
        %v4194 = vmul.f32 %v4174, %v928
        %v4195 = vmul.f32 %v4177, %v928
        %v4196 = vmul.f32 %v4180, %v928
        %v4197 = vadd.f32 %v4181, 1e-05
        %v4198 = vadd.f32 %v4182, 1e-05
        %v4199 = vadd.f32 %v4183, 1e-05
        %v4200 = vadd.f32 %v4184, 1e-05
        %v4201 = vadd.f32 %v4185, 1e-05
        %v4202 = vadd.f32 %v4186, 1e-05
        %v4203 = vadd.f32 %v4187, 1e-05
        %v4204 = vadd.f32 %v4188, 1e-05
        %v4205 = vadd.f32 %v4189, 1e-05
        %v4206 = vadd.f32 %v4190, 1e-05
        %v4207 = vadd.f32 %v4191, 1e-05
        %v4208 = vadd.f32 %v4192, 1e-05
        %v4209 = vadd.f32 %v4193, 1e-05
        %v4210 = vadd.f32 %v4194, 1e-05
        %v4211 = vadd.f32 %v4195, 1e-05
        %v4212 = vadd.f32 %v4196, 1e-05
        %v4213 = vrsqrt.pop %v4197
        %v4214 = vrsqrt.pop %v4198
        %v4215 = vrsqrt.pop %v4199
        %v4216 = vrsqrt.pop %v4200
        %v4217 = vrsqrt.pop %v4201
        %v4218 = vrsqrt.pop %v4202
        %v4219 = vrsqrt.pop %v4203
        %v4220 = vrsqrt.pop %v4204
        %v4221 = vrsqrt.pop %v4205
        %v4222 = vrsqrt.pop %v4206
        %v4223 = vrsqrt.pop %v4207
        %v4224 = vrsqrt.pop %v4208
        %v4225 = vrsqrt.pop %v4209
        %v4226 = vrsqrt.pop %v4210
        %v4227 = vrsqrt.pop %v4211
        %v4228 = vrsqrt.pop %v4212
        %v4229 = vmul.f32 %v4101, %v4213
        %v4230 = vmul.f32 %v4102, %v4214
        %v4231 = vmul.f32 %v4103, %v4215
        %v4232 = vmul.f32 %v4104, %v4216
        %v4233 = vmul.f32 %v4105, %v4217
        %v4234 = vmul.f32 %v4106, %v4218
        %v4235 = vmul.f32 %v4107, %v4219
        %v4236 = vmul.f32 %v4108, %v4220
        %v4237 = vmul.f32 %v4109, %v4221
        %v4238 = vmul.f32 %v4110, %v4222
        %v4239 = vmul.f32 %v4111, %v4223
        %v4240 = vmul.f32 %v4112, %v4224
        %v4241 = vmul.f32 %v4113, %v4225
        %v4242 = vmul.f32 %v4114, %v4226
        %v4243 = vmul.f32 %v4115, %v4227
        %v4244 = vmul.f32 %v4116, %v4228
        %v4245 = vlaneseq
        %v4246 = vshrl.u32 %v4245, 7
        %v4247 = vsub.s32 4, %v4246
        %v4248 = vrot.slane %v235, %v4247
        %v4249 = vmul.f32 %v4229, %v4248
        %v4250 = vmul.f32 %v4230, %v4248
        %v4251 = vmul.f32 %v4231, %v4248
        %v4252 = vmul.f32 %v4232, %v4248
        %v4253 = vmul.f32 %v4233, %v4248
        %v4254 = vmul.f32 %v4234, %v4248
        %v4255 = vmul.f32 %v4235, %v4248
        %v4256 = vmul.f32 %v4236, %v4248
        %v4257 = vmul.f32 %v4237, %v4248
        %v4258 = vmul.f32 %v4238, %v4248
        %v4259 = vmul.f32 %v4239, %v4248
        %v4260 = vmul.f32 %v4240, %v4248
        %v4261 = vmul.f32 %v4241, %v4248
        %v4262 = vmul.f32 %v4242, %v4248
        %v4263 = vmul.f32 %v4243, %v4248
        %v4264 = vmul.f32 %v4244, %v4248
        %v4265 = vlaneseq
        %v4266 = vshrl.u32 %v4265, 7
        %v4267 = vsub.s32 5, %v4266
        %v4268 = vrot.slane %v235, %v4267
        %v4269 = vadd.f32 %v4249, %v4268
        %v4270 = vadd.f32 %v4250, %v4268
        %v4271 = vadd.f32 %v4251, %v4268
        %v4272 = vadd.f32 %v4252, %v4268
        %v4273 = vadd.f32 %v4253, %v4268
        %v4274 = vadd.f32 %v4254, %v4268
        %v4275 = vadd.f32 %v4255, %v4268
        %v4276 = vadd.f32 %v4256, %v4268
        %v4277 = vadd.f32 %v4257, %v4268
        %v4278 = vadd.f32 %v4258, %v4268
        %v4279 = vadd.f32 %v4259, %v4268
        %v4280 = vadd.f32 %v4260, %v4268
        %v4281 = vadd.f32 %v4261, %v4268
        %v4282 = vadd.f32 %v4262, %v4268
        %v4283 = vadd.f32 %v4263, %v4268
        %v4284 = vadd.f32 %v4264, %v4268
        %v4285 = vlaneseq
        %v4286 = vshrl.u32 %v4285, 7
        %v4287 = vsub.s32 6, %v4286
        %v4288 = vrot.slane %v235, %v4287
        %v4290 = vsel %vm879, %v4269, 0
        %v4293 = vsel %vm879, %v4270, 0
        %v4296 = vsel %vm879, %v4271, 0
        %v4299 = vsel %vm879, %v4272, 0
        %v4302 = vsel %vm879, %v4273, 0
        %v4305 = vsel %vm879, %v4274, 0
        %v4308 = vsel %vm879, %v4275, 0
        %v4311 = vsel %vm879, %v4276, 0
        %v4314 = vsel %vm879, %v4277, 0
        %v4317 = vsel %vm879, %v4278, 0
        %v4320 = vsel %vm879, %v4279, 0
        %v4323 = vsel %vm879, %v4280, 0
        %v4326 = vsel %vm879, %v4281, 0
        %v4329 = vsel %vm879, %v4282, 0
        %v4332 = vsel %vm879, %v4283, 0
        %v4335 = vsel %vm879, %v4284, 0
        %4337 = vmatprep.subr.mxu0 0.0
        %4338 = vmatpush1.msra.mxu0 %v870
        %4339 = vmatprep.subr.mxu0 0.0
        %4340 = vmatpush1.msra.mxu0 %v871
        %4341 = vmatprep.subr.mxu0 0.0
        %4342 = vmatpush1.msra.mxu0 %v872
        %4343 = vmatprep.subr.mxu0 0.0
        %4344 = vmatpush1.msra.mxu0 %v873
        %4345 = vmatprep.subr.mxu0 0.0
        %4346 = vmatpush1.msra.mxu0 0.0
        %4347 = vmatprep.subr.mxu0 0.0
        %4348 = vmatpush1.msra.mxu0 0.0
        %4349 = vmatprep.subr.mxu0 0.0
        %4350 = vmatpush1.msra.mxu0 0.0
        %4351 = vmatprep.subr.mxu0 0.0
        %4352 = vmatpush1.msra.mxu0 0.0
        %4353 = vmatprep.subr.mxu0 0.0
        %4354 = vmatpush1.msra.mxu0 0.0
        %4355 = vmatprep.subr.mxu0 0.0
        %4356 = vmatpush1.msra.mxu0 0.0
        %4357 = vmatprep.subr.mxu0 0.0
        %4358 = vmatpush1.msra.mxu0 0.0
        %4359 = vmatprep.subr.mxu0 0.0
        %4360 = vmatpush1.msra.mxu0 0.0
        %4361 = vmatprep.subr.mxu0 0.0
        %4362 = vmatpush1.msra.mxu0 0.0
        %4363 = vmatprep.subr.mxu0 0.0
        %4364 = vmatpush1.msra.mxu0 0.0
        %4365 = vmatprep.subr.mxu0 0.0
        %4366 = vmatpush1.msra.mxu0 0.0
        %4367 = vmatprep.subr.mxu0 0.0
        %4368 = vmatpush1.msra.mxu0 0.0
        %4369 = vmatprep.subr.mxu0 0.0
        %4370 = vmatpush1.msra.mxu0 0.0
        %4371 = vmatprep.subr.mxu0 0.0
        %4372 = vmatpush1.msra.mxu0 0.0
        %4373 = vmatprep.subr.mxu0 0.0
        %4374 = vmatpush1.msra.mxu0 0.0
        %4375 = vmatprep.subr.mxu0 0.0
        %4376 = vmatpush1.msra.mxu0 0.0
        %4377 = vmatprep.subr.mxu0 0.0
        %4378 = vmatpush1.msra.mxu0 0.0
        %4379 = vmatprep.subr.mxu0 0.0
        %4380 = vmatpush1.msra.mxu0 0.0
        %4381 = vmatprep.subr.mxu0 0.0
        %4382 = vmatpush1.msra.mxu0 0.0
        %4383 = vmatprep.subr.mxu0 0.0
        %4384 = vmatpush1.msra.mxu0 0.0
        %4385 = vmatprep.subr.mxu0 0.0
        %4386 = vmatpush1.msra.mxu0 0.0
        %4387 = vmatprep.subr.mxu0 0.0
        %4388 = vmatpush1.msra.mxu0 0.0
        %4389 = vmatprep.subr.mxu0 0.0
        %4390 = vmatpush1.msra.mxu0 0.0
        %4391 = vmatprep.subr.mxu0 0.0
        %4392 = vmatpush1.msra.mxu0 0.0
        %4393 = vmatprep.subr.mxu0 0.0
        %4394 = vmatpush1.msra.mxu0 0.0
        %4395 = vmatprep.subr.mxu0 0.0
        %4396 = vmatpush1.msra.mxu0 0.0
        %4397 = vmatprep.subr.mxu0 0.0
        %4398 = vmatpush1.msra.mxu0 0.0
        %4399 = vmatprep.subr.mxu0 0.0
        %4400 = vmatpush1.msra.mxu0 0.0
        %4401 = vmatprep.mubr.f32.mxu0 0.0
        %4402 = vmatmul.mubr.f32.gmra.mrb[0].mxu0 %v4290
        %v4403 = vpop.f32.mrb[0].mxu0
        %v4404 = vadd.f32 %v4288, %v4403
        %v4405 = vpop.f32.mrb[0].mxu0
        %4406 = vmatprep.mubr.f32.mxu0 0.0
        %4407 = vmatmul.mubr.f32.gmra.mrb[0].mxu0 %v4293
        %v4408 = vpop.f32.mrb[0].mxu0
        %v4409 = vadd.f32 %v4288, %v4408
        %v4410 = vpop.f32.mrb[0].mxu0
        %4411 = vmatprep.mubr.f32.mxu0 0.0
        %4412 = vmatmul.mubr.f32.gmra.mrb[0].mxu0 %v4296
        %v4413 = vpop.f32.mrb[0].mxu0
        %v4414 = vadd.f32 %v4288, %v4413
        %v4415 = vpop.f32.mrb[0].mxu0
        %4416 = vmatprep.mubr.f32.mxu0 0.0
        %4417 = vmatmul.mubr.f32.gmra.mrb[0].mxu0 %v4299
        %v4418 = vpop.f32.mrb[0].mxu0
        %v4419 = vadd.f32 %v4288, %v4418
        %v4420 = vpop.f32.mrb[0].mxu0
        %4421 = vmatprep.mubr.f32.mxu0 0.0
        %4422 = vmatmul.mubr.f32.gmra.mrb[0].mxu0 %v4302
        %v4423 = vpop.f32.mrb[0].mxu0
        %v4424 = vadd.f32 %v4288, %v4423
        %v4425 = vpop.f32.mrb[0].mxu0
        %4426 = vmatprep.mubr.f32.mxu0 0.0
        %4427 = vmatmul.mubr.f32.gmra.mrb[0].mxu0 %v4305
        %v4428 = vpop.f32.mrb[0].mxu0
        %v4429 = vadd.f32 %v4288, %v4428
        %v4430 = vpop.f32.mrb[0].mxu0
        %4431 = vmatprep.mubr.f32.mxu0 0.0
        %4432 = vmatmul.mubr.f32.gmra.mrb[0].mxu0 %v4308
        %v4433 = vpop.f32.mrb[0].mxu0
        %v4434 = vadd.f32 %v4288, %v4433
        %v4435 = vpop.f32.mrb[0].mxu0
        %4436 = vmatprep.mubr.f32.mxu0 0.0
        %4437 = vmatmul.mubr.f32.gmra.mrb[0].mxu0 %v4311
        %v4438 = vpop.f32.mrb[0].mxu0
        %v4439 = vadd.f32 %v4288, %v4438
        %v4440 = vpop.f32.mrb[0].mxu0
        %4441 = vmatprep.mubr.f32.mxu0 0.0
        %4442 = vmatmul.mubr.f32.gmra.mrb[0].mxu0 %v4314
        %v4443 = vpop.f32.mrb[0].mxu0
        %v4444 = vadd.f32 %v4288, %v4443
        %v4445 = vpop.f32.mrb[0].mxu0
        %4446 = vmatprep.mubr.f32.mxu0 0.0
        %4447 = vmatmul.mubr.f32.gmra.mrb[0].mxu0 %v4317
        %v4448 = vpop.f32.mrb[0].mxu0
        %v4449 = vadd.f32 %v4288, %v4448
        %v4450 = vpop.f32.mrb[0].mxu0
        %4451 = vmatprep.mubr.f32.mxu0 0.0
        %4452 = vmatmul.mubr.f32.gmra.mrb[0].mxu0 %v4320
        %v4453 = vpop.f32.mrb[0].mxu0
        %v4454 = vadd.f32 %v4288, %v4453
        %v4455 = vpop.f32.mrb[0].mxu0
        %4456 = vmatprep.mubr.f32.mxu0 0.0
        %4457 = vmatmul.mubr.f32.gmra.mrb[0].mxu0 %v4323
        %v4458 = vpop.f32.mrb[0].mxu0
        %v4459 = vadd.f32 %v4288, %v4458
        %v4460 = vpop.f32.mrb[0].mxu0
        %4461 = vmatprep.mubr.f32.mxu0 0.0
        %4462 = vmatmul.mubr.f32.gmra.mrb[0].mxu0 %v4326
        %v4463 = vpop.f32.mrb[0].mxu0
        %v4464 = vadd.f32 %v4288, %v4463
        %v4465 = vpop.f32.mrb[0].mxu0
        %4466 = vmatprep.mubr.f32.mxu0 0.0
        %4467 = vmatmul.mubr.f32.gmra.mrb[0].mxu0 %v4329
        %v4468 = vpop.f32.mrb[0].mxu0
        %v4469 = vadd.f32 %v4288, %v4468
        %v4470 = vpop.f32.mrb[0].mxu0
        %4471 = vmatprep.mubr.f32.mxu0 0.0
        %4472 = vmatmul.mubr.f32.gmra.mrb[0].mxu0 %v4332
        %v4473 = vpop.f32.mrb[0].mxu0
        %v4474 = vadd.f32 %v4288, %v4473
        %v4475 = vpop.f32.mrb[0].mxu0
        %4476 = vmatprep.mubr.f32.mxu0 0.0
        %4477 = vmatmul.mubr.f32.gmra.mrb[0].mxu0 %v4335
        %v4478 = vpop.f32.mrb[0].mxu0
        %v4479 = vadd.f32 %v4288, %v4478
        %v4480 = vpop.f32.mrb[0].mxu0
        %4481 = vdwg.mxu0
        %v4482 = vmax.f32 %v4404, 0.0
        %v4483 = vmax.f32 %v4409, 0.0
        %v4484 = vmax.f32 %v4414, 0.0
        %v4485 = vmax.f32 %v4419, 0.0
        %v4486 = vmax.f32 %v4424, 0.0
        %v4487 = vmax.f32 %v4429, 0.0
        %v4488 = vmax.f32 %v4434, 0.0
        %v4489 = vmax.f32 %v4439, 0.0
        %v4490 = vmax.f32 %v4444, 0.0
        %v4491 = vmax.f32 %v4449, 0.0
        %v4492 = vmax.f32 %v4454, 0.0
        %v4493 = vmax.f32 %v4459, 0.0
        %v4494 = vmax.f32 %v4464, 0.0
        %v4495 = vmax.f32 %v4469, 0.0
        %v4496 = vmax.f32 %v4474, 0.0
        %v4497 = vmax.f32 %v4479, 0.0
        %v4498 = vlaneseq
        %v4499 = vshrl.u32 %v4498, 7
        %v4500 = vsub.s32 7, %v4499
        %v4501 = vrot.slane %v235, %v4500
        %v4503 = vsel %vm879, %v4482, 0
        %v4506 = vsel %vm879, %v4483, 0
        %v4509 = vsel %vm879, %v4484, 0
        %v4512 = vsel %vm879, %v4485, 0
        %v4515 = vsel %vm879, %v4486, 0
        %v4518 = vsel %vm879, %v4487, 0
        %v4521 = vsel %vm879, %v4488, 0
        %v4524 = vsel %vm879, %v4489, 0
        %v4527 = vsel %vm879, %v4490, 0
        %v4530 = vsel %vm879, %v4491, 0
        %v4533 = vsel %vm879, %v4492, 0
        %v4536 = vsel %vm879, %v4493, 0
        %v4539 = vsel %vm879, %v4494, 0
        %v4542 = vsel %vm879, %v4495, 0
        %v4545 = vsel %vm879, %v4496, 0
        %v4548 = vsel %vm879, %v4497, 0
        %4550 = vmatprep.subr.mxu0 0.0
        %4551 = vmatpush1.msra.mxu0 %v875
        %4552 = vmatprep.subr.mxu0 0.0
        %4553 = vmatpush1.msra.mxu0 %v876
        %4554 = vmatprep.subr.mxu0 0.0
        %4555 = vmatpush1.msra.mxu0 %v877
        %4556 = vmatprep.subr.mxu0 0.0
        %4557 = vmatpush1.msra.mxu0 %v878
        %4558 = vmatprep.subr.mxu0 0.0
        %4559 = vmatpush1.msra.mxu0 0.0
        %4560 = vmatprep.subr.mxu0 0.0
        %4561 = vmatpush1.msra.mxu0 0.0
        %4562 = vmatprep.subr.mxu0 0.0
        %4563 = vmatpush1.msra.mxu0 0.0
        %4564 = vmatprep.subr.mxu0 0.0
        %4565 = vmatpush1.msra.mxu0 0.0
        %4566 = vmatprep.subr.mxu0 0.0
        %4567 = vmatpush1.msra.mxu0 0.0
        %4568 = vmatprep.subr.mxu0 0.0
        %4569 = vmatpush1.msra.mxu0 0.0
        %4570 = vmatprep.subr.mxu0 0.0
        %4571 = vmatpush1.msra.mxu0 0.0
        %4572 = vmatprep.subr.mxu0 0.0
        %4573 = vmatpush1.msra.mxu0 0.0
        %4574 = vmatprep.subr.mxu0 0.0
        %4575 = vmatpush1.msra.mxu0 0.0
        %4576 = vmatprep.subr.mxu0 0.0
        %4577 = vmatpush1.msra.mxu0 0.0
        %4578 = vmatprep.subr.mxu0 0.0
        %4579 = vmatpush1.msra.mxu0 0.0
        %4580 = vmatprep.subr.mxu0 0.0
        %4581 = vmatpush1.msra.mxu0 0.0
        %4582 = vmatprep.subr.mxu0 0.0
        %4583 = vmatpush1.msra.mxu0 0.0
        %4584 = vmatprep.subr.mxu0 0.0
        %4585 = vmatpush1.msra.mxu0 0.0
        %4586 = vmatprep.subr.mxu0 0.0
        %4587 = vmatpush1.msra.mxu0 0.0
        %4588 = vmatprep.subr.mxu0 0.0
        %4589 = vmatpush1.msra.mxu0 0.0
        %4590 = vmatprep.subr.mxu0 0.0
        %4591 = vmatpush1.msra.mxu0 0.0
        %4592 = vmatprep.subr.mxu0 0.0
        %4593 = vmatpush1.msra.mxu0 0.0
        %4594 = vmatprep.subr.mxu0 0.0
        %4595 = vmatpush1.msra.mxu0 0.0
        %4596 = vmatprep.subr.mxu0 0.0
        %4597 = vmatpush1.msra.mxu0 0.0
        %4598 = vmatprep.subr.mxu0 0.0
        %4599 = vmatpush1.msra.mxu0 0.0
        %4600 = vmatprep.subr.mxu0 0.0
        %4601 = vmatpush1.msra.mxu0 0.0
        %4602 = vmatprep.subr.mxu0 0.0
        %4603 = vmatpush1.msra.mxu0 0.0
        %4604 = vmatprep.subr.mxu0 0.0
        %4605 = vmatpush1.msra.mxu0 0.0
        %4606 = vmatprep.subr.mxu0 0.0
        %4607 = vmatpush1.msra.mxu0 0.0
        %4608 = vmatprep.subr.mxu0 0.0
        %4609 = vmatpush1.msra.mxu0 0.0
        %4610 = vmatprep.subr.mxu0 0.0
        %4611 = vmatpush1.msra.mxu0 0.0
        %4612 = vmatprep.subr.mxu0 0.0
        %4613 = vmatpush1.msra.mxu0 0.0
        %4614 = vmatprep.mubr.f32.mxu0 0.0
        %4615 = vmatmul.mubr.f32.gmra.mrb[0].mxu0 %v4503
        %v4616 = vpop.f32.mrb[0].mxu0
        %v4617 = vadd.f32 %v4501, %v4616
        %v4618 = vpop.f32.mrb[0].mxu0
        %4619 = vmatprep.mubr.f32.mxu0 0.0
        %4620 = vmatmul.mubr.f32.gmra.mrb[0].mxu0 %v4506
        %v4621 = vpop.f32.mrb[0].mxu0
        %v4622 = vadd.f32 %v4501, %v4621
        %v4623 = vpop.f32.mrb[0].mxu0
        %4624 = vmatprep.mubr.f32.mxu0 0.0
        %4625 = vmatmul.mubr.f32.gmra.mrb[0].mxu0 %v4509
        %v4626 = vpop.f32.mrb[0].mxu0
        %v4627 = vadd.f32 %v4501, %v4626
        %v4628 = vpop.f32.mrb[0].mxu0
        %4629 = vmatprep.mubr.f32.mxu0 0.0
        %4630 = vmatmul.mubr.f32.gmra.mrb[0].mxu0 %v4512
        %v4631 = vpop.f32.mrb[0].mxu0
        %v4632 = vadd.f32 %v4501, %v4631
        %v4633 = vpop.f32.mrb[0].mxu0
        %4634 = vmatprep.mubr.f32.mxu0 0.0
        %4635 = vmatmul.mubr.f32.gmra.mrb[0].mxu0 %v4515
        %v4636 = vpop.f32.mrb[0].mxu0
        %v4637 = vadd.f32 %v4501, %v4636
        %v4638 = vpop.f32.mrb[0].mxu0
        %4639 = vmatprep.mubr.f32.mxu0 0.0
        %4640 = vmatmul.mubr.f32.gmra.mrb[0].mxu0 %v4518
        %v4641 = vpop.f32.mrb[0].mxu0
        %v4642 = vadd.f32 %v4501, %v4641
        %v4643 = vpop.f32.mrb[0].mxu0
        %4644 = vmatprep.mubr.f32.mxu0 0.0
        %4645 = vmatmul.mubr.f32.gmra.mrb[0].mxu0 %v4521
        %v4646 = vpop.f32.mrb[0].mxu0
        %v4647 = vadd.f32 %v4501, %v4646
        %v4648 = vpop.f32.mrb[0].mxu0
        %4649 = vmatprep.mubr.f32.mxu0 0.0
        %4650 = vmatmul.mubr.f32.gmra.mrb[0].mxu0 %v4524
        %v4651 = vpop.f32.mrb[0].mxu0
        %v4652 = vadd.f32 %v4501, %v4651
        %v4653 = vpop.f32.mrb[0].mxu0
        %4654 = vmatprep.mubr.f32.mxu0 0.0
        %4655 = vmatmul.mubr.f32.gmra.mrb[0].mxu0 %v4527
        %v4656 = vpop.f32.mrb[0].mxu0
        %v4657 = vadd.f32 %v4501, %v4656
        %v4658 = vpop.f32.mrb[0].mxu0
        %4659 = vmatprep.mubr.f32.mxu0 0.0
        %4660 = vmatmul.mubr.f32.gmra.mrb[0].mxu0 %v4530
        %v4661 = vpop.f32.mrb[0].mxu0
        %v4662 = vadd.f32 %v4501, %v4661
        %v4663 = vpop.f32.mrb[0].mxu0
        %4664 = vmatprep.mubr.f32.mxu0 0.0
        %4665 = vmatmul.mubr.f32.gmra.mrb[0].mxu0 %v4533
        %v4666 = vpop.f32.mrb[0].mxu0
        %v4667 = vadd.f32 %v4501, %v4666
        %v4668 = vpop.f32.mrb[0].mxu0
        %4669 = vmatprep.mubr.f32.mxu0 0.0
        %4670 = vmatmul.mubr.f32.gmra.mrb[0].mxu0 %v4536
        %v4671 = vpop.f32.mrb[0].mxu0
        %v4672 = vadd.f32 %v4501, %v4671
        %v4673 = vpop.f32.mrb[0].mxu0
        %4674 = vmatprep.mubr.f32.mxu0 0.0
        %4675 = vmatmul.mubr.f32.gmra.mrb[0].mxu0 %v4539
        %v4676 = vpop.f32.mrb[0].mxu0
        %v4677 = vadd.f32 %v4501, %v4676
        %v4678 = vpop.f32.mrb[0].mxu0
        %4679 = vmatprep.mubr.f32.mxu0 0.0
        %4680 = vmatmul.mubr.f32.gmra.mrb[0].mxu0 %v4542
        %v4681 = vpop.f32.mrb[0].mxu0
        %v4682 = vadd.f32 %v4501, %v4681
        %v4683 = vpop.f32.mrb[0].mxu0
        %4684 = vmatprep.mubr.f32.mxu0 0.0
        %4685 = vmatmul.mubr.f32.gmra.mrb[0].mxu0 %v4545
        %v4686 = vpop.f32.mrb[0].mxu0
        %v4687 = vadd.f32 %v4501, %v4686
        %v4688 = vpop.f32.mrb[0].mxu0
        %4689 = vmatprep.mubr.f32.mxu0 0.0
        %4690 = vmatmul.mubr.f32.gmra.mrb[0].mxu0 %v4548
        %v4691 = vpop.f32.mrb[0].mxu0
        %v4692 = vadd.f32 %v4501, %v4691
        %v4693 = vpop.f32.mrb[0].mxu0
        %4694 = vdwg.mxu0
        %v4695 = vadd.f32 %v4269, %v4617
        %v4696 = vadd.f32 %v4270, %v4622
        %v4697 = vadd.f32 %v4271, %v4627
        %v4698 = vadd.f32 %v4272, %v4632
        %v4699 = vadd.f32 %v4273, %v4637
        %v4700 = vadd.f32 %v4274, %v4642
        %v4701 = vadd.f32 %v4275, %v4647
        %v4702 = vadd.f32 %v4276, %v4652
        %v4703 = vadd.f32 %v4277, %v4657
        %v4704 = vadd.f32 %v4278, %v4662
        %v4705 = vadd.f32 %v4279, %v4667
        %v4706 = vadd.f32 %v4280, %v4672
        %v4707 = vadd.f32 %v4281, %v4677
        %v4708 = vadd.f32 %v4282, %v4682
        %v4709 = vadd.f32 %v4283, %v4687
        %v4710 = vadd.f32 %v4284, %v4692
        %s4711 = scalar_lea.vmem [#allocation5], 160
        %v4712 = vld [vmem:[%s4711] sm:$0xff]
        %v4713 = vld [vmem:[%s4711 + $0x8] sm:$0xff]
        %v4714 = vld [vmem:[%s4711 + $0x10] sm:$0xff]
        %v4715 = vld [vmem:[%s4711 + $0x18] sm:$0xff]
        %s4716 = scalar_lea.vmem [#allocation5], 192
        %v4717 = vld [vmem:[%s4716] sm:$0xff]
        %v4718 = vld [vmem:[%s4716 + $0x8] sm:$0xff]
        %v4719 = vld [vmem:[%s4716 + $0x10] sm:$0xff]
        %v4720 = vld [vmem:[%s4716 + $0x18] sm:$0xff]
        %s4721 = scalar_lea.vmem [#allocation5], 224
        %v4722 = vld [vmem:[%s4721] sm:$0xff]
        %v4723 = vld [vmem:[%s4721 + $0x8] sm:$0xff]
        %v4724 = vld [vmem:[%s4721 + $0x10] sm:$0xff]
        %v4725 = vld [vmem:[%s4721 + $0x18] sm:$0xff]
        %v4726 = vsel %vm879, %v4695, 0.0
        %4727 = vadd.xlane.f32.xlu0 %v4726
        %v4728 = vpop.xlane.xlu0 %4727
        %v4729 = vsel %vm879, %v4696, 0.0
        %4730 = vadd.xlane.f32.xlu0 %v4729
        %v4731 = vpop.xlane.xlu0 %4730
        %v4732 = vsel %vm879, %v4697, 0.0
        %4733 = vadd.xlane.f32.xlu0 %v4732
        %v4734 = vpop.xlane.xlu0 %4733
        %v4735 = vsel %vm879, %v4698, 0.0
        %4736 = vadd.xlane.f32.xlu0 %v4735
        %v4737 = vpop.xlane.xlu0 %4736
        %v4738 = vsel %vm879, %v4699, 0.0
        %4739 = vadd.xlane.f32.xlu0 %v4738
        %v4740 = vpop.xlane.xlu0 %4739
        %v4741 = vsel %vm879, %v4700, 0.0
        %4742 = vadd.xlane.f32.xlu0 %v4741
        %v4743 = vpop.xlane.xlu0 %4742
        %v4744 = vsel %vm879, %v4701, 0.0
        %4745 = vadd.xlane.f32.xlu0 %v4744
        %v4746 = vpop.xlane.xlu0 %4745
        %v4747 = vsel %vm879, %v4702, 0.0
        %4748 = vadd.xlane.f32.xlu0 %v4747
        %v4749 = vpop.xlane.xlu0 %4748
        %v4750 = vsel %vm879, %v4703, 0.0
        %4751 = vadd.xlane.f32.xlu0 %v4750
        %v4752 = vpop.xlane.xlu0 %4751
        %v4753 = vsel %vm879, %v4704, 0.0
        %4754 = vadd.xlane.f32.xlu0 %v4753
        %v4755 = vpop.xlane.xlu0 %4754
        %v4756 = vsel %vm879, %v4705, 0.0
        %4757 = vadd.xlane.f32.xlu0 %v4756
        %v4758 = vpop.xlane.xlu0 %4757
        %v4759 = vsel %vm879, %v4706, 0.0
        %4760 = vadd.xlane.f32.xlu0 %v4759
        %v4761 = vpop.xlane.xlu0 %4760
        %v4762 = vsel %vm879, %v4707, 0.0
        %4763 = vadd.xlane.f32.xlu0 %v4762
        %v4764 = vpop.xlane.xlu0 %4763
        %v4765 = vsel %vm879, %v4708, 0.0
        %4766 = vadd.xlane.f32.xlu0 %v4765
        %v4767 = vpop.xlane.xlu0 %4766
        %v4768 = vsel %vm879, %v4709, 0.0
        %4769 = vadd.xlane.f32.xlu0 %v4768
        %v4770 = vpop.xlane.xlu0 %4769
        %v4771 = vsel %vm879, %v4710, 0.0
        %4772 = vadd.xlane.f32.xlu0 %v4771
        %v4773 = vpop.xlane.xlu0 %4772
        %v4774 = vmul.f32 %v4728, %v928
        %v4775 = vmul.f32 %v4731, %v928
        %v4776 = vmul.f32 %v4734, %v928
        %v4777 = vmul.f32 %v4737, %v928
        %v4778 = vmul.f32 %v4740, %v928
        %v4779 = vmul.f32 %v4743, %v928
        %v4780 = vmul.f32 %v4746, %v928
        %v4781 = vmul.f32 %v4749, %v928
        %v4782 = vmul.f32 %v4752, %v928
        %v4783 = vmul.f32 %v4755, %v928
        %v4784 = vmul.f32 %v4758, %v928
        %v4785 = vmul.f32 %v4761, %v928
        %v4786 = vmul.f32 %v4764, %v928
        %v4787 = vmul.f32 %v4767, %v928
        %v4788 = vmul.f32 %v4770, %v928
        %v4789 = vmul.f32 %v4773, %v928
        %v4790 = vsub.f32 %v4695, %v4774
        %v4791 = vsub.f32 %v4696, %v4775
        %v4792 = vsub.f32 %v4697, %v4776
        %v4793 = vsub.f32 %v4698, %v4777
        %v4794 = vsub.f32 %v4699, %v4778
        %v4795 = vsub.f32 %v4700, %v4779
        %v4796 = vsub.f32 %v4701, %v4780
        %v4797 = vsub.f32 %v4702, %v4781
        %v4798 = vsub.f32 %v4703, %v4782
        %v4799 = vsub.f32 %v4704, %v4783
        %v4800 = vsub.f32 %v4705, %v4784
        %v4801 = vsub.f32 %v4706, %v4785
        %v4802 = vsub.f32 %v4707, %v4786
        %v4803 = vsub.f32 %v4708, %v4787
        %v4804 = vsub.f32 %v4709, %v4788
        %v4805 = vsub.f32 %v4710, %v4789
        %v4806 = vmul.f32 %v4790, %v4790
        %v4807 = vmul.f32 %v4791, %v4791
        %v4808 = vmul.f32 %v4792, %v4792
        %v4809 = vmul.f32 %v4793, %v4793
        %v4810 = vmul.f32 %v4794, %v4794
        %v4811 = vmul.f32 %v4795, %v4795
        %v4812 = vmul.f32 %v4796, %v4796
        %v4813 = vmul.f32 %v4797, %v4797
        %v4814 = vmul.f32 %v4798, %v4798
        %v4815 = vmul.f32 %v4799, %v4799
        %v4816 = vmul.f32 %v4800, %v4800
        %v4817 = vmul.f32 %v4801, %v4801
        %v4818 = vmul.f32 %v4802, %v4802
        %v4819 = vmul.f32 %v4803, %v4803
        %v4820 = vmul.f32 %v4804, %v4804
        %v4821 = vmul.f32 %v4805, %v4805
        %v4822 = vsel %vm879, %v4806, 0.0
        %4823 = vadd.xlane.f32.xlu0 %v4822
        %v4824 = vpop.xlane.xlu0 %4823
        %v4825 = vsel %vm879, %v4807, 0.0
        %4826 = vadd.xlane.f32.xlu0 %v4825
        %v4827 = vpop.xlane.xlu0 %4826
        %v4828 = vsel %vm879, %v4808, 0.0
        %4829 = vadd.xlane.f32.xlu0 %v4828
        %v4830 = vpop.xlane.xlu0 %4829
        %v4831 = vsel %vm879, %v4809, 0.0
        %4832 = vadd.xlane.f32.xlu0 %v4831
        %v4833 = vpop.xlane.xlu0 %4832
        %v4834 = vsel %vm879, %v4810, 0.0
        %4835 = vadd.xlane.f32.xlu0 %v4834
        %v4836 = vpop.xlane.xlu0 %4835
        %v4837 = vsel %vm879, %v4811, 0.0
        %4838 = vadd.xlane.f32.xlu0 %v4837
        %v4839 = vpop.xlane.xlu0 %4838
        %v4840 = vsel %vm879, %v4812, 0.0
        %4841 = vadd.xlane.f32.xlu0 %v4840
        %v4842 = vpop.xlane.xlu0 %4841
        %v4843 = vsel %vm879, %v4813, 0.0
        %4844 = vadd.xlane.f32.xlu0 %v4843
        %v4845 = vpop.xlane.xlu0 %4844
        %v4846 = vsel %vm879, %v4814, 0.0
        %4847 = vadd.xlane.f32.xlu0 %v4846
        %v4848 = vpop.xlane.xlu0 %4847
        %v4849 = vsel %vm879, %v4815, 0.0
        %4850 = vadd.xlane.f32.xlu0 %v4849
        %v4851 = vpop.xlane.xlu0 %4850
        %v4852 = vsel %vm879, %v4816, 0.0
        %4853 = vadd.xlane.f32.xlu0 %v4852
        %v4854 = vpop.xlane.xlu0 %4853
        %v4855 = vsel %vm879, %v4817, 0.0
        %4856 = vadd.xlane.f32.xlu0 %v4855
        %v4857 = vpop.xlane.xlu0 %4856
        %v4858 = vsel %vm879, %v4818, 0.0
        %4859 = vadd.xlane.f32.xlu0 %v4858
        %v4860 = vpop.xlane.xlu0 %4859
        %v4861 = vsel %vm879, %v4819, 0.0
        %4862 = vadd.xlane.f32.xlu0 %v4861
        %v4863 = vpop.xlane.xlu0 %4862
        %v4864 = vsel %vm879, %v4820, 0.0
        %4865 = vadd.xlane.f32.xlu0 %v4864
        %v4866 = vpop.xlane.xlu0 %4865
        %v4867 = vsel %vm879, %v4821, 0.0
        %4868 = vadd.xlane.f32.xlu0 %v4867
        %v4869 = vpop.xlane.xlu0 %4868
        %v4870 = vmul.f32 %v4824, %v928
        %v4871 = vmul.f32 %v4827, %v928
        %v4872 = vmul.f32 %v4830, %v928
        %v4873 = vmul.f32 %v4833, %v928
        %v4874 = vmul.f32 %v4836, %v928
        %v4875 = vmul.f32 %v4839, %v928
        %v4876 = vmul.f32 %v4842, %v928
        %v4877 = vmul.f32 %v4845, %v928
        %v4878 = vmul.f32 %v4848, %v928
        %v4879 = vmul.f32 %v4851, %v928
        %v4880 = vmul.f32 %v4854, %v928
        %v4881 = vmul.f32 %v4857, %v928
        %v4882 = vmul.f32 %v4860, %v928
        %v4883 = vmul.f32 %v4863, %v928
        %v4884 = vmul.f32 %v4866, %v928
        %v4885 = vmul.f32 %v4869, %v928
        %v4886 = vadd.f32 %v4870, 1e-05
        %v4887 = vadd.f32 %v4871, 1e-05
        %v4888 = vadd.f32 %v4872, 1e-05
        %v4889 = vadd.f32 %v4873, 1e-05
        %v4890 = vadd.f32 %v4874, 1e-05
        %v4891 = vadd.f32 %v4875, 1e-05
        %v4892 = vadd.f32 %v4876, 1e-05
        %v4893 = vadd.f32 %v4877, 1e-05
        %v4894 = vadd.f32 %v4878, 1e-05
        %v4895 = vadd.f32 %v4879, 1e-05
        %v4896 = vadd.f32 %v4880, 1e-05
        %v4897 = vadd.f32 %v4881, 1e-05
        %v4898 = vadd.f32 %v4882, 1e-05
        %v4899 = vadd.f32 %v4883, 1e-05
        %v4900 = vadd.f32 %v4884, 1e-05
        %v4901 = vadd.f32 %v4885, 1e-05
        %v4902 = vrsqrt.pop %v4886
        %v4903 = vrsqrt.pop %v4887
        %v4904 = vrsqrt.pop %v4888
        %v4905 = vrsqrt.pop %v4889
        %v4906 = vrsqrt.pop %v4890
        %v4907 = vrsqrt.pop %v4891
        %v4908 = vrsqrt.pop %v4892
        %v4909 = vrsqrt.pop %v4893
        %v4910 = vrsqrt.pop %v4894
        %v4911 = vrsqrt.pop %v4895
        %v4912 = vrsqrt.pop %v4896
        %v4913 = vrsqrt.pop %v4897
        %v4914 = vrsqrt.pop %v4898
        %v4915 = vrsqrt.pop %v4899
        %v4916 = vrsqrt.pop %v4900
        %v4917 = vrsqrt.pop %v4901
        %v4918 = vmul.f32 %v4790, %v4902
        %v4919 = vmul.f32 %v4791, %v4903
        %v4920 = vmul.f32 %v4792, %v4904
        %v4921 = vmul.f32 %v4793, %v4905
        %v4922 = vmul.f32 %v4794, %v4906
        %v4923 = vmul.f32 %v4795, %v4907
        %v4924 = vmul.f32 %v4796, %v4908
        %v4925 = vmul.f32 %v4797, %v4909
        %v4926 = vmul.f32 %v4798, %v4910
        %v4927 = vmul.f32 %v4799, %v4911
        %v4928 = vmul.f32 %v4800, %v4912
        %v4929 = vmul.f32 %v4801, %v4913
        %v4930 = vmul.f32 %v4802, %v4914
        %v4931 = vmul.f32 %v4803, %v4915
        %v4932 = vmul.f32 %v4804, %v4916
        %v4933 = vmul.f32 %v4805, %v4917
        %v4934 = vlaneseq
        %v4935 = vshrl.u32 %v4934, 7
        %v4936 = vsub.s32 0, %v4935
        %v4937 = vrot.slane %v236, %v4936
        %v4938 = vmul.f32 %v4918, %v4937
        %v4939 = vmul.f32 %v4919, %v4937
        %v4940 = vmul.f32 %v4920, %v4937
        %v4941 = vmul.f32 %v4921, %v4937
        %v4942 = vmul.f32 %v4922, %v4937
        %v4943 = vmul.f32 %v4923, %v4937
        %v4944 = vmul.f32 %v4924, %v4937
        %v4945 = vmul.f32 %v4925, %v4937
        %v4946 = vmul.f32 %v4926, %v4937
        %v4947 = vmul.f32 %v4927, %v4937
        %v4948 = vmul.f32 %v4928, %v4937
        %v4949 = vmul.f32 %v4929, %v4937
        %v4950 = vmul.f32 %v4930, %v4937
        %v4951 = vmul.f32 %v4931, %v4937
        %v4952 = vmul.f32 %v4932, %v4937
        %v4953 = vmul.f32 %v4933, %v4937
        %v4954 = vlaneseq
        %v4955 = vshrl.u32 %v4954, 7
        %v4956 = vsub.s32 1, %v4955
        %v4957 = vrot.slane %v236, %v4956
        %v4958 = vadd.f32 %v4938, %v4957
        %v4959 = vadd.f32 %v4939, %v4957
        %v4960 = vadd.f32 %v4940, %v4957
        %v4961 = vadd.f32 %v4941, %v4957
        %v4962 = vadd.f32 %v4942, %v4957
        %v4963 = vadd.f32 %v4943, %v4957
        %v4964 = vadd.f32 %v4944, %v4957
        %v4965 = vadd.f32 %v4945, %v4957
        %v4966 = vadd.f32 %v4946, %v4957
        %v4967 = vadd.f32 %v4947, %v4957
        %v4968 = vadd.f32 %v4948, %v4957
        %v4969 = vadd.f32 %v4949, %v4957
        %v4970 = vadd.f32 %v4950, %v4957
        %v4971 = vadd.f32 %v4951, %v4957
        %v4972 = vadd.f32 %v4952, %v4957
        %v4973 = vadd.f32 %v4953, %v4957
        %v4975 = vsel %vm879, %v4958, 0
        %v4978 = vsel %vm879, %v4959, 0
        %v4981 = vsel %vm879, %v4960, 0
        %v4984 = vsel %vm879, %v4961, 0
        %v4987 = vsel %vm879, %v4962, 0
        %v4990 = vsel %vm879, %v4963, 0
        %v4993 = vsel %vm879, %v4964, 0
        %v4996 = vsel %vm879, %v4965, 0
        %v4999 = vsel %vm879, %v4966, 0
        %v5002 = vsel %vm879, %v4967, 0
        %v5005 = vsel %vm879, %v4968, 0
        %v5008 = vsel %vm879, %v4969, 0
        %v5011 = vsel %vm879, %v4970, 0
        %v5014 = vsel %vm879, %v4971, 0
        %v5017 = vsel %vm879, %v4972, 0
        %v5020 = vsel %vm879, %v4973, 0
        %5022 = vmatprep.subr.mxu0 0.0
        %5023 = vmatpush1.msra.mxu0 %v4712
        %5024 = vmatprep.subr.mxu0 0.0
        %5025 = vmatpush1.msra.mxu0 %v4713
        %5026 = vmatprep.subr.mxu0 0.0
        %5027 = vmatpush1.msra.mxu0 %v4714
        %5028 = vmatprep.subr.mxu0 0.0
        %5029 = vmatpush1.msra.mxu0 %v4715
        %5030 = vmatprep.subr.mxu0 0.0
        %5031 = vmatpush1.msra.mxu0 0.0
        %5032 = vmatprep.subr.mxu0 0.0
        %5033 = vmatpush1.msra.mxu0 0.0
        %5034 = vmatprep.subr.mxu0 0.0
        %5035 = vmatpush1.msra.mxu0 0.0
        %5036 = vmatprep.subr.mxu0 0.0
        %5037 = vmatpush1.msra.mxu0 0.0
        %5038 = vmatprep.subr.mxu0 0.0
        %5039 = vmatpush1.msra.mxu0 0.0
        %5040 = vmatprep.subr.mxu0 0.0
        %5041 = vmatpush1.msra.mxu0 0.0
        %5042 = vmatprep.subr.mxu0 0.0
        %5043 = vmatpush1.msra.mxu0 0.0
        %5044 = vmatprep.subr.mxu0 0.0
        %5045 = vmatpush1.msra.mxu0 0.0
        %5046 = vmatprep.subr.mxu0 0.0
        %5047 = vmatpush1.msra.mxu0 0.0
        %5048 = vmatprep.subr.mxu0 0.0
        %5049 = vmatpush1.msra.mxu0 0.0
        %5050 = vmatprep.subr.mxu0 0.0
        %5051 = vmatpush1.msra.mxu0 0.0
        %5052 = vmatprep.subr.mxu0 0.0
        %5053 = vmatpush1.msra.mxu0 0.0
        %5054 = vmatprep.subr.mxu0 0.0
        %5055 = vmatpush1.msra.mxu0 0.0
        %5056 = vmatprep.subr.mxu0 0.0
        %5057 = vmatpush1.msra.mxu0 0.0
        %5058 = vmatprep.subr.mxu0 0.0
        %5059 = vmatpush1.msra.mxu0 0.0
        %5060 = vmatprep.subr.mxu0 0.0
        %5061 = vmatpush1.msra.mxu0 0.0
        %5062 = vmatprep.subr.mxu0 0.0
        %5063 = vmatpush1.msra.mxu0 0.0
        %5064 = vmatprep.subr.mxu0 0.0
        %5065 = vmatpush1.msra.mxu0 0.0
        %5066 = vmatprep.subr.mxu0 0.0
        %5067 = vmatpush1.msra.mxu0 0.0
        %5068 = vmatprep.subr.mxu0 0.0
        %5069 = vmatpush1.msra.mxu0 0.0
        %5070 = vmatprep.subr.mxu0 0.0
        %5071 = vmatpush1.msra.mxu0 0.0
        %5072 = vmatprep.subr.mxu0 0.0
        %5073 = vmatpush1.msra.mxu0 0.0
        %5074 = vmatprep.subr.mxu0 0.0
        %5075 = vmatpush1.msra.mxu0 0.0
        %5076 = vmatprep.subr.mxu0 0.0
        %5077 = vmatpush1.msra.mxu0 0.0
        %5078 = vmatprep.subr.mxu0 0.0
        %5079 = vmatpush1.msra.mxu0 0.0
        %5080 = vmatprep.subr.mxu0 0.0
        %5081 = vmatpush1.msra.mxu0 0.0
        %5082 = vmatprep.subr.mxu0 0.0
        %5083 = vmatpush1.msra.mxu0 0.0
        %5084 = vmatprep.subr.mxu0 0.0
        %5085 = vmatpush1.msra.mxu0 0.0
        %5086 = vmatprep.mubr.f32.mxu0 0.0
        %5087 = vmatmul.mubr.f32.gmra.mrb[0].mxu0 %v4975
        %v5088 = vpop.f32.mrb[0].mxu0
        %v5089 = vadd.f32 0.0, %v5088
        %v5090 = vpop.f32.mrb[0].mxu0
        %5091 = vmatprep.mubr.f32.mxu0 0.0
        %5092 = vmatmul.mubr.f32.gmra.mrb[0].mxu0 %v4978
        %v5093 = vpop.f32.mrb[0].mxu0
        %v5094 = vadd.f32 0.0, %v5093
        %v5095 = vpop.f32.mrb[0].mxu0
        %5096 = vmatprep.mubr.f32.mxu0 0.0
        %5097 = vmatmul.mubr.f32.gmra.mrb[0].mxu0 %v4981
        %v5098 = vpop.f32.mrb[0].mxu0
        %v5099 = vadd.f32 0.0, %v5098
        %v5100 = vpop.f32.mrb[0].mxu0
        %5101 = vmatprep.mubr.f32.mxu0 0.0
        %5102 = vmatmul.mubr.f32.gmra.mrb[0].mxu0 %v4984
        %v5103 = vpop.f32.mrb[0].mxu0
        %v5104 = vadd.f32 0.0, %v5103
        %v5105 = vpop.f32.mrb[0].mxu0
        %5106 = vmatprep.mubr.f32.mxu0 0.0
        %5107 = vmatmul.mubr.f32.gmra.mrb[0].mxu0 %v4987
        %v5108 = vpop.f32.mrb[0].mxu0
        %v5109 = vadd.f32 0.0, %v5108
        %v5110 = vpop.f32.mrb[0].mxu0
        %5111 = vmatprep.mubr.f32.mxu0 0.0
        %5112 = vmatmul.mubr.f32.gmra.mrb[0].mxu0 %v4990
        %v5113 = vpop.f32.mrb[0].mxu0
        %v5114 = vadd.f32 0.0, %v5113
        %v5115 = vpop.f32.mrb[0].mxu0
        %5116 = vmatprep.mubr.f32.mxu0 0.0
        %5117 = vmatmul.mubr.f32.gmra.mrb[0].mxu0 %v4993
        %v5118 = vpop.f32.mrb[0].mxu0
        %v5119 = vadd.f32 0.0, %v5118
        %v5120 = vpop.f32.mrb[0].mxu0
        %5121 = vmatprep.mubr.f32.mxu0 0.0
        %5122 = vmatmul.mubr.f32.gmra.mrb[0].mxu0 %v4996
        %v5123 = vpop.f32.mrb[0].mxu0
        %v5124 = vadd.f32 0.0, %v5123
        %v5125 = vpop.f32.mrb[0].mxu0
        %5126 = vmatprep.mubr.f32.mxu0 0.0
        %5127 = vmatmul.mubr.f32.gmra.mrb[0].mxu0 %v4999
        %v5128 = vpop.f32.mrb[0].mxu0
        %v5129 = vadd.f32 0.0, %v5128
        %v5130 = vpop.f32.mrb[0].mxu0
        %5131 = vmatprep.mubr.f32.mxu0 0.0
        %5132 = vmatmul.mubr.f32.gmra.mrb[0].mxu0 %v5002
        %v5133 = vpop.f32.mrb[0].mxu0
        %v5134 = vadd.f32 0.0, %v5133
        %v5135 = vpop.f32.mrb[0].mxu0
        %5136 = vmatprep.mubr.f32.mxu0 0.0
        %5137 = vmatmul.mubr.f32.gmra.mrb[0].mxu0 %v5005
        %v5138 = vpop.f32.mrb[0].mxu0
        %v5139 = vadd.f32 0.0, %v5138
        %v5140 = vpop.f32.mrb[0].mxu0
        %5141 = vmatprep.mubr.f32.mxu0 0.0
        %5142 = vmatmul.mubr.f32.gmra.mrb[0].mxu0 %v5008
        %v5143 = vpop.f32.mrb[0].mxu0
        %v5144 = vadd.f32 0.0, %v5143
        %v5145 = vpop.f32.mrb[0].mxu0
        %5146 = vmatprep.mubr.f32.mxu0 0.0
        %5147 = vmatmul.mubr.f32.gmra.mrb[0].mxu0 %v5011
        %v5148 = vpop.f32.mrb[0].mxu0
        %v5149 = vadd.f32 0.0, %v5148
        %v5150 = vpop.f32.mrb[0].mxu0
        %5151 = vmatprep.mubr.f32.mxu0 0.0
        %5152 = vmatmul.mubr.f32.gmra.mrb[0].mxu0 %v5014
        %v5153 = vpop.f32.mrb[0].mxu0
        %v5154 = vadd.f32 0.0, %v5153
        %v5155 = vpop.f32.mrb[0].mxu0
        %5156 = vmatprep.mubr.f32.mxu0 0.0
        %5157 = vmatmul.mubr.f32.gmra.mrb[0].mxu0 %v5017
        %v5158 = vpop.f32.mrb[0].mxu0
        %v5159 = vadd.f32 0.0, %v5158
        %v5160 = vpop.f32.mrb[0].mxu0
        %5161 = vmatprep.mubr.f32.mxu0 0.0
        %5162 = vmatmul.mubr.f32.gmra.mrb[0].mxu0 %v5020
        %v5163 = vpop.f32.mrb[0].mxu0
        %v5164 = vadd.f32 0.0, %v5163
        %v5165 = vpop.f32.mrb[0].mxu0
        %5166 = vdwg.mxu0
        %5183 = vrot.lane.b32.xlu0 %v5089, 96
        %v5184 = vpop.permute.xlu0 %5183
        %5185 = vrot.lane.b32.xlu0 %v5094, 96
        %v5186 = vpop.permute.xlu0 %5185
        %5187 = vrot.lane.b32.xlu0 %v5099, 96
        %v5188 = vpop.permute.xlu0 %5187
        %5189 = vrot.lane.b32.xlu0 %v5104, 96
        %v5190 = vpop.permute.xlu0 %5189
        %5191 = vrot.lane.b32.xlu0 %v5109, 96
        %v5192 = vpop.permute.xlu0 %5191
        %5193 = vrot.lane.b32.xlu0 %v5114, 96
        %v5194 = vpop.permute.xlu0 %5193
        %5195 = vrot.lane.b32.xlu0 %v5119, 96
        %v5196 = vpop.permute.xlu0 %5195
        %5197 = vrot.lane.b32.xlu0 %v5124, 96
        %v5198 = vpop.permute.xlu0 %5197
        %5199 = vrot.lane.b32.xlu0 %v5129, 96
        %v5200 = vpop.permute.xlu0 %5199
        %5201 = vrot.lane.b32.xlu0 %v5134, 96
        %v5202 = vpop.permute.xlu0 %5201
        %5203 = vrot.lane.b32.xlu0 %v5139, 96
        %v5204 = vpop.permute.xlu0 %5203
        %5205 = vrot.lane.b32.xlu0 %v5144, 96
        %v5206 = vpop.permute.xlu0 %5205
        %5207 = vrot.lane.b32.xlu0 %v5149, 96
        %v5208 = vpop.permute.xlu0 %5207
        %5209 = vrot.lane.b32.xlu0 %v5154, 96
        %v5210 = vpop.permute.xlu0 %5209
        %5211 = vrot.lane.b32.xlu0 %v5159, 96
        %v5212 = vpop.permute.xlu0 %5211
        %5213 = vrot.lane.b32.xlu0 %v5164, 96
        %v5214 = vpop.permute.xlu0 %5213
        %v5215 = vsel %vm427, %v5089, 0
        %v5217 = vsel %vm427, %v5094, 0
        %v5219 = vsel %vm427, %v5099, 0
        %v5221 = vsel %vm427, %v5104, 0
        %v5223 = vsel %vm427, %v5109, 0
        %v5225 = vsel %vm427, %v5114, 0
        %v5227 = vsel %vm427, %v5119, 0
        %v5229 = vsel %vm427, %v5124, 0
        %v5231 = vsel %vm427, %v5129, 0
        %v5233 = vsel %vm427, %v5134, 0
        %v5235 = vsel %vm427, %v5139, 0
        %v5237 = vsel %vm427, %v5144, 0
        %v5239 = vsel %vm427, %v5149, 0
        %v5241 = vsel %vm427, %v5154, 0
        %v5243 = vsel %vm427, %v5159, 0
        %v5245 = vsel %vm427, %v5164, 0
        %v5247 = vsel %vm427, %v5184, 0
        %v5249 = vsel %vm427, %v5186, 0
        %v5251 = vsel %vm427, %v5188, 0
        %v5253 = vsel %vm427, %v5190, 0
        %v5255 = vsel %vm427, %v5192, 0
        %v5257 = vsel %vm427, %v5194, 0
        %v5259 = vsel %vm427, %v5196, 0
        %v5261 = vsel %vm427, %v5198, 0
        %v5263 = vsel %vm427, %v5200, 0
        %v5265 = vsel %vm427, %v5202, 0
        %v5267 = vsel %vm427, %v5204, 0
        %v5269 = vsel %vm427, %v5206, 0
        %v5271 = vsel %vm427, %v5208, 0
        %v5273 = vsel %vm427, %v5210, 0
        %v5275 = vsel %vm427, %v5212, 0
        %v5277 = vsel %vm427, %v5214, 0
        %5279 = vmatprep.subr.mxu0 0.0
        %5280 = vmatpush1.xpose.msra.mxu0 %v5247
        %5281 = vmatprep.subr.mxu0 0.0
        %5282 = vmatpush1.xpose.msra.mxu0 %v5249
        %5283 = vmatprep.subr.mxu0 0.0
        %5284 = vmatpush1.xpose.msra.mxu0 %v5251
        %5285 = vmatprep.subr.mxu0 0.0
        %5286 = vmatpush1.xpose.msra.mxu0 %v5253
        %5287 = vmatprep.subr.mxu0 0.0
        %5288 = vmatpush1.xpose.msra.mxu0 %v5255
        %5289 = vmatprep.subr.mxu0 0.0
        %5290 = vmatpush1.xpose.msra.mxu0 %v5257
        %5291 = vmatprep.subr.mxu0 0.0
        %5292 = vmatpush1.xpose.msra.mxu0 %v5259
        %5293 = vmatprep.subr.mxu0 0.0
        %5294 = vmatpush1.xpose.msra.mxu0 %v5261
        %5295 = vmatprep.subr.mxu0 0.0
        %5296 = vmatpush1.xpose.msra.mxu0 %v5263
        %5297 = vmatprep.subr.mxu0 0.0
        %5298 = vmatpush1.xpose.msra.mxu0 %v5265
        %5299 = vmatprep.subr.mxu0 0.0
        %5300 = vmatpush1.xpose.msra.mxu0 %v5267
        %5301 = vmatprep.subr.mxu0 0.0
        %5302 = vmatpush1.xpose.msra.mxu0 %v5269
        %5303 = vmatprep.subr.mxu0 0.0
        %5304 = vmatpush1.xpose.msra.mxu0 %v5271
        %5305 = vmatprep.subr.mxu0 0.0
        %5306 = vmatpush1.xpose.msra.mxu0 %v5273
        %5307 = vmatprep.subr.mxu0 0.0
        %5308 = vmatpush1.xpose.msra.mxu0 %v5275
        %5309 = vmatprep.subr.mxu0 0.0
        %5310 = vmatpush1.xpose.msra.mxu0 %v5277
        %5311 = vmatprep.subr.mxu0 0.0
        %5312 = vmatpush1.xpose.msra.mxu0 0.0
        %5313 = vmatprep.subr.mxu0 0.0
        %5314 = vmatpush1.xpose.msra.mxu0 0.0
        %5315 = vmatprep.subr.mxu0 0.0
        %5316 = vmatpush1.xpose.msra.mxu0 0.0
        %5317 = vmatprep.subr.mxu0 0.0
        %5318 = vmatpush1.xpose.msra.mxu0 0.0
        %5319 = vmatprep.subr.mxu0 0.0
        %5320 = vmatpush1.xpose.msra.mxu0 0.0
        %5321 = vmatprep.subr.mxu0 0.0
        %5322 = vmatpush1.xpose.msra.mxu0 0.0
        %5323 = vmatprep.subr.mxu0 0.0
        %5324 = vmatpush1.xpose.msra.mxu0 0.0
        %5325 = vmatprep.subr.mxu0 0.0
        %5326 = vmatpush1.xpose.msra.mxu0 0.0
        %5327 = vmatprep.subr.mxu0 0.0
        %5328 = vmatpush1.xpose.msra.mxu0 0.0
        %5329 = vmatprep.subr.mxu0 0.0
        %5330 = vmatpush1.xpose.msra.mxu0 0.0
        %5331 = vmatprep.subr.mxu0 0.0
        %5332 = vmatpush1.xpose.msra.mxu0 0.0
        %5333 = vmatprep.subr.mxu0 0.0
        %5334 = vmatpush1.xpose.msra.mxu0 0.0
        %5335 = vmatprep.subr.mxu0 0.0
        %5336 = vmatpush1.xpose.msra.mxu0 0.0
        %5337 = vmatprep.subr.mxu0 0.0
        %5338 = vmatpush1.xpose.msra.mxu0 0.0
        %5339 = vmatprep.subr.mxu0 0.0
        %5340 = vmatpush1.xpose.msra.mxu0 0.0
        %5341 = vmatprep.subr.mxu0 0.0
        %5342 = vmatpush1.xpose.msra.mxu0 0.0
        %5343 = vmatprep.mubr.f32.mxu0 0.0
        %5344 = vmatmul.mubr.f32.gmra.mrb[0].mxu0 %v5215
        %v5345 = vpop.f32.mrb[0].mxu0
        %v5346 = vadd.f32 %v254, %v5345
        %v5347 = vpop.f32.mrb[0].mxu0
        %5348 = vmatprep.mubr.f32.mxu0 0.0
        %5349 = vmatmul.mubr.f32.gmra.mrb[0].mxu0 %v5217
        %v5350 = vpop.f32.mrb[0].mxu0
        %v5351 = vadd.f32 %v255, %v5350
        %v5352 = vpop.f32.mrb[0].mxu0
        %5353 = vmatprep.mubr.f32.mxu0 0.0
        %5354 = vmatmul.mubr.f32.gmra.mrb[0].mxu0 %v5219
        %v5355 = vpop.f32.mrb[0].mxu0
        %v5356 = vadd.f32 %v256, %v5355
        %v5357 = vpop.f32.mrb[0].mxu0
        %5358 = vmatprep.mubr.f32.mxu0 0.0
        %5359 = vmatmul.mubr.f32.gmra.mrb[0].mxu0 %v5221
        %v5360 = vpop.f32.mrb[0].mxu0
        %v5361 = vadd.f32 %v257, %v5360
        %v5362 = vpop.f32.mrb[0].mxu0
        %5363 = vmatprep.mubr.f32.mxu0 0.0
        %5364 = vmatmul.mubr.f32.gmra.mrb[0].mxu0 %v5223
        %v5365 = vpop.f32.mrb[0].mxu0
        %v5366 = vadd.f32 %v258, %v5365
        %v5367 = vpop.f32.mrb[0].mxu0
        %5368 = vmatprep.mubr.f32.mxu0 0.0
        %5369 = vmatmul.mubr.f32.gmra.mrb[0].mxu0 %v5225
        %v5370 = vpop.f32.mrb[0].mxu0
        %v5371 = vadd.f32 %v259, %v5370
        %v5372 = vpop.f32.mrb[0].mxu0
        %5373 = vmatprep.mubr.f32.mxu0 0.0
        %5374 = vmatmul.mubr.f32.gmra.mrb[0].mxu0 %v5227
        %v5375 = vpop.f32.mrb[0].mxu0
        %v5376 = vadd.f32 %v260, %v5375
        %v5377 = vpop.f32.mrb[0].mxu0
        %5378 = vmatprep.mubr.f32.mxu0 0.0
        %5379 = vmatmul.mubr.f32.gmra.mrb[0].mxu0 %v5229
        %v5380 = vpop.f32.mrb[0].mxu0
        %v5381 = vadd.f32 %v261, %v5380
        %v5382 = vpop.f32.mrb[0].mxu0
        %5383 = vmatprep.mubr.f32.mxu0 0.0
        %5384 = vmatmul.mubr.f32.gmra.mrb[0].mxu0 %v5231
        %v5385 = vpop.f32.mrb[0].mxu0
        %v5386 = vadd.f32 %v262, %v5385
        %v5387 = vpop.f32.mrb[0].mxu0
        %5388 = vmatprep.mubr.f32.mxu0 0.0
        %5389 = vmatmul.mubr.f32.gmra.mrb[0].mxu0 %v5233
        %v5390 = vpop.f32.mrb[0].mxu0
        %v5391 = vadd.f32 %v263, %v5390
        %v5392 = vpop.f32.mrb[0].mxu0
        %5393 = vmatprep.mubr.f32.mxu0 0.0
        %5394 = vmatmul.mubr.f32.gmra.mrb[0].mxu0 %v5235
        %v5395 = vpop.f32.mrb[0].mxu0
        %v5396 = vadd.f32 %v264, %v5395
        %v5397 = vpop.f32.mrb[0].mxu0
        %5398 = vmatprep.mubr.f32.mxu0 0.0
        %5399 = vmatmul.mubr.f32.gmra.mrb[0].mxu0 %v5237
        %v5400 = vpop.f32.mrb[0].mxu0
        %v5401 = vadd.f32 %v265, %v5400
        %v5402 = vpop.f32.mrb[0].mxu0
        %5403 = vmatprep.mubr.f32.mxu0 0.0
        %5404 = vmatmul.mubr.f32.gmra.mrb[0].mxu0 %v5239
        %v5405 = vpop.f32.mrb[0].mxu0
        %v5406 = vadd.f32 %v266, %v5405
        %v5407 = vpop.f32.mrb[0].mxu0
        %5408 = vmatprep.mubr.f32.mxu0 0.0
        %5409 = vmatmul.mubr.f32.gmra.mrb[0].mxu0 %v5241
        %v5410 = vpop.f32.mrb[0].mxu0
        %v5411 = vadd.f32 %v267, %v5410
        %v5412 = vpop.f32.mrb[0].mxu0
        %5413 = vmatprep.mubr.f32.mxu0 0.0
        %5414 = vmatmul.mubr.f32.gmra.mrb[0].mxu0 %v5243
        %v5415 = vpop.f32.mrb[0].mxu0
        %v5416 = vadd.f32 %v268, %v5415
        %v5417 = vpop.f32.mrb[0].mxu0
        %5418 = vmatprep.mubr.f32.mxu0 0.0
        %5419 = vmatmul.mubr.f32.gmra.mrb[0].mxu0 %v5245
        %v5420 = vpop.f32.mrb[0].mxu0
        %v5421 = vadd.f32 %v269, %v5420
        %v5422 = vpop.f32.mrb[0].mxu0
        %5423 = vdwg.mxu0
        %5424 = vmax.xlane.f32.xlu0 %v5346
        %v5425 = vpop.xlane.xlu0 %5424
        %5426 = vmax.xlane.f32.xlu0 %v5351
        %v5427 = vpop.xlane.xlu0 %5426
        %5428 = vmax.xlane.f32.xlu0 %v5356
        %v5429 = vpop.xlane.xlu0 %5428
        %5430 = vmax.xlane.f32.xlu0 %v5361
        %v5431 = vpop.xlane.xlu0 %5430
        %5432 = vmax.xlane.f32.xlu0 %v5366
        %v5433 = vpop.xlane.xlu0 %5432
        %5434 = vmax.xlane.f32.xlu0 %v5371
        %v5435 = vpop.xlane.xlu0 %5434
        %5436 = vmax.xlane.f32.xlu0 %v5376
        %v5437 = vpop.xlane.xlu0 %5436
        %5438 = vmax.xlane.f32.xlu0 %v5381
        %v5439 = vpop.xlane.xlu0 %5438
        %5440 = vmax.xlane.f32.xlu0 %v5386
        %v5441 = vpop.xlane.xlu0 %5440
        %5442 = vmax.xlane.f32.xlu0 %v5391
        %v5443 = vpop.xlane.xlu0 %5442
        %5444 = vmax.xlane.f32.xlu0 %v5396
        %v5445 = vpop.xlane.xlu0 %5444
        %5446 = vmax.xlane.f32.xlu0 %v5401
        %v5447 = vpop.xlane.xlu0 %5446
        %5448 = vmax.xlane.f32.xlu0 %v5406
        %v5449 = vpop.xlane.xlu0 %5448
        %5450 = vmax.xlane.f32.xlu0 %v5411
        %v5451 = vpop.xlane.xlu0 %5450
        %5452 = vmax.xlane.f32.xlu0 %v5416
        %v5453 = vpop.xlane.xlu0 %5452
        %5454 = vmax.xlane.f32.xlu0 %v5421
        %v5455 = vpop.xlane.xlu0 %5454
        %v5456 = vsub.f32 %v5346, %v5425
        %v5457 = vsub.f32 %v5351, %v5427
        %v5458 = vsub.f32 %v5356, %v5429
        %v5459 = vsub.f32 %v5361, %v5431
        %v5460 = vsub.f32 %v5366, %v5433
        %v5461 = vsub.f32 %v5371, %v5435
        %v5462 = vsub.f32 %v5376, %v5437
        %v5463 = vsub.f32 %v5381, %v5439
        %v5464 = vsub.f32 %v5386, %v5441
        %v5465 = vsub.f32 %v5391, %v5443
        %v5466 = vsub.f32 %v5396, %v5445
        %v5467 = vsub.f32 %v5401, %v5447
        %v5468 = vsub.f32 %v5406, %v5449
        %v5469 = vsub.f32 %v5411, %v5451
        %v5470 = vsub.f32 %v5416, %v5453
        %v5471 = vsub.f32 %v5421, %v5455
        %v5472 = vmul.f32 %v5456, 1.442695
        %v5473 = vpow.pop %v5472
        %v5474 = vmul.f32 %v5457, 1.442695
        %v5475 = vpow.pop %v5474
        %v5476 = vmul.f32 %v5458, 1.442695
        %v5477 = vpow.pop %v5476
        %v5478 = vmul.f32 %v5459, 1.442695
        %v5479 = vpow.pop %v5478
        %v5480 = vmul.f32 %v5460, 1.442695
        %v5481 = vpow.pop %v5480
        %v5482 = vmul.f32 %v5461, 1.442695
        %v5483 = vpow.pop %v5482
        %v5484 = vmul.f32 %v5462, 1.442695
        %v5485 = vpow.pop %v5484
        %v5486 = vmul.f32 %v5463, 1.442695
        %v5487 = vpow.pop %v5486
        %v5488 = vmul.f32 %v5464, 1.442695
        %v5489 = vpow.pop %v5488
        %v5490 = vmul.f32 %v5465, 1.442695
        %v5491 = vpow.pop %v5490
        %v5492 = vmul.f32 %v5466, 1.442695
        %v5493 = vpow.pop %v5492
        %v5494 = vmul.f32 %v5467, 1.442695
        %v5495 = vpow.pop %v5494
        %v5496 = vmul.f32 %v5468, 1.442695
        %v5497 = vpow.pop %v5496
        %v5498 = vmul.f32 %v5469, 1.442695
        %v5499 = vpow.pop %v5498
        %v5500 = vmul.f32 %v5470, 1.442695
        %v5501 = vpow.pop %v5500
        %v5502 = vmul.f32 %v5471, 1.442695
        %v5503 = vpow.pop %v5502
        %5504 = vadd.xlane.f32.xlu0 %v5473
        %v5505 = vpop.xlane.xlu0 %5504
        %5506 = vadd.xlane.f32.xlu0 %v5475
        %v5507 = vpop.xlane.xlu0 %5506
        %5508 = vadd.xlane.f32.xlu0 %v5477
        %v5509 = vpop.xlane.xlu0 %5508
        %5510 = vadd.xlane.f32.xlu0 %v5479
        %v5511 = vpop.xlane.xlu0 %5510
        %5512 = vadd.xlane.f32.xlu0 %v5481
        %v5513 = vpop.xlane.xlu0 %5512
        %5514 = vadd.xlane.f32.xlu0 %v5483
        %v5515 = vpop.xlane.xlu0 %5514
        %5516 = vadd.xlane.f32.xlu0 %v5485
        %v5517 = vpop.xlane.xlu0 %5516
        %5518 = vadd.xlane.f32.xlu0 %v5487
        %v5519 = vpop.xlane.xlu0 %5518
        %5520 = vadd.xlane.f32.xlu0 %v5489
        %v5521 = vpop.xlane.xlu0 %5520
        %5522 = vadd.xlane.f32.xlu0 %v5491
        %v5523 = vpop.xlane.xlu0 %5522
        %5524 = vadd.xlane.f32.xlu0 %v5493
        %v5525 = vpop.xlane.xlu0 %5524
        %5526 = vadd.xlane.f32.xlu0 %v5495
        %v5527 = vpop.xlane.xlu0 %5526
        %5528 = vadd.xlane.f32.xlu0 %v5497
        %v5529 = vpop.xlane.xlu0 %5528
        %5530 = vadd.xlane.f32.xlu0 %v5499
        %v5531 = vpop.xlane.xlu0 %5530
        %5532 = vadd.xlane.f32.xlu0 %v5501
        %v5533 = vpop.xlane.xlu0 %5532
        %5534 = vadd.xlane.f32.xlu0 %v5503
        %v5535 = vpop.xlane.xlu0 %5534
        %v5536 = vrcp.pop %v5505
        %v5537 = vmul.f32 %v5473, %v5536
        %v5538 = vrcp.pop %v5507
        %v5539 = vmul.f32 %v5475, %v5538
        %v5540 = vrcp.pop %v5509
        %v5541 = vmul.f32 %v5477, %v5540
        %v5542 = vrcp.pop %v5511
        %v5543 = vmul.f32 %v5479, %v5542
        %v5544 = vrcp.pop %v5513
        %v5545 = vmul.f32 %v5481, %v5544
        %v5546 = vrcp.pop %v5515
        %v5547 = vmul.f32 %v5483, %v5546
        %v5548 = vrcp.pop %v5517
        %v5549 = vmul.f32 %v5485, %v5548
        %v5550 = vrcp.pop %v5519
        %v5551 = vmul.f32 %v5487, %v5550
        %v5552 = vrcp.pop %v5521
        %v5553 = vmul.f32 %v5489, %v5552
        %v5554 = vrcp.pop %v5523
        %v5555 = vmul.f32 %v5491, %v5554
        %v5556 = vrcp.pop %v5525
        %v5557 = vmul.f32 %v5493, %v5556
        %v5558 = vrcp.pop %v5527
        %v5559 = vmul.f32 %v5495, %v5558
        %v5560 = vrcp.pop %v5529
        %v5561 = vmul.f32 %v5497, %v5560
        %v5562 = vrcp.pop %v5531
        %v5563 = vmul.f32 %v5499, %v5562
        %v5564 = vrcp.pop %v5533
        %v5565 = vmul.f32 %v5501, %v5564
        %v5566 = vrcp.pop %v5535
        %v5567 = vmul.f32 %v5503, %v5566
        %5568 = vrot.lane.b32.xlu0 %v5089, 64
        %v5569 = vpop.permute.xlu0 %5568
        %5570 = vrot.lane.b32.xlu0 %v5094, 64
        %v5571 = vpop.permute.xlu0 %5570
        %5572 = vrot.lane.b32.xlu0 %v5099, 64
        %v5573 = vpop.permute.xlu0 %5572
        %5574 = vrot.lane.b32.xlu0 %v5104, 64
        %v5575 = vpop.permute.xlu0 %5574
        %5576 = vrot.lane.b32.xlu0 %v5109, 64
        %v5577 = vpop.permute.xlu0 %5576
        %5578 = vrot.lane.b32.xlu0 %v5114, 64
        %v5579 = vpop.permute.xlu0 %5578
        %5580 = vrot.lane.b32.xlu0 %v5119, 64
        %v5581 = vpop.permute.xlu0 %5580
        %5582 = vrot.lane.b32.xlu0 %v5124, 64
        %v5583 = vpop.permute.xlu0 %5582
        %5584 = vrot.lane.b32.xlu0 %v5129, 64
        %v5585 = vpop.permute.xlu0 %5584
        %5586 = vrot.lane.b32.xlu0 %v5134, 64
        %v5587 = vpop.permute.xlu0 %5586
        %5588 = vrot.lane.b32.xlu0 %v5139, 64
        %v5589 = vpop.permute.xlu0 %5588
        %5590 = vrot.lane.b32.xlu0 %v5144, 64
        %v5591 = vpop.permute.xlu0 %5590
        %5592 = vrot.lane.b32.xlu0 %v5149, 64
        %v5593 = vpop.permute.xlu0 %5592
        %5594 = vrot.lane.b32.xlu0 %v5154, 64
        %v5595 = vpop.permute.xlu0 %5594
        %5596 = vrot.lane.b32.xlu0 %v5159, 64
        %v5597 = vpop.permute.xlu0 %5596
        %5598 = vrot.lane.b32.xlu0 %v5164, 64
        %v5599 = vpop.permute.xlu0 %5598
        %5616 = vmatprep.subr.mxu0 0.0
        %5617 = vmatpush1.msra.mxu0 %v5569
        %5618 = vmatprep.subr.mxu0 0.0
        %5619 = vmatpush1.msra.mxu0 %v5571
        %5620 = vmatprep.subr.mxu0 0.0
        %5621 = vmatpush1.msra.mxu0 %v5573
        %5622 = vmatprep.subr.mxu0 0.0
        %5623 = vmatpush1.msra.mxu0 %v5575
        %5624 = vmatprep.subr.mxu0 0.0
        %5625 = vmatpush1.msra.mxu0 %v5577
        %5626 = vmatprep.subr.mxu0 0.0
        %5627 = vmatpush1.msra.mxu0 %v5579
        %5628 = vmatprep.subr.mxu0 0.0
        %5629 = vmatpush1.msra.mxu0 %v5581
        %5630 = vmatprep.subr.mxu0 0.0
        %5631 = vmatpush1.msra.mxu0 %v5583
        %5632 = vmatprep.subr.mxu0 0.0
        %5633 = vmatpush1.msra.mxu0 %v5585
        %5634 = vmatprep.subr.mxu0 0.0
        %5635 = vmatpush1.msra.mxu0 %v5587
        %5636 = vmatprep.subr.mxu0 0.0
        %5637 = vmatpush1.msra.mxu0 %v5589
        %5638 = vmatprep.subr.mxu0 0.0
        %5639 = vmatpush1.msra.mxu0 %v5591
        %5640 = vmatprep.subr.mxu0 0.0
        %5641 = vmatpush1.msra.mxu0 %v5593
        %5642 = vmatprep.subr.mxu0 0.0
        %5643 = vmatpush1.msra.mxu0 %v5595
        %5644 = vmatprep.subr.mxu0 0.0
        %5645 = vmatpush1.msra.mxu0 %v5597
        %5646 = vmatprep.subr.mxu0 0.0
        %5647 = vmatpush1.msra.mxu0 %v5599
        %5648 = vmatprep.subr.mxu0 0.0
        %5649 = vmatpush1.msra.mxu0 0.0
        %5650 = vmatprep.subr.mxu0 0.0
        %5651 = vmatpush1.msra.mxu0 0.0
        %5652 = vmatprep.subr.mxu0 0.0
        %5653 = vmatpush1.msra.mxu0 0.0
        %5654 = vmatprep.subr.mxu0 0.0
        %5655 = vmatpush1.msra.mxu0 0.0
        %5656 = vmatprep.subr.mxu0 0.0
        %5657 = vmatpush1.msra.mxu0 0.0
        %5658 = vmatprep.subr.mxu0 0.0
        %5659 = vmatpush1.msra.mxu0 0.0
        %5660 = vmatprep.subr.mxu0 0.0
        %5661 = vmatpush1.msra.mxu0 0.0
        %5662 = vmatprep.subr.mxu0 0.0
        %5663 = vmatpush1.msra.mxu0 0.0
        %5664 = vmatprep.subr.mxu0 0.0
        %5665 = vmatpush1.msra.mxu0 0.0
        %5666 = vmatprep.subr.mxu0 0.0
        %5667 = vmatpush1.msra.mxu0 0.0
        %5668 = vmatprep.subr.mxu0 0.0
        %5669 = vmatpush1.msra.mxu0 0.0
        %5670 = vmatprep.subr.mxu0 0.0
        %5671 = vmatpush1.msra.mxu0 0.0
        %5672 = vmatprep.subr.mxu0 0.0
        %5673 = vmatpush1.msra.mxu0 0.0
        %5674 = vmatprep.subr.mxu0 0.0
        %5675 = vmatpush1.msra.mxu0 0.0
        %5676 = vmatprep.subr.mxu0 0.0
        %5677 = vmatpush1.msra.mxu0 0.0
        %5678 = vmatprep.subr.mxu0 0.0
        %5679 = vmatpush1.msra.mxu0 0.0
        %5680 = vmatprep.mubr.f32.mxu0 0.0
        %5681 = vmatmul.mubr.f32.gmra.mrb[0].mxu0 %v5537
        %v5682 = vpop.f32.mrb[0].mxu0
        %v5683 = vadd.f32 0.0, %v5682
        %v5684 = vpop.f32.mrb[0].mxu0
        %5685 = vmatprep.mubr.f32.mxu0 0.0
        %5686 = vmatmul.mubr.f32.gmra.mrb[0].mxu0 %v5539
        %v5687 = vpop.f32.mrb[0].mxu0
        %v5688 = vadd.f32 0.0, %v5687
        %v5689 = vpop.f32.mrb[0].mxu0
        %5690 = vmatprep.mubr.f32.mxu0 0.0
        %5691 = vmatmul.mubr.f32.gmra.mrb[0].mxu0 %v5541
        %v5692 = vpop.f32.mrb[0].mxu0
        %v5693 = vadd.f32 0.0, %v5692
        %v5694 = vpop.f32.mrb[0].mxu0
        %5695 = vmatprep.mubr.f32.mxu0 0.0
        %5696 = vmatmul.mubr.f32.gmra.mrb[0].mxu0 %v5543
        %v5697 = vpop.f32.mrb[0].mxu0
        %v5698 = vadd.f32 0.0, %v5697
        %v5699 = vpop.f32.mrb[0].mxu0
        %5700 = vmatprep.mubr.f32.mxu0 0.0
        %5701 = vmatmul.mubr.f32.gmra.mrb[0].mxu0 %v5545
        %v5702 = vpop.f32.mrb[0].mxu0
        %v5703 = vadd.f32 0.0, %v5702
        %v5704 = vpop.f32.mrb[0].mxu0
        %5705 = vmatprep.mubr.f32.mxu0 0.0
        %5706 = vmatmul.mubr.f32.gmra.mrb[0].mxu0 %v5547
        %v5707 = vpop.f32.mrb[0].mxu0
        %v5708 = vadd.f32 0.0, %v5707
        %v5709 = vpop.f32.mrb[0].mxu0
        %5710 = vmatprep.mubr.f32.mxu0 0.0
        %5711 = vmatmul.mubr.f32.gmra.mrb[0].mxu0 %v5549
        %v5712 = vpop.f32.mrb[0].mxu0
        %v5713 = vadd.f32 0.0, %v5712
        %v5714 = vpop.f32.mrb[0].mxu0
        %5715 = vmatprep.mubr.f32.mxu0 0.0
        %5716 = vmatmul.mubr.f32.gmra.mrb[0].mxu0 %v5551
        %v5717 = vpop.f32.mrb[0].mxu0
        %v5718 = vadd.f32 0.0, %v5717
        %v5719 = vpop.f32.mrb[0].mxu0
        %5720 = vmatprep.mubr.f32.mxu0 0.0
        %5721 = vmatmul.mubr.f32.gmra.mrb[0].mxu0 %v5553
        %v5722 = vpop.f32.mrb[0].mxu0
        %v5723 = vadd.f32 0.0, %v5722
        %v5724 = vpop.f32.mrb[0].mxu0
        %5725 = vmatprep.mubr.f32.mxu0 0.0
        %5726 = vmatmul.mubr.f32.gmra.mrb[0].mxu0 %v5555
        %v5727 = vpop.f32.mrb[0].mxu0
        %v5728 = vadd.f32 0.0, %v5727
        %v5729 = vpop.f32.mrb[0].mxu0
        %5730 = vmatprep.mubr.f32.mxu0 0.0
        %5731 = vmatmul.mubr.f32.gmra.mrb[0].mxu0 %v5557
        %v5732 = vpop.f32.mrb[0].mxu0
        %v5733 = vadd.f32 0.0, %v5732
        %v5734 = vpop.f32.mrb[0].mxu0
        %5735 = vmatprep.mubr.f32.mxu0 0.0
        %5736 = vmatmul.mubr.f32.gmra.mrb[0].mxu0 %v5559
        %v5737 = vpop.f32.mrb[0].mxu0
        %v5738 = vadd.f32 0.0, %v5737
        %v5739 = vpop.f32.mrb[0].mxu0
        %5740 = vmatprep.mubr.f32.mxu0 0.0
        %5741 = vmatmul.mubr.f32.gmra.mrb[0].mxu0 %v5561
        %v5742 = vpop.f32.mrb[0].mxu0
        %v5743 = vadd.f32 0.0, %v5742
        %v5744 = vpop.f32.mrb[0].mxu0
        %5745 = vmatprep.mubr.f32.mxu0 0.0
        %5746 = vmatmul.mubr.f32.gmra.mrb[0].mxu0 %v5563
        %v5747 = vpop.f32.mrb[0].mxu0
        %v5748 = vadd.f32 0.0, %v5747
        %v5749 = vpop.f32.mrb[0].mxu0
        %5750 = vmatprep.mubr.f32.mxu0 0.0
        %5751 = vmatmul.mubr.f32.gmra.mrb[0].mxu0 %v5565
        %v5752 = vpop.f32.mrb[0].mxu0
        %v5753 = vadd.f32 0.0, %v5752
        %v5754 = vpop.f32.mrb[0].mxu0
        %5755 = vmatprep.mubr.f32.mxu0 0.0
        %5756 = vmatmul.mubr.f32.gmra.mrb[0].mxu0 %v5567
        %v5757 = vpop.f32.mrb[0].mxu0
        %v5758 = vadd.f32 0.0, %v5757
        %v5759 = vpop.f32.mrb[0].mxu0
        %5760 = vdwg.mxu0
        %5761 = vst.msk [vmem:[#allocation2] sm:$0xff] %vm427, %v5683
        %5762 = vst.msk [vmem:[#allocation2 + $0x8] sm:$0xff] %vm427, %v5688
        %5763 = vst.msk [vmem:[#allocation2 + $0x10] sm:$0xff] %vm427, %v5693
        %5764 = vst.msk [vmem:[#allocation2 + $0x18] sm:$0xff] %vm427, %v5698
        %5765 = vst.msk [vmem:[#allocation2 + $0x20] sm:$0xff] %vm427, %v5703
        %5766 = vst.msk [vmem:[#allocation2 + $0x28] sm:$0xff] %vm427, %v5708
        %5767 = vst.msk [vmem:[#allocation2 + $0x30] sm:$0xff] %vm427, %v5713
        %5768 = vst.msk [vmem:[#allocation2 + $0x38] sm:$0xff] %vm427, %v5718
        %5769 = vst.msk [vmem:[#allocation2 + $0x40] sm:$0xff] %vm427, %v5723
        %5770 = vst.msk [vmem:[#allocation2 + $0x48] sm:$0xff] %vm427, %v5728
        %5771 = vst.msk [vmem:[#allocation2 + $0x50] sm:$0xff] %vm427, %v5733
        %5772 = vst.msk [vmem:[#allocation2 + $0x58] sm:$0xff] %vm427, %v5738
        %5773 = vst.msk [vmem:[#allocation2 + $0x60] sm:$0xff] %vm427, %v5743
        %5774 = vst.msk [vmem:[#allocation2 + $0x68] sm:$0xff] %vm427, %v5748
        %5775 = vst.msk [vmem:[#allocation2 + $0x70] sm:$0xff] %vm427, %v5753
        %5776 = vst.msk [vmem:[#allocation2 + $0x78] sm:$0xff] %vm427, %v5758
        %5777 = vrot.lane.b32.xlu0 %v5089, 112
        %v5778 = vpop.permute.xlu0 %5777
        %5779 = vrot.lane.b32.xlu0 %v5094, 112
        %v5780 = vpop.permute.xlu0 %5779
        %5781 = vrot.lane.b32.xlu0 %v5099, 112
        %v5782 = vpop.permute.xlu0 %5781
        %5783 = vrot.lane.b32.xlu0 %v5104, 112
        %v5784 = vpop.permute.xlu0 %5783
        %5785 = vrot.lane.b32.xlu0 %v5109, 112
        %v5786 = vpop.permute.xlu0 %5785
        %5787 = vrot.lane.b32.xlu0 %v5114, 112
        %v5788 = vpop.permute.xlu0 %5787
        %5789 = vrot.lane.b32.xlu0 %v5119, 112
        %v5790 = vpop.permute.xlu0 %5789
        %5791 = vrot.lane.b32.xlu0 %v5124, 112
        %v5792 = vpop.permute.xlu0 %5791
        %5793 = vrot.lane.b32.xlu0 %v5129, 112
        %v5794 = vpop.permute.xlu0 %5793
        %5795 = vrot.lane.b32.xlu0 %v5134, 112
        %v5796 = vpop.permute.xlu0 %5795
        %5797 = vrot.lane.b32.xlu0 %v5139, 112
        %v5798 = vpop.permute.xlu0 %5797
        %5799 = vrot.lane.b32.xlu0 %v5144, 112
        %v5800 = vpop.permute.xlu0 %5799
        %5801 = vrot.lane.b32.xlu0 %v5149, 112
        %v5802 = vpop.permute.xlu0 %5801
        %5803 = vrot.lane.b32.xlu0 %v5154, 112
        %v5804 = vpop.permute.xlu0 %5803
        %5805 = vrot.lane.b32.xlu0 %v5159, 112
        %v5806 = vpop.permute.xlu0 %5805
        %5807 = vrot.lane.b32.xlu0 %v5164, 112
        %v5808 = vpop.permute.xlu0 %5807
        %5809 = vrot.lane.b32.xlu0 %v5089, 80
        %v5810 = vpop.permute.xlu0 %5809
        %5811 = vrot.lane.b32.xlu0 %v5094, 80
        %v5812 = vpop.permute.xlu0 %5811
        %5813 = vrot.lane.b32.xlu0 %v5099, 80
        %v5814 = vpop.permute.xlu0 %5813
        %5815 = vrot.lane.b32.xlu0 %v5104, 80
        %v5816 = vpop.permute.xlu0 %5815
        %5817 = vrot.lane.b32.xlu0 %v5109, 80
        %v5818 = vpop.permute.xlu0 %5817
        %5819 = vrot.lane.b32.xlu0 %v5114, 80
        %v5820 = vpop.permute.xlu0 %5819
        %5821 = vrot.lane.b32.xlu0 %v5119, 80
        %v5822 = vpop.permute.xlu0 %5821
        %5823 = vrot.lane.b32.xlu0 %v5124, 80
        %v5824 = vpop.permute.xlu0 %5823
        %5825 = vrot.lane.b32.xlu0 %v5129, 80
        %v5826 = vpop.permute.xlu0 %5825
        %5827 = vrot.lane.b32.xlu0 %v5134, 80
        %v5828 = vpop.permute.xlu0 %5827
        %5829 = vrot.lane.b32.xlu0 %v5139, 80
        %v5830 = vpop.permute.xlu0 %5829
        %5831 = vrot.lane.b32.xlu0 %v5144, 80
        %v5832 = vpop.permute.xlu0 %5831
        %5833 = vrot.lane.b32.xlu0 %v5149, 80
        %v5834 = vpop.permute.xlu0 %5833
        %5835 = vrot.lane.b32.xlu0 %v5154, 80
        %v5836 = vpop.permute.xlu0 %5835
        %5837 = vrot.lane.b32.xlu0 %v5159, 80
        %v5838 = vpop.permute.xlu0 %5837
        %5839 = vrot.lane.b32.xlu0 %v5164, 80
        %v5840 = vpop.permute.xlu0 %5839
        %v5841 = vsel %vm427, %v5778, 0
        %v5843 = vsel %vm427, %v5780, 0
        %v5845 = vsel %vm427, %v5782, 0
        %v5847 = vsel %vm427, %v5784, 0
        %v5849 = vsel %vm427, %v5786, 0
        %v5851 = vsel %vm427, %v5788, 0
        %v5853 = vsel %vm427, %v5790, 0
        %v5855 = vsel %vm427, %v5792, 0
        %v5857 = vsel %vm427, %v5794, 0
        %v5859 = vsel %vm427, %v5796, 0
        %v5861 = vsel %vm427, %v5798, 0
        %v5863 = vsel %vm427, %v5800, 0
        %v5865 = vsel %vm427, %v5802, 0
        %v5867 = vsel %vm427, %v5804, 0
        %v5869 = vsel %vm427, %v5806, 0
        %v5871 = vsel %vm427, %v5808, 0
        %v5873 = vsel %vm427, %v5810, 0
        %v5875 = vsel %vm427, %v5812, 0
        %v5877 = vsel %vm427, %v5814, 0
        %v5879 = vsel %vm427, %v5816, 0
        %v5881 = vsel %vm427, %v5818, 0
        %v5883 = vsel %vm427, %v5820, 0
        %v5885 = vsel %vm427, %v5822, 0
        %v5887 = vsel %vm427, %v5824, 0
        %v5889 = vsel %vm427, %v5826, 0
        %v5891 = vsel %vm427, %v5828, 0
        %v5893 = vsel %vm427, %v5830, 0
        %v5895 = vsel %vm427, %v5832, 0
        %v5897 = vsel %vm427, %v5834, 0
        %v5899 = vsel %vm427, %v5836, 0
        %v5901 = vsel %vm427, %v5838, 0
        %v5903 = vsel %vm427, %v5840, 0
        %5905 = vmatprep.subr.mxu0 0.0
        %5906 = vmatpush1.xpose.msra.mxu0 %v5873
        %5907 = vmatprep.subr.mxu0 0.0
        %5908 = vmatpush1.xpose.msra.mxu0 %v5875
        %5909 = vmatprep.subr.mxu0 0.0
        %5910 = vmatpush1.xpose.msra.mxu0 %v5877
        %5911 = vmatprep.subr.mxu0 0.0
        %5912 = vmatpush1.xpose.msra.mxu0 %v5879
        %5913 = vmatprep.subr.mxu0 0.0
        %5914 = vmatpush1.xpose.msra.mxu0 %v5881
        %5915 = vmatprep.subr.mxu0 0.0
        %5916 = vmatpush1.xpose.msra.mxu0 %v5883
        %5917 = vmatprep.subr.mxu0 0.0
        %5918 = vmatpush1.xpose.msra.mxu0 %v5885
        %5919 = vmatprep.subr.mxu0 0.0
        %5920 = vmatpush1.xpose.msra.mxu0 %v5887
        %5921 = vmatprep.subr.mxu0 0.0
        %5922 = vmatpush1.xpose.msra.mxu0 %v5889
        %5923 = vmatprep.subr.mxu0 0.0
        %5924 = vmatpush1.xpose.msra.mxu0 %v5891
        %5925 = vmatprep.subr.mxu0 0.0
        %5926 = vmatpush1.xpose.msra.mxu0 %v5893
        %5927 = vmatprep.subr.mxu0 0.0
        %5928 = vmatpush1.xpose.msra.mxu0 %v5895
        %5929 = vmatprep.subr.mxu0 0.0
        %5930 = vmatpush1.xpose.msra.mxu0 %v5897
        %5931 = vmatprep.subr.mxu0 0.0
        %5932 = vmatpush1.xpose.msra.mxu0 %v5899
        %5933 = vmatprep.subr.mxu0 0.0
        %5934 = vmatpush1.xpose.msra.mxu0 %v5901
        %5935 = vmatprep.subr.mxu0 0.0
        %5936 = vmatpush1.xpose.msra.mxu0 %v5903
        %5937 = vmatprep.subr.mxu0 0.0
        %5938 = vmatpush1.xpose.msra.mxu0 0.0
        %5939 = vmatprep.subr.mxu0 0.0
        %5940 = vmatpush1.xpose.msra.mxu0 0.0
        %5941 = vmatprep.subr.mxu0 0.0
        %5942 = vmatpush1.xpose.msra.mxu0 0.0
        %5943 = vmatprep.subr.mxu0 0.0
        %5944 = vmatpush1.xpose.msra.mxu0 0.0
        %5945 = vmatprep.subr.mxu0 0.0
        %5946 = vmatpush1.xpose.msra.mxu0 0.0
        %5947 = vmatprep.subr.mxu0 0.0
        %5948 = vmatpush1.xpose.msra.mxu0 0.0
        %5949 = vmatprep.subr.mxu0 0.0
        %5950 = vmatpush1.xpose.msra.mxu0 0.0
        %5951 = vmatprep.subr.mxu0 0.0
        %5952 = vmatpush1.xpose.msra.mxu0 0.0
        %5953 = vmatprep.subr.mxu0 0.0
        %5954 = vmatpush1.xpose.msra.mxu0 0.0
        %5955 = vmatprep.subr.mxu0 0.0
        %5956 = vmatpush1.xpose.msra.mxu0 0.0
        %5957 = vmatprep.subr.mxu0 0.0
        %5958 = vmatpush1.xpose.msra.mxu0 0.0
        %5959 = vmatprep.subr.mxu0 0.0
        %5960 = vmatpush1.xpose.msra.mxu0 0.0
        %5961 = vmatprep.subr.mxu0 0.0
        %5962 = vmatpush1.xpose.msra.mxu0 0.0
        %5963 = vmatprep.subr.mxu0 0.0
        %5964 = vmatpush1.xpose.msra.mxu0 0.0
        %5965 = vmatprep.subr.mxu0 0.0
        %5966 = vmatpush1.xpose.msra.mxu0 0.0
        %5967 = vmatprep.subr.mxu0 0.0
        %5968 = vmatpush1.xpose.msra.mxu0 0.0
        %5969 = vmatprep.mubr.f32.mxu0 0.0
        %5970 = vmatmul.mubr.f32.gmra.mrb[0].mxu0 %v5841
        %v5971 = vpop.f32.mrb[0].mxu0
        %v5972 = vadd.f32 %v254, %v5971
        %v5973 = vpop.f32.mrb[0].mxu0
        %5974 = vmatprep.mubr.f32.mxu0 0.0
        %5975 = vmatmul.mubr.f32.gmra.mrb[0].mxu0 %v5843
        %v5976 = vpop.f32.mrb[0].mxu0
        %v5977 = vadd.f32 %v255, %v5976
        %v5978 = vpop.f32.mrb[0].mxu0
        %5979 = vmatprep.mubr.f32.mxu0 0.0
        %5980 = vmatmul.mubr.f32.gmra.mrb[0].mxu0 %v5845
        %v5981 = vpop.f32.mrb[0].mxu0
        %v5982 = vadd.f32 %v256, %v5981
        %v5983 = vpop.f32.mrb[0].mxu0
        %5984 = vmatprep.mubr.f32.mxu0 0.0
        %5985 = vmatmul.mubr.f32.gmra.mrb[0].mxu0 %v5847
        %v5986 = vpop.f32.mrb[0].mxu0
        %v5987 = vadd.f32 %v257, %v5986
        %v5988 = vpop.f32.mrb[0].mxu0
        %5989 = vmatprep.mubr.f32.mxu0 0.0
        %5990 = vmatmul.mubr.f32.gmra.mrb[0].mxu0 %v5849
        %v5991 = vpop.f32.mrb[0].mxu0
        %v5992 = vadd.f32 %v258, %v5991
        %v5993 = vpop.f32.mrb[0].mxu0
        %5994 = vmatprep.mubr.f32.mxu0 0.0
        %5995 = vmatmul.mubr.f32.gmra.mrb[0].mxu0 %v5851
        %v5996 = vpop.f32.mrb[0].mxu0
        %v5997 = vadd.f32 %v259, %v5996
        %v5998 = vpop.f32.mrb[0].mxu0
        %5999 = vmatprep.mubr.f32.mxu0 0.0
        %6000 = vmatmul.mubr.f32.gmra.mrb[0].mxu0 %v5853
        %v6001 = vpop.f32.mrb[0].mxu0
        %v6002 = vadd.f32 %v260, %v6001
        %v6003 = vpop.f32.mrb[0].mxu0
        %6004 = vmatprep.mubr.f32.mxu0 0.0
        %6005 = vmatmul.mubr.f32.gmra.mrb[0].mxu0 %v5855
        %v6006 = vpop.f32.mrb[0].mxu0
        %v6007 = vadd.f32 %v261, %v6006
        %v6008 = vpop.f32.mrb[0].mxu0
        %6009 = vmatprep.mubr.f32.mxu0 0.0
        %6010 = vmatmul.mubr.f32.gmra.mrb[0].mxu0 %v5857
        %v6011 = vpop.f32.mrb[0].mxu0
        %v6012 = vadd.f32 %v262, %v6011
        %v6013 = vpop.f32.mrb[0].mxu0
        %6014 = vmatprep.mubr.f32.mxu0 0.0
        %6015 = vmatmul.mubr.f32.gmra.mrb[0].mxu0 %v5859
        %v6016 = vpop.f32.mrb[0].mxu0
        %v6017 = vadd.f32 %v263, %v6016
        %v6018 = vpop.f32.mrb[0].mxu0
        %6019 = vmatprep.mubr.f32.mxu0 0.0
        %6020 = vmatmul.mubr.f32.gmra.mrb[0].mxu0 %v5861
        %v6021 = vpop.f32.mrb[0].mxu0
        %v6022 = vadd.f32 %v264, %v6021
        %v6023 = vpop.f32.mrb[0].mxu0
        %6024 = vmatprep.mubr.f32.mxu0 0.0
        %6025 = vmatmul.mubr.f32.gmra.mrb[0].mxu0 %v5863
        %v6026 = vpop.f32.mrb[0].mxu0
        %v6027 = vadd.f32 %v265, %v6026
        %v6028 = vpop.f32.mrb[0].mxu0
        %6029 = vmatprep.mubr.f32.mxu0 0.0
        %6030 = vmatmul.mubr.f32.gmra.mrb[0].mxu0 %v5865
        %v6031 = vpop.f32.mrb[0].mxu0
        %v6032 = vadd.f32 %v266, %v6031
        %v6033 = vpop.f32.mrb[0].mxu0
        %6034 = vmatprep.mubr.f32.mxu0 0.0
        %6035 = vmatmul.mubr.f32.gmra.mrb[0].mxu0 %v5867
        %v6036 = vpop.f32.mrb[0].mxu0
        %v6037 = vadd.f32 %v267, %v6036
        %v6038 = vpop.f32.mrb[0].mxu0
        %6039 = vmatprep.mubr.f32.mxu0 0.0
        %6040 = vmatmul.mubr.f32.gmra.mrb[0].mxu0 %v5869
        %v6041 = vpop.f32.mrb[0].mxu0
        %v6042 = vadd.f32 %v268, %v6041
        %v6043 = vpop.f32.mrb[0].mxu0
        %6044 = vmatprep.mubr.f32.mxu0 0.0
        %6045 = vmatmul.mubr.f32.gmra.mrb[0].mxu0 %v5871
        %v6046 = vpop.f32.mrb[0].mxu0
        %v6047 = vadd.f32 %v269, %v6046
        %v6048 = vpop.f32.mrb[0].mxu0
        %6049 = vdwg.mxu0
        %6050 = vmax.xlane.f32.xlu0 %v5972
        %v6051 = vpop.xlane.xlu0 %6050
        %6052 = vmax.xlane.f32.xlu0 %v5977
        %v6053 = vpop.xlane.xlu0 %6052
        %6054 = vmax.xlane.f32.xlu0 %v5982
        %v6055 = vpop.xlane.xlu0 %6054
        %6056 = vmax.xlane.f32.xlu0 %v5987
        %v6057 = vpop.xlane.xlu0 %6056
        %6058 = vmax.xlane.f32.xlu0 %v5992
        %v6059 = vpop.xlane.xlu0 %6058
        %6060 = vmax.xlane.f32.xlu0 %v5997
        %v6061 = vpop.xlane.xlu0 %6060
        %6062 = vmax.xlane.f32.xlu0 %v6002
        %v6063 = vpop.xlane.xlu0 %6062
        %6064 = vmax.xlane.f32.xlu0 %v6007
        %v6065 = vpop.xlane.xlu0 %6064
        %6066 = vmax.xlane.f32.xlu0 %v6012
        %v6067 = vpop.xlane.xlu0 %6066
        %6068 = vmax.xlane.f32.xlu0 %v6017
        %v6069 = vpop.xlane.xlu0 %6068
        %6070 = vmax.xlane.f32.xlu0 %v6022
        %v6071 = vpop.xlane.xlu0 %6070
        %6072 = vmax.xlane.f32.xlu0 %v6027
        %v6073 = vpop.xlane.xlu0 %6072
        %6074 = vmax.xlane.f32.xlu0 %v6032
        %v6075 = vpop.xlane.xlu0 %6074
        %6076 = vmax.xlane.f32.xlu0 %v6037
        %v6077 = vpop.xlane.xlu0 %6076
        %6078 = vmax.xlane.f32.xlu0 %v6042
        %v6079 = vpop.xlane.xlu0 %6078
        %6080 = vmax.xlane.f32.xlu0 %v6047
        %v6081 = vpop.xlane.xlu0 %6080
        %v6082 = vsub.f32 %v5972, %v6051
        %v6083 = vsub.f32 %v5977, %v6053
        %v6084 = vsub.f32 %v5982, %v6055
        %v6085 = vsub.f32 %v5987, %v6057
        %v6086 = vsub.f32 %v5992, %v6059
        %v6087 = vsub.f32 %v5997, %v6061
        %v6088 = vsub.f32 %v6002, %v6063
        %v6089 = vsub.f32 %v6007, %v6065
        %v6090 = vsub.f32 %v6012, %v6067
        %v6091 = vsub.f32 %v6017, %v6069
        %v6092 = vsub.f32 %v6022, %v6071
        %v6093 = vsub.f32 %v6027, %v6073
        %v6094 = vsub.f32 %v6032, %v6075
        %v6095 = vsub.f32 %v6037, %v6077
        %v6096 = vsub.f32 %v6042, %v6079
        %v6097 = vsub.f32 %v6047, %v6081
        %v6098 = vmul.f32 %v6082, 1.442695
        %v6099 = vpow.pop %v6098
        %v6100 = vmul.f32 %v6083, 1.442695
        %v6101 = vpow.pop %v6100
        %v6102 = vmul.f32 %v6084, 1.442695
        %v6103 = vpow.pop %v6102
        %v6104 = vmul.f32 %v6085, 1.442695
        %v6105 = vpow.pop %v6104
        %v6106 = vmul.f32 %v6086, 1.442695
        %v6107 = vpow.pop %v6106
        %v6108 = vmul.f32 %v6087, 1.442695
        %v6109 = vpow.pop %v6108
        %v6110 = vmul.f32 %v6088, 1.442695
        %v6111 = vpow.pop %v6110
        %v6112 = vmul.f32 %v6089, 1.442695
        %v6113 = vpow.pop %v6112
        %v6114 = vmul.f32 %v6090, 1.442695
        %v6115 = vpow.pop %v6114
        %v6116 = vmul.f32 %v6091, 1.442695
        %v6117 = vpow.pop %v6116
        %v6118 = vmul.f32 %v6092, 1.442695
        %v6119 = vpow.pop %v6118
        %v6120 = vmul.f32 %v6093, 1.442695
        %v6121 = vpow.pop %v6120
        %v6122 = vmul.f32 %v6094, 1.442695
        %v6123 = vpow.pop %v6122
        %v6124 = vmul.f32 %v6095, 1.442695
        %v6125 = vpow.pop %v6124
        %v6126 = vmul.f32 %v6096, 1.442695
        %v6127 = vpow.pop %v6126
        %v6128 = vmul.f32 %v6097, 1.442695
        %v6129 = vpow.pop %v6128
        %6130 = vadd.xlane.f32.xlu0 %v6099
        %v6131 = vpop.xlane.xlu0 %6130
        %6132 = vadd.xlane.f32.xlu0 %v6101
        %v6133 = vpop.xlane.xlu0 %6132
        %6134 = vadd.xlane.f32.xlu0 %v6103
        %v6135 = vpop.xlane.xlu0 %6134
        %6136 = vadd.xlane.f32.xlu0 %v6105
        %v6137 = vpop.xlane.xlu0 %6136
        %6138 = vadd.xlane.f32.xlu0 %v6107
        %v6139 = vpop.xlane.xlu0 %6138
        %6140 = vadd.xlane.f32.xlu0 %v6109
        %v6141 = vpop.xlane.xlu0 %6140
        %6142 = vadd.xlane.f32.xlu0 %v6111
        %v6143 = vpop.xlane.xlu0 %6142
        %6144 = vadd.xlane.f32.xlu0 %v6113
        %v6145 = vpop.xlane.xlu0 %6144
        %6146 = vadd.xlane.f32.xlu0 %v6115
        %v6147 = vpop.xlane.xlu0 %6146
        %6148 = vadd.xlane.f32.xlu0 %v6117
        %v6149 = vpop.xlane.xlu0 %6148
        %6150 = vadd.xlane.f32.xlu0 %v6119
        %v6151 = vpop.xlane.xlu0 %6150
        %6152 = vadd.xlane.f32.xlu0 %v6121
        %v6153 = vpop.xlane.xlu0 %6152
        %6154 = vadd.xlane.f32.xlu0 %v6123
        %v6155 = vpop.xlane.xlu0 %6154
        %6156 = vadd.xlane.f32.xlu0 %v6125
        %v6157 = vpop.xlane.xlu0 %6156
        %6158 = vadd.xlane.f32.xlu0 %v6127
        %v6159 = vpop.xlane.xlu0 %6158
        %6160 = vadd.xlane.f32.xlu0 %v6129
        %v6161 = vpop.xlane.xlu0 %6160
        %v6162 = vrcp.pop %v6131
        %v6163 = vmul.f32 %v6099, %v6162
        %v6164 = vrcp.pop %v6133
        %v6165 = vmul.f32 %v6101, %v6164
        %v6166 = vrcp.pop %v6135
        %v6167 = vmul.f32 %v6103, %v6166
        %v6168 = vrcp.pop %v6137
        %v6169 = vmul.f32 %v6105, %v6168
        %v6170 = vrcp.pop %v6139
        %v6171 = vmul.f32 %v6107, %v6170
        %v6172 = vrcp.pop %v6141
        %v6173 = vmul.f32 %v6109, %v6172
        %v6174 = vrcp.pop %v6143
        %v6175 = vmul.f32 %v6111, %v6174
        %v6176 = vrcp.pop %v6145
        %v6177 = vmul.f32 %v6113, %v6176
        %v6178 = vrcp.pop %v6147
        %v6179 = vmul.f32 %v6115, %v6178
        %v6180 = vrcp.pop %v6149
        %v6181 = vmul.f32 %v6117, %v6180
        %v6182 = vrcp.pop %v6151
        %v6183 = vmul.f32 %v6119, %v6182
        %v6184 = vrcp.pop %v6153
        %v6185 = vmul.f32 %v6121, %v6184
        %v6186 = vrcp.pop %v6155
        %v6187 = vmul.f32 %v6123, %v6186
        %v6188 = vrcp.pop %v6157
        %v6189 = vmul.f32 %v6125, %v6188
        %v6190 = vrcp.pop %v6159
        %v6191 = vmul.f32 %v6127, %v6190
        %v6192 = vrcp.pop %v6161
        %v6193 = vmul.f32 %v6129, %v6192
        %6194 = vrot.lane.b32.xlu0 %v5089, 48
        %v6195 = vpop.permute.xlu0 %6194
        %6196 = vrot.lane.b32.xlu0 %v5094, 48
        %v6197 = vpop.permute.xlu0 %6196
        %6198 = vrot.lane.b32.xlu0 %v5099, 48
        %v6199 = vpop.permute.xlu0 %6198
        %6200 = vrot.lane.b32.xlu0 %v5104, 48
        %v6201 = vpop.permute.xlu0 %6200
        %6202 = vrot.lane.b32.xlu0 %v5109, 48
        %v6203 = vpop.permute.xlu0 %6202
        %6204 = vrot.lane.b32.xlu0 %v5114, 48
        %v6205 = vpop.permute.xlu0 %6204
        %6206 = vrot.lane.b32.xlu0 %v5119, 48
        %v6207 = vpop.permute.xlu0 %6206
        %6208 = vrot.lane.b32.xlu0 %v5124, 48
        %v6209 = vpop.permute.xlu0 %6208
        %6210 = vrot.lane.b32.xlu0 %v5129, 48
        %v6211 = vpop.permute.xlu0 %6210
        %6212 = vrot.lane.b32.xlu0 %v5134, 48
        %v6213 = vpop.permute.xlu0 %6212
        %6214 = vrot.lane.b32.xlu0 %v5139, 48
        %v6215 = vpop.permute.xlu0 %6214
        %6216 = vrot.lane.b32.xlu0 %v5144, 48
        %v6217 = vpop.permute.xlu0 %6216
        %6218 = vrot.lane.b32.xlu0 %v5149, 48
        %v6219 = vpop.permute.xlu0 %6218
        %6220 = vrot.lane.b32.xlu0 %v5154, 48
        %v6221 = vpop.permute.xlu0 %6220
        %6222 = vrot.lane.b32.xlu0 %v5159, 48
        %v6223 = vpop.permute.xlu0 %6222
        %6224 = vrot.lane.b32.xlu0 %v5164, 48
        %v6225 = vpop.permute.xlu0 %6224
        %6242 = vmatprep.subr.mxu0 0.0
        %6243 = vmatpush1.msra.mxu0 %v6195
        %6244 = vmatprep.subr.mxu0 0.0
        %6245 = vmatpush1.msra.mxu0 %v6197
        %6246 = vmatprep.subr.mxu0 0.0
        %6247 = vmatpush1.msra.mxu0 %v6199
        %6248 = vmatprep.subr.mxu0 0.0
        %6249 = vmatpush1.msra.mxu0 %v6201
        %6250 = vmatprep.subr.mxu0 0.0
        %6251 = vmatpush1.msra.mxu0 %v6203
        %6252 = vmatprep.subr.mxu0 0.0
        %6253 = vmatpush1.msra.mxu0 %v6205
        %6254 = vmatprep.subr.mxu0 0.0
        %6255 = vmatpush1.msra.mxu0 %v6207
        %6256 = vmatprep.subr.mxu0 0.0
        %6257 = vmatpush1.msra.mxu0 %v6209
        %6258 = vmatprep.subr.mxu0 0.0
        %6259 = vmatpush1.msra.mxu0 %v6211
        %6260 = vmatprep.subr.mxu0 0.0
        %6261 = vmatpush1.msra.mxu0 %v6213
        %6262 = vmatprep.subr.mxu0 0.0
        %6263 = vmatpush1.msra.mxu0 %v6215
        %6264 = vmatprep.subr.mxu0 0.0
        %6265 = vmatpush1.msra.mxu0 %v6217
        %6266 = vmatprep.subr.mxu0 0.0
        %6267 = vmatpush1.msra.mxu0 %v6219
        %6268 = vmatprep.subr.mxu0 0.0
        %6269 = vmatpush1.msra.mxu0 %v6221
        %6270 = vmatprep.subr.mxu0 0.0
        %6271 = vmatpush1.msra.mxu0 %v6223
        %6272 = vmatprep.subr.mxu0 0.0
        %6273 = vmatpush1.msra.mxu0 %v6225
        %6274 = vmatprep.subr.mxu0 0.0
        %6275 = vmatpush1.msra.mxu0 0.0
        %6276 = vmatprep.subr.mxu0 0.0
        %6277 = vmatpush1.msra.mxu0 0.0
        %6278 = vmatprep.subr.mxu0 0.0
        %6279 = vmatpush1.msra.mxu0 0.0
        %6280 = vmatprep.subr.mxu0 0.0
        %6281 = vmatpush1.msra.mxu0 0.0
        %6282 = vmatprep.subr.mxu0 0.0
        %6283 = vmatpush1.msra.mxu0 0.0
        %6284 = vmatprep.subr.mxu0 0.0
        %6285 = vmatpush1.msra.mxu0 0.0
        %6286 = vmatprep.subr.mxu0 0.0
        %6287 = vmatpush1.msra.mxu0 0.0
        %6288 = vmatprep.subr.mxu0 0.0
        %6289 = vmatpush1.msra.mxu0 0.0
        %6290 = vmatprep.subr.mxu0 0.0
        %6291 = vmatpush1.msra.mxu0 0.0
        %6292 = vmatprep.subr.mxu0 0.0
        %6293 = vmatpush1.msra.mxu0 0.0
        %6294 = vmatprep.subr.mxu0 0.0
        %6295 = vmatpush1.msra.mxu0 0.0
        %6296 = vmatprep.subr.mxu0 0.0
        %6297 = vmatpush1.msra.mxu0 0.0
        %6298 = vmatprep.subr.mxu0 0.0
        %6299 = vmatpush1.msra.mxu0 0.0
        %6300 = vmatprep.subr.mxu0 0.0
        %6301 = vmatpush1.msra.mxu0 0.0
        %6302 = vmatprep.subr.mxu0 0.0
        %6303 = vmatpush1.msra.mxu0 0.0
        %6304 = vmatprep.subr.mxu0 0.0
        %6305 = vmatpush1.msra.mxu0 0.0
        %6306 = vmatprep.mubr.f32.mxu0 0.0
        %6307 = vmatmul.mubr.f32.gmra.mrb[0].mxu0 %v6163
        %v6308 = vpop.f32.mrb[0].mxu0
        %v6309 = vadd.f32 0.0, %v6308
        %v6310 = vpop.f32.mrb[0].mxu0
        %6311 = vmatprep.mubr.f32.mxu0 0.0
        %6312 = vmatmul.mubr.f32.gmra.mrb[0].mxu0 %v6165
        %v6313 = vpop.f32.mrb[0].mxu0
        %v6314 = vadd.f32 0.0, %v6313
        %v6315 = vpop.f32.mrb[0].mxu0
        %6316 = vmatprep.mubr.f32.mxu0 0.0
        %6317 = vmatmul.mubr.f32.gmra.mrb[0].mxu0 %v6167
        %v6318 = vpop.f32.mrb[0].mxu0
        %v6319 = vadd.f32 0.0, %v6318
        %v6320 = vpop.f32.mrb[0].mxu0
        %6321 = vmatprep.mubr.f32.mxu0 0.0
        %6322 = vmatmul.mubr.f32.gmra.mrb[0].mxu0 %v6169
        %v6323 = vpop.f32.mrb[0].mxu0
        %v6324 = vadd.f32 0.0, %v6323
        %v6325 = vpop.f32.mrb[0].mxu0
        %6326 = vmatprep.mubr.f32.mxu0 0.0
        %6327 = vmatmul.mubr.f32.gmra.mrb[0].mxu0 %v6171
        %v6328 = vpop.f32.mrb[0].mxu0
        %v6329 = vadd.f32 0.0, %v6328
        %v6330 = vpop.f32.mrb[0].mxu0
        %6331 = vmatprep.mubr.f32.mxu0 0.0
        %6332 = vmatmul.mubr.f32.gmra.mrb[0].mxu0 %v6173
        %v6333 = vpop.f32.mrb[0].mxu0
        %v6334 = vadd.f32 0.0, %v6333
        %v6335 = vpop.f32.mrb[0].mxu0
        %6336 = vmatprep.mubr.f32.mxu0 0.0
        %6337 = vmatmul.mubr.f32.gmra.mrb[0].mxu0 %v6175
        %v6338 = vpop.f32.mrb[0].mxu0
        %v6339 = vadd.f32 0.0, %v6338
        %v6340 = vpop.f32.mrb[0].mxu0
        %6341 = vmatprep.mubr.f32.mxu0 0.0
        %6342 = vmatmul.mubr.f32.gmra.mrb[0].mxu0 %v6177
        %v6343 = vpop.f32.mrb[0].mxu0
        %v6344 = vadd.f32 0.0, %v6343
        %v6345 = vpop.f32.mrb[0].mxu0
        %6346 = vmatprep.mubr.f32.mxu0 0.0
        %6347 = vmatmul.mubr.f32.gmra.mrb[0].mxu0 %v6179
        %v6348 = vpop.f32.mrb[0].mxu0
        %v6349 = vadd.f32 0.0, %v6348
        %v6350 = vpop.f32.mrb[0].mxu0
        %6351 = vmatprep.mubr.f32.mxu0 0.0
        %6352 = vmatmul.mubr.f32.gmra.mrb[0].mxu0 %v6181
        %v6353 = vpop.f32.mrb[0].mxu0
        %v6354 = vadd.f32 0.0, %v6353
        %v6355 = vpop.f32.mrb[0].mxu0
        %6356 = vmatprep.mubr.f32.mxu0 0.0
        %6357 = vmatmul.mubr.f32.gmra.mrb[0].mxu0 %v6183
        %v6358 = vpop.f32.mrb[0].mxu0
        %v6359 = vadd.f32 0.0, %v6358
        %v6360 = vpop.f32.mrb[0].mxu0
        %6361 = vmatprep.mubr.f32.mxu0 0.0
        %6362 = vmatmul.mubr.f32.gmra.mrb[0].mxu0 %v6185
        %v6363 = vpop.f32.mrb[0].mxu0
        %v6364 = vadd.f32 0.0, %v6363
        %v6365 = vpop.f32.mrb[0].mxu0
        %6366 = vmatprep.mubr.f32.mxu0 0.0
        %6367 = vmatmul.mubr.f32.gmra.mrb[0].mxu0 %v6187
        %v6368 = vpop.f32.mrb[0].mxu0
        %v6369 = vadd.f32 0.0, %v6368
        %v6370 = vpop.f32.mrb[0].mxu0
        %6371 = vmatprep.mubr.f32.mxu0 0.0
        %6372 = vmatmul.mubr.f32.gmra.mrb[0].mxu0 %v6189
        %v6373 = vpop.f32.mrb[0].mxu0
        %v6374 = vadd.f32 0.0, %v6373
        %v6375 = vpop.f32.mrb[0].mxu0
        %6376 = vmatprep.mubr.f32.mxu0 0.0
        %6377 = vmatmul.mubr.f32.gmra.mrb[0].mxu0 %v6191
        %v6378 = vpop.f32.mrb[0].mxu0
        %v6379 = vadd.f32 0.0, %v6378
        %v6380 = vpop.f32.mrb[0].mxu0
        %6381 = vmatprep.mubr.f32.mxu0 0.0
        %6382 = vmatmul.mubr.f32.gmra.mrb[0].mxu0 %v6193
        %v6383 = vpop.f32.mrb[0].mxu0
        %v6384 = vadd.f32 0.0, %v6383
        %v6385 = vpop.f32.mrb[0].mxu0
        %6386 = vdwg.mxu0
        %6403 = vrot.lane.b32.xlu0 %v6309, 16
        %v6404 = vpop.permute.xlu0 %6403
        %6405 = vrot.lane.b32.xlu0 %v6314, 16
        %v6406 = vpop.permute.xlu0 %6405
        %6407 = vrot.lane.b32.xlu0 %v6319, 16
        %v6408 = vpop.permute.xlu0 %6407
        %6409 = vrot.lane.b32.xlu0 %v6324, 16
        %v6410 = vpop.permute.xlu0 %6409
        %6411 = vrot.lane.b32.xlu0 %v6329, 16
        %v6412 = vpop.permute.xlu0 %6411
        %6413 = vrot.lane.b32.xlu0 %v6334, 16
        %v6414 = vpop.permute.xlu0 %6413
        %6415 = vrot.lane.b32.xlu0 %v6339, 16
        %v6416 = vpop.permute.xlu0 %6415
        %6417 = vrot.lane.b32.xlu0 %v6344, 16
        %v6418 = vpop.permute.xlu0 %6417
        %6419 = vrot.lane.b32.xlu0 %v6349, 16
        %v6420 = vpop.permute.xlu0 %6419
        %6421 = vrot.lane.b32.xlu0 %v6354, 16
        %v6422 = vpop.permute.xlu0 %6421
        %6423 = vrot.lane.b32.xlu0 %v6359, 16
        %v6424 = vpop.permute.xlu0 %6423
        %6425 = vrot.lane.b32.xlu0 %v6364, 16
        %v6426 = vpop.permute.xlu0 %6425
        %6427 = vrot.lane.b32.xlu0 %v6369, 16
        %v6428 = vpop.permute.xlu0 %6427
        %6429 = vrot.lane.b32.xlu0 %v6374, 16
        %v6430 = vpop.permute.xlu0 %6429
        %6431 = vrot.lane.b32.xlu0 %v6379, 16
        %v6432 = vpop.permute.xlu0 %6431
        %6433 = vrot.lane.b32.xlu0 %v6384, 16
        %v6434 = vpop.permute.xlu0 %6433
        %vm6451 = vcmask 261248
        %6452 = vst.msk [vmem:[#allocation2] sm:$0xff] %vm6451, %v6404
        %6453 = vst.msk [vmem:[#allocation2 + $0x8] sm:$0xff] %vm6451, %v6406
        %6454 = vst.msk [vmem:[#allocation2 + $0x10] sm:$0xff] %vm6451, %v6408
        %6455 = vst.msk [vmem:[#allocation2 + $0x18] sm:$0xff] %vm6451, %v6410
        %6456 = vst.msk [vmem:[#allocation2 + $0x20] sm:$0xff] %vm6451, %v6412
        %6457 = vst.msk [vmem:[#allocation2 + $0x28] sm:$0xff] %vm6451, %v6414
        %6458 = vst.msk [vmem:[#allocation2 + $0x30] sm:$0xff] %vm6451, %v6416
        %6459 = vst.msk [vmem:[#allocation2 + $0x38] sm:$0xff] %vm6451, %v6418
        %6460 = vst.msk [vmem:[#allocation2 + $0x40] sm:$0xff] %vm6451, %v6420
        %6461 = vst.msk [vmem:[#allocation2 + $0x48] sm:$0xff] %vm6451, %v6422
        %6462 = vst.msk [vmem:[#allocation2 + $0x50] sm:$0xff] %vm6451, %v6424
        %6463 = vst.msk [vmem:[#allocation2 + $0x58] sm:$0xff] %vm6451, %v6426
        %6464 = vst.msk [vmem:[#allocation2 + $0x60] sm:$0xff] %vm6451, %v6428
        %6465 = vst.msk [vmem:[#allocation2 + $0x68] sm:$0xff] %vm6451, %v6430
        %6466 = vst.msk [vmem:[#allocation2 + $0x70] sm:$0xff] %vm6451, %v6432
        %6467 = vst.msk [vmem:[#allocation2 + $0x78] sm:$0xff] %vm6451, %v6434
        %v6468 = vld [vmem:[#allocation2] sm:$0xff]
        %v6469 = vld [vmem:[#allocation2 + $0x8] sm:$0xff]
        %v6470 = vld [vmem:[#allocation2 + $0x10] sm:$0xff]
        %v6471 = vld [vmem:[#allocation2 + $0x18] sm:$0xff]
        %v6472 = vld [vmem:[#allocation2 + $0x20] sm:$0xff]
        %v6473 = vld [vmem:[#allocation2 + $0x28] sm:$0xff]
        %v6474 = vld [vmem:[#allocation2 + $0x30] sm:$0xff]
        %v6475 = vld [vmem:[#allocation2 + $0x38] sm:$0xff]
        %v6476 = vld [vmem:[#allocation2 + $0x40] sm:$0xff]
        %v6477 = vld [vmem:[#allocation2 + $0x48] sm:$0xff]
        %v6478 = vld [vmem:[#allocation2 + $0x50] sm:$0xff]
        %v6479 = vld [vmem:[#allocation2 + $0x58] sm:$0xff]
        %v6480 = vld [vmem:[#allocation2 + $0x60] sm:$0xff]
        %v6481 = vld [vmem:[#allocation2 + $0x68] sm:$0xff]
        %v6482 = vld [vmem:[#allocation2 + $0x70] sm:$0xff]
        %v6483 = vld [vmem:[#allocation2 + $0x78] sm:$0xff]
        %v6484 = vadd.f32 %v4958, %v6468
        %v6485 = vadd.f32 %v4959, %v6469
        %v6486 = vadd.f32 %v4960, %v6470
        %v6487 = vadd.f32 %v4961, %v6471
        %v6488 = vadd.f32 %v4962, %v6472
        %v6489 = vadd.f32 %v4963, %v6473
        %v6490 = vadd.f32 %v4964, %v6474
        %v6491 = vadd.f32 %v4965, %v6475
        %v6492 = vadd.f32 %v4966, %v6476
        %v6493 = vadd.f32 %v4967, %v6477
        %v6494 = vadd.f32 %v4968, %v6478
        %v6495 = vadd.f32 %v4969, %v6479
        %v6496 = vadd.f32 %v4970, %v6480
        %v6497 = vadd.f32 %v4971, %v6481
        %v6498 = vadd.f32 %v4972, %v6482
        %v6499 = vadd.f32 %v4973, %v6483
        %v6500 = vsel %vm879, %v6484, 0.0
        %6501 = vadd.xlane.f32.xlu0 %v6500
        %v6502 = vpop.xlane.xlu0 %6501
        %v6503 = vsel %vm879, %v6485, 0.0
        %6504 = vadd.xlane.f32.xlu0 %v6503
        %v6505 = vpop.xlane.xlu0 %6504
        %v6506 = vsel %vm879, %v6486, 0.0
        %6507 = vadd.xlane.f32.xlu0 %v6506
        %v6508 = vpop.xlane.xlu0 %6507
        %v6509 = vsel %vm879, %v6487, 0.0
        %6510 = vadd.xlane.f32.xlu0 %v6509
        %v6511 = vpop.xlane.xlu0 %6510
        %v6512 = vsel %vm879, %v6488, 0.0
        %6513 = vadd.xlane.f32.xlu0 %v6512
        %v6514 = vpop.xlane.xlu0 %6513
        %v6515 = vsel %vm879, %v6489, 0.0
        %6516 = vadd.xlane.f32.xlu0 %v6515
        %v6517 = vpop.xlane.xlu0 %6516
        %v6518 = vsel %vm879, %v6490, 0.0
        %6519 = vadd.xlane.f32.xlu0 %v6518
        %v6520 = vpop.xlane.xlu0 %6519
        %v6521 = vsel %vm879, %v6491, 0.0
        %6522 = vadd.xlane.f32.xlu0 %v6521
        %v6523 = vpop.xlane.xlu0 %6522
        %v6524 = vsel %vm879, %v6492, 0.0
        %6525 = vadd.xlane.f32.xlu0 %v6524
        %v6526 = vpop.xlane.xlu0 %6525
        %v6527 = vsel %vm879, %v6493, 0.0
        %6528 = vadd.xlane.f32.xlu0 %v6527
        %v6529 = vpop.xlane.xlu0 %6528
        %v6530 = vsel %vm879, %v6494, 0.0
        %6531 = vadd.xlane.f32.xlu0 %v6530
        %v6532 = vpop.xlane.xlu0 %6531
        %v6533 = vsel %vm879, %v6495, 0.0
        %6534 = vadd.xlane.f32.xlu0 %v6533
        %v6535 = vpop.xlane.xlu0 %6534
        %v6536 = vsel %vm879, %v6496, 0.0
        %6537 = vadd.xlane.f32.xlu0 %v6536
        %v6538 = vpop.xlane.xlu0 %6537
        %v6539 = vsel %vm879, %v6497, 0.0
        %6540 = vadd.xlane.f32.xlu0 %v6539
        %v6541 = vpop.xlane.xlu0 %6540
        %v6542 = vsel %vm879, %v6498, 0.0
        %6543 = vadd.xlane.f32.xlu0 %v6542
        %v6544 = vpop.xlane.xlu0 %6543
        %v6545 = vsel %vm879, %v6499, 0.0
        %6546 = vadd.xlane.f32.xlu0 %v6545
        %v6547 = vpop.xlane.xlu0 %6546
        %v6548 = vmul.f32 %v6502, %v928
        %v6549 = vmul.f32 %v6505, %v928
        %v6550 = vmul.f32 %v6508, %v928
        %v6551 = vmul.f32 %v6511, %v928
        %v6552 = vmul.f32 %v6514, %v928
        %v6553 = vmul.f32 %v6517, %v928
        %v6554 = vmul.f32 %v6520, %v928
        %v6555 = vmul.f32 %v6523, %v928
        %v6556 = vmul.f32 %v6526, %v928
        %v6557 = vmul.f32 %v6529, %v928
        %v6558 = vmul.f32 %v6532, %v928
        %v6559 = vmul.f32 %v6535, %v928
        %v6560 = vmul.f32 %v6538, %v928
        %v6561 = vmul.f32 %v6541, %v928
        %v6562 = vmul.f32 %v6544, %v928
        %v6563 = vmul.f32 %v6547, %v928
        %v6564 = vsub.f32 %v6484, %v6548
        %v6565 = vsub.f32 %v6485, %v6549
        %v6566 = vsub.f32 %v6486, %v6550
        %v6567 = vsub.f32 %v6487, %v6551
        %v6568 = vsub.f32 %v6488, %v6552
        %v6569 = vsub.f32 %v6489, %v6553
        %v6570 = vsub.f32 %v6490, %v6554
        %v6571 = vsub.f32 %v6491, %v6555
        %v6572 = vsub.f32 %v6492, %v6556
        %v6573 = vsub.f32 %v6493, %v6557
        %v6574 = vsub.f32 %v6494, %v6558
        %v6575 = vsub.f32 %v6495, %v6559
        %v6576 = vsub.f32 %v6496, %v6560
        %v6577 = vsub.f32 %v6497, %v6561
        %v6578 = vsub.f32 %v6498, %v6562
        %v6579 = vsub.f32 %v6499, %v6563
        %v6580 = vmul.f32 %v6564, %v6564
        %v6581 = vmul.f32 %v6565, %v6565
        %v6582 = vmul.f32 %v6566, %v6566
        %v6583 = vmul.f32 %v6567, %v6567
        %v6584 = vmul.f32 %v6568, %v6568
        %v6585 = vmul.f32 %v6569, %v6569
        %v6586 = vmul.f32 %v6570, %v6570
        %v6587 = vmul.f32 %v6571, %v6571
        %v6588 = vmul.f32 %v6572, %v6572
        %v6589 = vmul.f32 %v6573, %v6573
        %v6590 = vmul.f32 %v6574, %v6574
        %v6591 = vmul.f32 %v6575, %v6575
        %v6592 = vmul.f32 %v6576, %v6576
        %v6593 = vmul.f32 %v6577, %v6577
        %v6594 = vmul.f32 %v6578, %v6578
        %v6595 = vmul.f32 %v6579, %v6579
        %v6596 = vsel %vm879, %v6580, 0.0
        %6597 = vadd.xlane.f32.xlu0 %v6596
        %v6598 = vpop.xlane.xlu0 %6597
        %v6599 = vsel %vm879, %v6581, 0.0
        %6600 = vadd.xlane.f32.xlu0 %v6599
        %v6601 = vpop.xlane.xlu0 %6600
        %v6602 = vsel %vm879, %v6582, 0.0
        %6603 = vadd.xlane.f32.xlu0 %v6602
        %v6604 = vpop.xlane.xlu0 %6603
        %v6605 = vsel %vm879, %v6583, 0.0
        %6606 = vadd.xlane.f32.xlu0 %v6605
        %v6607 = vpop.xlane.xlu0 %6606
        %v6608 = vsel %vm879, %v6584, 0.0
        %6609 = vadd.xlane.f32.xlu0 %v6608
        %v6610 = vpop.xlane.xlu0 %6609
        %v6611 = vsel %vm879, %v6585, 0.0
        %6612 = vadd.xlane.f32.xlu0 %v6611
        %v6613 = vpop.xlane.xlu0 %6612
        %v6614 = vsel %vm879, %v6586, 0.0
        %6615 = vadd.xlane.f32.xlu0 %v6614
        %v6616 = vpop.xlane.xlu0 %6615
        %v6617 = vsel %vm879, %v6587, 0.0
        %6618 = vadd.xlane.f32.xlu0 %v6617
        %v6619 = vpop.xlane.xlu0 %6618
        %v6620 = vsel %vm879, %v6588, 0.0
        %6621 = vadd.xlane.f32.xlu0 %v6620
        %v6622 = vpop.xlane.xlu0 %6621
        %v6623 = vsel %vm879, %v6589, 0.0
        %6624 = vadd.xlane.f32.xlu0 %v6623
        %v6625 = vpop.xlane.xlu0 %6624
        %v6626 = vsel %vm879, %v6590, 0.0
        %6627 = vadd.xlane.f32.xlu0 %v6626
        %v6628 = vpop.xlane.xlu0 %6627
        %v6629 = vsel %vm879, %v6591, 0.0
        %6630 = vadd.xlane.f32.xlu0 %v6629
        %v6631 = vpop.xlane.xlu0 %6630
        %v6632 = vsel %vm879, %v6592, 0.0
        %6633 = vadd.xlane.f32.xlu0 %v6632
        %v6634 = vpop.xlane.xlu0 %6633
        %v6635 = vsel %vm879, %v6593, 0.0
        %6636 = vadd.xlane.f32.xlu0 %v6635
        %v6637 = vpop.xlane.xlu0 %6636
        %v6638 = vsel %vm879, %v6594, 0.0
        %6639 = vadd.xlane.f32.xlu0 %v6638
        %v6640 = vpop.xlane.xlu0 %6639
        %v6641 = vsel %vm879, %v6595, 0.0
        %6642 = vadd.xlane.f32.xlu0 %v6641
        %v6643 = vpop.xlane.xlu0 %6642
        %v6644 = vmul.f32 %v6598, %v928
        %v6645 = vmul.f32 %v6601, %v928
        %v6646 = vmul.f32 %v6604, %v928
        %v6647 = vmul.f32 %v6607, %v928
        %v6648 = vmul.f32 %v6610, %v928
        %v6649 = vmul.f32 %v6613, %v928
        %v6650 = vmul.f32 %v6616, %v928
        %v6651 = vmul.f32 %v6619, %v928
        %v6652 = vmul.f32 %v6622, %v928
        %v6653 = vmul.f32 %v6625, %v928
        %v6654 = vmul.f32 %v6628, %v928
        %v6655 = vmul.f32 %v6631, %v928
        %v6656 = vmul.f32 %v6634, %v928
        %v6657 = vmul.f32 %v6637, %v928
        %v6658 = vmul.f32 %v6640, %v928
        %v6659 = vmul.f32 %v6643, %v928
        %v6660 = vadd.f32 %v6644, 1e-05
        %v6661 = vadd.f32 %v6645, 1e-05
        %v6662 = vadd.f32 %v6646, 1e-05
        %v6663 = vadd.f32 %v6647, 1e-05
        %v6664 = vadd.f32 %v6648, 1e-05
        %v6665 = vadd.f32 %v6649, 1e-05
        %v6666 = vadd.f32 %v6650, 1e-05
        %v6667 = vadd.f32 %v6651, 1e-05
        %v6668 = vadd.f32 %v6652, 1e-05
        %v6669 = vadd.f32 %v6653, 1e-05
        %v6670 = vadd.f32 %v6654, 1e-05
        %v6671 = vadd.f32 %v6655, 1e-05
        %v6672 = vadd.f32 %v6656, 1e-05
        %v6673 = vadd.f32 %v6657, 1e-05
        %v6674 = vadd.f32 %v6658, 1e-05
        %v6675 = vadd.f32 %v6659, 1e-05
        %v6676 = vrsqrt.pop %v6660
        %v6677 = vrsqrt.pop %v6661
        %v6678 = vrsqrt.pop %v6662
        %v6679 = vrsqrt.pop %v6663
        %v6680 = vrsqrt.pop %v6664
        %v6681 = vrsqrt.pop %v6665
        %v6682 = vrsqrt.pop %v6666
        %v6683 = vrsqrt.pop %v6667
        %v6684 = vrsqrt.pop %v6668
        %v6685 = vrsqrt.pop %v6669
        %v6686 = vrsqrt.pop %v6670
        %v6687 = vrsqrt.pop %v6671
        %v6688 = vrsqrt.pop %v6672
        %v6689 = vrsqrt.pop %v6673
        %v6690 = vrsqrt.pop %v6674
        %v6691 = vrsqrt.pop %v6675
        %v6692 = vmul.f32 %v6564, %v6676
        %v6693 = vmul.f32 %v6565, %v6677
        %v6694 = vmul.f32 %v6566, %v6678
        %v6695 = vmul.f32 %v6567, %v6679
        %v6696 = vmul.f32 %v6568, %v6680
        %v6697 = vmul.f32 %v6569, %v6681
        %v6698 = vmul.f32 %v6570, %v6682
        %v6699 = vmul.f32 %v6571, %v6683
        %v6700 = vmul.f32 %v6572, %v6684
        %v6701 = vmul.f32 %v6573, %v6685
        %v6702 = vmul.f32 %v6574, %v6686
        %v6703 = vmul.f32 %v6575, %v6687
        %v6704 = vmul.f32 %v6576, %v6688
        %v6705 = vmul.f32 %v6577, %v6689
        %v6706 = vmul.f32 %v6578, %v6690
        %v6707 = vmul.f32 %v6579, %v6691
        %v6708 = vlaneseq
        %v6709 = vshrl.u32 %v6708, 7
        %v6710 = vsub.s32 2, %v6709
        %v6711 = vrot.slane %v236, %v6710
        %v6712 = vmul.f32 %v6692, %v6711
        %v6713 = vmul.f32 %v6693, %v6711
        %v6714 = vmul.f32 %v6694, %v6711
        %v6715 = vmul.f32 %v6695, %v6711
        %v6716 = vmul.f32 %v6696, %v6711
        %v6717 = vmul.f32 %v6697, %v6711
        %v6718 = vmul.f32 %v6698, %v6711
        %v6719 = vmul.f32 %v6699, %v6711
        %v6720 = vmul.f32 %v6700, %v6711
        %v6721 = vmul.f32 %v6701, %v6711
        %v6722 = vmul.f32 %v6702, %v6711
        %v6723 = vmul.f32 %v6703, %v6711
        %v6724 = vmul.f32 %v6704, %v6711
        %v6725 = vmul.f32 %v6705, %v6711
        %v6726 = vmul.f32 %v6706, %v6711
        %v6727 = vmul.f32 %v6707, %v6711
        %v6728 = vlaneseq
        %v6729 = vshrl.u32 %v6728, 7
        %v6730 = vsub.s32 3, %v6729
        %v6731 = vrot.slane %v236, %v6730
        %v6732 = vadd.f32 %v6712, %v6731
        %v6733 = vadd.f32 %v6713, %v6731
        %v6734 = vadd.f32 %v6714, %v6731
        %v6735 = vadd.f32 %v6715, %v6731
        %v6736 = vadd.f32 %v6716, %v6731
        %v6737 = vadd.f32 %v6717, %v6731
        %v6738 = vadd.f32 %v6718, %v6731
        %v6739 = vadd.f32 %v6719, %v6731
        %v6740 = vadd.f32 %v6720, %v6731
        %v6741 = vadd.f32 %v6721, %v6731
        %v6742 = vadd.f32 %v6722, %v6731
        %v6743 = vadd.f32 %v6723, %v6731
        %v6744 = vadd.f32 %v6724, %v6731
        %v6745 = vadd.f32 %v6725, %v6731
        %v6746 = vadd.f32 %v6726, %v6731
        %v6747 = vadd.f32 %v6727, %v6731
        %v6748 = vlaneseq
        %v6749 = vshrl.u32 %v6748, 7
        %v6750 = vsub.s32 4, %v6749
        %v6751 = vrot.slane %v236, %v6750
        %v6753 = vsel %vm879, %v6732, 0
        %v6756 = vsel %vm879, %v6733, 0
        %v6759 = vsel %vm879, %v6734, 0
        %v6762 = vsel %vm879, %v6735, 0
        %v6765 = vsel %vm879, %v6736, 0
        %v6768 = vsel %vm879, %v6737, 0
        %v6771 = vsel %vm879, %v6738, 0
        %v6774 = vsel %vm879, %v6739, 0
        %v6777 = vsel %vm879, %v6740, 0
        %v6780 = vsel %vm879, %v6741, 0
        %v6783 = vsel %vm879, %v6742, 0
        %v6786 = vsel %vm879, %v6743, 0
        %v6789 = vsel %vm879, %v6744, 0
        %v6792 = vsel %vm879, %v6745, 0
        %v6795 = vsel %vm879, %v6746, 0
        %v6798 = vsel %vm879, %v6747, 0
        %6800 = vmatprep.subr.mxu0 0.0
        %6801 = vmatpush1.msra.mxu0 %v4717
        %6802 = vmatprep.subr.mxu0 0.0
        %6803 = vmatpush1.msra.mxu0 %v4718
        %6804 = vmatprep.subr.mxu0 0.0
        %6805 = vmatpush1.msra.mxu0 %v4719
        %6806 = vmatprep.subr.mxu0 0.0
        %6807 = vmatpush1.msra.mxu0 %v4720
        %6808 = vmatprep.subr.mxu0 0.0
        %6809 = vmatpush1.msra.mxu0 0.0
        %6810 = vmatprep.subr.mxu0 0.0
        %6811 = vmatpush1.msra.mxu0 0.0
        %6812 = vmatprep.subr.mxu0 0.0
        %6813 = vmatpush1.msra.mxu0 0.0
        %6814 = vmatprep.subr.mxu0 0.0
        %6815 = vmatpush1.msra.mxu0 0.0
        %6816 = vmatprep.subr.mxu0 0.0
        %6817 = vmatpush1.msra.mxu0 0.0
        %6818 = vmatprep.subr.mxu0 0.0
        %6819 = vmatpush1.msra.mxu0 0.0
        %6820 = vmatprep.subr.mxu0 0.0
        %6821 = vmatpush1.msra.mxu0 0.0
        %6822 = vmatprep.subr.mxu0 0.0
        %6823 = vmatpush1.msra.mxu0 0.0
        %6824 = vmatprep.subr.mxu0 0.0
        %6825 = vmatpush1.msra.mxu0 0.0
        %6826 = vmatprep.subr.mxu0 0.0
        %6827 = vmatpush1.msra.mxu0 0.0
        %6828 = vmatprep.subr.mxu0 0.0
        %6829 = vmatpush1.msra.mxu0 0.0
        %6830 = vmatprep.subr.mxu0 0.0
        %6831 = vmatpush1.msra.mxu0 0.0
        %6832 = vmatprep.subr.mxu0 0.0
        %6833 = vmatpush1.msra.mxu0 0.0
        %6834 = vmatprep.subr.mxu0 0.0
        %6835 = vmatpush1.msra.mxu0 0.0
        %6836 = vmatprep.subr.mxu0 0.0
        %6837 = vmatpush1.msra.mxu0 0.0
        %6838 = vmatprep.subr.mxu0 0.0
        %6839 = vmatpush1.msra.mxu0 0.0
        %6840 = vmatprep.subr.mxu0 0.0
        %6841 = vmatpush1.msra.mxu0 0.0
        %6842 = vmatprep.subr.mxu0 0.0
        %6843 = vmatpush1.msra.mxu0 0.0
        %6844 = vmatprep.subr.mxu0 0.0
        %6845 = vmatpush1.msra.mxu0 0.0
        %6846 = vmatprep.subr.mxu0 0.0
        %6847 = vmatpush1.msra.mxu0 0.0
        %6848 = vmatprep.subr.mxu0 0.0
        %6849 = vmatpush1.msra.mxu0 0.0
        %6850 = vmatprep.subr.mxu0 0.0
        %6851 = vmatpush1.msra.mxu0 0.0
        %6852 = vmatprep.subr.mxu0 0.0
        %6853 = vmatpush1.msra.mxu0 0.0
        %6854 = vmatprep.subr.mxu0 0.0
        %6855 = vmatpush1.msra.mxu0 0.0
        %6856 = vmatprep.subr.mxu0 0.0
        %6857 = vmatpush1.msra.mxu0 0.0
        %6858 = vmatprep.subr.mxu0 0.0
        %6859 = vmatpush1.msra.mxu0 0.0
        %6860 = vmatprep.subr.mxu0 0.0
        %6861 = vmatpush1.msra.mxu0 0.0
        %6862 = vmatprep.subr.mxu0 0.0
        %6863 = vmatpush1.msra.mxu0 0.0
        %6864 = vmatprep.mubr.f32.mxu0 0.0
        %6865 = vmatmul.mubr.f32.gmra.mrb[0].mxu0 %v6753
        %v6866 = vpop.f32.mrb[0].mxu0
        %v6867 = vadd.f32 %v6751, %v6866
        %v6868 = vpop.f32.mrb[0].mxu0
        %6869 = vmatprep.mubr.f32.mxu0 0.0
        %6870 = vmatmul.mubr.f32.gmra.mrb[0].mxu0 %v6756
        %v6871 = vpop.f32.mrb[0].mxu0
        %v6872 = vadd.f32 %v6751, %v6871
        %v6873 = vpop.f32.mrb[0].mxu0
        %6874 = vmatprep.mubr.f32.mxu0 0.0
        %6875 = vmatmul.mubr.f32.gmra.mrb[0].mxu0 %v6759
        %v6876 = vpop.f32.mrb[0].mxu0
        %v6877 = vadd.f32 %v6751, %v6876
        %v6878 = vpop.f32.mrb[0].mxu0
        %6879 = vmatprep.mubr.f32.mxu0 0.0
        %6880 = vmatmul.mubr.f32.gmra.mrb[0].mxu0 %v6762
        %v6881 = vpop.f32.mrb[0].mxu0
        %v6882 = vadd.f32 %v6751, %v6881
        %v6883 = vpop.f32.mrb[0].mxu0
        %6884 = vmatprep.mubr.f32.mxu0 0.0
        %6885 = vmatmul.mubr.f32.gmra.mrb[0].mxu0 %v6765
        %v6886 = vpop.f32.mrb[0].mxu0
        %v6887 = vadd.f32 %v6751, %v6886
        %v6888 = vpop.f32.mrb[0].mxu0
        %6889 = vmatprep.mubr.f32.mxu0 0.0
        %6890 = vmatmul.mubr.f32.gmra.mrb[0].mxu0 %v6768
        %v6891 = vpop.f32.mrb[0].mxu0
        %v6892 = vadd.f32 %v6751, %v6891
        %v6893 = vpop.f32.mrb[0].mxu0
        %6894 = vmatprep.mubr.f32.mxu0 0.0
        %6895 = vmatmul.mubr.f32.gmra.mrb[0].mxu0 %v6771
        %v6896 = vpop.f32.mrb[0].mxu0
        %v6897 = vadd.f32 %v6751, %v6896
        %v6898 = vpop.f32.mrb[0].mxu0
        %6899 = vmatprep.mubr.f32.mxu0 0.0
        %6900 = vmatmul.mubr.f32.gmra.mrb[0].mxu0 %v6774
        %v6901 = vpop.f32.mrb[0].mxu0
        %v6902 = vadd.f32 %v6751, %v6901
        %v6903 = vpop.f32.mrb[0].mxu0
        %6904 = vmatprep.mubr.f32.mxu0 0.0
        %6905 = vmatmul.mubr.f32.gmra.mrb[0].mxu0 %v6777
        %v6906 = vpop.f32.mrb[0].mxu0
        %v6907 = vadd.f32 %v6751, %v6906
        %v6908 = vpop.f32.mrb[0].mxu0
        %6909 = vmatprep.mubr.f32.mxu0 0.0
        %6910 = vmatmul.mubr.f32.gmra.mrb[0].mxu0 %v6780
        %v6911 = vpop.f32.mrb[0].mxu0
        %v6912 = vadd.f32 %v6751, %v6911
        %v6913 = vpop.f32.mrb[0].mxu0
        %6914 = vmatprep.mubr.f32.mxu0 0.0
        %6915 = vmatmul.mubr.f32.gmra.mrb[0].mxu0 %v6783
        %v6916 = vpop.f32.mrb[0].mxu0
        %v6917 = vadd.f32 %v6751, %v6916
        %v6918 = vpop.f32.mrb[0].mxu0
        %6919 = vmatprep.mubr.f32.mxu0 0.0
        %6920 = vmatmul.mubr.f32.gmra.mrb[0].mxu0 %v6786
        %v6921 = vpop.f32.mrb[0].mxu0
        %v6922 = vadd.f32 %v6751, %v6921
        %v6923 = vpop.f32.mrb[0].mxu0
        %6924 = vmatprep.mubr.f32.mxu0 0.0
        %6925 = vmatmul.mubr.f32.gmra.mrb[0].mxu0 %v6789
        %v6926 = vpop.f32.mrb[0].mxu0
        %v6927 = vadd.f32 %v6751, %v6926
        %v6928 = vpop.f32.mrb[0].mxu0
        %6929 = vmatprep.mubr.f32.mxu0 0.0
        %6930 = vmatmul.mubr.f32.gmra.mrb[0].mxu0 %v6792
        %v6931 = vpop.f32.mrb[0].mxu0
        %v6932 = vadd.f32 %v6751, %v6931
        %v6933 = vpop.f32.mrb[0].mxu0
        %6934 = vmatprep.mubr.f32.mxu0 0.0
        %6935 = vmatmul.mubr.f32.gmra.mrb[0].mxu0 %v6795
        %v6936 = vpop.f32.mrb[0].mxu0
        %v6937 = vadd.f32 %v6751, %v6936
        %v6938 = vpop.f32.mrb[0].mxu0
        %6939 = vmatprep.mubr.f32.mxu0 0.0
        %6940 = vmatmul.mubr.f32.gmra.mrb[0].mxu0 %v6798
        %v6941 = vpop.f32.mrb[0].mxu0
        %v6942 = vadd.f32 %v6751, %v6941
        %v6943 = vpop.f32.mrb[0].mxu0
        %6944 = vdwg.mxu0
        %v6945 = vmax.f32 %v6867, 0.0
        %v6946 = vmax.f32 %v6872, 0.0
        %v6947 = vmax.f32 %v6877, 0.0
        %v6948 = vmax.f32 %v6882, 0.0
        %v6949 = vmax.f32 %v6887, 0.0
        %v6950 = vmax.f32 %v6892, 0.0
        %v6951 = vmax.f32 %v6897, 0.0
        %v6952 = vmax.f32 %v6902, 0.0
        %v6953 = vmax.f32 %v6907, 0.0
        %v6954 = vmax.f32 %v6912, 0.0
        %v6955 = vmax.f32 %v6917, 0.0
        %v6956 = vmax.f32 %v6922, 0.0
        %v6957 = vmax.f32 %v6927, 0.0
        %v6958 = vmax.f32 %v6932, 0.0
        %v6959 = vmax.f32 %v6937, 0.0
        %v6960 = vmax.f32 %v6942, 0.0
        %v6961 = vlaneseq
        %v6962 = vshrl.u32 %v6961, 7
        %v6963 = vsub.s32 5, %v6962
        %v6964 = vrot.slane %v236, %v6963
        %v6966 = vsel %vm879, %v6945, 0
        %v6969 = vsel %vm879, %v6946, 0
        %v6972 = vsel %vm879, %v6947, 0
        %v6975 = vsel %vm879, %v6948, 0
        %v6978 = vsel %vm879, %v6949, 0
        %v6981 = vsel %vm879, %v6950, 0
        %v6984 = vsel %vm879, %v6951, 0
        %v6987 = vsel %vm879, %v6952, 0
        %v6990 = vsel %vm879, %v6953, 0
        %v6993 = vsel %vm879, %v6954, 0
        %v6996 = vsel %vm879, %v6955, 0
        %v6999 = vsel %vm879, %v6956, 0
        %v7002 = vsel %vm879, %v6957, 0
        %v7005 = vsel %vm879, %v6958, 0
        %v7008 = vsel %vm879, %v6959, 0
        %v7011 = vsel %vm879, %v6960, 0
        %7013 = vmatprep.subr.mxu0 0.0
        %7014 = vmatpush1.msra.mxu0 %v4722
        %7015 = vmatprep.subr.mxu0 0.0
        %7016 = vmatpush1.msra.mxu0 %v4723
        %7017 = vmatprep.subr.mxu0 0.0
        %7018 = vmatpush1.msra.mxu0 %v4724
        %7019 = vmatprep.subr.mxu0 0.0
        %7020 = vmatpush1.msra.mxu0 %v4725
        %7021 = vmatprep.subr.mxu0 0.0
        %7022 = vmatpush1.msra.mxu0 0.0
        %7023 = vmatprep.subr.mxu0 0.0
        %7024 = vmatpush1.msra.mxu0 0.0
        %7025 = vmatprep.subr.mxu0 0.0
        %7026 = vmatpush1.msra.mxu0 0.0
        %7027 = vmatprep.subr.mxu0 0.0
        %7028 = vmatpush1.msra.mxu0 0.0
        %7029 = vmatprep.subr.mxu0 0.0
        %7030 = vmatpush1.msra.mxu0 0.0
        %7031 = vmatprep.subr.mxu0 0.0
        %7032 = vmatpush1.msra.mxu0 0.0
        %7033 = vmatprep.subr.mxu0 0.0
        %7034 = vmatpush1.msra.mxu0 0.0
        %7035 = vmatprep.subr.mxu0 0.0
        %7036 = vmatpush1.msra.mxu0 0.0
        %7037 = vmatprep.subr.mxu0 0.0
        %7038 = vmatpush1.msra.mxu0 0.0
        %7039 = vmatprep.subr.mxu0 0.0
        %7040 = vmatpush1.msra.mxu0 0.0
        %7041 = vmatprep.subr.mxu0 0.0
        %7042 = vmatpush1.msra.mxu0 0.0
        %7043 = vmatprep.subr.mxu0 0.0
        %7044 = vmatpush1.msra.mxu0 0.0
        %7045 = vmatprep.subr.mxu0 0.0
        %7046 = vmatpush1.msra.mxu0 0.0
        %7047 = vmatprep.subr.mxu0 0.0
        %7048 = vmatpush1.msra.mxu0 0.0
        %7049 = vmatprep.subr.mxu0 0.0
        %7050 = vmatpush1.msra.mxu0 0.0
        %7051 = vmatprep.subr.mxu0 0.0
        %7052 = vmatpush1.msra.mxu0 0.0
        %7053 = vmatprep.subr.mxu0 0.0
        %7054 = vmatpush1.msra.mxu0 0.0
        %7055 = vmatprep.subr.mxu0 0.0
        %7056 = vmatpush1.msra.mxu0 0.0
        %7057 = vmatprep.subr.mxu0 0.0
        %7058 = vmatpush1.msra.mxu0 0.0
        %7059 = vmatprep.subr.mxu0 0.0
        %7060 = vmatpush1.msra.mxu0 0.0
        %7061 = vmatprep.subr.mxu0 0.0
        %7062 = vmatpush1.msra.mxu0 0.0
        %7063 = vmatprep.subr.mxu0 0.0
        %7064 = vmatpush1.msra.mxu0 0.0
        %7065 = vmatprep.subr.mxu0 0.0
        %7066 = vmatpush1.msra.mxu0 0.0
        %7067 = vmatprep.subr.mxu0 0.0
        %7068 = vmatpush1.msra.mxu0 0.0
        %7069 = vmatprep.subr.mxu0 0.0
        %7070 = vmatpush1.msra.mxu0 0.0
        %7071 = vmatprep.subr.mxu0 0.0
        %7072 = vmatpush1.msra.mxu0 0.0
        %7073 = vmatprep.subr.mxu0 0.0
        %7074 = vmatpush1.msra.mxu0 0.0
        %7075 = vmatprep.subr.mxu0 0.0
        %7076 = vmatpush1.msra.mxu0 0.0
        %7077 = vmatprep.mubr.f32.mxu0 0.0
        %7078 = vmatmul.mubr.f32.gmra.mrb[0].mxu0 %v6966
        %v7079 = vpop.f32.mrb[0].mxu0
        %v7080 = vadd.f32 %v6964, %v7079
        %v7081 = vpop.f32.mrb[0].mxu0
        %7082 = vmatprep.mubr.f32.mxu0 0.0
        %7083 = vmatmul.mubr.f32.gmra.mrb[0].mxu0 %v6969
        %v7084 = vpop.f32.mrb[0].mxu0
        %v7085 = vadd.f32 %v6964, %v7084
        %v7086 = vpop.f32.mrb[0].mxu0
        %7087 = vmatprep.mubr.f32.mxu0 0.0
        %7088 = vmatmul.mubr.f32.gmra.mrb[0].mxu0 %v6972
        %v7089 = vpop.f32.mrb[0].mxu0
        %v7090 = vadd.f32 %v6964, %v7089
        %v7091 = vpop.f32.mrb[0].mxu0
        %7092 = vmatprep.mubr.f32.mxu0 0.0
        %7093 = vmatmul.mubr.f32.gmra.mrb[0].mxu0 %v6975
        %v7094 = vpop.f32.mrb[0].mxu0
        %v7095 = vadd.f32 %v6964, %v7094
        %v7096 = vpop.f32.mrb[0].mxu0
        %7097 = vmatprep.mubr.f32.mxu0 0.0
        %7098 = vmatmul.mubr.f32.gmra.mrb[0].mxu0 %v6978
        %v7099 = vpop.f32.mrb[0].mxu0
        %v7100 = vadd.f32 %v6964, %v7099
        %v7101 = vpop.f32.mrb[0].mxu0
        %7102 = vmatprep.mubr.f32.mxu0 0.0
        %7103 = vmatmul.mubr.f32.gmra.mrb[0].mxu0 %v6981
        %v7104 = vpop.f32.mrb[0].mxu0
        %v7105 = vadd.f32 %v6964, %v7104
        %v7106 = vpop.f32.mrb[0].mxu0
        %7107 = vmatprep.mubr.f32.mxu0 0.0
        %7108 = vmatmul.mubr.f32.gmra.mrb[0].mxu0 %v6984
        %v7109 = vpop.f32.mrb[0].mxu0
        %v7110 = vadd.f32 %v6964, %v7109
        %v7111 = vpop.f32.mrb[0].mxu0
        %7112 = vmatprep.mubr.f32.mxu0 0.0
        %7113 = vmatmul.mubr.f32.gmra.mrb[0].mxu0 %v6987
        %v7114 = vpop.f32.mrb[0].mxu0
        %v7115 = vadd.f32 %v6964, %v7114
        %v7116 = vpop.f32.mrb[0].mxu0
        %7117 = vmatprep.mubr.f32.mxu0 0.0
        %7118 = vmatmul.mubr.f32.gmra.mrb[0].mxu0 %v6990
        %v7119 = vpop.f32.mrb[0].mxu0
        %v7120 = vadd.f32 %v6964, %v7119
        %v7121 = vpop.f32.mrb[0].mxu0
        %7122 = vmatprep.mubr.f32.mxu0 0.0
        %7123 = vmatmul.mubr.f32.gmra.mrb[0].mxu0 %v6993
        %v7124 = vpop.f32.mrb[0].mxu0
        %v7125 = vadd.f32 %v6964, %v7124
        %v7126 = vpop.f32.mrb[0].mxu0
        %7127 = vmatprep.mubr.f32.mxu0 0.0
        %7128 = vmatmul.mubr.f32.gmra.mrb[0].mxu0 %v6996
        %v7129 = vpop.f32.mrb[0].mxu0
        %v7130 = vadd.f32 %v6964, %v7129
        %v7131 = vpop.f32.mrb[0].mxu0
        %7132 = vmatprep.mubr.f32.mxu0 0.0
        %7133 = vmatmul.mubr.f32.gmra.mrb[0].mxu0 %v6999
        %v7134 = vpop.f32.mrb[0].mxu0
        %v7135 = vadd.f32 %v6964, %v7134
        %v7136 = vpop.f32.mrb[0].mxu0
        %7137 = vmatprep.mubr.f32.mxu0 0.0
        %7138 = vmatmul.mubr.f32.gmra.mrb[0].mxu0 %v7002
        %v7139 = vpop.f32.mrb[0].mxu0
        %v7140 = vadd.f32 %v6964, %v7139
        %v7141 = vpop.f32.mrb[0].mxu0
        %7142 = vmatprep.mubr.f32.mxu0 0.0
        %7143 = vmatmul.mubr.f32.gmra.mrb[0].mxu0 %v7005
        %v7144 = vpop.f32.mrb[0].mxu0
        %v7145 = vadd.f32 %v6964, %v7144
        %v7146 = vpop.f32.mrb[0].mxu0
        %7147 = vmatprep.mubr.f32.mxu0 0.0
        %7148 = vmatmul.mubr.f32.gmra.mrb[0].mxu0 %v7008
        %v7149 = vpop.f32.mrb[0].mxu0
        %v7150 = vadd.f32 %v6964, %v7149
        %v7151 = vpop.f32.mrb[0].mxu0
        %7152 = vmatprep.mubr.f32.mxu0 0.0
        %7153 = vmatmul.mubr.f32.gmra.mrb[0].mxu0 %v7011
        %v7154 = vpop.f32.mrb[0].mxu0
        %v7155 = vadd.f32 %v6964, %v7154
        %v7156 = vpop.f32.mrb[0].mxu0
        %7157 = vdwg.mxu0
        %v7158 = vadd.f32 %v6732, %v7080
        %v7159 = vadd.f32 %v6733, %v7085
        %v7160 = vadd.f32 %v6734, %v7090
        %v7161 = vadd.f32 %v6735, %v7095
        %v7162 = vadd.f32 %v6736, %v7100
        %v7163 = vadd.f32 %v6737, %v7105
        %v7164 = vadd.f32 %v6738, %v7110
        %v7165 = vadd.f32 %v6739, %v7115
        %v7166 = vadd.f32 %v6740, %v7120
        %v7167 = vadd.f32 %v6741, %v7125
        %v7168 = vadd.f32 %v6742, %v7130
        %v7169 = vadd.f32 %v6743, %v7135
        %v7170 = vadd.f32 %v6744, %v7140
        %v7171 = vadd.f32 %v6745, %v7145
        %v7172 = vadd.f32 %v6746, %v7150
        %v7173 = vadd.f32 %v6747, %v7155
        %s7174 = scalar_lea.vmem [#allocation5], 256
        %v7175 = vld [vmem:[%s7174] sm:$0xff]
        %v7176 = vld [vmem:[%s7174 + $0x8] sm:$0xff]
        %v7177 = vld [vmem:[%s7174 + $0x10] sm:$0xff]
        %v7178 = vld [vmem:[%s7174 + $0x18] sm:$0xff]
        %v7180 = vsel %vm879, %v7158, 0
        %v7183 = vsel %vm879, %v7159, 0
        %v7186 = vsel %vm879, %v7160, 0
        %v7189 = vsel %vm879, %v7161, 0
        %v7192 = vsel %vm879, %v7162, 0
        %v7195 = vsel %vm879, %v7163, 0
        %v7198 = vsel %vm879, %v7164, 0
        %v7201 = vsel %vm879, %v7165, 0
        %v7204 = vsel %vm879, %v7166, 0
        %v7207 = vsel %vm879, %v7167, 0
        %v7210 = vsel %vm879, %v7168, 0
        %v7213 = vsel %vm879, %v7169, 0
        %v7216 = vsel %vm879, %v7170, 0
        %v7219 = vsel %vm879, %v7171, 0
        %v7222 = vsel %vm879, %v7172, 0
        %v7225 = vsel %vm879, %v7173, 0
        %7227 = vmatprep.subr.mxu0 0.0
        %7228 = vmatpush1.msra.mxu0 %v7175
        %7229 = vmatprep.subr.mxu0 0.0
        %7230 = vmatpush1.msra.mxu0 %v7176
        %7231 = vmatprep.subr.mxu0 0.0
        %7232 = vmatpush1.msra.mxu0 %v7177
        %7233 = vmatprep.subr.mxu0 0.0
        %7234 = vmatpush1.msra.mxu0 %v7178
        %7235 = vmatprep.subr.mxu0 0.0
        %7236 = vmatpush1.msra.mxu0 0.0
        %7237 = vmatprep.subr.mxu0 0.0
        %7238 = vmatpush1.msra.mxu0 0.0
        %7239 = vmatprep.subr.mxu0 0.0
        %7240 = vmatpush1.msra.mxu0 0.0
        %7241 = vmatprep.subr.mxu0 0.0
        %7242 = vmatpush1.msra.mxu0 0.0
        %7243 = vmatprep.subr.mxu0 0.0
        %7244 = vmatpush1.msra.mxu0 0.0
        %7245 = vmatprep.subr.mxu0 0.0
        %7246 = vmatpush1.msra.mxu0 0.0
        %7247 = vmatprep.subr.mxu0 0.0
        %7248 = vmatpush1.msra.mxu0 0.0
        %7249 = vmatprep.subr.mxu0 0.0
        %7250 = vmatpush1.msra.mxu0 0.0
        %7251 = vmatprep.subr.mxu0 0.0
        %7252 = vmatpush1.msra.mxu0 0.0
        %7253 = vmatprep.subr.mxu0 0.0
        %7254 = vmatpush1.msra.mxu0 0.0
        %7255 = vmatprep.subr.mxu0 0.0
        %7256 = vmatpush1.msra.mxu0 0.0
        %7257 = vmatprep.subr.mxu0 0.0
        %7258 = vmatpush1.msra.mxu0 0.0
        %7259 = vmatprep.subr.mxu0 0.0
        %7260 = vmatpush1.msra.mxu0 0.0
        %7261 = vmatprep.subr.mxu0 0.0
        %7262 = vmatpush1.msra.mxu0 0.0
        %7263 = vmatprep.subr.mxu0 0.0
        %7264 = vmatpush1.msra.mxu0 0.0
        %7265 = vmatprep.subr.mxu0 0.0
        %7266 = vmatpush1.msra.mxu0 0.0
        %7267 = vmatprep.subr.mxu0 0.0
        %7268 = vmatpush1.msra.mxu0 0.0
        %7269 = vmatprep.subr.mxu0 0.0
        %7270 = vmatpush1.msra.mxu0 0.0
        %7271 = vmatprep.subr.mxu0 0.0
        %7272 = vmatpush1.msra.mxu0 0.0
        %7273 = vmatprep.subr.mxu0 0.0
        %7274 = vmatpush1.msra.mxu0 0.0
        %7275 = vmatprep.subr.mxu0 0.0
        %7276 = vmatpush1.msra.mxu0 0.0
        %7277 = vmatprep.subr.mxu0 0.0
        %7278 = vmatpush1.msra.mxu0 0.0
        %7279 = vmatprep.subr.mxu0 0.0
        %7280 = vmatpush1.msra.mxu0 0.0
        %7281 = vmatprep.subr.mxu0 0.0
        %7282 = vmatpush1.msra.mxu0 0.0
        %7283 = vmatprep.subr.mxu0 0.0
        %7284 = vmatpush1.msra.mxu0 0.0
        %7285 = vmatprep.subr.mxu0 0.0
        %7286 = vmatpush1.msra.mxu0 0.0
        %7287 = vmatprep.subr.mxu0 0.0
        %7288 = vmatpush1.msra.mxu0 0.0
        %7289 = vmatprep.subr.mxu0 0.0
        %7290 = vmatpush1.msra.mxu0 0.0
        %7291 = vmatprep.mubr.f32.mxu0 0.0
        %7292 = vmatmul.mubr.f32.gmra.mrb[0].mxu0 %v7180
        %v7293 = vpop.f32.mrb[0].mxu0
        %v7294 = vadd.f32 0.0, %v7293
        %v7295 = vpop.f32.mrb[0].mxu0
        %7296 = vmatprep.mubr.f32.mxu0 0.0
        %7297 = vmatmul.mubr.f32.gmra.mrb[0].mxu0 %v7183
        %v7298 = vpop.f32.mrb[0].mxu0
        %v7299 = vadd.f32 0.0, %v7298
        %v7300 = vpop.f32.mrb[0].mxu0
        %7301 = vmatprep.mubr.f32.mxu0 0.0
        %7302 = vmatmul.mubr.f32.gmra.mrb[0].mxu0 %v7186
        %v7303 = vpop.f32.mrb[0].mxu0
        %v7304 = vadd.f32 0.0, %v7303
        %v7305 = vpop.f32.mrb[0].mxu0
        %7306 = vmatprep.mubr.f32.mxu0 0.0
        %7307 = vmatmul.mubr.f32.gmra.mrb[0].mxu0 %v7189
        %v7308 = vpop.f32.mrb[0].mxu0
        %v7309 = vadd.f32 0.0, %v7308
        %v7310 = vpop.f32.mrb[0].mxu0
        %7311 = vmatprep.mubr.f32.mxu0 0.0
        %7312 = vmatmul.mubr.f32.gmra.mrb[0].mxu0 %v7192
        %v7313 = vpop.f32.mrb[0].mxu0
        %v7314 = vadd.f32 0.0, %v7313
        %v7315 = vpop.f32.mrb[0].mxu0
        %7316 = vmatprep.mubr.f32.mxu0 0.0
        %7317 = vmatmul.mubr.f32.gmra.mrb[0].mxu0 %v7195
        %v7318 = vpop.f32.mrb[0].mxu0
        %v7319 = vadd.f32 0.0, %v7318
        %v7320 = vpop.f32.mrb[0].mxu0
        %7321 = vmatprep.mubr.f32.mxu0 0.0
        %7322 = vmatmul.mubr.f32.gmra.mrb[0].mxu0 %v7198
        %v7323 = vpop.f32.mrb[0].mxu0
        %v7324 = vadd.f32 0.0, %v7323
        %v7325 = vpop.f32.mrb[0].mxu0
        %7326 = vmatprep.mubr.f32.mxu0 0.0
        %7327 = vmatmul.mubr.f32.gmra.mrb[0].mxu0 %v7201
        %v7328 = vpop.f32.mrb[0].mxu0
        %v7329 = vadd.f32 0.0, %v7328
        %v7330 = vpop.f32.mrb[0].mxu0
        %7331 = vmatprep.mubr.f32.mxu0 0.0
        %7332 = vmatmul.mubr.f32.gmra.mrb[0].mxu0 %v7204
        %v7333 = vpop.f32.mrb[0].mxu0
        %v7334 = vadd.f32 0.0, %v7333
        %v7335 = vpop.f32.mrb[0].mxu0
        %7336 = vmatprep.mubr.f32.mxu0 0.0
        %7337 = vmatmul.mubr.f32.gmra.mrb[0].mxu0 %v7207
        %v7338 = vpop.f32.mrb[0].mxu0
        %v7339 = vadd.f32 0.0, %v7338
        %v7340 = vpop.f32.mrb[0].mxu0
        %7341 = vmatprep.mubr.f32.mxu0 0.0
        %7342 = vmatmul.mubr.f32.gmra.mrb[0].mxu0 %v7210
        %v7343 = vpop.f32.mrb[0].mxu0
        %v7344 = vadd.f32 0.0, %v7343
        %v7345 = vpop.f32.mrb[0].mxu0
        %7346 = vmatprep.mubr.f32.mxu0 0.0
        %7347 = vmatmul.mubr.f32.gmra.mrb[0].mxu0 %v7213
        %v7348 = vpop.f32.mrb[0].mxu0
        %v7349 = vadd.f32 0.0, %v7348
        %v7350 = vpop.f32.mrb[0].mxu0
        %7351 = vmatprep.mubr.f32.mxu0 0.0
        %7352 = vmatmul.mubr.f32.gmra.mrb[0].mxu0 %v7216
        %v7353 = vpop.f32.mrb[0].mxu0
        %v7354 = vadd.f32 0.0, %v7353
        %v7355 = vpop.f32.mrb[0].mxu0
        %7356 = vmatprep.mubr.f32.mxu0 0.0
        %7357 = vmatmul.mubr.f32.gmra.mrb[0].mxu0 %v7219
        %v7358 = vpop.f32.mrb[0].mxu0
        %v7359 = vadd.f32 0.0, %v7358
        %v7360 = vpop.f32.mrb[0].mxu0
        %7361 = vmatprep.mubr.f32.mxu0 0.0
        %7362 = vmatmul.mubr.f32.gmra.mrb[0].mxu0 %v7222
        %v7363 = vpop.f32.mrb[0].mxu0
        %v7364 = vadd.f32 0.0, %v7363
        %v7365 = vpop.f32.mrb[0].mxu0
        %7366 = vmatprep.mubr.f32.mxu0 0.0
        %7367 = vmatmul.mubr.f32.gmra.mrb[0].mxu0 %v7225
        %v7368 = vpop.f32.mrb[0].mxu0
        %v7369 = vadd.f32 0.0, %v7368
        %v7370 = vpop.f32.mrb[0].mxu0
        %7371 = vdwg.mxu0
        %v7372 = vlaneseq
        %v7373 = vshrl.u32 %v7372, 7
        %v7374 = vsub.s32 7, %v7373
        %v7375 = vrot.slane %v7294, %v7374
        %v7376 = vlaneseq
        %v7377 = vshrl.u32 %v7376, 7
        %v7378 = vsub.s32 7, %v7377
        %v7379 = vrot.slane %v7299, %v7378
        %v7380 = vlaneseq
        %v7381 = vshrl.u32 %v7380, 7
        %v7382 = vsub.s32 7, %v7381
        %v7383 = vrot.slane %v7304, %v7382
        %v7384 = vlaneseq
        %v7385 = vshrl.u32 %v7384, 7
        %v7386 = vsub.s32 7, %v7385
        %v7387 = vrot.slane %v7309, %v7386
        %v7388 = vlaneseq
        %v7389 = vshrl.u32 %v7388, 7
        %v7390 = vsub.s32 7, %v7389
        %v7391 = vrot.slane %v7314, %v7390
        %v7392 = vlaneseq
        %v7393 = vshrl.u32 %v7392, 7
        %v7394 = vsub.s32 7, %v7393
        %v7395 = vrot.slane %v7319, %v7394
        %v7396 = vlaneseq
        %v7397 = vshrl.u32 %v7396, 7
        %v7398 = vsub.s32 7, %v7397
        %v7399 = vrot.slane %v7324, %v7398
        %v7400 = vlaneseq
        %v7401 = vshrl.u32 %v7400, 7
        %v7402 = vsub.s32 7, %v7401
        %v7403 = vrot.slane %v7329, %v7402
        %v7404 = vlaneseq
        %v7405 = vshrl.u32 %v7404, 7
        %v7406 = vsub.s32 7, %v7405
        %v7407 = vrot.slane %v7334, %v7406
        %v7408 = vlaneseq
        %v7409 = vshrl.u32 %v7408, 7
        %v7410 = vsub.s32 7, %v7409
        %v7411 = vrot.slane %v7339, %v7410
        %v7412 = vlaneseq
        %v7413 = vshrl.u32 %v7412, 7
        %v7414 = vsub.s32 7, %v7413
        %v7415 = vrot.slane %v7344, %v7414
        %v7416 = vlaneseq
        %v7417 = vshrl.u32 %v7416, 7
        %v7418 = vsub.s32 7, %v7417
        %v7419 = vrot.slane %v7349, %v7418
        %v7420 = vlaneseq
        %v7421 = vshrl.u32 %v7420, 7
        %v7422 = vsub.s32 7, %v7421
        %v7423 = vrot.slane %v7354, %v7422
        %v7424 = vlaneseq
        %v7425 = vshrl.u32 %v7424, 7
        %v7426 = vsub.s32 7, %v7425
        %v7427 = vrot.slane %v7359, %v7426
        %v7428 = vlaneseq
        %v7429 = vshrl.u32 %v7428, 7
        %v7430 = vsub.s32 7, %v7429
        %v7431 = vrot.slane %v7364, %v7430
        %v7432 = vlaneseq
        %v7433 = vshrl.u32 %v7432, 7
        %v7434 = vsub.s32 7, %v7433
        %v7435 = vrot.slane %v7369, %v7434
        %v7436 = vmul.f32 %v7294, %v7375
        %v7437 = vmul.f32 %v7299, %v7379
        %v7438 = vmul.f32 %v7304, %v7383
        %v7439 = vmul.f32 %v7309, %v7387
        %v7440 = vmul.f32 %v7314, %v7391
        %v7441 = vmul.f32 %v7319, %v7395
        %v7442 = vmul.f32 %v7324, %v7399
        %v7443 = vmul.f32 %v7329, %v7403
        %v7444 = vmul.f32 %v7334, %v7407
        %v7445 = vmul.f32 %v7339, %v7411
        %v7446 = vmul.f32 %v7344, %v7415
        %v7447 = vmul.f32 %v7349, %v7419
        %v7448 = vmul.f32 %v7354, %v7423
        %v7449 = vmul.f32 %v7359, %v7427
        %v7450 = vmul.f32 %v7364, %v7431
        %v7451 = vmul.f32 %v7369, %v7435
        %v7452 = vsel %vm879, %v7436, 0.0
        %7453 = vadd.xlane.f32.xlu0 %v7452
        %v7454 = vpop.xlane.xlu0 %7453
        %v7455 = vsel %vm879, %v7437, 0.0
        %7456 = vadd.xlane.f32.xlu0 %v7455
        %v7457 = vpop.xlane.xlu0 %7456
        %v7458 = vsel %vm879, %v7438, 0.0
        %7459 = vadd.xlane.f32.xlu0 %v7458
        %v7460 = vpop.xlane.xlu0 %7459
        %v7461 = vsel %vm879, %v7439, 0.0
        %7462 = vadd.xlane.f32.xlu0 %v7461
        %v7463 = vpop.xlane.xlu0 %7462
        %v7464 = vsel %vm879, %v7440, 0.0
        %7465 = vadd.xlane.f32.xlu0 %v7464
        %v7466 = vpop.xlane.xlu0 %7465
        %v7467 = vsel %vm879, %v7441, 0.0
        %7468 = vadd.xlane.f32.xlu0 %v7467
        %v7469 = vpop.xlane.xlu0 %7468
        %v7470 = vsel %vm879, %v7442, 0.0
        %7471 = vadd.xlane.f32.xlu0 %v7470
        %v7472 = vpop.xlane.xlu0 %7471
        %v7473 = vsel %vm879, %v7443, 0.0
        %7474 = vadd.xlane.f32.xlu0 %v7473
        %v7475 = vpop.xlane.xlu0 %7474
        %v7476 = vsel %vm879, %v7444, 0.0
        %7477 = vadd.xlane.f32.xlu0 %v7476
        %v7478 = vpop.xlane.xlu0 %7477
        %v7479 = vsel %vm879, %v7445, 0.0
        %7480 = vadd.xlane.f32.xlu0 %v7479
        %v7481 = vpop.xlane.xlu0 %7480
        %v7482 = vsel %vm879, %v7446, 0.0
        %7483 = vadd.xlane.f32.xlu0 %v7482
        %v7484 = vpop.xlane.xlu0 %7483
        %v7485 = vsel %vm879, %v7447, 0.0
        %7486 = vadd.xlane.f32.xlu0 %v7485
        %v7487 = vpop.xlane.xlu0 %7486
        %v7488 = vsel %vm879, %v7448, 0.0
        %7489 = vadd.xlane.f32.xlu0 %v7488
        %v7490 = vpop.xlane.xlu0 %7489
        %v7491 = vsel %vm879, %v7449, 0.0
        %7492 = vadd.xlane.f32.xlu0 %v7491
        %v7493 = vpop.xlane.xlu0 %7492
        %v7494 = vsel %vm879, %v7450, 0.0
        %7495 = vadd.xlane.f32.xlu0 %v7494
        %v7496 = vpop.xlane.xlu0 %7495
        %v7497 = vsel %vm879, %v7451, 0.0
        %7498 = vadd.xlane.f32.xlu0 %v7497
        %v7499 = vpop.xlane.xlu0 %7498
        %v7516 = vlaneseq
        %v7517 = vand.u32 %v7516, 127
        %v7518 = vlaneseq
        %v7519 = vshrl.u32 %v7518, 7
        %v7520 = vsub.s32 %v7517, %v7519
        %v7521 = vrot.slane %v7454, %v7520
        %v7522 = vlaneseq
        %v7523 = vshrl.u32 %v7522, 7
        %v7524 = vsub.s32 %v7517, %v7523
        %v7525 = vrot.slane %v7457, %v7524
        %v7526 = vlaneseq
        %v7527 = vshrl.u32 %v7526, 7
        %v7528 = vsub.s32 %v7517, %v7527
        %v7529 = vrot.slane %v7460, %v7528
        %v7530 = vlaneseq
        %v7531 = vshrl.u32 %v7530, 7
        %v7532 = vsub.s32 %v7517, %v7531
        %v7533 = vrot.slane %v7463, %v7532
        %v7534 = vlaneseq
        %v7535 = vshrl.u32 %v7534, 7
        %v7536 = vsub.s32 %v7517, %v7535
        %v7537 = vrot.slane %v7466, %v7536
        %v7538 = vlaneseq
        %v7539 = vshrl.u32 %v7538, 7
        %v7540 = vsub.s32 %v7517, %v7539
        %v7541 = vrot.slane %v7469, %v7540
        %v7542 = vlaneseq
        %v7543 = vshrl.u32 %v7542, 7
        %v7544 = vsub.s32 %v7517, %v7543
        %v7545 = vrot.slane %v7472, %v7544
        %v7546 = vlaneseq
        %v7547 = vshrl.u32 %v7546, 7
        %v7548 = vsub.s32 %v7517, %v7547
        %v7549 = vrot.slane %v7475, %v7548
        %v7550 = vlaneseq
        %v7551 = vshrl.u32 %v7550, 7
        %v7552 = vsub.s32 %v7517, %v7551
        %v7553 = vrot.slane %v7478, %v7552
        %v7554 = vlaneseq
        %v7555 = vshrl.u32 %v7554, 7
        %v7556 = vsub.s32 %v7517, %v7555
        %v7557 = vrot.slane %v7481, %v7556
        %v7558 = vlaneseq
        %v7559 = vshrl.u32 %v7558, 7
        %v7560 = vsub.s32 %v7517, %v7559
        %v7561 = vrot.slane %v7484, %v7560
        %v7562 = vlaneseq
        %v7563 = vshrl.u32 %v7562, 7
        %v7564 = vsub.s32 %v7517, %v7563
        %v7565 = vrot.slane %v7487, %v7564
        %v7566 = vlaneseq
        %v7567 = vshrl.u32 %v7566, 7
        %v7568 = vsub.s32 %v7517, %v7567
        %v7569 = vrot.slane %v7490, %v7568
        %v7570 = vlaneseq
        %v7571 = vshrl.u32 %v7570, 7
        %v7572 = vsub.s32 %v7517, %v7571
        %v7573 = vrot.slane %v7493, %v7572
        %v7574 = vlaneseq
        %v7575 = vshrl.u32 %v7574, 7
        %v7576 = vsub.s32 %v7517, %v7575
        %v7577 = vrot.slane %v7496, %v7576
        %v7578 = vlaneseq
        %v7579 = vshrl.u32 %v7578, 7
        %v7580 = vsub.s32 %v7517, %v7579
        %v7581 = vrot.slane %v7499, %v7580
        %v7582 = vsel %vm310, %v7525, %v7521
        %v7583 = vsel %vm313, %v7529, %v7582
        %v7584 = vsel %vm316, %v7533, %v7583
        %v7585 = vsel %vm319, %v7537, %v7584
        %v7586 = vsel %vm322, %v7541, %v7585
        %v7587 = vsel %vm325, %v7545, %v7586
        %v7588 = vsel %vm327, %v7549, %v7587
        %v7589 = vsel %vm310, %v7557, %v7553
        %v7590 = vsel %vm313, %v7561, %v7589
        %v7591 = vsel %vm316, %v7565, %v7590
        %v7592 = vsel %vm319, %v7569, %v7591
        %v7593 = vsel %vm322, %v7573, %v7592
        %v7594 = vsel %vm325, %v7577, %v7593
        %v7595 = vsel %vm327, %v7581, %v7594
        %v7598 = vsel %vm347, %v7588, -inf
        %7599 = vmax.xlane.f32.xlu0 %v7598
        %v7600 = vpop.xlane.xlu0 %7599
        %v7601 = vsel %vm347, %v7595, -inf
        %7602 = vmax.xlane.f32.xlu0 %v7601
        %v7603 = vpop.xlane.xlu0 %7602
        %v7606 = vlaneseq
        %v7607 = vshrl.u32 %v7606, 7
        %v7608 = vsub.s32 0, %v7607
        %v7609 = vrot.slane %v7600, %v7608
        %v7610 = vlaneseq
        %v7611 = vshrl.u32 %v7610, 7
        %v7612 = vsub.s32 1, %v7611
        %v7613 = vrot.slane %v7600, %v7612
        %v7614 = vlaneseq
        %v7615 = vshrl.u32 %v7614, 7
        %v7616 = vsub.s32 2, %v7615
        %v7617 = vrot.slane %v7600, %v7616
        %v7618 = vlaneseq
        %v7619 = vshrl.u32 %v7618, 7
        %v7620 = vsub.s32 3, %v7619
        %v7621 = vrot.slane %v7600, %v7620
        %v7622 = vlaneseq
        %v7623 = vshrl.u32 %v7622, 7
        %v7624 = vsub.s32 4, %v7623
        %v7625 = vrot.slane %v7600, %v7624
        %v7626 = vlaneseq
        %v7627 = vshrl.u32 %v7626, 7
        %v7628 = vsub.s32 5, %v7627
        %v7629 = vrot.slane %v7600, %v7628
        %v7630 = vlaneseq
        %v7631 = vshrl.u32 %v7630, 7
        %v7632 = vsub.s32 6, %v7631
        %v7633 = vrot.slane %v7600, %v7632
        %v7634 = vlaneseq
        %v7635 = vshrl.u32 %v7634, 7
        %v7636 = vsub.s32 7, %v7635
        %v7637 = vrot.slane %v7600, %v7636
        %v7638 = vlaneseq
        %v7639 = vshrl.u32 %v7638, 7
        %v7640 = vsub.s32 0, %v7639
        %v7641 = vrot.slane %v7603, %v7640
        %v7642 = vlaneseq
        %v7643 = vshrl.u32 %v7642, 7
        %v7644 = vsub.s32 1, %v7643
        %v7645 = vrot.slane %v7603, %v7644
        %v7646 = vlaneseq
        %v7647 = vshrl.u32 %v7646, 7
        %v7648 = vsub.s32 2, %v7647
        %v7649 = vrot.slane %v7603, %v7648
        %v7650 = vlaneseq
        %v7651 = vshrl.u32 %v7650, 7
        %v7652 = vsub.s32 3, %v7651
        %v7653 = vrot.slane %v7603, %v7652
        %v7654 = vlaneseq
        %v7655 = vshrl.u32 %v7654, 7
        %v7656 = vsub.s32 4, %v7655
        %v7657 = vrot.slane %v7603, %v7656
        %v7658 = vlaneseq
        %v7659 = vshrl.u32 %v7658, 7
        %v7660 = vsub.s32 5, %v7659
        %v7661 = vrot.slane %v7603, %v7660
        %v7662 = vlaneseq
        %v7663 = vshrl.u32 %v7662, 7
        %v7664 = vsub.s32 6, %v7663
        %v7665 = vrot.slane %v7603, %v7664
        %v7666 = vlaneseq
        %v7667 = vshrl.u32 %v7666, 7
        %v7668 = vsub.s32 7, %v7667
        %v7669 = vrot.slane %v7603, %v7668
        %v7686 = vsub.f32 %v7454, %v7609
        %v7687 = vsub.f32 %v7457, %v7613
        %v7688 = vsub.f32 %v7460, %v7617
        %v7689 = vsub.f32 %v7463, %v7621
        %v7690 = vsub.f32 %v7466, %v7625
        %v7691 = vsub.f32 %v7469, %v7629
        %v7692 = vsub.f32 %v7472, %v7633
        %v7693 = vsub.f32 %v7475, %v7637
        %v7694 = vsub.f32 %v7478, %v7641
        %v7695 = vsub.f32 %v7481, %v7645
        %v7696 = vsub.f32 %v7484, %v7649
        %v7697 = vsub.f32 %v7487, %v7653
        %v7698 = vsub.f32 %v7490, %v7657
        %v7699 = vsub.f32 %v7493, %v7661
        %v7700 = vsub.f32 %v7496, %v7665
        %v7701 = vsub.f32 %v7499, %v7669
        %v7702 = vmul.f32 %v7686, 1.442695
        %v7703 = vpow.pop %v7702
        %v7704 = vmul.f32 %v7687, 1.442695
        %v7705 = vpow.pop %v7704
        %v7706 = vmul.f32 %v7688, 1.442695
        %v7707 = vpow.pop %v7706
        %v7708 = vmul.f32 %v7689, 1.442695
        %v7709 = vpow.pop %v7708
        %v7710 = vmul.f32 %v7690, 1.442695
        %v7711 = vpow.pop %v7710
        %v7712 = vmul.f32 %v7691, 1.442695
        %v7713 = vpow.pop %v7712
        %v7714 = vmul.f32 %v7692, 1.442695
        %v7715 = vpow.pop %v7714
        %v7716 = vmul.f32 %v7693, 1.442695
        %v7717 = vpow.pop %v7716
        %v7718 = vmul.f32 %v7694, 1.442695
        %v7719 = vpow.pop %v7718
        %v7720 = vmul.f32 %v7695, 1.442695
        %v7721 = vpow.pop %v7720
        %v7722 = vmul.f32 %v7696, 1.442695
        %v7723 = vpow.pop %v7722
        %v7724 = vmul.f32 %v7697, 1.442695
        %v7725 = vpow.pop %v7724
        %v7726 = vmul.f32 %v7698, 1.442695
        %v7727 = vpow.pop %v7726
        %v7728 = vmul.f32 %v7699, 1.442695
        %v7729 = vpow.pop %v7728
        %v7730 = vmul.f32 %v7700, 1.442695
        %v7731 = vpow.pop %v7730
        %v7732 = vmul.f32 %v7701, 1.442695
        %v7733 = vpow.pop %v7732
        %7750 = vset.pattern.permute.xlu0 0
        %7751 = vperm.xlu0 %7750, %v7703
        %v7752 = vpop.permute.xlu0 %7751
        %7753 = vset.pattern.permute.xlu0 0
        %7754 = vperm.xlu0 %7753, %v7705
        %v7755 = vpop.permute.xlu0 %7754
        %7756 = vset.pattern.permute.xlu0 0
        %7757 = vperm.xlu0 %7756, %v7707
        %v7758 = vpop.permute.xlu0 %7757
        %7759 = vset.pattern.permute.xlu0 0
        %7760 = vperm.xlu0 %7759, %v7709
        %v7761 = vpop.permute.xlu0 %7760
        %7762 = vset.pattern.permute.xlu0 0
        %7763 = vperm.xlu0 %7762, %v7711
        %v7764 = vpop.permute.xlu0 %7763
        %7765 = vset.pattern.permute.xlu0 0
        %7766 = vperm.xlu0 %7765, %v7713
        %v7767 = vpop.permute.xlu0 %7766
        %7768 = vset.pattern.permute.xlu0 0
        %7769 = vperm.xlu0 %7768, %v7715
        %v7770 = vpop.permute.xlu0 %7769
        %7771 = vset.pattern.permute.xlu0 0
        %7772 = vperm.xlu0 %7771, %v7717
        %v7773 = vpop.permute.xlu0 %7772
        %7774 = vset.pattern.permute.xlu0 0
        %7775 = vperm.xlu0 %7774, %v7719
        %v7776 = vpop.permute.xlu0 %7775
        %7777 = vset.pattern.permute.xlu0 0
        %7778 = vperm.xlu0 %7777, %v7721
        %v7779 = vpop.permute.xlu0 %7778
        %7780 = vset.pattern.permute.xlu0 0
        %7781 = vperm.xlu0 %7780, %v7723
        %v7782 = vpop.permute.xlu0 %7781
        %7783 = vset.pattern.permute.xlu0 0
        %7784 = vperm.xlu0 %7783, %v7725
        %v7785 = vpop.permute.xlu0 %7784
        %7786 = vset.pattern.permute.xlu0 0
        %7787 = vperm.xlu0 %7786, %v7727
        %v7788 = vpop.permute.xlu0 %7787
        %7789 = vset.pattern.permute.xlu0 0
        %7790 = vperm.xlu0 %7789, %v7729
        %v7791 = vpop.permute.xlu0 %7790
        %7792 = vset.pattern.permute.xlu0 0
        %7793 = vperm.xlu0 %7792, %v7731
        %v7794 = vpop.permute.xlu0 %7793
        %7795 = vset.pattern.permute.xlu0 0
        %7796 = vperm.xlu0 %7795, %v7733
        %v7797 = vpop.permute.xlu0 %7796
        %v7798 = vlaneseq
        %v7799 = vshrl.u32 %v7798, 7
        %v7800 = vsub.s32 %v7517, %v7799
        %v7801 = vrot.slane %v7752, %v7800
        %v7802 = vlaneseq
        %v7803 = vshrl.u32 %v7802, 7
        %v7804 = vsub.s32 %v7517, %v7803
        %v7805 = vrot.slane %v7755, %v7804
        %v7806 = vlaneseq
        %v7807 = vshrl.u32 %v7806, 7
        %v7808 = vsub.s32 %v7517, %v7807
        %v7809 = vrot.slane %v7758, %v7808
        %v7810 = vlaneseq
        %v7811 = vshrl.u32 %v7810, 7
        %v7812 = vsub.s32 %v7517, %v7811
        %v7813 = vrot.slane %v7761, %v7812
        %v7814 = vlaneseq
        %v7815 = vshrl.u32 %v7814, 7
        %v7816 = vsub.s32 %v7517, %v7815
        %v7817 = vrot.slane %v7764, %v7816
        %v7818 = vlaneseq
        %v7819 = vshrl.u32 %v7818, 7
        %v7820 = vsub.s32 %v7517, %v7819
        %v7821 = vrot.slane %v7767, %v7820
        %v7822 = vlaneseq
        %v7823 = vshrl.u32 %v7822, 7
        %v7824 = vsub.s32 %v7517, %v7823
        %v7825 = vrot.slane %v7770, %v7824
        %v7826 = vlaneseq
        %v7827 = vshrl.u32 %v7826, 7
        %v7828 = vsub.s32 %v7517, %v7827
        %v7829 = vrot.slane %v7773, %v7828
        %v7830 = vlaneseq
        %v7831 = vshrl.u32 %v7830, 7
        %v7832 = vsub.s32 %v7517, %v7831
        %v7833 = vrot.slane %v7776, %v7832
        %v7834 = vlaneseq
        %v7835 = vshrl.u32 %v7834, 7
        %v7836 = vsub.s32 %v7517, %v7835
        %v7837 = vrot.slane %v7779, %v7836
        %v7838 = vlaneseq
        %v7839 = vshrl.u32 %v7838, 7
        %v7840 = vsub.s32 %v7517, %v7839
        %v7841 = vrot.slane %v7782, %v7840
        %v7842 = vlaneseq
        %v7843 = vshrl.u32 %v7842, 7
        %v7844 = vsub.s32 %v7517, %v7843
        %v7845 = vrot.slane %v7785, %v7844
        %v7846 = vlaneseq
        %v7847 = vshrl.u32 %v7846, 7
        %v7848 = vsub.s32 %v7517, %v7847
        %v7849 = vrot.slane %v7788, %v7848
        %v7850 = vlaneseq
        %v7851 = vshrl.u32 %v7850, 7
        %v7852 = vsub.s32 %v7517, %v7851
        %v7853 = vrot.slane %v7791, %v7852
        %v7854 = vlaneseq
        %v7855 = vshrl.u32 %v7854, 7
        %v7856 = vsub.s32 %v7517, %v7855
        %v7857 = vrot.slane %v7794, %v7856
        %v7858 = vlaneseq
        %v7859 = vshrl.u32 %v7858, 7
        %v7860 = vsub.s32 %v7517, %v7859
        %v7861 = vrot.slane %v7797, %v7860
        %v7862 = vsel %vm310, %v7805, %v7801
        %v7863 = vsel %vm313, %v7809, %v7862
        %v7864 = vsel %vm316, %v7813, %v7863
        %v7865 = vsel %vm319, %v7817, %v7864
        %v7866 = vsel %vm322, %v7821, %v7865
        %v7867 = vsel %vm325, %v7825, %v7866
        %v7868 = vsel %vm327, %v7829, %v7867
        %v7869 = vsel %vm310, %v7837, %v7833
        %v7870 = vsel %vm313, %v7841, %v7869
        %v7871 = vsel %vm316, %v7845, %v7870
        %v7872 = vsel %vm319, %v7849, %v7871
        %v7873 = vsel %vm322, %v7853, %v7872
        %v7874 = vsel %vm325, %v7857, %v7873
        %v7875 = vsel %vm327, %v7861, %v7874
        %v7878 = vsel %vm347, %v7868, 0.0
        %7879 = vadd.xlane.f32.xlu0 %v7878
        %v7880 = vpop.xlane.xlu0 %7879
        %v7881 = vsel %vm347, %v7875, 0.0
        %7882 = vadd.xlane.f32.xlu0 %v7881
        %v7883 = vpop.xlane.xlu0 %7882
        %v7886 = vlaneseq
        %v7887 = vshrl.u32 %v7886, 7
        %v7888 = vsub.s32 0, %v7887
        %v7889 = vrot.slane %v7880, %v7888
        %v7890 = vlaneseq
        %v7891 = vshrl.u32 %v7890, 7
        %v7892 = vsub.s32 1, %v7891
        %v7893 = vrot.slane %v7880, %v7892
        %v7894 = vlaneseq
        %v7895 = vshrl.u32 %v7894, 7
        %v7896 = vsub.s32 2, %v7895
        %v7897 = vrot.slane %v7880, %v7896
        %v7898 = vlaneseq
        %v7899 = vshrl.u32 %v7898, 7
        %v7900 = vsub.s32 3, %v7899
        %v7901 = vrot.slane %v7880, %v7900
        %v7902 = vlaneseq
        %v7903 = vshrl.u32 %v7902, 7
        %v7904 = vsub.s32 4, %v7903
        %v7905 = vrot.slane %v7880, %v7904
        %v7906 = vlaneseq
        %v7907 = vshrl.u32 %v7906, 7
        %v7908 = vsub.s32 5, %v7907
        %v7909 = vrot.slane %v7880, %v7908
        %v7910 = vlaneseq
        %v7911 = vshrl.u32 %v7910, 7
        %v7912 = vsub.s32 6, %v7911
        %v7913 = vrot.slane %v7880, %v7912
        %v7914 = vlaneseq
        %v7915 = vshrl.u32 %v7914, 7
        %v7916 = vsub.s32 7, %v7915
        %v7917 = vrot.slane %v7880, %v7916
        %v7918 = vlaneseq
        %v7919 = vshrl.u32 %v7918, 7
        %v7920 = vsub.s32 0, %v7919
        %v7921 = vrot.slane %v7883, %v7920
        %v7922 = vlaneseq
        %v7923 = vshrl.u32 %v7922, 7
        %v7924 = vsub.s32 1, %v7923
        %v7925 = vrot.slane %v7883, %v7924
        %v7926 = vlaneseq
        %v7927 = vshrl.u32 %v7926, 7
        %v7928 = vsub.s32 2, %v7927
        %v7929 = vrot.slane %v7883, %v7928
        %v7930 = vlaneseq
        %v7931 = vshrl.u32 %v7930, 7
        %v7932 = vsub.s32 3, %v7931
        %v7933 = vrot.slane %v7883, %v7932
        %v7934 = vlaneseq
        %v7935 = vshrl.u32 %v7934, 7
        %v7936 = vsub.s32 4, %v7935
        %v7937 = vrot.slane %v7883, %v7936
        %v7938 = vlaneseq
        %v7939 = vshrl.u32 %v7938, 7
        %v7940 = vsub.s32 5, %v7939
        %v7941 = vrot.slane %v7883, %v7940
        %v7942 = vlaneseq
        %v7943 = vshrl.u32 %v7942, 7
        %v7944 = vsub.s32 6, %v7943
        %v7945 = vrot.slane %v7883, %v7944
        %v7946 = vlaneseq
        %v7947 = vshrl.u32 %v7946, 7
        %v7948 = vsub.s32 7, %v7947
        %v7949 = vrot.slane %v7883, %v7948
        %v7966 = vrcp.pop %v7889
        %v7967 = vmul.f32 %v7703, %v7966
        %v7968 = vrcp.pop %v7893
        %v7969 = vmul.f32 %v7705, %v7968
        %v7970 = vrcp.pop %v7897
        %v7971 = vmul.f32 %v7707, %v7970
        %v7972 = vrcp.pop %v7901
        %v7973 = vmul.f32 %v7709, %v7972
        %v7974 = vrcp.pop %v7905
        %v7975 = vmul.f32 %v7711, %v7974
        %v7976 = vrcp.pop %v7909
        %v7977 = vmul.f32 %v7713, %v7976
        %v7978 = vrcp.pop %v7913
        %v7979 = vmul.f32 %v7715, %v7978
        %v7980 = vrcp.pop %v7917
        %v7981 = vmul.f32 %v7717, %v7980
        %v7982 = vrcp.pop %v7921
        %v7983 = vmul.f32 %v7719, %v7982
        %v7984 = vrcp.pop %v7925
        %v7985 = vmul.f32 %v7721, %v7984
        %v7986 = vrcp.pop %v7929
        %v7987 = vmul.f32 %v7723, %v7986
        %v7988 = vrcp.pop %v7933
        %v7989 = vmul.f32 %v7725, %v7988
        %v7990 = vrcp.pop %v7937
        %v7991 = vmul.f32 %v7727, %v7990
        %v7992 = vrcp.pop %v7941
        %v7993 = vmul.f32 %v7729, %v7992
        %v7994 = vrcp.pop %v7945
        %v7995 = vmul.f32 %v7731, %v7994
        %v7996 = vrcp.pop %v7949
        %v7997 = vmul.f32 %v7733, %v7996
        %7999 = vset.pattern.permute.xlu0 0
        %8000 = vperm.xlu0 %7999, %v7967
        %v8001 = vpop.permute.xlu0 %8000
        %8004 = vset.pattern.permute.xlu0 0
        %8005 = vperm.xlu0 %8004, %v7969
        %v8006 = vpop.permute.xlu0 %8005
        %8009 = vset.pattern.permute.xlu0 0
        %8010 = vperm.xlu0 %8009, %v7971
        %v8011 = vpop.permute.xlu0 %8010
        %8014 = vset.pattern.permute.xlu0 0
        %8015 = vperm.xlu0 %8014, %v7973
        %v8016 = vpop.permute.xlu0 %8015
        %8019 = vset.pattern.permute.xlu0 0
        %8020 = vperm.xlu0 %8019, %v7975
        %v8021 = vpop.permute.xlu0 %8020
        %8024 = vset.pattern.permute.xlu0 0
        %8025 = vperm.xlu0 %8024, %v7977
        %v8026 = vpop.permute.xlu0 %8025
        %8029 = vset.pattern.permute.xlu0 0
        %8030 = vperm.xlu0 %8029, %v7979
        %v8031 = vpop.permute.xlu0 %8030
        %8034 = vset.pattern.permute.xlu0 0
        %8035 = vperm.xlu0 %8034, %v7981
        %v8036 = vpop.permute.xlu0 %8035
        %8039 = vset.pattern.permute.xlu0 0
        %8040 = vperm.xlu0 %8039, %v7983
        %v8041 = vpop.permute.xlu0 %8040
        %8044 = vset.pattern.permute.xlu0 0
        %8045 = vperm.xlu0 %8044, %v7985
        %v8046 = vpop.permute.xlu0 %8045
        %8049 = vset.pattern.permute.xlu0 0
        %8050 = vperm.xlu0 %8049, %v7987
        %v8051 = vpop.permute.xlu0 %8050
        %8054 = vset.pattern.permute.xlu0 0
        %8055 = vperm.xlu0 %8054, %v7989
        %v8056 = vpop.permute.xlu0 %8055
        %8059 = vset.pattern.permute.xlu0 0
        %8060 = vperm.xlu0 %8059, %v7991
        %v8061 = vpop.permute.xlu0 %8060
        %8064 = vset.pattern.permute.xlu0 0
        %8065 = vperm.xlu0 %8064, %v7993
        %v8066 = vpop.permute.xlu0 %8065
        %8069 = vset.pattern.permute.xlu0 0
        %8070 = vperm.xlu0 %8069, %v7995
        %v8071 = vpop.permute.xlu0 %8070
        %8074 = vset.pattern.permute.xlu0 0
        %8075 = vperm.xlu0 %8074, %v7997
        %v8076 = vpop.permute.xlu0 %8075
        %v8078 = vmul.f32 %v8001, %v7158
        %v8079 = vmul.f32 %v8006, %v7159
        %v8080 = vmul.f32 %v8011, %v7160
        %v8081 = vmul.f32 %v8016, %v7161
        %v8082 = vmul.f32 %v8021, %v7162
        %v8083 = vmul.f32 %v8026, %v7163
        %v8084 = vmul.f32 %v8031, %v7164
        %v8085 = vmul.f32 %v8036, %v7165
        %v8086 = vmul.f32 %v8041, %v7166
        %v8087 = vmul.f32 %v8046, %v7167
        %v8088 = vmul.f32 %v8051, %v7168
        %v8089 = vmul.f32 %v8056, %v7169
        %v8090 = vmul.f32 %v8061, %v7170
        %v8091 = vmul.f32 %v8066, %v7171
        %v8092 = vmul.f32 %v8071, %v7172
        %v8093 = vmul.f32 %v8076, %v7173
        %v8094 = vsel %vm879, %v8078, 0.0
        %v8095 = vrot.slane %v8094, 4
        %v8096 = vadd.f32 %v8094, %v8095
        %v8097 = vrot.slane %v8096, 2
        %v8098 = vadd.f32 %v8096, %v8097
        %v8099 = vrot.slane %v8098, 1
        %v8100 = vadd.f32 %v8098, %v8099
        %v8101 = vsel %vm879, %v8079, 0.0
        %v8102 = vrot.slane %v8101, 4
        %v8103 = vadd.f32 %v8101, %v8102
        %v8104 = vrot.slane %v8103, 2
        %v8105 = vadd.f32 %v8103, %v8104
        %v8106 = vrot.slane %v8105, 1
        %v8107 = vadd.f32 %v8105, %v8106
        %v8108 = vsel %vm879, %v8080, 0.0
        %v8109 = vrot.slane %v8108, 4
        %v8110 = vadd.f32 %v8108, %v8109
        %v8111 = vrot.slane %v8110, 2
        %v8112 = vadd.f32 %v8110, %v8111
        %v8113 = vrot.slane %v8112, 1
        %v8114 = vadd.f32 %v8112, %v8113
        %v8115 = vsel %vm879, %v8081, 0.0
        %v8116 = vrot.slane %v8115, 4
        %v8117 = vadd.f32 %v8115, %v8116
        %v8118 = vrot.slane %v8117, 2
        %v8119 = vadd.f32 %v8117, %v8118
        %v8120 = vrot.slane %v8119, 1
        %v8121 = vadd.f32 %v8119, %v8120
        %v8122 = vsel %vm879, %v8082, 0.0
        %v8123 = vrot.slane %v8122, 4
        %v8124 = vadd.f32 %v8122, %v8123
        %v8125 = vrot.slane %v8124, 2
        %v8126 = vadd.f32 %v8124, %v8125
        %v8127 = vrot.slane %v8126, 1
        %v8128 = vadd.f32 %v8126, %v8127
        %v8129 = vsel %vm879, %v8083, 0.0
        %v8130 = vrot.slane %v8129, 4
        %v8131 = vadd.f32 %v8129, %v8130
        %v8132 = vrot.slane %v8131, 2
        %v8133 = vadd.f32 %v8131, %v8132
        %v8134 = vrot.slane %v8133, 1
        %v8135 = vadd.f32 %v8133, %v8134
        %v8136 = vsel %vm879, %v8084, 0.0
        %v8137 = vrot.slane %v8136, 4
        %v8138 = vadd.f32 %v8136, %v8137
        %v8139 = vrot.slane %v8138, 2
        %v8140 = vadd.f32 %v8138, %v8139
        %v8141 = vrot.slane %v8140, 1
        %v8142 = vadd.f32 %v8140, %v8141
        %v8143 = vsel %vm879, %v8085, 0.0
        %v8144 = vrot.slane %v8143, 4
        %v8145 = vadd.f32 %v8143, %v8144
        %v8146 = vrot.slane %v8145, 2
        %v8147 = vadd.f32 %v8145, %v8146
        %v8148 = vrot.slane %v8147, 1
        %v8149 = vadd.f32 %v8147, %v8148
        %v8150 = vsel %vm879, %v8086, 0.0
        %v8151 = vrot.slane %v8150, 4
        %v8152 = vadd.f32 %v8150, %v8151
        %v8153 = vrot.slane %v8152, 2
        %v8154 = vadd.f32 %v8152, %v8153
        %v8155 = vrot.slane %v8154, 1
        %v8156 = vadd.f32 %v8154, %v8155
        %v8157 = vsel %vm879, %v8087, 0.0
        %v8158 = vrot.slane %v8157, 4
        %v8159 = vadd.f32 %v8157, %v8158
        %v8160 = vrot.slane %v8159, 2
        %v8161 = vadd.f32 %v8159, %v8160
        %v8162 = vrot.slane %v8161, 1
        %v8163 = vadd.f32 %v8161, %v8162
        %v8164 = vsel %vm879, %v8088, 0.0
        %v8165 = vrot.slane %v8164, 4
        %v8166 = vadd.f32 %v8164, %v8165
        %v8167 = vrot.slane %v8166, 2
        %v8168 = vadd.f32 %v8166, %v8167
        %v8169 = vrot.slane %v8168, 1
        %v8170 = vadd.f32 %v8168, %v8169
        %v8171 = vsel %vm879, %v8089, 0.0
        %v8172 = vrot.slane %v8171, 4
        %v8173 = vadd.f32 %v8171, %v8172
        %v8174 = vrot.slane %v8173, 2
        %v8175 = vadd.f32 %v8173, %v8174
        %v8176 = vrot.slane %v8175, 1
        %v8177 = vadd.f32 %v8175, %v8176
        %v8178 = vsel %vm879, %v8090, 0.0
        %v8179 = vrot.slane %v8178, 4
        %v8180 = vadd.f32 %v8178, %v8179
        %v8181 = vrot.slane %v8180, 2
        %v8182 = vadd.f32 %v8180, %v8181
        %v8183 = vrot.slane %v8182, 1
        %v8184 = vadd.f32 %v8182, %v8183
        %v8185 = vsel %vm879, %v8091, 0.0
        %v8186 = vrot.slane %v8185, 4
        %v8187 = vadd.f32 %v8185, %v8186
        %v8188 = vrot.slane %v8187, 2
        %v8189 = vadd.f32 %v8187, %v8188
        %v8190 = vrot.slane %v8189, 1
        %v8191 = vadd.f32 %v8189, %v8190
        %v8192 = vsel %vm879, %v8092, 0.0
        %v8193 = vrot.slane %v8192, 4
        %v8194 = vadd.f32 %v8192, %v8193
        %v8195 = vrot.slane %v8194, 2
        %v8196 = vadd.f32 %v8194, %v8195
        %v8197 = vrot.slane %v8196, 1
        %v8198 = vadd.f32 %v8196, %v8197
        %v8199 = vsel %vm879, %v8093, 0.0
        %v8200 = vrot.slane %v8199, 4
        %v8201 = vadd.f32 %v8199, %v8200
        %v8202 = vrot.slane %v8201, 2
        %v8203 = vadd.f32 %v8201, %v8202
        %v8204 = vrot.slane %v8203, 1
        %v8205 = vadd.f32 %v8203, %v8204
        %8207 = vset.pattern.permute.xlu0 0
        %8208 = vperm.xlu0 %8207, %v236
        %v8209 = vpop.permute.xlu0 %8208
        %v8210 = vrot.slane %v236, 6
        %v8227 = vsel %vm310, %v8107, %v8100
        %v8228 = vsel %vm313, %v8114, %v8227
        %v8229 = vsel %vm316, %v8121, %v8228
        %v8230 = vsel %vm319, %v8128, %v8229
        %v8231 = vsel %vm322, %v8135, %v8230
        %v8232 = vsel %vm325, %v8142, %v8231
        %v8233 = vsel %vm327, %v8149, %v8232
        %v8234 = vsel %vm310, %v8163, %v8156
        %v8235 = vsel %vm313, %v8170, %v8234
        %v8236 = vsel %vm316, %v8177, %v8235
        %v8237 = vsel %vm319, %v8184, %v8236
        %v8238 = vsel %vm322, %v8191, %v8237
        %v8239 = vsel %vm325, %v8198, %v8238
        %v8240 = vsel %vm327, %v8205, %v8239
        %v8241 = vrot.slane %v8209, 7
        %v8243 = vsel %vm879, %v8210, 0
        %v8245 = vsel %vm879, %v8233, 0
        %v8247 = vsel %vm879, %v8240, 0
        %8249 = vmatprep.subr.mxu0 0.0
        %8250 = vmatpush1.xpose.msra.mxu0 %v8245
        %8251 = vmatprep.subr.mxu0 0.0
        %8252 = vmatpush1.xpose.msra.mxu0 %v8247
        %8253 = vmatprep.subr.mxu0 0.0
        %8254 = vmatpush1.xpose.msra.mxu0 0.0
        %8255 = vmatprep.subr.mxu0 0.0
        %8256 = vmatpush1.xpose.msra.mxu0 0.0
        %8257 = vmatprep.subr.mxu0 0.0
        %8258 = vmatpush1.xpose.msra.mxu0 0.0
        %8259 = vmatprep.subr.mxu0 0.0
        %8260 = vmatpush1.xpose.msra.mxu0 0.0
        %8261 = vmatprep.subr.mxu0 0.0
        %8262 = vmatpush1.xpose.msra.mxu0 0.0
        %8263 = vmatprep.subr.mxu0 0.0
        %8264 = vmatpush1.xpose.msra.mxu0 0.0
        %8265 = vmatprep.subr.mxu0 0.0
        %8266 = vmatpush1.xpose.msra.mxu0 0.0
        %8267 = vmatprep.subr.mxu0 0.0
        %8268 = vmatpush1.xpose.msra.mxu0 0.0
        %8269 = vmatprep.subr.mxu0 0.0
        %8270 = vmatpush1.xpose.msra.mxu0 0.0
        %8271 = vmatprep.subr.mxu0 0.0
        %8272 = vmatpush1.xpose.msra.mxu0 0.0
        %8273 = vmatprep.subr.mxu0 0.0
        %8274 = vmatpush1.xpose.msra.mxu0 0.0
        %8275 = vmatprep.subr.mxu0 0.0
        %8276 = vmatpush1.xpose.msra.mxu0 0.0
        %8277 = vmatprep.subr.mxu0 0.0
        %8278 = vmatpush1.xpose.msra.mxu0 0.0
        %8279 = vmatprep.subr.mxu0 0.0
        %8280 = vmatpush1.xpose.msra.mxu0 0.0
        %8281 = vmatprep.subr.mxu0 0.0
        %8282 = vmatpush1.xpose.msra.mxu0 0.0
        %8283 = vmatprep.subr.mxu0 0.0
        %8284 = vmatpush1.xpose.msra.mxu0 0.0
        %8285 = vmatprep.subr.mxu0 0.0
        %8286 = vmatpush1.xpose.msra.mxu0 0.0
        %8287 = vmatprep.subr.mxu0 0.0
        %8288 = vmatpush1.xpose.msra.mxu0 0.0
        %8289 = vmatprep.subr.mxu0 0.0
        %8290 = vmatpush1.xpose.msra.mxu0 0.0
        %8291 = vmatprep.subr.mxu0 0.0
        %8292 = vmatpush1.xpose.msra.mxu0 0.0
        %8293 = vmatprep.subr.mxu0 0.0
        %8294 = vmatpush1.xpose.msra.mxu0 0.0
        %8295 = vmatprep.subr.mxu0 0.0
        %8296 = vmatpush1.xpose.msra.mxu0 0.0
        %8297 = vmatprep.subr.mxu0 0.0
        %8298 = vmatpush1.xpose.msra.mxu0 0.0
        %8299 = vmatprep.subr.mxu0 0.0
        %8300 = vmatpush1.xpose.msra.mxu0 0.0
        %8301 = vmatprep.subr.mxu0 0.0
        %8302 = vmatpush1.xpose.msra.mxu0 0.0
        %8303 = vmatprep.subr.mxu0 0.0
        %8304 = vmatpush1.xpose.msra.mxu0 0.0
        %8305 = vmatprep.subr.mxu0 0.0
        %8306 = vmatpush1.xpose.msra.mxu0 0.0
        %8307 = vmatprep.subr.mxu0 0.0
        %8308 = vmatpush1.xpose.msra.mxu0 0.0
        %8309 = vmatprep.subr.mxu0 0.0
        %8310 = vmatpush1.xpose.msra.mxu0 0.0
        %8311 = vmatprep.subr.mxu0 0.0
        %8312 = vmatpush1.xpose.msra.mxu0 0.0
        %8313 = vmatprep.mubr.f32.mxu0 0.0
        %8314 = vmatmul.mubr.f32.gmra.mrb[0].mxu0 %v8243
        %v8315 = vpop.f32.mrb[0].mxu0
        %v8316 = vadd.f32 %v8241, %v8315
        %v8317 = vpop.f32.mrb[0].mxu0
        %8318 = vdwg.mxu0
        %vm8319 = vcmask 122880
        %8320 = vst.msk [vmem:[%s217] sm:$0x1] %vm8319, %v8316
        %p8321 = scmp.lt.s32.totalorder %s18, 1
        %s8322 = scalar_select %p8321, %s18, 1
        %s8323 = scalar_lea.vmem %s3, %s8322
        // Predicated region
        $region45: #{master_pallas.1} parent=31 // pred_check
          %p8324 = pneg %p104
        $region46: #{master_pallas.1} parent=31 // pred_check_branch
          %8326 = sbr.rel (%p8324) target = $region48
        $region47: #{master_pallas.1} parent=31 // pred_region
          _
        $region48: #{master_pallas.1} parent=31 // pred_fallthru
          _
      $region32: #{master_pallas.1} parent=5 // pred_fallthru
        _
      %p8327 = scmp.le.s32.totalorder 2, %s13
      // Predicated region
      $region49: #{master_pallas.1} parent=5 // pred_check
        %p8328 = pneg %p8327
      $region50: #{master_pallas.1} parent=5 // pred_check_branch
        %8330 = sbr.rel (%p8328) target = $region52
      $region51: #{master_pallas.1} parent=5 // pred_region
        %s8331 = ssub.s32 %s13, 2
        // Predicated region
        $region53: #{master_pallas.1} parent=51 // pred_check
          %p8332 = pneg %p110
        $region54: #{master_pallas.1} parent=51 // pred_check_branch
          %8334 = sbr.rel (%p8332) target = $region56
        $region55: #{master_pallas.1} parent=51 // pred_region
          %p8335 = scmp.lt.s32.totalorder %s19, 1
          %s8336 = scalar_select %p8335, %s19, 1
          %s8337 = scalar_lea.vmem %s3, %s8336
        $region56: #{master_pallas.1} parent=51 // pred_fallthru
          _
      $region52: #{master_pallas.1} parent=5 // pred_fallthru
        _
    $region6: #{master_pallas.1} parent=1 // loop_footer
      %s17 = sadd.s32 1, %s13
    $region7: #{master_pallas.1} parent=1 // loop_footer_branch
      %12 = sbr.rel target = $region3
    $region8: #{master_pallas.1} parent=1 // loop_exit
      _
    %8338 = vsyncpa [#allocation4], 1
    %s8339 = scalar_lea.sflag [#allocation4], 1
    %8340 = vsyncpa %s8339, 1
    %8341 = vsyncpa [#allocation6], 1

</llo_original>
